<compile_context>
chip_gen: v7x
topology: tpu7x:2x2x1
jax: 0.10.0
libtpu: 0.0.40
codegen_flags: <defaults>
</compile_context>

<pallas_src>
import functools

import jax
import jax.numpy as jnp
from jax.experimental import pallas as pl
from jax.experimental.pallas import tpu as pltpu


def _round_up(a, b):
    return ((a + b - 1) // b) * b


def _make_kernel(chunk):
    """Fused 4-layer MLP kernel, samples-on-lanes layout, chunked over lanes."""

    def kernel(x_ref, w2_ref, w3_ref, w4_ref, vec_ref, o_ref):
        # x_ref : (1, TM)   input tile (samples on lanes)
        # w2/w3 : (16, 16)  hidden weights (PyTorch (out,in) layout)
        # w4    : (1, 16)   output weights
        # vec   : (16, 5)   packed columns [w1 | b1 | b2 | b3 | b4]
        # o_ref : (1, TM)   output tile (lane-dense stores)
        tm = x_ref.shape[1]
        n_chunks = tm // chunk

        w2 = w2_ref[...]
        w3 = w3_ref[...]
        w4 = w4_ref[...]
        vec = vec_ref[...]
        w1 = vec[:, 0:1]          # (16, 1)  — input_dim == 1
        b1 = vec[:, 1:2]
        b2 = vec[:, 2:3]
        b3 = vec[:, 3:4]
        b4 = vec[0:1, 4:5]        # (1, 1)

        # Static, fully-unrolled chunk loop (<= 16 iterations).  All slice
        # offsets are Python ints that are multiples of 512 -> tile-aligned,
        # unmasked vld/vst; h:(16, chunk) = 8 vregs stays register-resident.
        for c in range(n_chunks):
            lo = c * chunk
            xs = x_ref[:, lo:lo + chunk].astype(jnp.float32)        # (1, chunk)

            # Layer 1 (input_dim == 1): rank-1 broadcast on the VPU.
            h = jnp.tanh(w1 * xs + b1)                              # (16, chunk)

            # Hidden layers 2 & 3: tiny-K matmuls on the (idle) MXU.
            h = jnp.tanh(jnp.dot(w2, h,
                                 preferred_element_type=jnp.float32) + b2)
            h = jnp.tanh(jnp.dot(w3, h,
                                 preferred_element_type=jnp.float32) + b3)

            # Output layer + numerically-stable softplus.
            u = jnp.dot(w4, h, preferred_element_type=jnp.float32) + b4
            u = jnp.maximum(u, 0.0) + jnp.log1p(jnp.exp(-jnp.abs(u)))

            # output_transform is the default identity in (x, u) -> u.
            o_ref[:, lo:lo + chunk] = u.astype(o_ref.dtype)

    return kernel


@jax.jit
def param_function_forward(x, packed):
    """x: (N, 1) float32.  packed: output of pack_params()."""
    N, input_dim = x.shape
    fwidth = packed["w2"].shape[0]
    output_dim = packed["w4"].shape[0]
    assert input_dim == 1 and output_dim == 1, "kernel specialized to defaults"

    # Free relayouts (contiguous): (N,1) -> (1,N) and back at the end.
    xr = x.reshape(1, N)

    # Balanced tiling: >=2 grid steps (two v7x TensorCores), per-step tile
    # capped so the in-kernel chunk loop stays short (<=16 chunks) and the
    # I/O tiles stay ~64 KiB (safe under v7x's 32 MiB scoped VMEM).
    chunk = min(512, _round_up(N, 128))
    n_steps = max(2, pl.cdiv(N, 8192))
    tm = max(chunk, _round_up(pl.cdiv(N, n_steps), chunk))
    grid = (pl.cdiv(N, tm),)

    flops = 2 * N * (fwidth * input_dim + 2 * fwidth * fwidth
                     + fwidth * output_dim)
    cost = pl.CostEstimate(
        flops=flops,
        transcendentals=N * (3 * fwidth + 2 * output_dim),
        bytes_accessed=4 * (N * (input_dim + output_dim)
                            + 2 * fwidth * fwidth
                            + output_dim * fwidth + 5 * fwidth),
    )

    full = lambda shape: pl.BlockSpec(shape, lambda i: (0, 0))

    out = pl.pallas_call(
        _make_kernel(chunk),
        out_shape=jax.ShapeDtypeStruct((output_dim, N), x.dtype),
        grid_spec=pltpu.PrefetchScalarGridSpec(
            num_scalar_prefetch=0,
            grid=grid,
            in_specs=[
                pl.BlockSpec((1, tm), lambda i: (0, i)),     # x tile
                full((fwidth, fwidth)),                      # W2
                full((fwidth, fwidth)),                      # W3
                full((output_dim, fwidth)),                  # W4
                full((fwidth, 5)),                           # [w1|b1|b2|b3|b4]
            ],
            out_specs=pl.BlockSpec((output_dim, tm), lambda i: (0, i)),
        ),
        # Single grid axis marked parallel so Mosaic can shard the >=2 steps
        # across the two v7x TensorCores (no-op on v5e/v6e single-TC chips).
        compiler_params=pltpu.CompilerParams(
            dimension_semantics=("parallel",)),
        cost_estimate=cost,
    )(xr, packed["w2"], packed["w3"], packed["w4"], packed["vec"])

    return out.reshape(N, output_dim)


def pack_params(params):
    """Pack PyTorch-layout params (w:(out,in), b:(out,)) into kernel operands."""
    fw = params["w2"].shape[0]
    assert params["w1"].shape == (fw, 1) and params["w4"].shape == (1, fw)
    f32 = jnp.float32
    vec = jnp.concatenate(
        [
            params["w1"].reshape(fw, 1),
            params["b1"].reshape(fw, 1),
            params["b2"].reshape(fw, 1),
            params["b3"].reshape(fw, 1),
            jnp.broadcast_to(params["b4"].reshape(1, 1), (fw, 1)),
        ],
        axis=1,
    ).astype(f32)
    return {
        "w2": params["w2"].astype(f32),
        "w3": params["w3"].astype(f32),
        "w4": params["w4"].astype(f32),
        "vec": vec,
    }


def init_param_function(key, input_dim=1, output_dim=1, fdepth=4, fwidth=16,
                        dtype=jnp.float32):
    """torch.nn.Linear-style init: U(-1/sqrt(fan_in), 1/sqrt(fan_in)).
    Weights stored (out_features, in_features); biases stored (out_features,)."""
    assert fdepth == 4, "this script instantiates the default fdepth=4 MLP"
    dims = [(input_dim, fwidth), (fwidth, fwidth), (fwidth, fwidth),
            (fwidth, output_dim)]
    params = {}
    for li, (fan_in, fan_out) in enumerate(dims, start=1):
        key, kw, kb = jax.random.split(key, 3)
        bound = 1.0 / jnp.sqrt(fan_in)
        params[f"w{li}"] = jax.random.uniform(
            kw, (fan_out, fan_in), dtype, minval=-bound, maxval=bound)
        params[f"b{li}"] = jax.random.uniform(
            kb, (fan_out,), dtype, minval=-bound, maxval=bound)
    return params


def _reference_forward(x, params):
    """Pure-JAX reference, standard (N, features) layout."""
    h = jnp.tanh(x @ params["w1"].T + params["b1"])
    h = jnp.tanh(h @ params["w2"].T + params["b2"])
    h = jnp.tanh(h @ params["w3"].T + params["b3"])
    u = h @ params["w4"].T + params["b4"]
    return jax.nn.softplus(u)


if __name__ == "__main__":
    key = jax.random.PRNGKey(0)
    kx, kp = jax.random.split(key)

    N, INPUT_DIM = 10000, 1          # batch of 1-D sample points, e.g. x in [0,1]
    x = jax.random.uniform(kx, (N, INPUT_DIM), jnp.float32)
    params = init_param_function(kp, input_dim=INPUT_DIM, output_dim=1,
                                 fdepth=4, fwidth=16)
    packed = pack_params(params)

    out = param_function_forward(x, packed)   # 2 balanced tiles of 5120 lanes
    out = jax.block_until_ready(out)

    ref = _reference_forward(x, params)
    assert out.shape == (N, 1)
    assert jnp.allclose(out, ref, atol=1e-4, rtol=1e-4), "mismatch vs reference"

    print("KERNEL_OK")
</pallas_src>

<mosaic_0001>
module attributes {stable_mosaic.version = 11 : i64} {
  func.func @kernel(%arg0: i32, %arg1: memref<1x5120xf32, #tpu.memory_space<vmem>>, %arg2: memref<16x16xf32, #tpu.memory_space<vmem>>, %arg3: memref<16x16xf32, #tpu.memory_space<vmem>>, %arg4: memref<1x16xf32, #tpu.memory_space<vmem>>, %arg5: memref<16x5xf32, #tpu.memory_space<vmem>>, %arg6: memref<1x5120xf32, #tpu.memory_space<vmem>>) attributes {dimension_semantics = [#tpu.dimension_semantics<parallel>], iteration_bounds = array<i64: 2>, scalar_prefetch = 0 : i64, scratch_operands = 0 : i64, tpu.core_type = #tpu.core_type<tc>, window_params = [{transform_indices = @transform_0, window_bounds = array<i64: 1, 5120>}, {pipeline_mode = #tpu.pipeline_mode<synchronous>, transform_indices = @transform_1, window_bounds = array<i64: 16, 16>}, {pipeline_mode = #tpu.pipeline_mode<synchronous>, transform_indices = @transform_2, window_bounds = array<i64: 16, 16>}, {pipeline_mode = #tpu.pipeline_mode<synchronous>, transform_indices = @transform_3, window_bounds = array<i64: 1, 16>}, {pipeline_mode = #tpu.pipeline_mode<synchronous>, transform_indices = @transform_4, window_bounds = array<i64: 16, 5>}, {transform_indices = @transform_5, window_bounds = array<i64: 1, 5120>}]} {
    %c0 = arith.constant 0 : index
    %c0_0 = arith.constant 0 : index
    %0 = vector.load %arg2[%c0, %c0_0] : memref<16x16xf32, #tpu.memory_space<vmem>>, vector<16x16xf32>
    %c0_1 = arith.constant 0 : index
    %c0_2 = arith.constant 0 : index
    %1 = vector.load %arg3[%c0_1, %c0_2] : memref<16x16xf32, #tpu.memory_space<vmem>>, vector<16x16xf32>
    %c0_3 = arith.constant 0 : index
    %c0_4 = arith.constant 0 : index
    %2 = vector.load %arg4[%c0_3, %c0_4] : memref<1x16xf32, #tpu.memory_space<vmem>>, vector<1x16xf32>
    %c0_5 = arith.constant 0 : index
    %c0_6 = arith.constant 0 : index
    %3 = vector.load %arg5[%c0_5, %c0_6] : memref<16x5xf32, #tpu.memory_space<vmem>>, vector<16x5xf32>
    %4 = vector.extract_strided_slice %3 {offsets = [0, 0], sizes = [16, 1], strides = [1, 1]} : vector<16x5xf32> to vector<16x1xf32>
    %5 = vector.extract_strided_slice %3 {offsets = [0, 1], sizes = [16, 1], strides = [1, 1]} : vector<16x5xf32> to vector<16x1xf32>
    %6 = vector.extract_strided_slice %3 {offsets = [0, 2], sizes = [16, 1], strides = [1, 1]} : vector<16x5xf32> to vector<16x1xf32>
    %7 = vector.extract_strided_slice %3 {offsets = [0, 3], sizes = [16, 1], strides = [1, 1]} : vector<16x5xf32> to vector<16x1xf32>
    %8 = vector.extract_strided_slice %3 {offsets = [0, 4], sizes = [1, 1], strides = [1, 1]} : vector<16x5xf32> to vector<1x1xf32>
    %c0_7 = arith.constant 0 : index
    %c0_8 = arith.constant 0 : index
    %9 = vector.load %arg1[%c0_7, %c0_8] : memref<1x5120xf32, #tpu.memory_space<vmem>>, vector<1x512xf32>
    %10 = vector.broadcast %4 : vector<16x1xf32> to vector<16x512xf32>
    %11 = vector.broadcast %9 : vector<1x512xf32> to vector<16x512xf32>
    %12 = arith.mulf %10, %11 : vector<16x512xf32>
    %13 = vector.broadcast %5 : vector<16x1xf32> to vector<16x512xf32>
    %14 = arith.addf %12, %13 : vector<16x512xf32>
    %15 = math.tanh %14 : vector<16x512xf32>
    %cst = arith.constant dense<0.000000e+00> : vector<16x512xf32>
    %16 = tpu.matmul %0, %15, %cst {dimension_numbers = #tpu.dot_dimension_numbers<[1], [0], [0], [1], [0, 0, 1, 1], [], []>} : vector<16x16xf32>, vector<16x512xf32>, vector<16x512xf32> -> vector<16x512xf32>
    %17 = vector.broadcast %6 : vector<16x1xf32> to vector<16x512xf32>
    %18 = arith.addf %16, %17 : vector<16x512xf32>
    %19 = math.tanh %18 : vector<16x512xf32>
    %cst_9 = arith.constant dense<0.000000e+00> : vector<16x512xf32>
    %20 = tpu.matmul %1, %19, %cst_9 {dimension_numbers = #tpu.dot_dimension_numbers<[1], [0], [0], [1], [0, 0, 1, 1], [], []>} : vector<16x16xf32>, vector<16x512xf32>, vector<16x512xf32> -> vector<16x512xf32>
    %21 = vector.broadcast %7 : vector<16x1xf32> to vector<16x512xf32>
    %22 = arith.addf %20, %21 : vector<16x512xf32>
    %23 = math.tanh %22 : vector<16x512xf32>
    %cst_10 = arith.constant dense<0.000000e+00> : vector<1x512xf32>
    %24 = tpu.matmul %2, %23, %cst_10 {dimension_numbers = #tpu.dot_dimension_numbers<[1], [0], [0], [1], [0, 0, 1, 1], [], []>} : vector<1x16xf32>, vector<16x512xf32>, vector<1x512xf32> -> vector<1x512xf32>
    %25 = vector.broadcast %8 : vector<1x1xf32> to vector<1x512xf32>
    %26 = arith.addf %24, %25 : vector<1x512xf32>
    %cst_11 = arith.constant 0.000000e+00 : f32
    %27 = vector.broadcast %cst_11 : f32 to vector<1x512xf32>
    %28 = arith.maximumf %26, %27 : vector<1x512xf32>
    %29 = math.absf %26 : vector<1x512xf32>
    %cst_12 = arith.constant 0.000000e+00 : f32
    %30 = vector.broadcast %cst_12 : f32 to vector<1x512xf32>
    %31 = arith.subf %30, %29 : vector<1x512xf32>
    %32 = math.exp %31 : vector<1x512xf32>
    %33 = math.log1p %32 : vector<1x512xf32>
    %34 = arith.addf %28, %33 : vector<1x512xf32>
    %c0_13 = arith.constant 0 : index
    %c0_14 = arith.constant 0 : index
    %35 = vector.load %arg6[%c0_13, %c0_14] : memref<1x5120xf32, #tpu.memory_space<vmem>>, vector<1x512xf32>
    tpu.vector_store %arg6[%c0_13, %c0_14], %34 {strides = array<i32>} : memref<1x5120xf32, #tpu.memory_space<vmem>>, vector<1x512xf32>,
    %c0_15 = arith.constant 0 : index
    %c512 = arith.constant 512 : index
    %36 = vector.load %arg1[%c0_15, %c512] : memref<1x5120xf32, #tpu.memory_space<vmem>>, vector<1x512xf32>
    %37 = vector.broadcast %4 : vector<16x1xf32> to vector<16x512xf32>
    %38 = vector.broadcast %36 : vector<1x512xf32> to vector<16x512xf32>
    %39 = arith.mulf %37, %38 : vector<16x512xf32>
    %40 = vector.broadcast %5 : vector<16x1xf32> to vector<16x512xf32>
    %41 = arith.addf %39, %40 : vector<16x512xf32>
    %42 = math.tanh %41 : vector<16x512xf32>
    %cst_16 = arith.constant dense<0.000000e+00> : vector<16x512xf32>
    %43 = tpu.matmul %0, %42, %cst_16 {dimension_numbers = #tpu.dot_dimension_numbers<[1], [0], [0], [1], [0, 0, 1, 1], [], []>} : vector<16x16xf32>, vector<16x512xf32>, vector<16x512xf32> -> vector<16x512xf32>
    %44 = vector.broadcast %6 : vector<16x1xf32> to vector<16x512xf32>
    %45 = arith.addf %43, %44 : vector<16x512xf32>
    %46 = math.tanh %45 : vector<16x512xf32>
    %cst_17 = arith.constant dense<0.000000e+00> : vector<16x512xf32>
    %47 = tpu.matmul %1, %46, %cst_17 {dimension_numbers = #tpu.dot_dimension_numbers<[1], [0], [0], [1], [0, 0, 1, 1], [], []>} : vector<16x16xf32>, vector<16x512xf32>, vector<16x512xf32> -> vector<16x512xf32>
    %48 = vector.broadcast %7 : vector<16x1xf32> to vector<16x512xf32>
    %49 = arith.addf %47, %48 : vector<16x512xf32>
    %50 = math.tanh %49 : vector<16x512xf32>
    %cst_18 = arith.constant dense<0.000000e+00> : vector<1x512xf32>
    %51 = tpu.matmul %2, %50, %cst_18 {dimension_numbers = #tpu.dot_dimension_numbers<[1], [0], [0], [1], [0, 0, 1, 1], [], []>} : vector<1x16xf32>, vector<16x512xf32>, vector<1x512xf32> -> vector<1x512xf32>
    %52 = vector.broadcast %8 : vector<1x1xf32> to vector<1x512xf32>
    %53 = arith.addf %51, %52 : vector<1x512xf32>
    %cst_19 = arith.constant 0.000000e+00 : f32
    %54 = vector.broadcast %cst_19 : f32 to vector<1x512xf32>
    %55 = arith.maximumf %53, %54 : vector<1x512xf32>
    %56 = math.absf %53 : vector<1x512xf32>
    %cst_20 = arith.constant 0.000000e+00 : f32
    %57 = vector.broadcast %cst_20 : f32 to vector<1x512xf32>
    %58 = arith.subf %57, %56 : vector<1x512xf32>
    %59 = math.exp %58 : vector<1x512xf32>
    %60 = math.log1p %59 : vector<1x512xf32>
    %61 = arith.addf %55, %60 : vector<1x512xf32>
    %c0_21 = arith.constant 0 : index
    %c512_22 = arith.constant 512 : index
    %62 = vector.load %arg6[%c0_21, %c512_22] : memref<1x5120xf32, #tpu.memory_space<vmem>>, vector<1x512xf32>
    tpu.vector_store %arg6[%c0_21, %c512_22], %61 {strides = array<i32>} : memref<1x5120xf32, #tpu.memory_space<vmem>>, vector<1x512xf32>,
    %c0_23 = arith.constant 0 : index
    %c1024 = arith.constant 1024 : index
    %63 = vector.load %arg1[%c0_23, %c1024] : memref<1x5120xf32, #tpu.memory_space<vmem>>, vector<1x512xf32>
    %64 = vector.broadcast %4 : vector<16x1xf32> to vector<16x512xf32>
    %65 = vector.broadcast %63 : vector<1x512xf32> to vector<16x512xf32>
    %66 = arith.mulf %64, %65 : vector<16x512xf32>
    %67 = vector.broadcast %5 : vector<16x1xf32> to vector<16x512xf32>
    %68 = arith.addf %66, %67 : vector<16x512xf32>
    %69 = math.tanh %68 : vector<16x512xf32>
    %cst_24 = arith.constant dense<0.000000e+00> : vector<16x512xf32>
    %70 = tpu.matmul %0, %69, %cst_24 {dimension_numbers = #tpu.dot_dimension_numbers<[1], [0], [0], [1], [0, 0, 1, 1], [], []>} : vector<16x16xf32>, vector<16x512xf32>, vector<16x512xf32> -> vector<16x512xf32>
    %71 = vector.broadcast %6 : vector<16x1xf32> to vector<16x512xf32>
    %72 = arith.addf %70, %71 : vector<16x512xf32>
    %73 = math.tanh %72 : vector<16x512xf32>
    %cst_25 = arith.constant dense<0.000000e+00> : vector<16x512xf32>
    %74 = tpu.matmul %1, %73, %cst_25 {dimension_numbers = #tpu.dot_dimension_numbers<[1], [0], [0], [1], [0, 0, 1, 1], [], []>} : vector<16x16xf32>, vector<16x512xf32>, vector<16x512xf32> -> vector<16x512xf32>
    %75 = vector.broadcast %7 : vector<16x1xf32> to vector<16x512xf32>
    %76 = arith.addf %74, %75 : vector<16x512xf32>
    %77 = math.tanh %76 : vector<16x512xf32>
    %cst_26 = arith.constant dense<0.000000e+00> : vector<1x512xf32>
    %78 = tpu.matmul %2, %77, %cst_26 {dimension_numbers = #tpu.dot_dimension_numbers<[1], [0], [0], [1], [0, 0, 1, 1], [], []>} : vector<1x16xf32>, vector<16x512xf32>, vector<1x512xf32> -> vector<1x512xf32>
    %79 = vector.broadcast %8 : vector<1x1xf32> to vector<1x512xf32>
    %80 = arith.addf %78, %79 : vector<1x512xf32>
    %cst_27 = arith.constant 0.000000e+00 : f32
    %81 = vector.broadcast %cst_27 : f32 to vector<1x512xf32>
    %82 = arith.maximumf %80, %81 : vector<1x512xf32>
    %83 = math.absf %80 : vector<1x512xf32>
    %cst_28 = arith.constant 0.000000e+00 : f32
    %84 = vector.broadcast %cst_28 : f32 to vector<1x512xf32>
    %85 = arith.subf %84, %83 : vector<1x512xf32>
    %86 = math.exp %85 : vector<1x512xf32>
    %87 = math.log1p %86 : vector<1x512xf32>
    %88 = arith.addf %82, %87 : vector<1x512xf32>
    %c0_29 = arith.constant 0 : index
    %c1024_30 = arith.constant 1024 : index
    %89 = vector.load %arg6[%c0_29, %c1024_30] : memref<1x5120xf32, #tpu.memory_space<vmem>>, vector<1x512xf32>
    tpu.vector_store %arg6[%c0_29, %c1024_30], %88 {strides = array<i32>} : memref<1x5120xf32, #tpu.memory_space<vmem>>, vector<1x512xf32>,
    %c0_31 = arith.constant 0 : index
    %c1536 = arith.constant 1536 : index
    %90 = vector.load %arg1[%c0_31, %c1536] : memref<1x5120xf32, #tpu.memory_space<vmem>>, vector<1x512xf32>
    %91 = vector.broadcast %4 : vector<16x1xf32> to vector<16x512xf32>
    %92 = vector.broadcast %90 : vector<1x512xf32> to vector<16x512xf32>
    %93 = arith.mulf %91, %92 : vector<16x512xf32>
    %94 = vector.broadcast %5 : vector<16x1xf32> to vector<16x512xf32>
    %95 = arith.addf %93, %94 : vector<16x512xf32>
    %96 = math.tanh %95 : vector<16x512xf32>
    %cst_32 = arith.constant dense<0.000000e+00> : vector<16x512xf32>
    %97 = tpu.matmul %0, %96, %cst_32 {dimension_numbers = #tpu.dot_dimension_numbers<[1], [0], [0], [1], [0, 0, 1, 1], [], []>} : vector<16x16xf32>, vector<16x512xf32>, vector<16x512xf32> -> vector<16x512xf32>
    %98 = vector.broadcast %6 : vector<16x1xf32> to vector<16x512xf32>
    %99 = arith.addf %97, %98 : vector<16x512xf32>
    %100 = math.tanh %99 : vector<16x512xf32>
    %cst_33 = arith.constant dense<0.000000e+00> : vector<16x512xf32>
    %101 = tpu.matmul %1, %100, %cst_33 {dimension_numbers = #tpu.dot_dimension_numbers<[1], [0], [0], [1], [0, 0, 1, 1], [], []>} : vector<16x16xf32>, vector<16x512xf32>, vector<16x512xf32> -> vector<16x512xf32>
    %102 = vector.broadcast %7 : vector<16x1xf32> to vector<16x512xf32>
    %103 = arith.addf %101, %102 : vector<16x512xf32>
    %104 = math.tanh %103 : vector<16x512xf32>
    %cst_34 = arith.constant dense<0.000000e+00> : vector<1x512xf32>
    %105 = tpu.matmul %2, %104, %cst_34 {dimension_numbers = #tpu.dot_dimension_numbers<[1], [0], [0], [1], [0, 0, 1, 1], [], []>} : vector<1x16xf32>, vector<16x512xf32>, vector<1x512xf32> -> vector<1x512xf32>
    %106 = vector.broadcast %8 : vector<1x1xf32> to vector<1x512xf32>
    %107 = arith.addf %105, %106 : vector<1x512xf32>
    %cst_35 = arith.constant 0.000000e+00 : f32
    %108 = vector.broadcast %cst_35 : f32 to vector<1x512xf32>
    %109 = arith.maximumf %107, %108 : vector<1x512xf32>
    %110 = math.absf %107 : vector<1x512xf32>
    %cst_36 = arith.constant 0.000000e+00 : f32
    %111 = vector.broadcast %cst_36 : f32 to vector<1x512xf32>
    %112 = arith.subf %111, %110 : vector<1x512xf32>
    %113 = math.exp %112 : vector<1x512xf32>
    %114 = math.log1p %113 : vector<1x512xf32>
    %115 = arith.addf %109, %114 : vector<1x512xf32>
    %c0_37 = arith.constant 0 : index
    %c1536_38 = arith.constant 1536 : index
    %116 = vector.load %arg6[%c0_37, %c1536_38] : memref<1x5120xf32, #tpu.memory_space<vmem>>, vector<1x512xf32>
    tpu.vector_store %arg6[%c0_37, %c1536_38], %115 {strides = array<i32>} : memref<1x5120xf32, #tpu.memory_space<vmem>>, vector<1x512xf32>,
    %c0_39 = arith.constant 0 : index
    %c2048 = arith.constant 2048 : index
    %117 = vector.load %arg1[%c0_39, %c2048] : memref<1x5120xf32, #tpu.memory_space<vmem>>, vector<1x512xf32>
    %118 = vector.broadcast %4 : vector<16x1xf32> to vector<16x512xf32>
    %119 = vector.broadcast %117 : vector<1x512xf32> to vector<16x512xf32>
    %120 = arith.mulf %118, %119 : vector<16x512xf32>
    %121 = vector.broadcast %5 : vector<16x1xf32> to vector<16x512xf32>
    %122 = arith.addf %120, %121 : vector<16x512xf32>
    %123 = math.tanh %122 : vector<16x512xf32>
    %cst_40 = arith.constant dense<0.000000e+00> : vector<16x512xf32>
    %124 = tpu.matmul %0, %123, %cst_40 {dimension_numbers = #tpu.dot_dimension_numbers<[1], [0], [0], [1], [0, 0, 1, 1], [], []>} : vector<16x16xf32>, vector<16x512xf32>, vector<16x512xf32> -> vector<16x512xf32>
    %125 = vector.broadcast %6 : vector<16x1xf32> to vector<16x512xf32>
    %126 = arith.addf %124, %125 : vector<16x512xf32>
    %127 = math.tanh %126 : vector<16x512xf32>
    %cst_41 = arith.constant dense<0.000000e+00> : vector<16x512xf32>
    %128 = tpu.matmul %1, %127, %cst_41 {dimension_numbers = #tpu.dot_dimension_numbers<[1], [0], [0], [1], [0, 0, 1, 1], [], []>} : vector<16x16xf32>, vector<16x512xf32>, vector<16x512xf32> -> vector<16x512xf32>
    %129 = vector.broadcast %7 : vector<16x1xf32> to vector<16x512xf32>
    %130 = arith.addf %128, %129 : vector<16x512xf32>
    %131 = math.tanh %130 : vector<16x512xf32>
    %cst_42 = arith.constant dense<0.000000e+00> : vector<1x512xf32>
    %132 = tpu.matmul %2, %131, %cst_42 {dimension_numbers = #tpu.dot_dimension_numbers<[1], [0], [0], [1], [0, 0, 1, 1], [], []>} : vector<1x16xf32>, vector<16x512xf32>, vector<1x512xf32> -> vector<1x512xf32>
    %133 = vector.broadcast %8 : vector<1x1xf32> to vector<1x512xf32>
    %134 = arith.addf %132, %133 : vector<1x512xf32>
    %cst_43 = arith.constant 0.000000e+00 : f32
    %135 = vector.broadcast %cst_43 : f32 to vector<1x512xf32>
    %136 = arith.maximumf %134, %135 : vector<1x512xf32>
    %137 = math.absf %134 : vector<1x512xf32>
    %cst_44 = arith.constant 0.000000e+00 : f32
    %138 = vector.broadcast %cst_44 : f32 to vector<1x512xf32>
    %139 = arith.subf %138, %137 : vector<1x512xf32>
    %140 = math.exp %139 : vector<1x512xf32>
    %141 = math.log1p %140 : vector<1x512xf32>
    %142 = arith.addf %136, %141 : vector<1x512xf32>
    %c0_45 = arith.constant 0 : index
    %c2048_46 = arith.constant 2048 : index
    %143 = vector.load %arg6[%c0_45, %c2048_46] : memref<1x5120xf32, #tpu.memory_space<vmem>>, vector<1x512xf32>
    tpu.vector_store %arg6[%c0_45, %c2048_46], %142 {strides = array<i32>} : memref<1x5120xf32, #tpu.memory_space<vmem>>, vector<1x512xf32>,
    %c0_47 = arith.constant 0 : index
    %c2560 = arith.constant 2560 : index
    %144 = vector.load %arg1[%c0_47, %c2560] : memref<1x5120xf32, #tpu.memory_space<vmem>>, vector<1x512xf32>
    %145 = vector.broadcast %4 : vector<16x1xf32> to vector<16x512xf32>
    %146 = vector.broadcast %144 : vector<1x512xf32> to vector<16x512xf32>
    %147 = arith.mulf %145, %146 : vector<16x512xf32>
    %148 = vector.broadcast %5 : vector<16x1xf32> to vector<16x512xf32>
    %149 = arith.addf %147, %148 : vector<16x512xf32>
    %150 = math.tanh %149 : vector<16x512xf32>
    %cst_48 = arith.constant dense<0.000000e+00> : vector<16x512xf32>
    %151 = tpu.matmul %0, %150, %cst_48 {dimension_numbers = #tpu.dot_dimension_numbers<[1], [0], [0], [1], [0, 0, 1, 1], [], []>} : vector<16x16xf32>, vector<16x512xf32>, vector<16x512xf32> -> vector<16x512xf32>
    %152 = vector.broadcast %6 : vector<16x1xf32> to vector<16x512xf32>
    %153 = arith.addf %151, %152 : vector<16x512xf32>
    %154 = math.tanh %153 : vector<16x512xf32>
    %cst_49 = arith.constant dense<0.000000e+00> : vector<16x512xf32>
    %155 = tpu.matmul %1, %154, %cst_49 {dimension_numbers = #tpu.dot_dimension_numbers<[1], [0], [0], [1], [0, 0, 1, 1], [], []>} : vector<16x16xf32>, vector<16x512xf32>, vector<16x512xf32> -> vector<16x512xf32>
    %156 = vector.broadcast %7 : vector<16x1xf32> to vector<16x512xf32>
    %157 = arith.addf %155, %156 : vector<16x512xf32>
    %158 = math.tanh %157 : vector<16x512xf32>
    %cst_50 = arith.constant dense<0.000000e+00> : vector<1x512xf32>
    %159 = tpu.matmul %2, %158, %cst_50 {dimension_numbers = #tpu.dot_dimension_numbers<[1], [0], [0], [1], [0, 0, 1, 1], [], []>} : vector<1x16xf32>, vector<16x512xf32>, vector<1x512xf32> -> vector<1x512xf32>
    %160 = vector.broadcast %8 : vector<1x1xf32> to vector<1x512xf32>
    %161 = arith.addf %159, %160 : vector<1x512xf32>
    %cst_51 = arith.constant 0.000000e+00 : f32
    %162 = vector.broadcast %cst_51 : f32 to vector<1x512xf32>
    %163 = arith.maximumf %161, %162 : vector<1x512xf32>
    %164 = math.absf %161 : vector<1x512xf32>
    %cst_52 = arith.constant 0.000000e+00 : f32
    %165 = vector.broadcast %cst_52 : f32 to vector<1x512xf32>
    %166 = arith.subf %165, %164 : vector<1x512xf32>
    %167 = math.exp %166 : vector<1x512xf32>
    %168 = math.log1p %167 : vector<1x512xf32>
    %169 = arith.addf %163, %168 : vector<1x512xf32>
    %c0_53 = arith.constant 0 : index
    %c2560_54 = arith.constant 2560 : index
    %170 = vector.load %arg6[%c0_53, %c2560_54] : memref<1x5120xf32, #tpu.memory_space<vmem>>, vector<1x512xf32>
    tpu.vector_store %arg6[%c0_53, %c2560_54], %169 {strides = array<i32>} : memref<1x5120xf32, #tpu.memory_space<vmem>>, vector<1x512xf32>,
    %c0_55 = arith.constant 0 : index
    %c3072 = arith.constant 3072 : index
    %171 = vector.load %arg1[%c0_55, %c3072] : memref<1x5120xf32, #tpu.memory_space<vmem>>, vector<1x512xf32>
    %172 = vector.broadcast %4 : vector<16x1xf32> to vector<16x512xf32>
    %173 = vector.broadcast %171 : vector<1x512xf32> to vector<16x512xf32>
    %174 = arith.mulf %172, %173 : vector<16x512xf32>
    %175 = vector.broadcast %5 : vector<16x1xf32> to vector<16x512xf32>
    %176 = arith.addf %174, %175 : vector<16x512xf32>
    %177 = math.tanh %176 : vector<16x512xf32>
    %cst_56 = arith.constant dense<0.000000e+00> : vector<16x512xf32>
    %178 = tpu.matmul %0, %177, %cst_56 {dimension_numbers = #tpu.dot_dimension_numbers<[1], [0], [0], [1], [0, 0, 1, 1], [], []>} : vector<16x16xf32>, vector<16x512xf32>, vector<16x512xf32> -> vector<16x512xf32>
    %179 = vector.broadcast %6 : vector<16x1xf32> to vector<16x512xf32>
    %180 = arith.addf %178, %179 : vector<16x512xf32>
    %181 = math.tanh %180 : vector<16x512xf32>
    %cst_57 = arith.constant dense<0.000000e+00> : vector<16x512xf32>
    %182 = tpu.matmul %1, %181, %cst_57 {dimension_numbers = #tpu.dot_dimension_numbers<[1], [0], [0], [1], [0, 0, 1, 1], [], []>} : vector<16x16xf32>, vector<16x512xf32>, vector<16x512xf32> -> vector<16x512xf32>
    %183 = vector.broadcast %7 : vector<16x1xf32> to vector<16x512xf32>
    %184 = arith.addf %182, %183 : vector<16x512xf32>
    %185 = math.tanh %184 : vector<16x512xf32>
    %cst_58 = arith.constant dense<0.000000e+00> : vector<1x512xf32>
    %186 = tpu.matmul %2, %185, %cst_58 {dimension_numbers = #tpu.dot_dimension_numbers<[1], [0], [0], [1], [0, 0, 1, 1], [], []>} : vector<1x16xf32>, vector<16x512xf32>, vector<1x512xf32> -> vector<1x512xf32>
    %187 = vector.broadcast %8 : vector<1x1xf32> to vector<1x512xf32>
    %188 = arith.addf %186, %187 : vector<1x512xf32>
    %cst_59 = arith.constant 0.000000e+00 : f32
    %189 = vector.broadcast %cst_59 : f32 to vector<1x512xf32>
    %190 = arith.maximumf %188, %189 : vector<1x512xf32>
    %191 = math.absf %188 : vector<1x512xf32>
    %cst_60 = arith.constant 0.000000e+00 : f32
    %192 = vector.broadcast %cst_60 : f32 to vector<1x512xf32>
    %193 = arith.subf %192, %191 : vector<1x512xf32>
    %194 = math.exp %193 : vector<1x512xf32>
    %195 = math.log1p %194 : vector<1x512xf32>
    %196 = arith.addf %190, %195 : vector<1x512xf32>
    %c0_61 = arith.constant 0 : index
    %c3072_62 = arith.constant 3072 : index
    %197 = vector.load %arg6[%c0_61, %c3072_62] : memref<1x5120xf32, #tpu.memory_space<vmem>>, vector<1x512xf32>
    tpu.vector_store %arg6[%c0_61, %c3072_62], %196 {strides = array<i32>} : memref<1x5120xf32, #tpu.memory_space<vmem>>, vector<1x512xf32>,
    %c0_63 = arith.constant 0 : index
    %c3584 = arith.constant 3584 : index
    %198 = vector.load %arg1[%c0_63, %c3584] : memref<1x5120xf32, #tpu.memory_space<vmem>>, vector<1x512xf32>
    %199 = vector.broadcast %4 : vector<16x1xf32> to vector<16x512xf32>
    %200 = vector.broadcast %198 : vector<1x512xf32> to vector<16x512xf32>
    %201 = arith.mulf %199, %200 : vector<16x512xf32>
    %202 = vector.broadcast %5 : vector<16x1xf32> to vector<16x512xf32>
    %203 = arith.addf %201, %202 : vector<16x512xf32>
    %204 = math.tanh %203 : vector<16x512xf32>
    %cst_64 = arith.constant dense<0.000000e+00> : vector<16x512xf32>
    %205 = tpu.matmul %0, %204, %cst_64 {dimension_numbers = #tpu.dot_dimension_numbers<[1], [0], [0], [1], [0, 0, 1, 1], [], []>} : vector<16x16xf32>, vector<16x512xf32>, vector<16x512xf32> -> vector<16x512xf32>
    %206 = vector.broadcast %6 : vector<16x1xf32> to vector<16x512xf32>
    %207 = arith.addf %205, %206 : vector<16x512xf32>
    %208 = math.tanh %207 : vector<16x512xf32>
    %cst_65 = arith.constant dense<0.000000e+00> : vector<16x512xf32>
    %209 = tpu.matmul %1, %208, %cst_65 {dimension_numbers = #tpu.dot_dimension_numbers<[1], [0], [0], [1], [0, 0, 1, 1], [], []>} : vector<16x16xf32>, vector<16x512xf32>, vector<16x512xf32> -> vector<16x512xf32>
    %210 = vector.broadcast %7 : vector<16x1xf32> to vector<16x512xf32>
    %211 = arith.addf %209, %210 : vector<16x512xf32>
    %212 = math.tanh %211 : vector<16x512xf32>
    %cst_66 = arith.constant dense<0.000000e+00> : vector<1x512xf32>
    %213 = tpu.matmul %2, %212, %cst_66 {dimension_numbers = #tpu.dot_dimension_numbers<[1], [0], [0], [1], [0, 0, 1, 1], [], []>} : vector<1x16xf32>, vector<16x512xf32>, vector<1x512xf32> -> vector<1x512xf32>
    %214 = vector.broadcast %8 : vector<1x1xf32> to vector<1x512xf32>
    %215 = arith.addf %213, %214 : vector<1x512xf32>
    %cst_67 = arith.constant 0.000000e+00 : f32
    %216 = vector.broadcast %cst_67 : f32 to vector<1x512xf32>
    %217 = arith.maximumf %215, %216 : vector<1x512xf32>
    %218 = math.absf %215 : vector<1x512xf32>
    %cst_68 = arith.constant 0.000000e+00 : f32
    %219 = vector.broadcast %cst_68 : f32 to vector<1x512xf32>
    %220 = arith.subf %219, %218 : vector<1x512xf32>
    %221 = math.exp %220 : vector<1x512xf32>
    %222 = math.log1p %221 : vector<1x512xf32>
    %223 = arith.addf %217, %222 : vector<1x512xf32>
    %c0_69 = arith.constant 0 : index
    %c3584_70 = arith.constant 3584 : index
    %224 = vector.load %arg6[%c0_69, %c3584_70] : memref<1x5120xf32, #tpu.memory_space<vmem>>, vector<1x512xf32>
    tpu.vector_store %arg6[%c0_69, %c3584_70], %223 {strides = array<i32>} : memref<1x5120xf32, #tpu.memory_space<vmem>>, vector<1x512xf32>,
    %c0_71 = arith.constant 0 : index
    %c4096 = arith.constant 4096 : index
    %225 = vector.load %arg1[%c0_71, %c4096] : memref<1x5120xf32, #tpu.memory_space<vmem>>, vector<1x512xf32>
    %226 = vector.broadcast %4 : vector<16x1xf32> to vector<16x512xf32>
    %227 = vector.broadcast %225 : vector<1x512xf32> to vector<16x512xf32>
    %228 = arith.mulf %226, %227 : vector<16x512xf32>
    %229 = vector.broadcast %5 : vector<16x1xf32> to vector<16x512xf32>
    %230 = arith.addf %228, %229 : vector<16x512xf32>
    %231 = math.tanh %230 : vector<16x512xf32>
    %cst_72 = arith.constant dense<0.000000e+00> : vector<16x512xf32>
    %232 = tpu.matmul %0, %231, %cst_72 {dimension_numbers = #tpu.dot_dimension_numbers<[1], [0], [0], [1], [0, 0, 1, 1], [], []>} : vector<16x16xf32>, vector<16x512xf32>, vector<16x512xf32> -> vector<16x512xf32>
    %233 = vector.broadcast %6 : vector<16x1xf32> to vector<16x512xf32>
    %234 = arith.addf %232, %233 : vector<16x512xf32>
    %235 = math.tanh %234 : vector<16x512xf32>
    %cst_73 = arith.constant dense<0.000000e+00> : vector<16x512xf32>
    %236 = tpu.matmul %1, %235, %cst_73 {dimension_numbers = #tpu.dot_dimension_numbers<[1], [0], [0], [1], [0, 0, 1, 1], [], []>} : vector<16x16xf32>, vector<16x512xf32>, vector<16x512xf32> -> vector<16x512xf32>
    %237 = vector.broadcast %7 : vector<16x1xf32> to vector<16x512xf32>
    %238 = arith.addf %236, %237 : vector<16x512xf32>
    %239 = math.tanh %238 : vector<16x512xf32>
    %cst_74 = arith.constant dense<0.000000e+00> : vector<1x512xf32>
    %240 = tpu.matmul %2, %239, %cst_74 {dimension_numbers = #tpu.dot_dimension_numbers<[1], [0], [0], [1], [0, 0, 1, 1], [], []>} : vector<1x16xf32>, vector<16x512xf32>, vector<1x512xf32> -> vector<1x512xf32>
    %241 = vector.broadcast %8 : vector<1x1xf32> to vector<1x512xf32>
    %242 = arith.addf %240, %241 : vector<1x512xf32>
    %cst_75 = arith.constant 0.000000e+00 : f32
    %243 = vector.broadcast %cst_75 : f32 to vector<1x512xf32>
    %244 = arith.maximumf %242, %243 : vector<1x512xf32>
    %245 = math.absf %242 : vector<1x512xf32>
    %cst_76 = arith.constant 0.000000e+00 : f32
    %246 = vector.broadcast %cst_76 : f32 to vector<1x512xf32>
    %247 = arith.subf %246, %245 : vector<1x512xf32>
    %248 = math.exp %247 : vector<1x512xf32>
    %249 = math.log1p %248 : vector<1x512xf32>
    %250 = arith.addf %244, %249 : vector<1x512xf32>
    %c0_77 = arith.constant 0 : index
    %c4096_78 = arith.constant 4096 : index
    %251 = vector.load %arg6[%c0_77, %c4096_78] : memref<1x5120xf32, #tpu.memory_space<vmem>>, vector<1x512xf32>
    tpu.vector_store %arg6[%c0_77, %c4096_78], %250 {strides = array<i32>} : memref<1x5120xf32, #tpu.memory_space<vmem>>, vector<1x512xf32>,
    %c0_79 = arith.constant 0 : index
    %c4608 = arith.constant 4608 : index
    %252 = vector.load %arg1[%c0_79, %c4608] : memref<1x5120xf32, #tpu.memory_space<vmem>>, vector<1x512xf32>
    %253 = vector.broadcast %4 : vector<16x1xf32> to vector<16x512xf32>
    %254 = vector.broadcast %252 : vector<1x512xf32> to vector<16x512xf32>
    %255 = arith.mulf %253, %254 : vector<16x512xf32>
    %256 = vector.broadcast %5 : vector<16x1xf32> to vector<16x512xf32>
    %257 = arith.addf %255, %256 : vector<16x512xf32>
    %258 = math.tanh %257 : vector<16x512xf32>
    %cst_80 = arith.constant dense<0.000000e+00> : vector<16x512xf32>
    %259 = tpu.matmul %0, %258, %cst_80 {dimension_numbers = #tpu.dot_dimension_numbers<[1], [0], [0], [1], [0, 0, 1, 1], [], []>} : vector<16x16xf32>, vector<16x512xf32>, vector<16x512xf32> -> vector<16x512xf32>
    %260 = vector.broadcast %6 : vector<16x1xf32> to vector<16x512xf32>
    %261 = arith.addf %259, %260 : vector<16x512xf32>
    %262 = math.tanh %261 : vector<16x512xf32>
    %cst_81 = arith.constant dense<0.000000e+00> : vector<16x512xf32>
    %263 = tpu.matmul %1, %262, %cst_81 {dimension_numbers = #tpu.dot_dimension_numbers<[1], [0], [0], [1], [0, 0, 1, 1], [], []>} : vector<16x16xf32>, vector<16x512xf32>, vector<16x512xf32> -> vector<16x512xf32>
    %264 = vector.broadcast %7 : vector<16x1xf32> to vector<16x512xf32>
    %265 = arith.addf %263, %264 : vector<16x512xf32>
    %266 = math.tanh %265 : vector<16x512xf32>
    %cst_82 = arith.constant dense<0.000000e+00> : vector<1x512xf32>
    %267 = tpu.matmul %2, %266, %cst_82 {dimension_numbers = #tpu.dot_dimension_numbers<[1], [0], [0], [1], [0, 0, 1, 1], [], []>} : vector<1x16xf32>, vector<16x512xf32>, vector<1x512xf32> -> vector<1x512xf32>
    %268 = vector.broadcast %8 : vector<1x1xf32> to vector<1x512xf32>
    %269 = arith.addf %267, %268 : vector<1x512xf32>
    %cst_83 = arith.constant 0.000000e+00 : f32
    %270 = vector.broadcast %cst_83 : f32 to vector<1x512xf32>
    %271 = arith.maximumf %269, %270 : vector<1x512xf32>
    %272 = math.absf %269 : vector<1x512xf32>
    %cst_84 = arith.constant 0.000000e+00 : f32
    %273 = vector.broadcast %cst_84 : f32 to vector<1x512xf32>
    %274 = arith.subf %273, %272 : vector<1x512xf32>
    %275 = math.exp %274 : vector<1x512xf32>
    %276 = math.log1p %275 : vector<1x512xf32>
    %277 = arith.addf %271, %276 : vector<1x512xf32>
    %c0_85 = arith.constant 0 : index
    %c4608_86 = arith.constant 4608 : index
    %278 = vector.load %arg6[%c0_85, %c4608_86] : memref<1x5120xf32, #tpu.memory_space<vmem>>, vector<1x512xf32>
    tpu.vector_store %arg6[%c0_85, %c4608_86], %277 {strides = array<i32>} : memref<1x5120xf32, #tpu.memory_space<vmem>>, vector<1x512xf32>,
    return
  }
  func.func @transform_0(%arg0: i32) -> (i32, i32) {
    %c0_i32 = arith.constant 0 : i32
    %c0_i32_0 = arith.constant 0 : i32
    return %c0_i32, %arg0 : i32, i32
  }
  func.func @transform_1(%arg0: i32) -> (i32, i32) {
    %c0_i32 = arith.constant 0 : i32
    %c0_i32_0 = arith.constant 0 : i32
    %c0_i32_1 = arith.constant 0 : i32
    return %c0_i32, %c0_i32_0 : i32, i32
  }
  func.func @transform_2(%arg0: i32) -> (i32, i32) {
    %c0_i32 = arith.constant 0 : i32
    %c0_i32_0 = arith.constant 0 : i32
    %c0_i32_1 = arith.constant 0 : i32
    return %c0_i32, %c0_i32_0 : i32, i32
  }
  func.func @transform_3(%arg0: i32) -> (i32, i32) {
    %c0_i32 = arith.constant 0 : i32
    %c0_i32_0 = arith.constant 0 : i32
    %c0_i32_1 = arith.constant 0 : i32
    return %c0_i32, %c0_i32_0 : i32, i32
  }
  func.func @transform_4(%arg0: i32) -> (i32, i32) {
    %c0_i32 = arith.constant 0 : i32
    %c0_i32_0 = arith.constant 0 : i32
    %c0_i32_1 = arith.constant 0 : i32
    return %c0_i32, %c0_i32_0 : i32, i32
  }
  func.func @transform_5(%arg0: i32) -> (i32, i32) {
    %c0_i32 = arith.constant 0 : i32
    %c0_i32_0 = arith.constant 0 : i32
    return %c0_i32, %arg0 : i32, i32
  }
}

</mosaic_0001>

<llo_original>
// kernel: param_function_forward.1
$region0: #{param_function_forward.1}
  #allocation0 [shape = 'u32[]', space=smem, size = 0x4, offset = 0x4, fixed_abs, tag = 'smem constant byte address 0x4 - core index']
  #allocation1 [shape = 'u32[144,128]{1,0:T(1,128)}', space=vmem, size = 0x12000, scoped, tag = 'internal scratch']
  %s0 = inlined_call_operand.hbm [shape: f32[1,10000], index: 0, kind: input, shape index: {}]
  %s1 = inlined_call_operand.vmem [shape: f32[16,16], index: 1, kind: input, shape index: {}]
  %s2 = inlined_call_operand.vmem [shape: f32[16,16], index: 2, kind: input, shape index: {}]
  %s3 = inlined_call_operand.vmem [shape: f32[1,16], index: 3, kind: input, shape index: {}]
  %s4 = inlined_call_operand.vmem [shape: f32[16,5], index: 4, kind: input, shape index: {}]
  %s5 = inlined_call_operand.hbm [shape: f32[1,10000], index: 5, kind: output, shape index: {}]
  %s6 = sld [smem:[#allocation0]]
  $region57: #{param_function_forward.1} parent=0
    _
  %s8 = ssub.s32 1, %s6
  %s9 = scalar_select 0, %s8, %s6
  $region1: #{param_function_forward.1} parent=0
    #allocation2 [shape = 'u8[40960]{0}', space=vmem, size = 0xa000, scoped, tag = 'input window, operand 0']
    #allocation3 [shape = 's32[2]{0}', space=sflag, size = 0x8, scoped, tag = 'scoped memory for param_function_forward.1']
    #allocation4 [shape = 's32[2]{0}', space=sflag, size = 0x8, scoped, tag = 'scoped memory for param_function_forward.1']
    #allocation5 [shape = 'u8[40960]{0}', space=vmem, size = 0xa000, scoped, tag = 'output window, operand 0']
    %10 = vsyncpa [#allocation3], 0
    %s11 = scalar_lea.sflag [#allocation3], 1
    %12 = vsyncpa %s11, 0
    %13 = vsyncpa [#allocation4], 0
    %s14 = scalar_lea.sflag [#allocation4], 1
    %15 = vsyncpa %s14, 0
    loop: start=0, step=1, limit=4
    $region2: #{param_function_forward.1} parent=1 // loop_pre_header
      _
    $region3: #{param_function_forward.1} parent=1 // loop_header
      %s17 = sphi 0, %s21
      %p18 = scmp.ge.s32.totalorder %s17, 4
      %s27 = sphi 0, %s29
      %s30 = sphi 0, %s27
      %s31 = sphi 0, %s30
      %s47 = sphi 0, %s31
      %s51 = sphi 0, %s51
      %s53 = sphi 0, %s51
      %s54 = sphi 0, %s53
      %s68 = sphi 0, %s54
      %s72 = sphi 0, %s72
      %s74 = sphi 0, %s72
      %s75 = sphi 0, %s74
      %s89 = sphi 0, %s75
      %s93 = sphi 0, %s93
      %s95 = sphi 0, %s93
      %s96 = sphi 0, %s95
      %s110 = sphi 0, %s96
      %s114 = sphi 0, %s114
      %s116 = sphi 0, %s114
      %s117 = sphi 0, %s116
      %s131 = sphi 0, %s117
      %s137 = sphi 0, %s139
      %s140 = sphi 0, %s137
      %s141 = sphi 0, %s140
      %s157 = sphi 0, %s141
    $region4: #{param_function_forward.1} parent=1 // loop_header_branch
      %20 = sbr.rel (%p18) target = $region8
    $region5: #{param_function_forward.1} parent=1 // loop_body
      %s22 = ssub.s32 %s17, 1
      %s23 = ssub.s32 %s17, 2
      %s24 = sadd.s32 %s17, 1
      %s25 = ssub.s32 %s17, %s24
      %p26 = scmp.eq.s32.totalorder %s25, 0
      %s28 = sadd.s32 %s27, 1
      %s29 = scalar_select %p26, %s27, %s28
      %p32 = pneg %p26
      %p33 = scmp.eq.s32.totalorder %s17, 1
      %p34 = por %p32, %p33
      %p35 = scmp.ne.s32.totalorder %s27, %s30
      %p36 = scmp.eq.s32.totalorder %s17, 0
      %p37 = por %p35, %p36
      %p38 = scmp.ne.s32.totalorder %s27, %s30
      %p39 = scmp.eq.s32.totalorder %s22, 1
      %p40 = por %p38, %p39
      %p41 = scmp.ne.s32.totalorder %s30, %s31
      %p42 = scmp.eq.s32.totalorder %s22, 0
      %p43 = por %p41, %p42
      %p44 = scmp.ne.s32.totalorder %s30, %s31
      %p45 = scmp.eq.s32.totalorder %s23, 1
      %p46 = por %p44, %p45
      %p48 = scmp.ne.s32.totalorder %s31, %s47
      %p49 = scmp.eq.s32.totalorder %s23, 0
      %p50 = por %p48, %p49
      %s52 = sadd.s32 %s51, 1
      %p55 = scmp.eq.s32.totalorder %s17, 1
      %p56 = scmp.ne.s32.totalorder %s51, %s53
      %p57 = scmp.eq.s32.totalorder %s17, 0
      %p58 = por %p56, %p57
      %p59 = scmp.ne.s32.totalorder %s51, %s53
      %p60 = scmp.eq.s32.totalorder %s22, 1
      %p61 = por %p59, %p60
      %p62 = scmp.ne.s32.totalorder %s53, %s54
      %p63 = scmp.eq.s32.totalorder %s22, 0
      %p64 = por %p62, %p63
      %p65 = scmp.ne.s32.totalorder %s53, %s54
      %p66 = scmp.eq.s32.totalorder %s23, 1
      %p67 = por %p65, %p66
      %p69 = scmp.ne.s32.totalorder %s54, %s68
      %p70 = scmp.eq.s32.totalorder %s23, 0
      %p71 = por %p69, %p70
      %s73 = sadd.s32 %s72, 1
      %p76 = scmp.eq.s32.totalorder %s17, 1
      %p77 = scmp.ne.s32.totalorder %s72, %s74
      %p78 = scmp.eq.s32.totalorder %s17, 0
      %p79 = por %p77, %p78
      %p80 = scmp.ne.s32.totalorder %s72, %s74
      %p81 = scmp.eq.s32.totalorder %s22, 1
      %p82 = por %p80, %p81
      %p83 = scmp.ne.s32.totalorder %s74, %s75
      %p84 = scmp.eq.s32.totalorder %s22, 0
      %p85 = por %p83, %p84
      %p86 = scmp.ne.s32.totalorder %s74, %s75
      %p87 = scmp.eq.s32.totalorder %s23, 1
      %p88 = por %p86, %p87
      %p90 = scmp.ne.s32.totalorder %s75, %s89
      %p91 = scmp.eq.s32.totalorder %s23, 0
      %p92 = por %p90, %p91
      %s94 = sadd.s32 %s93, 1
      %p97 = scmp.eq.s32.totalorder %s17, 1
      %p98 = scmp.ne.s32.totalorder %s93, %s95
      %p99 = scmp.eq.s32.totalorder %s17, 0
      %p100 = por %p98, %p99
      %p101 = scmp.ne.s32.totalorder %s93, %s95
      %p102 = scmp.eq.s32.totalorder %s22, 1
      %p103 = por %p101, %p102
      %p104 = scmp.ne.s32.totalorder %s95, %s96
      %p105 = scmp.eq.s32.totalorder %s22, 0
      %p106 = por %p104, %p105
      %p107 = scmp.ne.s32.totalorder %s95, %s96
      %p108 = scmp.eq.s32.totalorder %s23, 1
      %p109 = por %p107, %p108
      %p111 = scmp.ne.s32.totalorder %s96, %s110
      %p112 = scmp.eq.s32.totalorder %s23, 0
      %p113 = por %p111, %p112
      %s115 = sadd.s32 %s114, 1
      %p118 = scmp.eq.s32.totalorder %s17, 1
      %p119 = scmp.ne.s32.totalorder %s114, %s116
      %p120 = scmp.eq.s32.totalorder %s17, 0
      %p121 = por %p119, %p120
      %p122 = scmp.ne.s32.totalorder %s114, %s116
      %p123 = scmp.eq.s32.totalorder %s22, 1
      %p124 = por %p122, %p123
      %p125 = scmp.ne.s32.totalorder %s116, %s117
      %p126 = scmp.eq.s32.totalorder %s22, 0
      %p127 = por %p125, %p126
      %p128 = scmp.ne.s32.totalorder %s116, %s117
      %p129 = scmp.eq.s32.totalorder %s23, 1
      %p130 = por %p128, %p129
      %p132 = scmp.ne.s32.totalorder %s117, %s131
      %p133 = scmp.eq.s32.totalorder %s23, 0
      %p134 = por %p132, %p133
      %s135 = ssub.s32 %s17, %s24
      %p136 = scmp.eq.s32.totalorder %s135, 0
      %s138 = sadd.s32 %s137, 1
      %s139 = scalar_select %p136, %s137, %s138
      %p142 = pneg %p136
      %p143 = scmp.eq.s32.totalorder %s17, 1
      %p144 = por %p142, %p143
      %p145 = scmp.ne.s32.totalorder %s137, %s140
      %p146 = scmp.eq.s32.totalorder %s17, 0
      %p147 = por %p145, %p146
      %p148 = scmp.ne.s32.totalorder %s137, %s140
      %p149 = scmp.eq.s32.totalorder %s22, 1
      %p150 = por %p148, %p149
      %p151 = scmp.ne.s32.totalorder %s140, %s141
      %p152 = scmp.eq.s32.totalorder %s22, 0
      %p153 = por %p151, %p152
      %p154 = scmp.ne.s32.totalorder %s140, %s141
      %p155 = scmp.eq.s32.totalorder %s23, 1
      %p156 = por %p154, %p155
      %p158 = scmp.ne.s32.totalorder %s141, %s157
      %p159 = scmp.eq.s32.totalorder %s23, 0
      %p160 = por %p158, %p159
      %p161 = scmp.le.s32.totalorder 1, %s17
      %p162 = scmp.lt.s32.totalorder %s17, 3
      %p163 = pnand %p161, %p162
      %p164 = pneg %p163
      // Predicated region
      $region9: #{param_function_forward.1} parent=5 // pred_check
        _
      $region10: #{param_function_forward.1} parent=5 // pred_check_branch
        %166 = sbr.rel (%p163) target = $region12
      $region11: #{param_function_forward.1} parent=5 // pred_region
        %s167 = ssub.s32 %s17, 1
        // Predicated region
        $region13: #{param_function_forward.1} parent=11 // pred_check
          %p168 = pneg %p64
        $region14: #{param_function_forward.1} parent=11 // pred_check_branch
          %170 = sbr.rel (%p168) target = $region16
        $region15: #{param_function_forward.1} parent=11 // pred_region
          _
        $region16: #{param_function_forward.1} parent=11 // pred_fallthru
          _
        // Predicated region
        $region17: #{param_function_forward.1} parent=11 // pred_check
          %p171 = pneg %p85
        $region18: #{param_function_forward.1} parent=11 // pred_check_branch
          %173 = sbr.rel (%p171) target = $region20
        $region19: #{param_function_forward.1} parent=11 // pred_region
          _
        $region20: #{param_function_forward.1} parent=11 // pred_fallthru
          _
        // Predicated region
        $region21: #{param_function_forward.1} parent=11 // pred_check
          %p174 = pneg %p106
        $region22: #{param_function_forward.1} parent=11 // pred_check_branch
          %176 = sbr.rel (%p174) target = $region24
        $region23: #{param_function_forward.1} parent=11 // pred_region
          _
        $region24: #{param_function_forward.1} parent=11 // pred_fallthru
          _
        // Predicated region
        $region25: #{param_function_forward.1} parent=11 // pred_check
          %p177 = pneg %p127
        $region26: #{param_function_forward.1} parent=11 // pred_check_branch
          %179 = sbr.rel (%p177) target = $region28
        $region27: #{param_function_forward.1} parent=11 // pred_region
          _
        $region28: #{param_function_forward.1} parent=11 // pred_fallthru
          _
      $region12: #{param_function_forward.1} parent=5 // pred_fallthru
        _
      %p180 = scmp.lt.s32.totalorder %s17, 2
      // Predicated region
      $region29: #{param_function_forward.1} parent=5 // pred_check
        %p181 = pneg %p180
      $region30: #{param_function_forward.1} parent=5 // pred_check_branch
        %183 = sbr.rel (%p181) target = $region32
      $region31: #{param_function_forward.1} parent=5 // pred_region
        // Predicated region
        $region33: #{param_function_forward.1} parent=31 // pred_check
          %p184 = pneg %p37
        $region34: #{param_function_forward.1} parent=31 // pred_check_branch
          %186 = sbr.rel (%p184) target = $region36
        $region35: #{param_function_forward.1} parent=31 // pred_region
          %s187 = sand.u32 %s27, 1
          %s188 = scalar_lea.sflag [#allocation3], %s187
          %s189 = sand.u32 %s27, 1
          %s190 = smul.addr %s189, 40
          %s191 = scalar_lea.vmem [#allocation2], %s190
          %s192 = smul.u32 40, %s17
          %s193 = ssub.s32 79, %s192
          %p194 = scmp.lt.s32.totalorder %s193, 40
          %s195 = scalar_select %p194, %s193, 40
          %s196 = smul.u32 16, %s195
          %s198 = ssub.s32 640, %s196
          %199 = vsyncadd %s188, %s198
          %p200 = scmp.ne.s32.totalorder 0, %s196
          %s201 = smul.addr %s192, 16
          %s202 = scalar_lea.hbm %s0, %s201
          %s203 = sshll.u32 %s195, 4
          %s204 = sshll.u32 %s191, 4
          %s205 = int_to_ptr.vmem [resolvable:$true] %s204
          %207 = dma.hbm_to_vmem [thread:$0]  (%p200), %s202, %s203, %s205, %s188
        $region36: #{param_function_forward.1} parent=31 // pred_fallthru
          _
      $region32: #{param_function_forward.1} parent=5 // pred_fallthru
        _
      %p208 = scmp.le.s32.totalorder 1, %s17
      %p209 = scmp.lt.s32.totalorder %s17, 3
      %p210 = pnand %p208, %p209
      %p211 = pneg %p210
      // Predicated region
      $region37: #{param_function_forward.1} parent=5 // pred_check
        _
      $region38: #{param_function_forward.1} parent=5 // pred_check_branch
        %213 = sbr.rel (%p210) target = $region40
      $region39: #{param_function_forward.1} parent=5 // pred_region
        %s214 = ssub.s32 %s17, 1
        %s215 = sand.u32 %s30, 1
        %s216 = scalar_lea.sflag [#allocation3], %s215
        %s217 = sand.u32 %s30, 1
        %s218 = smul.addr %s217, 40
        %s219 = scalar_lea.vmem [#allocation2], %s218
        // Predicated region
        $region41: #{param_function_forward.1} parent=39 // pred_check
          %p220 = pneg %p43
        $region42: #{param_function_forward.1} parent=39 // pred_check_branch
          %222 = sbr.rel (%p220) target = $region44
        $region43: #{param_function_forward.1} parent=39 // pred_region
          %223 = dma.done %s216, 640
        $region44: #{param_function_forward.1} parent=39 // pred_fallthru
          _
        %s224 = sand.u32 %s30, 1
        %s225 = scalar_lea.sflag [#allocation3], %s224
        %s226 = sand.u32 %s30, 1
        %s227 = smul.addr %s226, 40
        %s228 = scalar_lea.vmem [#allocation2], %s227
        %p229 = pneg %p43
        %p230 = pneg %p40
        %p231 = pneg %p64
        %p232 = pneg %p61
        %p233 = pneg %p85
        %p234 = pneg %p82
        %p235 = pneg %p106
        %p236 = pneg %p103
        %p237 = pneg %p127
        %p238 = pneg %p124
        %p239 = pneg %p153
        %p240 = pneg %p150
        %s241 = sand.u32 %s140, 1
        %s242 = scalar_lea.sflag [#allocation4], %s241
        %s243 = sand.u32 %s140, 1
        %s244 = smul.addr %s243, 40
        %s245 = scalar_lea.vmem [#allocation5], %s244
        %s246 = smul.u32 40, %s22
        %s247 = ssub.s32 79, %s246
        %p248 = scmp.lt.s32.totalorder %s247, 40
        %s249 = scalar_select %p248, %s247, 40
        %s250 = smul.u32 16, %s249
        %s251 = smul.u32 40, %s22
        %s252 = ssub.s32 79, %s251
        %p253 = scmp.lt.s32.totalorder %s252, 40
        %s254 = scalar_select %p253, %s252, 40
        %s255 = smul.u32 16, %s254
        %v256 = vld [vmem:[%s1] sm:$0xff]
        %v257 = vld [vmem:[%s1 + $0x8] sm:$0xff]
        %v258 = vld [vmem:[%s2] sm:$0xff]
        %v259 = vld [vmem:[%s2 + $0x8] sm:$0xff]
        %v260 = vld [vmem:[%s3] sm:$0x1]
        %v261 = vld [vmem:[%s4] sm:$0xff]
        %v262 = vld [vmem:[%s4 + $0x8] sm:$0xff]
        %v263 = vld [vmem:[%s219] sm:$0xf]
        %265 = vset.pattern.permute.xlu0 0
        %266 = vperm.xlu0 %265, %v261
        %v267 = vpop.permute.xlu0 %266
        %270 = vset.pattern.permute.xlu0 0
        %271 = vperm.xlu0 %270, %v262
        %v272 = vpop.permute.xlu0 %271
        %v275 = vlaneseq
        %v276 = vshrl.u32 %v275, 7
        %v277 = vsub.s32 0, %v276
        %v278 = vrot.slane %v263, %v277
        %v279 = vlaneseq
        %v280 = vshrl.u32 %v279, 7
        %v281 = vsub.s32 1, %v280
        %v282 = vrot.slane %v263, %v281
        %v283 = vlaneseq
        %v284 = vshrl.u32 %v283, 7
        %v285 = vsub.s32 2, %v284
        %v286 = vrot.slane %v263, %v285
        %v287 = vlaneseq
        %v288 = vshrl.u32 %v287, 7
        %v289 = vsub.s32 3, %v288
        %v290 = vrot.slane %v263, %v289
        %v295 = vmul.f32 %v267, %v278
        %v296 = vmul.f32 %v267, %v282
        %v297 = vmul.f32 %v267, %v286
        %v298 = vmul.f32 %v267, %v290
        %v299 = vmul.f32 %v272, %v278
        %v300 = vmul.f32 %v272, %v282
        %v301 = vmul.f32 %v272, %v286
        %v302 = vmul.f32 %v272, %v290
        %303 = vset.pattern.permute.xlu0 1
        %304 = vperm.xlu0 %303, %v261
        %v305 = vpop.permute.xlu0 %304
        %307 = vset.pattern.permute.xlu0 1
        %308 = vperm.xlu0 %307, %v262
        %v309 = vpop.permute.xlu0 %308
        %v311 = vadd.f32 %v295, %v305
        %v312 = vadd.f32 %v296, %v305
        %v313 = vadd.f32 %v297, %v305
        %v314 = vadd.f32 %v298, %v305
        %v315 = vadd.f32 %v299, %v309
        %v316 = vadd.f32 %v300, %v309
        %v317 = vadd.f32 %v301, %v309
        %v318 = vadd.f32 %v302, %v309
        %v319 = vtanh.pop %v311
        %v320 = vtanh.pop %v312
        %v321 = vtanh.pop %v313
        %v322 = vtanh.pop %v314
        %v323 = vtanh.pop %v315
        %v324 = vtanh.pop %v316
        %v325 = vtanh.pop %v317
        %v326 = vtanh.pop %v318
        %327 = vset.pattern.permute.xlu0 2
        %328 = vperm.xlu0 %327, %v261
        %v329 = vpop.permute.xlu0 %328
        %331 = vset.pattern.permute.xlu0 2
        %332 = vperm.xlu0 %331, %v262
        %v333 = vpop.permute.xlu0 %332
        %vm335 = vcmask 130048
        %v337 = vsel %vm335, %v256, 0
        %v340 = vsel %vm335, %v257, 0
        %342 = vmatprep.subr.mxu0 %v320
        %343 = vmatpush1.msra.mxu0 %v319
        %344 = vmatprep.subr.mxu0 %v324
        %345 = vmatpush1.msra.mxu0 %v323
        %346 = vmatprep.subr.mxu0 0.0
        %347 = vmatpush1.msra.mxu0 0.0
        %348 = vmatprep.subr.mxu0 0.0
        %349 = vmatpush1.msra.mxu0 0.0
        %350 = vmatprep.subr.mxu0 0.0
        %351 = vmatpush1.msra.mxu0 0.0
        %352 = vmatprep.subr.mxu0 0.0
        %353 = vmatpush1.msra.mxu0 0.0
        %354 = vmatprep.subr.mxu0 0.0
        %355 = vmatpush1.msra.mxu0 0.0
        %356 = vmatprep.subr.mxu0 0.0
        %357 = vmatpush1.msra.mxu0 0.0
        %358 = vmatprep.subr.mxu0 0.0
        %359 = vmatpush1.msra.mxu0 0.0
        %360 = vmatprep.subr.mxu0 0.0
        %361 = vmatpush1.msra.mxu0 0.0
        %362 = vmatprep.subr.mxu0 0.0
        %363 = vmatpush1.msra.mxu0 0.0
        %364 = vmatprep.subr.mxu0 0.0
        %365 = vmatpush1.msra.mxu0 0.0
        %366 = vmatprep.subr.mxu0 0.0
        %367 = vmatpush1.msra.mxu0 0.0
        %368 = vmatprep.subr.mxu0 0.0
        %369 = vmatpush1.msra.mxu0 0.0
        %370 = vmatprep.subr.mxu0 0.0
        %371 = vmatpush1.msra.mxu0 0.0
        %372 = vmatprep.subr.mxu0 0.0
        %373 = vmatpush1.msra.mxu0 0.0
        %374 = vmatprep.subr.mxu0 0.0
        %375 = vmatpush1.msra.mxu0 0.0
        %376 = vmatprep.subr.mxu0 0.0
        %377 = vmatpush1.msra.mxu0 0.0
        %378 = vmatprep.subr.mxu0 0.0
        %379 = vmatpush1.msra.mxu0 0.0
        %380 = vmatprep.subr.mxu0 0.0
        %381 = vmatpush1.msra.mxu0 0.0
        %382 = vmatprep.subr.mxu0 0.0
        %383 = vmatpush1.msra.mxu0 0.0
        %384 = vmatprep.subr.mxu0 0.0
        %385 = vmatpush1.msra.mxu0 0.0
        %386 = vmatprep.subr.mxu0 0.0
        %387 = vmatpush1.msra.mxu0 0.0
        %388 = vmatprep.subr.mxu0 0.0
        %389 = vmatpush1.msra.mxu0 0.0
        %390 = vmatprep.subr.mxu0 0.0
        %391 = vmatpush1.msra.mxu0 0.0
        %392 = vmatprep.subr.mxu0 0.0
        %393 = vmatpush1.msra.mxu0 0.0
        %394 = vmatprep.subr.mxu0 0.0
        %395 = vmatpush1.msra.mxu0 0.0
        %396 = vmatprep.subr.mxu0 0.0
        %397 = vmatpush1.msra.mxu0 0.0
        %398 = vmatprep.subr.mxu0 0.0
        %399 = vmatpush1.msra.mxu0 0.0
        %400 = vmatprep.subr.mxu0 0.0
        %401 = vmatpush1.msra.mxu0 0.0
        %402 = vmatprep.subr.mxu0 0.0
        %403 = vmatpush1.msra.mxu0 0.0
        %404 = vmatprep.subr.mxu0 0.0
        %405 = vmatpush1.msra.mxu0 0.0
        %406 = vmatprep.mubr.f32.mxu0 0.0
        %407 = vmatmul.mubr.f32.gmra.mrb[0].mxu0 %v337
        %v408 = vpop.f32.mrb[0].mxu0
        %v409 = vadd.f32 %v329, %v408
        %v410 = vpop.f32.mrb[0].mxu0
        %v411 = vadd.f32 %v329, %v410
        %412 = vmatprep.mubr.f32.mxu0 0.0
        %413 = vmatmul.mubr.f32.gmra.mrb[0].mxu0 %v340
        %v414 = vpop.f32.mrb[0].mxu0
        %v415 = vadd.f32 %v333, %v414
        %v416 = vpop.f32.mrb[0].mxu0
        %v417 = vadd.f32 %v333, %v416
        %418 = vdwg.mxu0
        %419 = vmatprep.subr.mxu0 %v322
        %420 = vmatpush1.msra.mxu0 %v321
        %421 = vmatprep.subr.mxu0 %v326
        %422 = vmatpush1.msra.mxu0 %v325
        %423 = vmatprep.subr.mxu0 0.0
        %424 = vmatpush1.msra.mxu0 0.0
        %425 = vmatprep.subr.mxu0 0.0
        %426 = vmatpush1.msra.mxu0 0.0
        %427 = vmatprep.subr.mxu0 0.0
        %428 = vmatpush1.msra.mxu0 0.0
        %429 = vmatprep.subr.mxu0 0.0
        %430 = vmatpush1.msra.mxu0 0.0
        %431 = vmatprep.subr.mxu0 0.0
        %432 = vmatpush1.msra.mxu0 0.0
        %433 = vmatprep.subr.mxu0 0.0
        %434 = vmatpush1.msra.mxu0 0.0
        %435 = vmatprep.subr.mxu0 0.0
        %436 = vmatpush1.msra.mxu0 0.0
        %437 = vmatprep.subr.mxu0 0.0
        %438 = vmatpush1.msra.mxu0 0.0
        %439 = vmatprep.subr.mxu0 0.0
        %440 = vmatpush1.msra.mxu0 0.0
        %441 = vmatprep.subr.mxu0 0.0
        %442 = vmatpush1.msra.mxu0 0.0
        %443 = vmatprep.subr.mxu0 0.0
        %444 = vmatpush1.msra.mxu0 0.0
        %445 = vmatprep.subr.mxu0 0.0
        %446 = vmatpush1.msra.mxu0 0.0
        %447 = vmatprep.subr.mxu0 0.0
        %448 = vmatpush1.msra.mxu0 0.0
        %449 = vmatprep.subr.mxu0 0.0
        %450 = vmatpush1.msra.mxu0 0.0
        %451 = vmatprep.subr.mxu0 0.0
        %452 = vmatpush1.msra.mxu0 0.0
        %453 = vmatprep.subr.mxu0 0.0
        %454 = vmatpush1.msra.mxu0 0.0
        %455 = vmatprep.subr.mxu0 0.0
        %456 = vmatpush1.msra.mxu0 0.0
        %457 = vmatprep.subr.mxu0 0.0
        %458 = vmatpush1.msra.mxu0 0.0
        %459 = vmatprep.subr.mxu0 0.0
        %460 = vmatpush1.msra.mxu0 0.0
        %461 = vmatprep.subr.mxu0 0.0
        %462 = vmatpush1.msra.mxu0 0.0
        %463 = vmatprep.subr.mxu0 0.0
        %464 = vmatpush1.msra.mxu0 0.0
        %465 = vmatprep.subr.mxu0 0.0
        %466 = vmatpush1.msra.mxu0 0.0
        %467 = vmatprep.subr.mxu0 0.0
        %468 = vmatpush1.msra.mxu0 0.0
        %469 = vmatprep.subr.mxu0 0.0
        %470 = vmatpush1.msra.mxu0 0.0
        %471 = vmatprep.subr.mxu0 0.0
        %472 = vmatpush1.msra.mxu0 0.0
        %473 = vmatprep.subr.mxu0 0.0
        %474 = vmatpush1.msra.mxu0 0.0
        %475 = vmatprep.subr.mxu0 0.0
        %476 = vmatpush1.msra.mxu0 0.0
        %477 = vmatprep.subr.mxu0 0.0
        %478 = vmatpush1.msra.mxu0 0.0
        %479 = vmatprep.subr.mxu0 0.0
        %480 = vmatpush1.msra.mxu0 0.0
        %481 = vmatprep.subr.mxu0 0.0
        %482 = vmatpush1.msra.mxu0 0.0
        %483 = vmatprep.mubr.f32.mxu0 0.0
        %484 = vmatmul.mubr.f32.gmra.mrb[0].mxu0 %v337
        %v485 = vpop.f32.mrb[0].mxu0
        %v486 = vadd.f32 %v329, %v485
        %v487 = vpop.f32.mrb[0].mxu0
        %v488 = vadd.f32 %v329, %v487
        %489 = vmatprep.mubr.f32.mxu0 0.0
        %490 = vmatmul.mubr.f32.gmra.mrb[0].mxu0 %v340
        %v491 = vpop.f32.mrb[0].mxu0
        %v492 = vadd.f32 %v333, %v491
        %v493 = vpop.f32.mrb[0].mxu0
        %v494 = vadd.f32 %v333, %v493
        %495 = vdwg.mxu0
        %v496 = vtanh.pop %v409
        %v497 = vtanh.pop %v411
        %v498 = vtanh.pop %v486
        %v499 = vtanh.pop %v488
        %v500 = vtanh.pop %v415
        %v501 = vtanh.pop %v417
        %v502 = vtanh.pop %v492
        %v503 = vtanh.pop %v494
        %504 = vset.pattern.permute.xlu0 3
        %505 = vperm.xlu0 %504, %v261
        %v506 = vpop.permute.xlu0 %505
        %508 = vset.pattern.permute.xlu0 3
        %509 = vperm.xlu0 %508, %v262
        %v510 = vpop.permute.xlu0 %509
        %v513 = vsel %vm335, %v258, 0
        %v516 = vsel %vm335, %v259, 0
        %518 = vmatprep.subr.mxu0 %v497
        %519 = vmatpush1.msra.mxu0 %v496
        %520 = vmatprep.subr.mxu0 %v501
        %521 = vmatpush1.msra.mxu0 %v500
        %522 = vmatprep.subr.mxu0 0.0
        %523 = vmatpush1.msra.mxu0 0.0
        %524 = vmatprep.subr.mxu0 0.0
        %525 = vmatpush1.msra.mxu0 0.0
        %526 = vmatprep.subr.mxu0 0.0
        %527 = vmatpush1.msra.mxu0 0.0
        %528 = vmatprep.subr.mxu0 0.0
        %529 = vmatpush1.msra.mxu0 0.0
        %530 = vmatprep.subr.mxu0 0.0
        %531 = vmatpush1.msra.mxu0 0.0
        %532 = vmatprep.subr.mxu0 0.0
        %533 = vmatpush1.msra.mxu0 0.0
        %534 = vmatprep.subr.mxu0 0.0
        %535 = vmatpush1.msra.mxu0 0.0
        %536 = vmatprep.subr.mxu0 0.0
        %537 = vmatpush1.msra.mxu0 0.0
        %538 = vmatprep.subr.mxu0 0.0
        %539 = vmatpush1.msra.mxu0 0.0
        %540 = vmatprep.subr.mxu0 0.0
        %541 = vmatpush1.msra.mxu0 0.0
        %542 = vmatprep.subr.mxu0 0.0
        %543 = vmatpush1.msra.mxu0 0.0
        %544 = vmatprep.subr.mxu0 0.0
        %545 = vmatpush1.msra.mxu0 0.0
        %546 = vmatprep.subr.mxu0 0.0
        %547 = vmatpush1.msra.mxu0 0.0
        %548 = vmatprep.subr.mxu0 0.0
        %549 = vmatpush1.msra.mxu0 0.0
        %550 = vmatprep.subr.mxu0 0.0
        %551 = vmatpush1.msra.mxu0 0.0
        %552 = vmatprep.subr.mxu0 0.0
        %553 = vmatpush1.msra.mxu0 0.0
        %554 = vmatprep.subr.mxu0 0.0
        %555 = vmatpush1.msra.mxu0 0.0
        %556 = vmatprep.subr.mxu0 0.0
        %557 = vmatpush1.msra.mxu0 0.0
        %558 = vmatprep.subr.mxu0 0.0
        %559 = vmatpush1.msra.mxu0 0.0
        %560 = vmatprep.subr.mxu0 0.0
        %561 = vmatpush1.msra.mxu0 0.0
        %562 = vmatprep.subr.mxu0 0.0
        %563 = vmatpush1.msra.mxu0 0.0
        %564 = vmatprep.subr.mxu0 0.0
        %565 = vmatpush1.msra.mxu0 0.0
        %566 = vmatprep.subr.mxu0 0.0
        %567 = vmatpush1.msra.mxu0 0.0
        %568 = vmatprep.subr.mxu0 0.0
        %569 = vmatpush1.msra.mxu0 0.0
        %570 = vmatprep.subr.mxu0 0.0
        %571 = vmatpush1.msra.mxu0 0.0
        %572 = vmatprep.subr.mxu0 0.0
        %573 = vmatpush1.msra.mxu0 0.0
        %574 = vmatprep.subr.mxu0 0.0
        %575 = vmatpush1.msra.mxu0 0.0
        %576 = vmatprep.subr.mxu0 0.0
        %577 = vmatpush1.msra.mxu0 0.0
        %578 = vmatprep.subr.mxu0 0.0
        %579 = vmatpush1.msra.mxu0 0.0
        %580 = vmatprep.subr.mxu0 0.0
        %581 = vmatpush1.msra.mxu0 0.0
        %582 = vmatprep.mubr.f32.mxu0 0.0
        %583 = vmatmul.mubr.f32.gmra.mrb[0].mxu0 %v513
        %v584 = vpop.f32.mrb[0].mxu0
        %v585 = vadd.f32 %v506, %v584
        %v586 = vpop.f32.mrb[0].mxu0
        %v587 = vadd.f32 %v506, %v586
        %588 = vmatprep.mubr.f32.mxu0 0.0
        %589 = vmatmul.mubr.f32.gmra.mrb[0].mxu0 %v516
        %v590 = vpop.f32.mrb[0].mxu0
        %v591 = vadd.f32 %v510, %v590
        %v592 = vpop.f32.mrb[0].mxu0
        %v593 = vadd.f32 %v510, %v592
        %594 = vdwg.mxu0
        %595 = vmatprep.subr.mxu0 %v499
        %596 = vmatpush1.msra.mxu0 %v498
        %597 = vmatprep.subr.mxu0 %v503
        %598 = vmatpush1.msra.mxu0 %v502
        %599 = vmatprep.subr.mxu0 0.0
        %600 = vmatpush1.msra.mxu0 0.0
        %601 = vmatprep.subr.mxu0 0.0
        %602 = vmatpush1.msra.mxu0 0.0
        %603 = vmatprep.subr.mxu0 0.0
        %604 = vmatpush1.msra.mxu0 0.0
        %605 = vmatprep.subr.mxu0 0.0
        %606 = vmatpush1.msra.mxu0 0.0
        %607 = vmatprep.subr.mxu0 0.0
        %608 = vmatpush1.msra.mxu0 0.0
        %609 = vmatprep.subr.mxu0 0.0
        %610 = vmatpush1.msra.mxu0 0.0
        %611 = vmatprep.subr.mxu0 0.0
        %612 = vmatpush1.msra.mxu0 0.0
        %613 = vmatprep.subr.mxu0 0.0
        %614 = vmatpush1.msra.mxu0 0.0
        %615 = vmatprep.subr.mxu0 0.0
        %616 = vmatpush1.msra.mxu0 0.0
        %617 = vmatprep.subr.mxu0 0.0
        %618 = vmatpush1.msra.mxu0 0.0
        %619 = vmatprep.subr.mxu0 0.0
        %620 = vmatpush1.msra.mxu0 0.0
        %621 = vmatprep.subr.mxu0 0.0
        %622 = vmatpush1.msra.mxu0 0.0
        %623 = vmatprep.subr.mxu0 0.0
        %624 = vmatpush1.msra.mxu0 0.0
        %625 = vmatprep.subr.mxu0 0.0
        %626 = vmatpush1.msra.mxu0 0.0
        %627 = vmatprep.subr.mxu0 0.0
        %628 = vmatpush1.msra.mxu0 0.0
        %629 = vmatprep.subr.mxu0 0.0
        %630 = vmatpush1.msra.mxu0 0.0
        %631 = vmatprep.subr.mxu0 0.0
        %632 = vmatpush1.msra.mxu0 0.0
        %633 = vmatprep.subr.mxu0 0.0
        %634 = vmatpush1.msra.mxu0 0.0
        %635 = vmatprep.subr.mxu0 0.0
        %636 = vmatpush1.msra.mxu0 0.0
        %637 = vmatprep.subr.mxu0 0.0
        %638 = vmatpush1.msra.mxu0 0.0
        %639 = vmatprep.subr.mxu0 0.0
        %640 = vmatpush1.msra.mxu0 0.0
        %641 = vmatprep.subr.mxu0 0.0
        %642 = vmatpush1.msra.mxu0 0.0
        %643 = vmatprep.subr.mxu0 0.0
        %644 = vmatpush1.msra.mxu0 0.0
        %645 = vmatprep.subr.mxu0 0.0
        %646 = vmatpush1.msra.mxu0 0.0
        %647 = vmatprep.subr.mxu0 0.0
        %648 = vmatpush1.msra.mxu0 0.0
        %649 = vmatprep.subr.mxu0 0.0
        %650 = vmatpush1.msra.mxu0 0.0
        %651 = vmatprep.subr.mxu0 0.0
        %652 = vmatpush1.msra.mxu0 0.0
        %653 = vmatprep.subr.mxu0 0.0
        %654 = vmatpush1.msra.mxu0 0.0
        %655 = vmatprep.subr.mxu0 0.0
        %656 = vmatpush1.msra.mxu0 0.0
        %657 = vmatprep.subr.mxu0 0.0
        %658 = vmatpush1.msra.mxu0 0.0
        %659 = vmatprep.mubr.f32.mxu0 0.0
        %660 = vmatmul.mubr.f32.gmra.mrb[0].mxu0 %v513
        %v661 = vpop.f32.mrb[0].mxu0
        %v662 = vadd.f32 %v506, %v661
        %v663 = vpop.f32.mrb[0].mxu0
        %v664 = vadd.f32 %v506, %v663
        %665 = vmatprep.mubr.f32.mxu0 0.0
        %666 = vmatmul.mubr.f32.gmra.mrb[0].mxu0 %v516
        %v667 = vpop.f32.mrb[0].mxu0
        %v668 = vadd.f32 %v510, %v667
        %v669 = vpop.f32.mrb[0].mxu0
        %v670 = vadd.f32 %v510, %v669
        %671 = vdwg.mxu0
        %v672 = vtanh.pop %v585
        %v673 = vtanh.pop %v587
        %v674 = vtanh.pop %v662
        %v675 = vtanh.pop %v664
        %v676 = vtanh.pop %v591
        %v677 = vtanh.pop %v593
        %v678 = vtanh.pop %v668
        %v679 = vtanh.pop %v670
        %680 = vset.pattern.permute.xlu0 4
        %681 = vperm.xlu0 %680, %v261
        %v682 = vpop.permute.xlu0 %681
        %v685 = vsel %vm335, %v260, 0
        %687 = vmatprep.subr.mxu0 %v673
        %688 = vmatpush1.msra.mxu0 %v672
        %689 = vmatprep.subr.mxu0 %v677
        %690 = vmatpush1.msra.mxu0 %v676
        %691 = vmatprep.subr.mxu0 0.0
        %692 = vmatpush1.msra.mxu0 0.0
        %693 = vmatprep.subr.mxu0 0.0
        %694 = vmatpush1.msra.mxu0 0.0
        %695 = vmatprep.subr.mxu0 0.0
        %696 = vmatpush1.msra.mxu0 0.0
        %697 = vmatprep.subr.mxu0 0.0
        %698 = vmatpush1.msra.mxu0 0.0
        %699 = vmatprep.subr.mxu0 0.0
        %700 = vmatpush1.msra.mxu0 0.0
        %701 = vmatprep.subr.mxu0 0.0
        %702 = vmatpush1.msra.mxu0 0.0
        %703 = vmatprep.subr.mxu0 0.0
        %704 = vmatpush1.msra.mxu0 0.0
        %705 = vmatprep.subr.mxu0 0.0
        %706 = vmatpush1.msra.mxu0 0.0
        %707 = vmatprep.subr.mxu0 0.0
        %708 = vmatpush1.msra.mxu0 0.0
        %709 = vmatprep.subr.mxu0 0.0
        %710 = vmatpush1.msra.mxu0 0.0
        %711 = vmatprep.subr.mxu0 0.0
        %712 = vmatpush1.msra.mxu0 0.0
        %713 = vmatprep.subr.mxu0 0.0
        %714 = vmatpush1.msra.mxu0 0.0
        %715 = vmatprep.subr.mxu0 0.0
        %716 = vmatpush1.msra.mxu0 0.0
        %717 = vmatprep.subr.mxu0 0.0
        %718 = vmatpush1.msra.mxu0 0.0
        %719 = vmatprep.subr.mxu0 0.0
        %720 = vmatpush1.msra.mxu0 0.0
        %721 = vmatprep.subr.mxu0 0.0
        %722 = vmatpush1.msra.mxu0 0.0
        %723 = vmatprep.subr.mxu0 0.0
        %724 = vmatpush1.msra.mxu0 0.0
        %725 = vmatprep.subr.mxu0 0.0
        %726 = vmatpush1.msra.mxu0 0.0
        %727 = vmatprep.subr.mxu0 0.0
        %728 = vmatpush1.msra.mxu0 0.0
        %729 = vmatprep.subr.mxu0 0.0
        %730 = vmatpush1.msra.mxu0 0.0
        %731 = vmatprep.subr.mxu0 0.0
        %732 = vmatpush1.msra.mxu0 0.0
        %733 = vmatprep.subr.mxu0 0.0
        %734 = vmatpush1.msra.mxu0 0.0
        %735 = vmatprep.subr.mxu0 0.0
        %736 = vmatpush1.msra.mxu0 0.0
        %737 = vmatprep.subr.mxu0 0.0
        %738 = vmatpush1.msra.mxu0 0.0
        %739 = vmatprep.subr.mxu0 0.0
        %740 = vmatpush1.msra.mxu0 0.0
        %741 = vmatprep.subr.mxu0 0.0
        %742 = vmatpush1.msra.mxu0 0.0
        %743 = vmatprep.subr.mxu0 0.0
        %744 = vmatpush1.msra.mxu0 0.0
        %745 = vmatprep.subr.mxu0 0.0
        %746 = vmatpush1.msra.mxu0 0.0
        %747 = vmatprep.subr.mxu0 0.0
        %748 = vmatpush1.msra.mxu0 0.0
        %749 = vmatprep.subr.mxu0 0.0
        %750 = vmatpush1.msra.mxu0 0.0
        %751 = vmatprep.mubr.f32.mxu0 0.0
        %752 = vmatmul.mubr.f32.gmra.mrb[0].mxu0 %v685
        %v753 = vpop.f32.mrb[0].mxu0
        %v754 = vadd.f32 %v682, %v753
        %v755 = vpop.f32.mrb[0].mxu0
        %v756 = vadd.f32 %v682, %v755
        %757 = vdwg.mxu0
        %758 = vmatprep.subr.mxu0 %v675
        %759 = vmatpush1.msra.mxu0 %v674
        %760 = vmatprep.subr.mxu0 %v679
        %761 = vmatpush1.msra.mxu0 %v678
        %762 = vmatprep.subr.mxu0 0.0
        %763 = vmatpush1.msra.mxu0 0.0
        %764 = vmatprep.subr.mxu0 0.0
        %765 = vmatpush1.msra.mxu0 0.0
        %766 = vmatprep.subr.mxu0 0.0
        %767 = vmatpush1.msra.mxu0 0.0
        %768 = vmatprep.subr.mxu0 0.0
        %769 = vmatpush1.msra.mxu0 0.0
        %770 = vmatprep.subr.mxu0 0.0
        %771 = vmatpush1.msra.mxu0 0.0
        %772 = vmatprep.subr.mxu0 0.0
        %773 = vmatpush1.msra.mxu0 0.0
        %774 = vmatprep.subr.mxu0 0.0
        %775 = vmatpush1.msra.mxu0 0.0
        %776 = vmatprep.subr.mxu0 0.0
        %777 = vmatpush1.msra.mxu0 0.0
        %778 = vmatprep.subr.mxu0 0.0
        %779 = vmatpush1.msra.mxu0 0.0
        %780 = vmatprep.subr.mxu0 0.0
        %781 = vmatpush1.msra.mxu0 0.0
        %782 = vmatprep.subr.mxu0 0.0
        %783 = vmatpush1.msra.mxu0 0.0
        %784 = vmatprep.subr.mxu0 0.0
        %785 = vmatpush1.msra.mxu0 0.0
        %786 = vmatprep.subr.mxu0 0.0
        %787 = vmatpush1.msra.mxu0 0.0
        %788 = vmatprep.subr.mxu0 0.0
        %789 = vmatpush1.msra.mxu0 0.0
        %790 = vmatprep.subr.mxu0 0.0
        %791 = vmatpush1.msra.mxu0 0.0
        %792 = vmatprep.subr.mxu0 0.0
        %793 = vmatpush1.msra.mxu0 0.0
        %794 = vmatprep.subr.mxu0 0.0
        %795 = vmatpush1.msra.mxu0 0.0
        %796 = vmatprep.subr.mxu0 0.0
        %797 = vmatpush1.msra.mxu0 0.0
        %798 = vmatprep.subr.mxu0 0.0
        %799 = vmatpush1.msra.mxu0 0.0
        %800 = vmatprep.subr.mxu0 0.0
        %801 = vmatpush1.msra.mxu0 0.0
        %802 = vmatprep.subr.mxu0 0.0
        %803 = vmatpush1.msra.mxu0 0.0
        %804 = vmatprep.subr.mxu0 0.0
        %805 = vmatpush1.msra.mxu0 0.0
        %806 = vmatprep.subr.mxu0 0.0
        %807 = vmatpush1.msra.mxu0 0.0
        %808 = vmatprep.subr.mxu0 0.0
        %809 = vmatpush1.msra.mxu0 0.0
        %810 = vmatprep.subr.mxu0 0.0
        %811 = vmatpush1.msra.mxu0 0.0
        %812 = vmatprep.subr.mxu0 0.0
        %813 = vmatpush1.msra.mxu0 0.0
        %814 = vmatprep.subr.mxu0 0.0
        %815 = vmatpush1.msra.mxu0 0.0
        %816 = vmatprep.subr.mxu0 0.0
        %817 = vmatpush1.msra.mxu0 0.0
        %818 = vmatprep.subr.mxu0 0.0
        %819 = vmatpush1.msra.mxu0 0.0
        %820 = vmatprep.subr.mxu0 0.0
        %821 = vmatpush1.msra.mxu0 0.0
        %822 = vmatprep.mubr.f32.mxu0 0.0
        %823 = vmatmul.mubr.f32.gmra.mrb[0].mxu0 %v685
        %v824 = vpop.f32.mrb[0].mxu0
        %v825 = vadd.f32 %v682, %v824
        %v826 = vpop.f32.mrb[0].mxu0
        %v827 = vadd.f32 %v682, %v826
        %828 = vdwg.mxu0
        %v829 = vmax.f32 %v754, 0.0
        %v830 = vmax.f32 %v756, 0.0
        %v831 = vmax.f32 %v825, 0.0
        %v832 = vmax.f32 %v827, 0.0
        %v833 = vand.u32 2147483647, %v754
        %v834 = vand.u32 2147483647, %v756
        %v835 = vand.u32 2147483647, %v825
        %v836 = vand.u32 2147483647, %v827
        %v837 = vsub.f32 0.0, %v833
        %v838 = vsub.f32 0.0, %v834
        %v839 = vsub.f32 0.0, %v835
        %v840 = vsub.f32 0.0, %v836
        %v841 = vmul.f32 %v837, 1.442695
        %v842 = vpow.pop %v841
        %v843 = vmul.f32 %v838, 1.442695
        %v844 = vpow.pop %v843
        %v845 = vmul.f32 %v839, 1.442695
        %v846 = vpow.pop %v845
        %v847 = vmul.f32 %v840, 1.442695
        %v848 = vpow.pop %v847
        %v849 = vadd.f32 %v842, 1.0
        %v850 = vlog2.pop %v849
        %v851 = vmul.f32 %v850, 0.6931472
        %v852 = vmul.f32 -0.5, %v842
        %v853 = vadd.f32 %v852, 1.0
        %v854 = vmul.f32 %v853, %v842
        %v855 = vand.u32 2147483647, %v842
        %vm856 = vcmp.lt.f32.partialorder %v855, 0.0004427343
        %v857 = vsel %vm856, %v854, %v851
        %v858 = vadd.f32 %v844, 1.0
        %v859 = vlog2.pop %v858
        %v860 = vmul.f32 %v859, 0.6931472
        %v861 = vmul.f32 -0.5, %v844
        %v862 = vadd.f32 %v861, 1.0
        %v863 = vmul.f32 %v862, %v844
        %v864 = vand.u32 2147483647, %v844
        %vm865 = vcmp.lt.f32.partialorder %v864, 0.0004427343
        %v866 = vsel %vm865, %v863, %v860
        %v867 = vadd.f32 %v846, 1.0
        %v868 = vlog2.pop %v867
        %v869 = vmul.f32 %v868, 0.6931472
        %v870 = vmul.f32 -0.5, %v846
        %v871 = vadd.f32 %v870, 1.0
        %v872 = vmul.f32 %v871, %v846
        %v873 = vand.u32 2147483647, %v846
        %vm874 = vcmp.lt.f32.partialorder %v873, 0.0004427343
        %v875 = vsel %vm874, %v872, %v869
        %v876 = vadd.f32 %v848, 1.0
        %v877 = vlog2.pop %v876
        %v878 = vmul.f32 %v877, 0.6931472
        %v879 = vmul.f32 -0.5, %v848
        %v880 = vadd.f32 %v879, 1.0
        %v881 = vmul.f32 %v880, %v848
        %v882 = vand.u32 2147483647, %v848
        %vm883 = vcmp.lt.f32.partialorder %v882, 0.0004427343
        %v884 = vsel %vm883, %v881, %v878
        %v885 = vadd.f32 %v829, %v857
        %v886 = vadd.f32 %v830, %v866
        %v887 = vadd.f32 %v831, %v875
        %v888 = vadd.f32 %v832, %v884
        %v893 = vcombine.low %v885, %v886
        %v894 = vcombine.low %v887, %v888
        %v896 = vunpack.c.l.s4 1966171168
        %v897 = vunpack.c.0.s8 %v896
        %v898 = vlaneseq
        %v899 = vshrl.u32 %v898, 7
        %v900 = vsub.s32 %v897, %v899
        %v901 = vrot.slane %v893, %v900
        %v903 = vunpack.c.l.s4 1966171168
        %v904 = vunpack.c.0.s8 %v903
        %v905 = vlaneseq
        %v906 = vshrl.u32 %v905, 7
        %v907 = vsub.s32 %v904, %v906
        %v908 = vrot.slane %v894, %v907
        %v909 = vcombine.low %v901, %v908
        %v911 = vunpack.c.l.s4 1966171168
        %v912 = vunpack.c.0.s8 %v911
        %v913 = vlaneseq
        %v914 = vshrl.u32 %v913, 7
        %v915 = vsub.s32 %v912, %v914
        %v916 = vrot.slane %v909, %v915
        %v918 = vlaneseq
        %vm919 = vcmp.ge.s32.totalorder %v918, 0
        %vm920 = vcmp.lt.s32.totalorder %v918, 512
        %vm921 = vmand %vm919, %vm920
        %922 = vst.msk [vmem:[%s245] sm:$0xf] %vm921, %v916
        %v923 = vld [vmem:[%s219 + $0x4] sm:$0xf]
        %v925 = vlaneseq
        %v926 = vshrl.u32 %v925, 7
        %v927 = vsub.s32 0, %v926
        %v928 = vrot.slane %v923, %v927
        %v929 = vlaneseq
        %v930 = vshrl.u32 %v929, 7
        %v931 = vsub.s32 1, %v930
        %v932 = vrot.slane %v923, %v931
        %v933 = vlaneseq
        %v934 = vshrl.u32 %v933, 7
        %v935 = vsub.s32 2, %v934
        %v936 = vrot.slane %v923, %v935
        %v937 = vlaneseq
        %v938 = vshrl.u32 %v937, 7
        %v939 = vsub.s32 3, %v938
        %v940 = vrot.slane %v923, %v939
        %v945 = vmul.f32 %v267, %v928
        %v946 = vmul.f32 %v267, %v932
        %v947 = vmul.f32 %v267, %v936
        %v948 = vmul.f32 %v267, %v940
        %v949 = vmul.f32 %v272, %v928
        %v950 = vmul.f32 %v272, %v932
        %v951 = vmul.f32 %v272, %v936
        %v952 = vmul.f32 %v272, %v940
        %v953 = vadd.f32 %v945, %v305
        %v954 = vadd.f32 %v946, %v305
        %v955 = vadd.f32 %v947, %v305
        %v956 = vadd.f32 %v948, %v305
        %v957 = vadd.f32 %v949, %v309
        %v958 = vadd.f32 %v950, %v309
        %v959 = vadd.f32 %v951, %v309
        %v960 = vadd.f32 %v952, %v309
        %v961 = vtanh.pop %v953
        %v962 = vtanh.pop %v954
        %v963 = vtanh.pop %v955
        %v964 = vtanh.pop %v956
        %v965 = vtanh.pop %v957
        %v966 = vtanh.pop %v958
        %v967 = vtanh.pop %v959
        %v968 = vtanh.pop %v960
        %969 = vmatprep.subr.mxu0 %v962
        %970 = vmatpush1.msra.mxu0 %v961
        %971 = vmatprep.subr.mxu0 %v966
        %972 = vmatpush1.msra.mxu0 %v965
        %973 = vmatprep.subr.mxu0 0.0
        %974 = vmatpush1.msra.mxu0 0.0
        %975 = vmatprep.subr.mxu0 0.0
        %976 = vmatpush1.msra.mxu0 0.0
        %977 = vmatprep.subr.mxu0 0.0
        %978 = vmatpush1.msra.mxu0 0.0
        %979 = vmatprep.subr.mxu0 0.0
        %980 = vmatpush1.msra.mxu0 0.0
        %981 = vmatprep.subr.mxu0 0.0
        %982 = vmatpush1.msra.mxu0 0.0
        %983 = vmatprep.subr.mxu0 0.0
        %984 = vmatpush1.msra.mxu0 0.0
        %985 = vmatprep.subr.mxu0 0.0
        %986 = vmatpush1.msra.mxu0 0.0
        %987 = vmatprep.subr.mxu0 0.0
        %988 = vmatpush1.msra.mxu0 0.0
        %989 = vmatprep.subr.mxu0 0.0
        %990 = vmatpush1.msra.mxu0 0.0
        %991 = vmatprep.subr.mxu0 0.0
        %992 = vmatpush1.msra.mxu0 0.0
        %993 = vmatprep.subr.mxu0 0.0
        %994 = vmatpush1.msra.mxu0 0.0
        %995 = vmatprep.subr.mxu0 0.0
        %996 = vmatpush1.msra.mxu0 0.0
        %997 = vmatprep.subr.mxu0 0.0
        %998 = vmatpush1.msra.mxu0 0.0
        %999 = vmatprep.subr.mxu0 0.0
        %1000 = vmatpush1.msra.mxu0 0.0
        %1001 = vmatprep.subr.mxu0 0.0
        %1002 = vmatpush1.msra.mxu0 0.0
        %1003 = vmatprep.subr.mxu0 0.0
        %1004 = vmatpush1.msra.mxu0 0.0
        %1005 = vmatprep.subr.mxu0 0.0
        %1006 = vmatpush1.msra.mxu0 0.0
        %1007 = vmatprep.subr.mxu0 0.0
        %1008 = vmatpush1.msra.mxu0 0.0
        %1009 = vmatprep.subr.mxu0 0.0
        %1010 = vmatpush1.msra.mxu0 0.0
        %1011 = vmatprep.subr.mxu0 0.0
        %1012 = vmatpush1.msra.mxu0 0.0
        %1013 = vmatprep.subr.mxu0 0.0
        %1014 = vmatpush1.msra.mxu0 0.0
        %1015 = vmatprep.subr.mxu0 0.0
        %1016 = vmatpush1.msra.mxu0 0.0
        %1017 = vmatprep.subr.mxu0 0.0
        %1018 = vmatpush1.msra.mxu0 0.0
        %1019 = vmatprep.subr.mxu0 0.0
        %1020 = vmatpush1.msra.mxu0 0.0
        %1021 = vmatprep.subr.mxu0 0.0
        %1022 = vmatpush1.msra.mxu0 0.0
        %1023 = vmatprep.subr.mxu0 0.0
        %1024 = vmatpush1.msra.mxu0 0.0
        %1025 = vmatprep.subr.mxu0 0.0
        %1026 = vmatpush1.msra.mxu0 0.0
        %1027 = vmatprep.subr.mxu0 0.0
        %1028 = vmatpush1.msra.mxu0 0.0
        %1029 = vmatprep.subr.mxu0 0.0
        %1030 = vmatpush1.msra.mxu0 0.0
        %1031 = vmatprep.subr.mxu0 0.0
        %1032 = vmatpush1.msra.mxu0 0.0
        %1033 = vmatprep.mubr.f32.mxu0 0.0
        %1034 = vmatmul.mubr.f32.gmra.mrb[0].mxu0 %v337
        %v1035 = vpop.f32.mrb[0].mxu0
        %v1036 = vadd.f32 %v329, %v1035
        %v1037 = vpop.f32.mrb[0].mxu0
        %v1038 = vadd.f32 %v329, %v1037
        %1039 = vmatprep.mubr.f32.mxu0 0.0
        %1040 = vmatmul.mubr.f32.gmra.mrb[0].mxu0 %v340
        %v1041 = vpop.f32.mrb[0].mxu0
        %v1042 = vadd.f32 %v333, %v1041
        %v1043 = vpop.f32.mrb[0].mxu0
        %v1044 = vadd.f32 %v333, %v1043
        %1045 = vdwg.mxu0
        %1046 = vmatprep.subr.mxu0 %v964
        %1047 = vmatpush1.msra.mxu0 %v963
        %1048 = vmatprep.subr.mxu0 %v968
        %1049 = vmatpush1.msra.mxu0 %v967
        %1050 = vmatprep.subr.mxu0 0.0
        %1051 = vmatpush1.msra.mxu0 0.0
        %1052 = vmatprep.subr.mxu0 0.0
        %1053 = vmatpush1.msra.mxu0 0.0
        %1054 = vmatprep.subr.mxu0 0.0
        %1055 = vmatpush1.msra.mxu0 0.0
        %1056 = vmatprep.subr.mxu0 0.0
        %1057 = vmatpush1.msra.mxu0 0.0
        %1058 = vmatprep.subr.mxu0 0.0
        %1059 = vmatpush1.msra.mxu0 0.0
        %1060 = vmatprep.subr.mxu0 0.0
        %1061 = vmatpush1.msra.mxu0 0.0
        %1062 = vmatprep.subr.mxu0 0.0
        %1063 = vmatpush1.msra.mxu0 0.0
        %1064 = vmatprep.subr.mxu0 0.0
        %1065 = vmatpush1.msra.mxu0 0.0
        %1066 = vmatprep.subr.mxu0 0.0
        %1067 = vmatpush1.msra.mxu0 0.0
        %1068 = vmatprep.subr.mxu0 0.0
        %1069 = vmatpush1.msra.mxu0 0.0
        %1070 = vmatprep.subr.mxu0 0.0
        %1071 = vmatpush1.msra.mxu0 0.0
        %1072 = vmatprep.subr.mxu0 0.0
        %1073 = vmatpush1.msra.mxu0 0.0
        %1074 = vmatprep.subr.mxu0 0.0
        %1075 = vmatpush1.msra.mxu0 0.0
        %1076 = vmatprep.subr.mxu0 0.0
        %1077 = vmatpush1.msra.mxu0 0.0
        %1078 = vmatprep.subr.mxu0 0.0
        %1079 = vmatpush1.msra.mxu0 0.0
        %1080 = vmatprep.subr.mxu0 0.0
        %1081 = vmatpush1.msra.mxu0 0.0
        %1082 = vmatprep.subr.mxu0 0.0
        %1083 = vmatpush1.msra.mxu0 0.0
        %1084 = vmatprep.subr.mxu0 0.0
        %1085 = vmatpush1.msra.mxu0 0.0
        %1086 = vmatprep.subr.mxu0 0.0
        %1087 = vmatpush1.msra.mxu0 0.0
        %1088 = vmatprep.subr.mxu0 0.0
        %1089 = vmatpush1.msra.mxu0 0.0
        %1090 = vmatprep.subr.mxu0 0.0
        %1091 = vmatpush1.msra.mxu0 0.0
        %1092 = vmatprep.subr.mxu0 0.0
        %1093 = vmatpush1.msra.mxu0 0.0
        %1094 = vmatprep.subr.mxu0 0.0
        %1095 = vmatpush1.msra.mxu0 0.0
        %1096 = vmatprep.subr.mxu0 0.0
        %1097 = vmatpush1.msra.mxu0 0.0
        %1098 = vmatprep.subr.mxu0 0.0
        %1099 = vmatpush1.msra.mxu0 0.0
        %1100 = vmatprep.subr.mxu0 0.0
        %1101 = vmatpush1.msra.mxu0 0.0
        %1102 = vmatprep.subr.mxu0 0.0
        %1103 = vmatpush1.msra.mxu0 0.0
        %1104 = vmatprep.subr.mxu0 0.0
        %1105 = vmatpush1.msra.mxu0 0.0
        %1106 = vmatprep.subr.mxu0 0.0
        %1107 = vmatpush1.msra.mxu0 0.0
        %1108 = vmatprep.subr.mxu0 0.0
        %1109 = vmatpush1.msra.mxu0 0.0
        %1110 = vmatprep.mubr.f32.mxu0 0.0
        %1111 = vmatmul.mubr.f32.gmra.mrb[0].mxu0 %v337
        %v1112 = vpop.f32.mrb[0].mxu0
        %v1113 = vadd.f32 %v329, %v1112
        %v1114 = vpop.f32.mrb[0].mxu0
        %v1115 = vadd.f32 %v329, %v1114
        %1116 = vmatprep.mubr.f32.mxu0 0.0
        %1117 = vmatmul.mubr.f32.gmra.mrb[0].mxu0 %v340
        %v1118 = vpop.f32.mrb[0].mxu0
        %v1119 = vadd.f32 %v333, %v1118
        %v1120 = vpop.f32.mrb[0].mxu0
        %v1121 = vadd.f32 %v333, %v1120
        %1122 = vdwg.mxu0
        %v1123 = vtanh.pop %v1036
        %v1124 = vtanh.pop %v1038
        %v1125 = vtanh.pop %v1113
        %v1126 = vtanh.pop %v1115
        %v1127 = vtanh.pop %v1042
        %v1128 = vtanh.pop %v1044
        %v1129 = vtanh.pop %v1119
        %v1130 = vtanh.pop %v1121
        %1131 = vmatprep.subr.mxu0 %v1124
        %1132 = vmatpush1.msra.mxu0 %v1123
        %1133 = vmatprep.subr.mxu0 %v1128
        %1134 = vmatpush1.msra.mxu0 %v1127
        %1135 = vmatprep.subr.mxu0 0.0
        %1136 = vmatpush1.msra.mxu0 0.0
        %1137 = vmatprep.subr.mxu0 0.0
        %1138 = vmatpush1.msra.mxu0 0.0
        %1139 = vmatprep.subr.mxu0 0.0
        %1140 = vmatpush1.msra.mxu0 0.0
        %1141 = vmatprep.subr.mxu0 0.0
        %1142 = vmatpush1.msra.mxu0 0.0
        %1143 = vmatprep.subr.mxu0 0.0
        %1144 = vmatpush1.msra.mxu0 0.0
        %1145 = vmatprep.subr.mxu0 0.0
        %1146 = vmatpush1.msra.mxu0 0.0
        %1147 = vmatprep.subr.mxu0 0.0
        %1148 = vmatpush1.msra.mxu0 0.0
        %1149 = vmatprep.subr.mxu0 0.0
        %1150 = vmatpush1.msra.mxu0 0.0
        %1151 = vmatprep.subr.mxu0 0.0
        %1152 = vmatpush1.msra.mxu0 0.0
        %1153 = vmatprep.subr.mxu0 0.0
        %1154 = vmatpush1.msra.mxu0 0.0
        %1155 = vmatprep.subr.mxu0 0.0
        %1156 = vmatpush1.msra.mxu0 0.0
        %1157 = vmatprep.subr.mxu0 0.0
        %1158 = vmatpush1.msra.mxu0 0.0
        %1159 = vmatprep.subr.mxu0 0.0
        %1160 = vmatpush1.msra.mxu0 0.0
        %1161 = vmatprep.subr.mxu0 0.0
        %1162 = vmatpush1.msra.mxu0 0.0
        %1163 = vmatprep.subr.mxu0 0.0
        %1164 = vmatpush1.msra.mxu0 0.0
        %1165 = vmatprep.subr.mxu0 0.0
        %1166 = vmatpush1.msra.mxu0 0.0
        %1167 = vmatprep.subr.mxu0 0.0
        %1168 = vmatpush1.msra.mxu0 0.0
        %1169 = vmatprep.subr.mxu0 0.0
        %1170 = vmatpush1.msra.mxu0 0.0
        %1171 = vmatprep.subr.mxu0 0.0
        %1172 = vmatpush1.msra.mxu0 0.0
        %1173 = vmatprep.subr.mxu0 0.0
        %1174 = vmatpush1.msra.mxu0 0.0
        %1175 = vmatprep.subr.mxu0 0.0
        %1176 = vmatpush1.msra.mxu0 0.0
        %1177 = vmatprep.subr.mxu0 0.0
        %1178 = vmatpush1.msra.mxu0 0.0
        %1179 = vmatprep.subr.mxu0 0.0
        %1180 = vmatpush1.msra.mxu0 0.0
        %1181 = vmatprep.subr.mxu0 0.0
        %1182 = vmatpush1.msra.mxu0 0.0
        %1183 = vmatprep.subr.mxu0 0.0
        %1184 = vmatpush1.msra.mxu0 0.0
        %1185 = vmatprep.subr.mxu0 0.0
        %1186 = vmatpush1.msra.mxu0 0.0
        %1187 = vmatprep.subr.mxu0 0.0
        %1188 = vmatpush1.msra.mxu0 0.0
        %1189 = vmatprep.subr.mxu0 0.0
        %1190 = vmatpush1.msra.mxu0 0.0
        %1191 = vmatprep.subr.mxu0 0.0
        %1192 = vmatpush1.msra.mxu0 0.0
        %1193 = vmatprep.subr.mxu0 0.0
        %1194 = vmatpush1.msra.mxu0 0.0
        %1195 = vmatprep.mubr.f32.mxu0 0.0
        %1196 = vmatmul.mubr.f32.gmra.mrb[0].mxu0 %v513
        %v1197 = vpop.f32.mrb[0].mxu0
        %v1198 = vadd.f32 %v506, %v1197
        %v1199 = vpop.f32.mrb[0].mxu0
        %v1200 = vadd.f32 %v506, %v1199
        %1201 = vmatprep.mubr.f32.mxu0 0.0
        %1202 = vmatmul.mubr.f32.gmra.mrb[0].mxu0 %v516
        %v1203 = vpop.f32.mrb[0].mxu0
        %v1204 = vadd.f32 %v510, %v1203
        %v1205 = vpop.f32.mrb[0].mxu0
        %v1206 = vadd.f32 %v510, %v1205
        %1207 = vdwg.mxu0
        %1208 = vmatprep.subr.mxu0 %v1126
        %1209 = vmatpush1.msra.mxu0 %v1125
        %1210 = vmatprep.subr.mxu0 %v1130
        %1211 = vmatpush1.msra.mxu0 %v1129
        %1212 = vmatprep.subr.mxu0 0.0
        %1213 = vmatpush1.msra.mxu0 0.0
        %1214 = vmatprep.subr.mxu0 0.0
        %1215 = vmatpush1.msra.mxu0 0.0
        %1216 = vmatprep.subr.mxu0 0.0
        %1217 = vmatpush1.msra.mxu0 0.0
        %1218 = vmatprep.subr.mxu0 0.0
        %1219 = vmatpush1.msra.mxu0 0.0
        %1220 = vmatprep.subr.mxu0 0.0
        %1221 = vmatpush1.msra.mxu0 0.0
        %1222 = vmatprep.subr.mxu0 0.0
        %1223 = vmatpush1.msra.mxu0 0.0
        %1224 = vmatprep.subr.mxu0 0.0
        %1225 = vmatpush1.msra.mxu0 0.0
        %1226 = vmatprep.subr.mxu0 0.0
        %1227 = vmatpush1.msra.mxu0 0.0
        %1228 = vmatprep.subr.mxu0 0.0
        %1229 = vmatpush1.msra.mxu0 0.0
        %1230 = vmatprep.subr.mxu0 0.0
        %1231 = vmatpush1.msra.mxu0 0.0
        %1232 = vmatprep.subr.mxu0 0.0
        %1233 = vmatpush1.msra.mxu0 0.0
        %1234 = vmatprep.subr.mxu0 0.0
        %1235 = vmatpush1.msra.mxu0 0.0
        %1236 = vmatprep.subr.mxu0 0.0
        %1237 = vmatpush1.msra.mxu0 0.0
        %1238 = vmatprep.subr.mxu0 0.0
        %1239 = vmatpush1.msra.mxu0 0.0
        %1240 = vmatprep.subr.mxu0 0.0
        %1241 = vmatpush1.msra.mxu0 0.0
        %1242 = vmatprep.subr.mxu0 0.0
        %1243 = vmatpush1.msra.mxu0 0.0
        %1244 = vmatprep.subr.mxu0 0.0
        %1245 = vmatpush1.msra.mxu0 0.0
        %1246 = vmatprep.subr.mxu0 0.0
        %1247 = vmatpush1.msra.mxu0 0.0
        %1248 = vmatprep.subr.mxu0 0.0
        %1249 = vmatpush1.msra.mxu0 0.0
        %1250 = vmatprep.subr.mxu0 0.0
        %1251 = vmatpush1.msra.mxu0 0.0
        %1252 = vmatprep.subr.mxu0 0.0
        %1253 = vmatpush1.msra.mxu0 0.0
        %1254 = vmatprep.subr.mxu0 0.0
        %1255 = vmatpush1.msra.mxu0 0.0
        %1256 = vmatprep.subr.mxu0 0.0
        %1257 = vmatpush1.msra.mxu0 0.0
        %1258 = vmatprep.subr.mxu0 0.0
        %1259 = vmatpush1.msra.mxu0 0.0
        %1260 = vmatprep.subr.mxu0 0.0
        %1261 = vmatpush1.msra.mxu0 0.0
        %1262 = vmatprep.subr.mxu0 0.0
        %1263 = vmatpush1.msra.mxu0 0.0
        %1264 = vmatprep.subr.mxu0 0.0
        %1265 = vmatpush1.msra.mxu0 0.0
        %1266 = vmatprep.subr.mxu0 0.0
        %1267 = vmatpush1.msra.mxu0 0.0
        %1268 = vmatprep.subr.mxu0 0.0
        %1269 = vmatpush1.msra.mxu0 0.0
        %1270 = vmatprep.subr.mxu0 0.0
        %1271 = vmatpush1.msra.mxu0 0.0
        %1272 = vmatprep.mubr.f32.mxu0 0.0
        %1273 = vmatmul.mubr.f32.gmra.mrb[0].mxu0 %v513
        %v1274 = vpop.f32.mrb[0].mxu0
        %v1275 = vadd.f32 %v506, %v1274
        %v1276 = vpop.f32.mrb[0].mxu0
        %v1277 = vadd.f32 %v506, %v1276
        %1278 = vmatprep.mubr.f32.mxu0 0.0
        %1279 = vmatmul.mubr.f32.gmra.mrb[0].mxu0 %v516
        %v1280 = vpop.f32.mrb[0].mxu0
        %v1281 = vadd.f32 %v510, %v1280
        %v1282 = vpop.f32.mrb[0].mxu0
        %v1283 = vadd.f32 %v510, %v1282
        %1284 = vdwg.mxu0
        %v1285 = vtanh.pop %v1198
        %v1286 = vtanh.pop %v1200
        %v1287 = vtanh.pop %v1275
        %v1288 = vtanh.pop %v1277
        %v1289 = vtanh.pop %v1204
        %v1290 = vtanh.pop %v1206
        %v1291 = vtanh.pop %v1281
        %v1292 = vtanh.pop %v1283
        %1293 = vmatprep.subr.mxu0 %v1286
        %1294 = vmatpush1.msra.mxu0 %v1285
        %1295 = vmatprep.subr.mxu0 %v1290
        %1296 = vmatpush1.msra.mxu0 %v1289
        %1297 = vmatprep.subr.mxu0 0.0
        %1298 = vmatpush1.msra.mxu0 0.0
        %1299 = vmatprep.subr.mxu0 0.0
        %1300 = vmatpush1.msra.mxu0 0.0
        %1301 = vmatprep.subr.mxu0 0.0
        %1302 = vmatpush1.msra.mxu0 0.0
        %1303 = vmatprep.subr.mxu0 0.0
        %1304 = vmatpush1.msra.mxu0 0.0
        %1305 = vmatprep.subr.mxu0 0.0
        %1306 = vmatpush1.msra.mxu0 0.0
        %1307 = vmatprep.subr.mxu0 0.0
        %1308 = vmatpush1.msra.mxu0 0.0
        %1309 = vmatprep.subr.mxu0 0.0
        %1310 = vmatpush1.msra.mxu0 0.0
        %1311 = vmatprep.subr.mxu0 0.0
        %1312 = vmatpush1.msra.mxu0 0.0
        %1313 = vmatprep.subr.mxu0 0.0
        %1314 = vmatpush1.msra.mxu0 0.0
        %1315 = vmatprep.subr.mxu0 0.0
        %1316 = vmatpush1.msra.mxu0 0.0
        %1317 = vmatprep.subr.mxu0 0.0
        %1318 = vmatpush1.msra.mxu0 0.0
        %1319 = vmatprep.subr.mxu0 0.0
        %1320 = vmatpush1.msra.mxu0 0.0
        %1321 = vmatprep.subr.mxu0 0.0
        %1322 = vmatpush1.msra.mxu0 0.0
        %1323 = vmatprep.subr.mxu0 0.0
        %1324 = vmatpush1.msra.mxu0 0.0
        %1325 = vmatprep.subr.mxu0 0.0
        %1326 = vmatpush1.msra.mxu0 0.0
        %1327 = vmatprep.subr.mxu0 0.0
        %1328 = vmatpush1.msra.mxu0 0.0
        %1329 = vmatprep.subr.mxu0 0.0
        %1330 = vmatpush1.msra.mxu0 0.0
        %1331 = vmatprep.subr.mxu0 0.0
        %1332 = vmatpush1.msra.mxu0 0.0
        %1333 = vmatprep.subr.mxu0 0.0
        %1334 = vmatpush1.msra.mxu0 0.0
        %1335 = vmatprep.subr.mxu0 0.0
        %1336 = vmatpush1.msra.mxu0 0.0
        %1337 = vmatprep.subr.mxu0 0.0
        %1338 = vmatpush1.msra.mxu0 0.0
        %1339 = vmatprep.subr.mxu0 0.0
        %1340 = vmatpush1.msra.mxu0 0.0
        %1341 = vmatprep.subr.mxu0 0.0
        %1342 = vmatpush1.msra.mxu0 0.0
        %1343 = vmatprep.subr.mxu0 0.0
        %1344 = vmatpush1.msra.mxu0 0.0
        %1345 = vmatprep.subr.mxu0 0.0
        %1346 = vmatpush1.msra.mxu0 0.0
        %1347 = vmatprep.subr.mxu0 0.0
        %1348 = vmatpush1.msra.mxu0 0.0
        %1349 = vmatprep.subr.mxu0 0.0
        %1350 = vmatpush1.msra.mxu0 0.0
        %1351 = vmatprep.subr.mxu0 0.0
        %1352 = vmatpush1.msra.mxu0 0.0
        %1353 = vmatprep.subr.mxu0 0.0
        %1354 = vmatpush1.msra.mxu0 0.0
        %1355 = vmatprep.subr.mxu0 0.0
        %1356 = vmatpush1.msra.mxu0 0.0
        %1357 = vmatprep.mubr.f32.mxu0 0.0
        %1358 = vmatmul.mubr.f32.gmra.mrb[0].mxu0 %v685
        %v1359 = vpop.f32.mrb[0].mxu0
        %v1360 = vadd.f32 %v682, %v1359
        %v1361 = vpop.f32.mrb[0].mxu0
        %v1362 = vadd.f32 %v682, %v1361
        %1363 = vdwg.mxu0
        %1364 = vmatprep.subr.mxu0 %v1288
        %1365 = vmatpush1.msra.mxu0 %v1287
        %1366 = vmatprep.subr.mxu0 %v1292
        %1367 = vmatpush1.msra.mxu0 %v1291
        %1368 = vmatprep.subr.mxu0 0.0
        %1369 = vmatpush1.msra.mxu0 0.0
        %1370 = vmatprep.subr.mxu0 0.0
        %1371 = vmatpush1.msra.mxu0 0.0
        %1372 = vmatprep.subr.mxu0 0.0
        %1373 = vmatpush1.msra.mxu0 0.0
        %1374 = vmatprep.subr.mxu0 0.0
        %1375 = vmatpush1.msra.mxu0 0.0
        %1376 = vmatprep.subr.mxu0 0.0
        %1377 = vmatpush1.msra.mxu0 0.0
        %1378 = vmatprep.subr.mxu0 0.0
        %1379 = vmatpush1.msra.mxu0 0.0
        %1380 = vmatprep.subr.mxu0 0.0
        %1381 = vmatpush1.msra.mxu0 0.0
        %1382 = vmatprep.subr.mxu0 0.0
        %1383 = vmatpush1.msra.mxu0 0.0
        %1384 = vmatprep.subr.mxu0 0.0
        %1385 = vmatpush1.msra.mxu0 0.0
        %1386 = vmatprep.subr.mxu0 0.0
        %1387 = vmatpush1.msra.mxu0 0.0
        %1388 = vmatprep.subr.mxu0 0.0
        %1389 = vmatpush1.msra.mxu0 0.0
        %1390 = vmatprep.subr.mxu0 0.0
        %1391 = vmatpush1.msra.mxu0 0.0
        %1392 = vmatprep.subr.mxu0 0.0
        %1393 = vmatpush1.msra.mxu0 0.0
        %1394 = vmatprep.subr.mxu0 0.0
        %1395 = vmatpush1.msra.mxu0 0.0
        %1396 = vmatprep.subr.mxu0 0.0
        %1397 = vmatpush1.msra.mxu0 0.0
        %1398 = vmatprep.subr.mxu0 0.0
        %1399 = vmatpush1.msra.mxu0 0.0
        %1400 = vmatprep.subr.mxu0 0.0
        %1401 = vmatpush1.msra.mxu0 0.0
        %1402 = vmatprep.subr.mxu0 0.0
        %1403 = vmatpush1.msra.mxu0 0.0
        %1404 = vmatprep.subr.mxu0 0.0
        %1405 = vmatpush1.msra.mxu0 0.0
        %1406 = vmatprep.subr.mxu0 0.0
        %1407 = vmatpush1.msra.mxu0 0.0
        %1408 = vmatprep.subr.mxu0 0.0
        %1409 = vmatpush1.msra.mxu0 0.0
        %1410 = vmatprep.subr.mxu0 0.0
        %1411 = vmatpush1.msra.mxu0 0.0
        %1412 = vmatprep.subr.mxu0 0.0
        %1413 = vmatpush1.msra.mxu0 0.0
        %1414 = vmatprep.subr.mxu0 0.0
        %1415 = vmatpush1.msra.mxu0 0.0
        %1416 = vmatprep.subr.mxu0 0.0
        %1417 = vmatpush1.msra.mxu0 0.0
        %1418 = vmatprep.subr.mxu0 0.0
        %1419 = vmatpush1.msra.mxu0 0.0
        %1420 = vmatprep.subr.mxu0 0.0
        %1421 = vmatpush1.msra.mxu0 0.0
        %1422 = vmatprep.subr.mxu0 0.0
        %1423 = vmatpush1.msra.mxu0 0.0
        %1424 = vmatprep.subr.mxu0 0.0
        %1425 = vmatpush1.msra.mxu0 0.0
        %1426 = vmatprep.subr.mxu0 0.0
        %1427 = vmatpush1.msra.mxu0 0.0
        %1428 = vmatprep.mubr.f32.mxu0 0.0
        %1429 = vmatmul.mubr.f32.gmra.mrb[0].mxu0 %v685
        %v1430 = vpop.f32.mrb[0].mxu0
        %v1431 = vadd.f32 %v682, %v1430
        %v1432 = vpop.f32.mrb[0].mxu0
        %v1433 = vadd.f32 %v682, %v1432
        %1434 = vdwg.mxu0
        %v1435 = vmax.f32 %v1360, 0.0
        %v1436 = vmax.f32 %v1362, 0.0
        %v1437 = vmax.f32 %v1431, 0.0
        %v1438 = vmax.f32 %v1433, 0.0
        %v1439 = vand.u32 2147483647, %v1360
        %v1440 = vand.u32 2147483647, %v1362
        %v1441 = vand.u32 2147483647, %v1431
        %v1442 = vand.u32 2147483647, %v1433
        %v1443 = vsub.f32 0.0, %v1439
        %v1444 = vsub.f32 0.0, %v1440
        %v1445 = vsub.f32 0.0, %v1441
        %v1446 = vsub.f32 0.0, %v1442
        %v1447 = vmul.f32 %v1443, 1.442695
        %v1448 = vpow.pop %v1447
        %v1449 = vmul.f32 %v1444, 1.442695
        %v1450 = vpow.pop %v1449
        %v1451 = vmul.f32 %v1445, 1.442695
        %v1452 = vpow.pop %v1451
        %v1453 = vmul.f32 %v1446, 1.442695
        %v1454 = vpow.pop %v1453
        %v1455 = vadd.f32 %v1448, 1.0
        %v1456 = vlog2.pop %v1455
        %v1457 = vmul.f32 %v1456, 0.6931472
        %v1458 = vmul.f32 -0.5, %v1448
        %v1459 = vadd.f32 %v1458, 1.0
        %v1460 = vmul.f32 %v1459, %v1448
        %v1461 = vand.u32 2147483647, %v1448
        %vm1462 = vcmp.lt.f32.partialorder %v1461, 0.0004427343
        %v1463 = vsel %vm1462, %v1460, %v1457
        %v1464 = vadd.f32 %v1450, 1.0
        %v1465 = vlog2.pop %v1464
        %v1466 = vmul.f32 %v1465, 0.6931472
        %v1467 = vmul.f32 -0.5, %v1450
        %v1468 = vadd.f32 %v1467, 1.0
        %v1469 = vmul.f32 %v1468, %v1450
        %v1470 = vand.u32 2147483647, %v1450
        %vm1471 = vcmp.lt.f32.partialorder %v1470, 0.0004427343
        %v1472 = vsel %vm1471, %v1469, %v1466
        %v1473 = vadd.f32 %v1452, 1.0
        %v1474 = vlog2.pop %v1473
        %v1475 = vmul.f32 %v1474, 0.6931472
        %v1476 = vmul.f32 -0.5, %v1452
        %v1477 = vadd.f32 %v1476, 1.0
        %v1478 = vmul.f32 %v1477, %v1452
        %v1479 = vand.u32 2147483647, %v1452
        %vm1480 = vcmp.lt.f32.partialorder %v1479, 0.0004427343
        %v1481 = vsel %vm1480, %v1478, %v1475
        %v1482 = vadd.f32 %v1454, 1.0
        %v1483 = vlog2.pop %v1482
        %v1484 = vmul.f32 %v1483, 0.6931472
        %v1485 = vmul.f32 -0.5, %v1454
        %v1486 = vadd.f32 %v1485, 1.0
        %v1487 = vmul.f32 %v1486, %v1454
        %v1488 = vand.u32 2147483647, %v1454
        %vm1489 = vcmp.lt.f32.partialorder %v1488, 0.0004427343
        %v1490 = vsel %vm1489, %v1487, %v1484
        %v1491 = vadd.f32 %v1435, %v1463
        %v1492 = vadd.f32 %v1436, %v1472
        %v1493 = vadd.f32 %v1437, %v1481
        %v1494 = vadd.f32 %v1438, %v1490
        %v1499 = vcombine.low %v1491, %v1492
        %v1500 = vcombine.low %v1493, %v1494
        %v1502 = vunpack.c.l.s4 1966171168
        %v1503 = vunpack.c.0.s8 %v1502
        %v1504 = vlaneseq
        %v1505 = vshrl.u32 %v1504, 7
        %v1506 = vsub.s32 %v1503, %v1505
        %v1507 = vrot.slane %v1499, %v1506
        %v1509 = vunpack.c.l.s4 1966171168
        %v1510 = vunpack.c.0.s8 %v1509
        %v1511 = vlaneseq
        %v1512 = vshrl.u32 %v1511, 7
        %v1513 = vsub.s32 %v1510, %v1512
        %v1514 = vrot.slane %v1500, %v1513
        %v1515 = vcombine.low %v1507, %v1514
        %v1517 = vunpack.c.l.s4 1966171168
        %v1518 = vunpack.c.0.s8 %v1517
        %v1519 = vlaneseq
        %v1520 = vshrl.u32 %v1519, 7
        %v1521 = vsub.s32 %v1518, %v1520
        %v1522 = vrot.slane %v1515, %v1521
        %1524 = vst.msk [vmem:[%s245 + $0x4] sm:$0xf] %vm921, %v1522
        %v1525 = vld [vmem:[%s219 + $0x8] sm:$0xf]
        %v1527 = vlaneseq
        %v1528 = vshrl.u32 %v1527, 7
        %v1529 = vsub.s32 0, %v1528
        %v1530 = vrot.slane %v1525, %v1529
        %v1531 = vlaneseq
        %v1532 = vshrl.u32 %v1531, 7
        %v1533 = vsub.s32 1, %v1532
        %v1534 = vrot.slane %v1525, %v1533
        %v1535 = vlaneseq
        %v1536 = vshrl.u32 %v1535, 7
        %v1537 = vsub.s32 2, %v1536
        %v1538 = vrot.slane %v1525, %v1537
        %v1539 = vlaneseq
        %v1540 = vshrl.u32 %v1539, 7
        %v1541 = vsub.s32 3, %v1540
        %v1542 = vrot.slane %v1525, %v1541
        %v1547 = vmul.f32 %v267, %v1530
        %v1548 = vmul.f32 %v267, %v1534
        %v1549 = vmul.f32 %v267, %v1538
        %v1550 = vmul.f32 %v267, %v1542
        %v1551 = vmul.f32 %v272, %v1530
        %v1552 = vmul.f32 %v272, %v1534
        %v1553 = vmul.f32 %v272, %v1538
        %v1554 = vmul.f32 %v272, %v1542
        %v1555 = vadd.f32 %v1547, %v305
        %v1556 = vadd.f32 %v1548, %v305
        %v1557 = vadd.f32 %v1549, %v305
        %v1558 = vadd.f32 %v1550, %v305
        %v1559 = vadd.f32 %v1551, %v309
        %v1560 = vadd.f32 %v1552, %v309
        %v1561 = vadd.f32 %v1553, %v309
        %v1562 = vadd.f32 %v1554, %v309
        %v1563 = vtanh.pop %v1555
        %v1564 = vtanh.pop %v1556
        %v1565 = vtanh.pop %v1557
        %v1566 = vtanh.pop %v1558
        %v1567 = vtanh.pop %v1559
        %v1568 = vtanh.pop %v1560
        %v1569 = vtanh.pop %v1561
        %v1570 = vtanh.pop %v1562
        %1571 = vmatprep.subr.mxu0 %v1564
        %1572 = vmatpush1.msra.mxu0 %v1563
        %1573 = vmatprep.subr.mxu0 %v1568
        %1574 = vmatpush1.msra.mxu0 %v1567
        %1575 = vmatprep.subr.mxu0 0.0
        %1576 = vmatpush1.msra.mxu0 0.0
        %1577 = vmatprep.subr.mxu0 0.0
        %1578 = vmatpush1.msra.mxu0 0.0
        %1579 = vmatprep.subr.mxu0 0.0
        %1580 = vmatpush1.msra.mxu0 0.0
        %1581 = vmatprep.subr.mxu0 0.0
        %1582 = vmatpush1.msra.mxu0 0.0
        %1583 = vmatprep.subr.mxu0 0.0
        %1584 = vmatpush1.msra.mxu0 0.0
        %1585 = vmatprep.subr.mxu0 0.0
        %1586 = vmatpush1.msra.mxu0 0.0
        %1587 = vmatprep.subr.mxu0 0.0
        %1588 = vmatpush1.msra.mxu0 0.0
        %1589 = vmatprep.subr.mxu0 0.0
        %1590 = vmatpush1.msra.mxu0 0.0
        %1591 = vmatprep.subr.mxu0 0.0
        %1592 = vmatpush1.msra.mxu0 0.0
        %1593 = vmatprep.subr.mxu0 0.0
        %1594 = vmatpush1.msra.mxu0 0.0
        %1595 = vmatprep.subr.mxu0 0.0
        %1596 = vmatpush1.msra.mxu0 0.0
        %1597 = vmatprep.subr.mxu0 0.0
        %1598 = vmatpush1.msra.mxu0 0.0
        %1599 = vmatprep.subr.mxu0 0.0
        %1600 = vmatpush1.msra.mxu0 0.0
        %1601 = vmatprep.subr.mxu0 0.0
        %1602 = vmatpush1.msra.mxu0 0.0
        %1603 = vmatprep.subr.mxu0 0.0
        %1604 = vmatpush1.msra.mxu0 0.0
        %1605 = vmatprep.subr.mxu0 0.0
        %1606 = vmatpush1.msra.mxu0 0.0
        %1607 = vmatprep.subr.mxu0 0.0
        %1608 = vmatpush1.msra.mxu0 0.0
        %1609 = vmatprep.subr.mxu0 0.0
        %1610 = vmatpush1.msra.mxu0 0.0
        %1611 = vmatprep.subr.mxu0 0.0
        %1612 = vmatpush1.msra.mxu0 0.0
        %1613 = vmatprep.subr.mxu0 0.0
        %1614 = vmatpush1.msra.mxu0 0.0
        %1615 = vmatprep.subr.mxu0 0.0
        %1616 = vmatpush1.msra.mxu0 0.0
        %1617 = vmatprep.subr.mxu0 0.0
        %1618 = vmatpush1.msra.mxu0 0.0
        %1619 = vmatprep.subr.mxu0 0.0
        %1620 = vmatpush1.msra.mxu0 0.0
        %1621 = vmatprep.subr.mxu0 0.0
        %1622 = vmatpush1.msra.mxu0 0.0
        %1623 = vmatprep.subr.mxu0 0.0
        %1624 = vmatpush1.msra.mxu0 0.0
        %1625 = vmatprep.subr.mxu0 0.0
        %1626 = vmatpush1.msra.mxu0 0.0
        %1627 = vmatprep.subr.mxu0 0.0
        %1628 = vmatpush1.msra.mxu0 0.0
        %1629 = vmatprep.subr.mxu0 0.0
        %1630 = vmatpush1.msra.mxu0 0.0
        %1631 = vmatprep.subr.mxu0 0.0
        %1632 = vmatpush1.msra.mxu0 0.0
        %1633 = vmatprep.subr.mxu0 0.0
        %1634 = vmatpush1.msra.mxu0 0.0
        %1635 = vmatprep.mubr.f32.mxu0 0.0
        %1636 = vmatmul.mubr.f32.gmra.mrb[0].mxu0 %v337
        %v1637 = vpop.f32.mrb[0].mxu0
        %v1638 = vadd.f32 %v329, %v1637
        %v1639 = vpop.f32.mrb[0].mxu0
        %v1640 = vadd.f32 %v329, %v1639
        %1641 = vmatprep.mubr.f32.mxu0 0.0
        %1642 = vmatmul.mubr.f32.gmra.mrb[0].mxu0 %v340
        %v1643 = vpop.f32.mrb[0].mxu0
        %v1644 = vadd.f32 %v333, %v1643
        %v1645 = vpop.f32.mrb[0].mxu0
        %v1646 = vadd.f32 %v333, %v1645
        %1647 = vdwg.mxu0
        %1648 = vmatprep.subr.mxu0 %v1566
        %1649 = vmatpush1.msra.mxu0 %v1565
        %1650 = vmatprep.subr.mxu0 %v1570
        %1651 = vmatpush1.msra.mxu0 %v1569
        %1652 = vmatprep.subr.mxu0 0.0
        %1653 = vmatpush1.msra.mxu0 0.0
        %1654 = vmatprep.subr.mxu0 0.0
        %1655 = vmatpush1.msra.mxu0 0.0
        %1656 = vmatprep.subr.mxu0 0.0
        %1657 = vmatpush1.msra.mxu0 0.0
        %1658 = vmatprep.subr.mxu0 0.0
        %1659 = vmatpush1.msra.mxu0 0.0
        %1660 = vmatprep.subr.mxu0 0.0
        %1661 = vmatpush1.msra.mxu0 0.0
        %1662 = vmatprep.subr.mxu0 0.0
        %1663 = vmatpush1.msra.mxu0 0.0
        %1664 = vmatprep.subr.mxu0 0.0
        %1665 = vmatpush1.msra.mxu0 0.0
        %1666 = vmatprep.subr.mxu0 0.0
        %1667 = vmatpush1.msra.mxu0 0.0
        %1668 = vmatprep.subr.mxu0 0.0
        %1669 = vmatpush1.msra.mxu0 0.0
        %1670 = vmatprep.subr.mxu0 0.0
        %1671 = vmatpush1.msra.mxu0 0.0
        %1672 = vmatprep.subr.mxu0 0.0
        %1673 = vmatpush1.msra.mxu0 0.0
        %1674 = vmatprep.subr.mxu0 0.0
        %1675 = vmatpush1.msra.mxu0 0.0
        %1676 = vmatprep.subr.mxu0 0.0
        %1677 = vmatpush1.msra.mxu0 0.0
        %1678 = vmatprep.subr.mxu0 0.0
        %1679 = vmatpush1.msra.mxu0 0.0
        %1680 = vmatprep.subr.mxu0 0.0
        %1681 = vmatpush1.msra.mxu0 0.0
        %1682 = vmatprep.subr.mxu0 0.0
        %1683 = vmatpush1.msra.mxu0 0.0
        %1684 = vmatprep.subr.mxu0 0.0
        %1685 = vmatpush1.msra.mxu0 0.0
        %1686 = vmatprep.subr.mxu0 0.0
        %1687 = vmatpush1.msra.mxu0 0.0
        %1688 = vmatprep.subr.mxu0 0.0
        %1689 = vmatpush1.msra.mxu0 0.0
        %1690 = vmatprep.subr.mxu0 0.0
        %1691 = vmatpush1.msra.mxu0 0.0
        %1692 = vmatprep.subr.mxu0 0.0
        %1693 = vmatpush1.msra.mxu0 0.0
        %1694 = vmatprep.subr.mxu0 0.0
        %1695 = vmatpush1.msra.mxu0 0.0
        %1696 = vmatprep.subr.mxu0 0.0
        %1697 = vmatpush1.msra.mxu0 0.0
        %1698 = vmatprep.subr.mxu0 0.0
        %1699 = vmatpush1.msra.mxu0 0.0
        %1700 = vmatprep.subr.mxu0 0.0
        %1701 = vmatpush1.msra.mxu0 0.0
        %1702 = vmatprep.subr.mxu0 0.0
        %1703 = vmatpush1.msra.mxu0 0.0
        %1704 = vmatprep.subr.mxu0 0.0
        %1705 = vmatpush1.msra.mxu0 0.0
        %1706 = vmatprep.subr.mxu0 0.0
        %1707 = vmatpush1.msra.mxu0 0.0
        %1708 = vmatprep.subr.mxu0 0.0
        %1709 = vmatpush1.msra.mxu0 0.0
        %1710 = vmatprep.subr.mxu0 0.0
        %1711 = vmatpush1.msra.mxu0 0.0
        %1712 = vmatprep.mubr.f32.mxu0 0.0
        %1713 = vmatmul.mubr.f32.gmra.mrb[0].mxu0 %v337
        %v1714 = vpop.f32.mrb[0].mxu0
        %v1715 = vadd.f32 %v329, %v1714
        %v1716 = vpop.f32.mrb[0].mxu0
        %v1717 = vadd.f32 %v329, %v1716
        %1718 = vmatprep.mubr.f32.mxu0 0.0
        %1719 = vmatmul.mubr.f32.gmra.mrb[0].mxu0 %v340
        %v1720 = vpop.f32.mrb[0].mxu0
        %v1721 = vadd.f32 %v333, %v1720
        %v1722 = vpop.f32.mrb[0].mxu0
        %v1723 = vadd.f32 %v333, %v1722
        %1724 = vdwg.mxu0
        %v1725 = vtanh.pop %v1638
        %v1726 = vtanh.pop %v1640
        %v1727 = vtanh.pop %v1715
        %v1728 = vtanh.pop %v1717
        %v1729 = vtanh.pop %v1644
        %v1730 = vtanh.pop %v1646
        %v1731 = vtanh.pop %v1721
        %v1732 = vtanh.pop %v1723
        %1733 = vmatprep.subr.mxu0 %v1726
        %1734 = vmatpush1.msra.mxu0 %v1725
        %1735 = vmatprep.subr.mxu0 %v1730
        %1736 = vmatpush1.msra.mxu0 %v1729
        %1737 = vmatprep.subr.mxu0 0.0
        %1738 = vmatpush1.msra.mxu0 0.0
        %1739 = vmatprep.subr.mxu0 0.0
        %1740 = vmatpush1.msra.mxu0 0.0
        %1741 = vmatprep.subr.mxu0 0.0
        %1742 = vmatpush1.msra.mxu0 0.0
        %1743 = vmatprep.subr.mxu0 0.0
        %1744 = vmatpush1.msra.mxu0 0.0
        %1745 = vmatprep.subr.mxu0 0.0
        %1746 = vmatpush1.msra.mxu0 0.0
        %1747 = vmatprep.subr.mxu0 0.0
        %1748 = vmatpush1.msra.mxu0 0.0
        %1749 = vmatprep.subr.mxu0 0.0
        %1750 = vmatpush1.msra.mxu0 0.0
        %1751 = vmatprep.subr.mxu0 0.0
        %1752 = vmatpush1.msra.mxu0 0.0
        %1753 = vmatprep.subr.mxu0 0.0
        %1754 = vmatpush1.msra.mxu0 0.0
        %1755 = vmatprep.subr.mxu0 0.0
        %1756 = vmatpush1.msra.mxu0 0.0
        %1757 = vmatprep.subr.mxu0 0.0
        %1758 = vmatpush1.msra.mxu0 0.0
        %1759 = vmatprep.subr.mxu0 0.0
        %1760 = vmatpush1.msra.mxu0 0.0
        %1761 = vmatprep.subr.mxu0 0.0
        %1762 = vmatpush1.msra.mxu0 0.0
        %1763 = vmatprep.subr.mxu0 0.0
        %1764 = vmatpush1.msra.mxu0 0.0
        %1765 = vmatprep.subr.mxu0 0.0
        %1766 = vmatpush1.msra.mxu0 0.0
        %1767 = vmatprep.subr.mxu0 0.0
        %1768 = vmatpush1.msra.mxu0 0.0
        %1769 = vmatprep.subr.mxu0 0.0
        %1770 = vmatpush1.msra.mxu0 0.0
        %1771 = vmatprep.subr.mxu0 0.0
        %1772 = vmatpush1.msra.mxu0 0.0
        %1773 = vmatprep.subr.mxu0 0.0
        %1774 = vmatpush1.msra.mxu0 0.0
        %1775 = vmatprep.subr.mxu0 0.0
        %1776 = vmatpush1.msra.mxu0 0.0
        %1777 = vmatprep.subr.mxu0 0.0
        %1778 = vmatpush1.msra.mxu0 0.0
        %1779 = vmatprep.subr.mxu0 0.0
        %1780 = vmatpush1.msra.mxu0 0.0
        %1781 = vmatprep.subr.mxu0 0.0
        %1782 = vmatpush1.msra.mxu0 0.0
        %1783 = vmatprep.subr.mxu0 0.0
        %1784 = vmatpush1.msra.mxu0 0.0
        %1785 = vmatprep.subr.mxu0 0.0
        %1786 = vmatpush1.msra.mxu0 0.0
        %1787 = vmatprep.subr.mxu0 0.0
        %1788 = vmatpush1.msra.mxu0 0.0
        %1789 = vmatprep.subr.mxu0 0.0
        %1790 = vmatpush1.msra.mxu0 0.0
        %1791 = vmatprep.subr.mxu0 0.0
        %1792 = vmatpush1.msra.mxu0 0.0
        %1793 = vmatprep.subr.mxu0 0.0
        %1794 = vmatpush1.msra.mxu0 0.0
        %1795 = vmatprep.subr.mxu0 0.0
        %1796 = vmatpush1.msra.mxu0 0.0
        %1797 = vmatprep.mubr.f32.mxu0 0.0
        %1798 = vmatmul.mubr.f32.gmra.mrb[0].mxu0 %v513
        %v1799 = vpop.f32.mrb[0].mxu0
        %v1800 = vadd.f32 %v506, %v1799
        %v1801 = vpop.f32.mrb[0].mxu0
        %v1802 = vadd.f32 %v506, %v1801
        %1803 = vmatprep.mubr.f32.mxu0 0.0
        %1804 = vmatmul.mubr.f32.gmra.mrb[0].mxu0 %v516
        %v1805 = vpop.f32.mrb[0].mxu0
        %v1806 = vadd.f32 %v510, %v1805
        %v1807 = vpop.f32.mrb[0].mxu0
        %v1808 = vadd.f32 %v510, %v1807
        %1809 = vdwg.mxu0
        %1810 = vmatprep.subr.mxu0 %v1728
        %1811 = vmatpush1.msra.mxu0 %v1727
        %1812 = vmatprep.subr.mxu0 %v1732
        %1813 = vmatpush1.msra.mxu0 %v1731
        %1814 = vmatprep.subr.mxu0 0.0
        %1815 = vmatpush1.msra.mxu0 0.0
        %1816 = vmatprep.subr.mxu0 0.0
        %1817 = vmatpush1.msra.mxu0 0.0
        %1818 = vmatprep.subr.mxu0 0.0
        %1819 = vmatpush1.msra.mxu0 0.0
        %1820 = vmatprep.subr.mxu0 0.0
        %1821 = vmatpush1.msra.mxu0 0.0
        %1822 = vmatprep.subr.mxu0 0.0
        %1823 = vmatpush1.msra.mxu0 0.0
        %1824 = vmatprep.subr.mxu0 0.0
        %1825 = vmatpush1.msra.mxu0 0.0
        %1826 = vmatprep.subr.mxu0 0.0
        %1827 = vmatpush1.msra.mxu0 0.0
        %1828 = vmatprep.subr.mxu0 0.0
        %1829 = vmatpush1.msra.mxu0 0.0
        %1830 = vmatprep.subr.mxu0 0.0
        %1831 = vmatpush1.msra.mxu0 0.0
        %1832 = vmatprep.subr.mxu0 0.0
        %1833 = vmatpush1.msra.mxu0 0.0
        %1834 = vmatprep.subr.mxu0 0.0
        %1835 = vmatpush1.msra.mxu0 0.0
        %1836 = vmatprep.subr.mxu0 0.0
        %1837 = vmatpush1.msra.mxu0 0.0
        %1838 = vmatprep.subr.mxu0 0.0
        %1839 = vmatpush1.msra.mxu0 0.0
        %1840 = vmatprep.subr.mxu0 0.0
        %1841 = vmatpush1.msra.mxu0 0.0
        %1842 = vmatprep.subr.mxu0 0.0
        %1843 = vmatpush1.msra.mxu0 0.0
        %1844 = vmatprep.subr.mxu0 0.0
        %1845 = vmatpush1.msra.mxu0 0.0
        %1846 = vmatprep.subr.mxu0 0.0
        %1847 = vmatpush1.msra.mxu0 0.0
        %1848 = vmatprep.subr.mxu0 0.0
        %1849 = vmatpush1.msra.mxu0 0.0
        %1850 = vmatprep.subr.mxu0 0.0
        %1851 = vmatpush1.msra.mxu0 0.0
        %1852 = vmatprep.subr.mxu0 0.0
        %1853 = vmatpush1.msra.mxu0 0.0
        %1854 = vmatprep.subr.mxu0 0.0
        %1855 = vmatpush1.msra.mxu0 0.0
        %1856 = vmatprep.subr.mxu0 0.0
        %1857 = vmatpush1.msra.mxu0 0.0
        %1858 = vmatprep.subr.mxu0 0.0
        %1859 = vmatpush1.msra.mxu0 0.0
        %1860 = vmatprep.subr.mxu0 0.0
        %1861 = vmatpush1.msra.mxu0 0.0
        %1862 = vmatprep.subr.mxu0 0.0
        %1863 = vmatpush1.msra.mxu0 0.0
        %1864 = vmatprep.subr.mxu0 0.0
        %1865 = vmatpush1.msra.mxu0 0.0
        %1866 = vmatprep.subr.mxu0 0.0
        %1867 = vmatpush1.msra.mxu0 0.0
        %1868 = vmatprep.subr.mxu0 0.0
        %1869 = vmatpush1.msra.mxu0 0.0
        %1870 = vmatprep.subr.mxu0 0.0
        %1871 = vmatpush1.msra.mxu0 0.0
        %1872 = vmatprep.subr.mxu0 0.0
        %1873 = vmatpush1.msra.mxu0 0.0
        %1874 = vmatprep.mubr.f32.mxu0 0.0
        %1875 = vmatmul.mubr.f32.gmra.mrb[0].mxu0 %v513
        %v1876 = vpop.f32.mrb[0].mxu0
        %v1877 = vadd.f32 %v506, %v1876
        %v1878 = vpop.f32.mrb[0].mxu0
        %v1879 = vadd.f32 %v506, %v1878
        %1880 = vmatprep.mubr.f32.mxu0 0.0
        %1881 = vmatmul.mubr.f32.gmra.mrb[0].mxu0 %v516
        %v1882 = vpop.f32.mrb[0].mxu0
        %v1883 = vadd.f32 %v510, %v1882
        %v1884 = vpop.f32.mrb[0].mxu0
        %v1885 = vadd.f32 %v510, %v1884
        %1886 = vdwg.mxu0
        %v1887 = vtanh.pop %v1800
        %v1888 = vtanh.pop %v1802
        %v1889 = vtanh.pop %v1877
        %v1890 = vtanh.pop %v1879
        %v1891 = vtanh.pop %v1806
        %v1892 = vtanh.pop %v1808
        %v1893 = vtanh.pop %v1883
        %v1894 = vtanh.pop %v1885
        %1895 = vmatprep.subr.mxu0 %v1888
        %1896 = vmatpush1.msra.mxu0 %v1887
        %1897 = vmatprep.subr.mxu0 %v1892
        %1898 = vmatpush1.msra.mxu0 %v1891
        %1899 = vmatprep.subr.mxu0 0.0
        %1900 = vmatpush1.msra.mxu0 0.0
        %1901 = vmatprep.subr.mxu0 0.0
        %1902 = vmatpush1.msra.mxu0 0.0
        %1903 = vmatprep.subr.mxu0 0.0
        %1904 = vmatpush1.msra.mxu0 0.0
        %1905 = vmatprep.subr.mxu0 0.0
        %1906 = vmatpush1.msra.mxu0 0.0
        %1907 = vmatprep.subr.mxu0 0.0
        %1908 = vmatpush1.msra.mxu0 0.0
        %1909 = vmatprep.subr.mxu0 0.0
        %1910 = vmatpush1.msra.mxu0 0.0
        %1911 = vmatprep.subr.mxu0 0.0
        %1912 = vmatpush1.msra.mxu0 0.0
        %1913 = vmatprep.subr.mxu0 0.0
        %1914 = vmatpush1.msra.mxu0 0.0
        %1915 = vmatprep.subr.mxu0 0.0
        %1916 = vmatpush1.msra.mxu0 0.0
        %1917 = vmatprep.subr.mxu0 0.0
        %1918 = vmatpush1.msra.mxu0 0.0
        %1919 = vmatprep.subr.mxu0 0.0
        %1920 = vmatpush1.msra.mxu0 0.0
        %1921 = vmatprep.subr.mxu0 0.0
        %1922 = vmatpush1.msra.mxu0 0.0
        %1923 = vmatprep.subr.mxu0 0.0
        %1924 = vmatpush1.msra.mxu0 0.0
        %1925 = vmatprep.subr.mxu0 0.0
        %1926 = vmatpush1.msra.mxu0 0.0
        %1927 = vmatprep.subr.mxu0 0.0
        %1928 = vmatpush1.msra.mxu0 0.0
        %1929 = vmatprep.subr.mxu0 0.0
        %1930 = vmatpush1.msra.mxu0 0.0
        %1931 = vmatprep.subr.mxu0 0.0
        %1932 = vmatpush1.msra.mxu0 0.0
        %1933 = vmatprep.subr.mxu0 0.0
        %1934 = vmatpush1.msra.mxu0 0.0
        %1935 = vmatprep.subr.mxu0 0.0
        %1936 = vmatpush1.msra.mxu0 0.0
        %1937 = vmatprep.subr.mxu0 0.0
        %1938 = vmatpush1.msra.mxu0 0.0
        %1939 = vmatprep.subr.mxu0 0.0
        %1940 = vmatpush1.msra.mxu0 0.0
        %1941 = vmatprep.subr.mxu0 0.0
        %1942 = vmatpush1.msra.mxu0 0.0
        %1943 = vmatprep.subr.mxu0 0.0
        %1944 = vmatpush1.msra.mxu0 0.0
        %1945 = vmatprep.subr.mxu0 0.0
        %1946 = vmatpush1.msra.mxu0 0.0
        %1947 = vmatprep.subr.mxu0 0.0
        %1948 = vmatpush1.msra.mxu0 0.0
        %1949 = vmatprep.subr.mxu0 0.0
        %1950 = vmatpush1.msra.mxu0 0.0
        %1951 = vmatprep.subr.mxu0 0.0
        %1952 = vmatpush1.msra.mxu0 0.0
        %1953 = vmatprep.subr.mxu0 0.0
        %1954 = vmatpush1.msra.mxu0 0.0
        %1955 = vmatprep.subr.mxu0 0.0
        %1956 = vmatpush1.msra.mxu0 0.0
        %1957 = vmatprep.subr.mxu0 0.0
        %1958 = vmatpush1.msra.mxu0 0.0
        %1959 = vmatprep.mubr.f32.mxu0 0.0
        %1960 = vmatmul.mubr.f32.gmra.mrb[0].mxu0 %v685
        %v1961 = vpop.f32.mrb[0].mxu0
        %v1962 = vadd.f32 %v682, %v1961
        %v1963 = vpop.f32.mrb[0].mxu0
        %v1964 = vadd.f32 %v682, %v1963
        %1965 = vdwg.mxu0
        %1966 = vmatprep.subr.mxu0 %v1890
        %1967 = vmatpush1.msra.mxu0 %v1889
        %1968 = vmatprep.subr.mxu0 %v1894
        %1969 = vmatpush1.msra.mxu0 %v1893
        %1970 = vmatprep.subr.mxu0 0.0
        %1971 = vmatpush1.msra.mxu0 0.0
        %1972 = vmatprep.subr.mxu0 0.0
        %1973 = vmatpush1.msra.mxu0 0.0
        %1974 = vmatprep.subr.mxu0 0.0
        %1975 = vmatpush1.msra.mxu0 0.0
        %1976 = vmatprep.subr.mxu0 0.0
        %1977 = vmatpush1.msra.mxu0 0.0
        %1978 = vmatprep.subr.mxu0 0.0
        %1979 = vmatpush1.msra.mxu0 0.0
        %1980 = vmatprep.subr.mxu0 0.0
        %1981 = vmatpush1.msra.mxu0 0.0
        %1982 = vmatprep.subr.mxu0 0.0
        %1983 = vmatpush1.msra.mxu0 0.0
        %1984 = vmatprep.subr.mxu0 0.0
        %1985 = vmatpush1.msra.mxu0 0.0
        %1986 = vmatprep.subr.mxu0 0.0
        %1987 = vmatpush1.msra.mxu0 0.0
        %1988 = vmatprep.subr.mxu0 0.0
        %1989 = vmatpush1.msra.mxu0 0.0
        %1990 = vmatprep.subr.mxu0 0.0
        %1991 = vmatpush1.msra.mxu0 0.0
        %1992 = vmatprep.subr.mxu0 0.0
        %1993 = vmatpush1.msra.mxu0 0.0
        %1994 = vmatprep.subr.mxu0 0.0
        %1995 = vmatpush1.msra.mxu0 0.0
        %1996 = vmatprep.subr.mxu0 0.0
        %1997 = vmatpush1.msra.mxu0 0.0
        %1998 = vmatprep.subr.mxu0 0.0
        %1999 = vmatpush1.msra.mxu0 0.0
        %2000 = vmatprep.subr.mxu0 0.0
        %2001 = vmatpush1.msra.mxu0 0.0
        %2002 = vmatprep.subr.mxu0 0.0
        %2003 = vmatpush1.msra.mxu0 0.0
        %2004 = vmatprep.subr.mxu0 0.0
        %2005 = vmatpush1.msra.mxu0 0.0
        %2006 = vmatprep.subr.mxu0 0.0
        %2007 = vmatpush1.msra.mxu0 0.0
        %2008 = vmatprep.subr.mxu0 0.0
        %2009 = vmatpush1.msra.mxu0 0.0
        %2010 = vmatprep.subr.mxu0 0.0
        %2011 = vmatpush1.msra.mxu0 0.0
        %2012 = vmatprep.subr.mxu0 0.0
        %2013 = vmatpush1.msra.mxu0 0.0
        %2014 = vmatprep.subr.mxu0 0.0
        %2015 = vmatpush1.msra.mxu0 0.0
        %2016 = vmatprep.subr.mxu0 0.0
        %2017 = vmatpush1.msra.mxu0 0.0
        %2018 = vmatprep.subr.mxu0 0.0
        %2019 = vmatpush1.msra.mxu0 0.0
        %2020 = vmatprep.subr.mxu0 0.0
        %2021 = vmatpush1.msra.mxu0 0.0
        %2022 = vmatprep.subr.mxu0 0.0
        %2023 = vmatpush1.msra.mxu0 0.0
        %2024 = vmatprep.subr.mxu0 0.0
        %2025 = vmatpush1.msra.mxu0 0.0
        %2026 = vmatprep.subr.mxu0 0.0
        %2027 = vmatpush1.msra.mxu0 0.0
        %2028 = vmatprep.subr.mxu0 0.0
        %2029 = vmatpush1.msra.mxu0 0.0
        %2030 = vmatprep.mubr.f32.mxu0 0.0
        %2031 = vmatmul.mubr.f32.gmra.mrb[0].mxu0 %v685
        %v2032 = vpop.f32.mrb[0].mxu0
        %v2033 = vadd.f32 %v682, %v2032
        %v2034 = vpop.f32.mrb[0].mxu0
        %v2035 = vadd.f32 %v682, %v2034
        %2036 = vdwg.mxu0
        %v2037 = vmax.f32 %v1962, 0.0
        %v2038 = vmax.f32 %v1964, 0.0
        %v2039 = vmax.f32 %v2033, 0.0
        %v2040 = vmax.f32 %v2035, 0.0
        %v2041 = vand.u32 2147483647, %v1962
        %v2042 = vand.u32 2147483647, %v1964
        %v2043 = vand.u32 2147483647, %v2033
        %v2044 = vand.u32 2147483647, %v2035
        %v2045 = vsub.f32 0.0, %v2041
        %v2046 = vsub.f32 0.0, %v2042
        %v2047 = vsub.f32 0.0, %v2043
        %v2048 = vsub.f32 0.0, %v2044
        %v2049 = vmul.f32 %v2045, 1.442695
        %v2050 = vpow.pop %v2049
        %v2051 = vmul.f32 %v2046, 1.442695
        %v2052 = vpow.pop %v2051
        %v2053 = vmul.f32 %v2047, 1.442695
        %v2054 = vpow.pop %v2053
        %v2055 = vmul.f32 %v2048, 1.442695
        %v2056 = vpow.pop %v2055
        %v2057 = vadd.f32 %v2050, 1.0
        %v2058 = vlog2.pop %v2057
        %v2059 = vmul.f32 %v2058, 0.6931472
        %v2060 = vmul.f32 -0.5, %v2050
        %v2061 = vadd.f32 %v2060, 1.0
        %v2062 = vmul.f32 %v2061, %v2050
        %v2063 = vand.u32 2147483647, %v2050
        %vm2064 = vcmp.lt.f32.partialorder %v2063, 0.0004427343
        %v2065 = vsel %vm2064, %v2062, %v2059
        %v2066 = vadd.f32 %v2052, 1.0
        %v2067 = vlog2.pop %v2066
        %v2068 = vmul.f32 %v2067, 0.6931472
        %v2069 = vmul.f32 -0.5, %v2052
        %v2070 = vadd.f32 %v2069, 1.0
        %v2071 = vmul.f32 %v2070, %v2052
        %v2072 = vand.u32 2147483647, %v2052
        %vm2073 = vcmp.lt.f32.partialorder %v2072, 0.0004427343
        %v2074 = vsel %vm2073, %v2071, %v2068
        %v2075 = vadd.f32 %v2054, 1.0
        %v2076 = vlog2.pop %v2075
        %v2077 = vmul.f32 %v2076, 0.6931472
        %v2078 = vmul.f32 -0.5, %v2054
        %v2079 = vadd.f32 %v2078, 1.0
        %v2080 = vmul.f32 %v2079, %v2054
        %v2081 = vand.u32 2147483647, %v2054
        %vm2082 = vcmp.lt.f32.partialorder %v2081, 0.0004427343
        %v2083 = vsel %vm2082, %v2080, %v2077
        %v2084 = vadd.f32 %v2056, 1.0
        %v2085 = vlog2.pop %v2084
        %v2086 = vmul.f32 %v2085, 0.6931472
        %v2087 = vmul.f32 -0.5, %v2056
        %v2088 = vadd.f32 %v2087, 1.0
        %v2089 = vmul.f32 %v2088, %v2056
        %v2090 = vand.u32 2147483647, %v2056
        %vm2091 = vcmp.lt.f32.partialorder %v2090, 0.0004427343
        %v2092 = vsel %vm2091, %v2089, %v2086
        %v2093 = vadd.f32 %v2037, %v2065
        %v2094 = vadd.f32 %v2038, %v2074
        %v2095 = vadd.f32 %v2039, %v2083
        %v2096 = vadd.f32 %v2040, %v2092
        %v2101 = vcombine.low %v2093, %v2094
        %v2102 = vcombine.low %v2095, %v2096
        %v2104 = vunpack.c.l.s4 1966171168
        %v2105 = vunpack.c.0.s8 %v2104
        %v2106 = vlaneseq
        %v2107 = vshrl.u32 %v2106, 7
        %v2108 = vsub.s32 %v2105, %v2107
        %v2109 = vrot.slane %v2101, %v2108
        %v2111 = vunpack.c.l.s4 1966171168
        %v2112 = vunpack.c.0.s8 %v2111
        %v2113 = vlaneseq
        %v2114 = vshrl.u32 %v2113, 7
        %v2115 = vsub.s32 %v2112, %v2114
        %v2116 = vrot.slane %v2102, %v2115
        %v2117 = vcombine.low %v2109, %v2116
        %v2119 = vunpack.c.l.s4 1966171168
        %v2120 = vunpack.c.0.s8 %v2119
        %v2121 = vlaneseq
        %v2122 = vshrl.u32 %v2121, 7
        %v2123 = vsub.s32 %v2120, %v2122
        %v2124 = vrot.slane %v2117, %v2123
        %2126 = vst.msk [vmem:[%s245 + $0x8] sm:$0xf] %vm921, %v2124
        %v2127 = vld [vmem:[%s219 + $0xc] sm:$0xf]
        %v2129 = vlaneseq
        %v2130 = vshrl.u32 %v2129, 7
        %v2131 = vsub.s32 0, %v2130
        %v2132 = vrot.slane %v2127, %v2131
        %v2133 = vlaneseq
        %v2134 = vshrl.u32 %v2133, 7
        %v2135 = vsub.s32 1, %v2134
        %v2136 = vrot.slane %v2127, %v2135
        %v2137 = vlaneseq
        %v2138 = vshrl.u32 %v2137, 7
        %v2139 = vsub.s32 2, %v2138
        %v2140 = vrot.slane %v2127, %v2139
        %v2141 = vlaneseq
        %v2142 = vshrl.u32 %v2141, 7
        %v2143 = vsub.s32 3, %v2142
        %v2144 = vrot.slane %v2127, %v2143
        %v2149 = vmul.f32 %v267, %v2132
        %v2150 = vmul.f32 %v267, %v2136
        %v2151 = vmul.f32 %v267, %v2140
        %v2152 = vmul.f32 %v267, %v2144
        %v2153 = vmul.f32 %v272, %v2132
        %v2154 = vmul.f32 %v272, %v2136
        %v2155 = vmul.f32 %v272, %v2140
        %v2156 = vmul.f32 %v272, %v2144
        %v2157 = vadd.f32 %v2149, %v305
        %v2158 = vadd.f32 %v2150, %v305
        %v2159 = vadd.f32 %v2151, %v305
        %v2160 = vadd.f32 %v2152, %v305
        %v2161 = vadd.f32 %v2153, %v309
        %v2162 = vadd.f32 %v2154, %v309
        %v2163 = vadd.f32 %v2155, %v309
        %v2164 = vadd.f32 %v2156, %v309
        %v2165 = vtanh.pop %v2157
        %v2166 = vtanh.pop %v2158
        %v2167 = vtanh.pop %v2159
        %v2168 = vtanh.pop %v2160
        %v2169 = vtanh.pop %v2161
        %v2170 = vtanh.pop %v2162
        %v2171 = vtanh.pop %v2163
        %v2172 = vtanh.pop %v2164
        %2173 = vmatprep.subr.mxu0 %v2166
        %2174 = vmatpush1.msra.mxu0 %v2165
        %2175 = vmatprep.subr.mxu0 %v2170
        %2176 = vmatpush1.msra.mxu0 %v2169
        %2177 = vmatprep.subr.mxu0 0.0
        %2178 = vmatpush1.msra.mxu0 0.0
        %2179 = vmatprep.subr.mxu0 0.0
        %2180 = vmatpush1.msra.mxu0 0.0
        %2181 = vmatprep.subr.mxu0 0.0
        %2182 = vmatpush1.msra.mxu0 0.0
        %2183 = vmatprep.subr.mxu0 0.0
        %2184 = vmatpush1.msra.mxu0 0.0
        %2185 = vmatprep.subr.mxu0 0.0
        %2186 = vmatpush1.msra.mxu0 0.0
        %2187 = vmatprep.subr.mxu0 0.0
        %2188 = vmatpush1.msra.mxu0 0.0
        %2189 = vmatprep.subr.mxu0 0.0
        %2190 = vmatpush1.msra.mxu0 0.0
        %2191 = vmatprep.subr.mxu0 0.0
        %2192 = vmatpush1.msra.mxu0 0.0
        %2193 = vmatprep.subr.mxu0 0.0
        %2194 = vmatpush1.msra.mxu0 0.0
        %2195 = vmatprep.subr.mxu0 0.0
        %2196 = vmatpush1.msra.mxu0 0.0
        %2197 = vmatprep.subr.mxu0 0.0
        %2198 = vmatpush1.msra.mxu0 0.0
        %2199 = vmatprep.subr.mxu0 0.0
        %2200 = vmatpush1.msra.mxu0 0.0
        %2201 = vmatprep.subr.mxu0 0.0
        %2202 = vmatpush1.msra.mxu0 0.0
        %2203 = vmatprep.subr.mxu0 0.0
        %2204 = vmatpush1.msra.mxu0 0.0
        %2205 = vmatprep.subr.mxu0 0.0
        %2206 = vmatpush1.msra.mxu0 0.0
        %2207 = vmatprep.subr.mxu0 0.0
        %2208 = vmatpush1.msra.mxu0 0.0
        %2209 = vmatprep.subr.mxu0 0.0
        %2210 = vmatpush1.msra.mxu0 0.0
        %2211 = vmatprep.subr.mxu0 0.0
        %2212 = vmatpush1.msra.mxu0 0.0
        %2213 = vmatprep.subr.mxu0 0.0
        %2214 = vmatpush1.msra.mxu0 0.0
        %2215 = vmatprep.subr.mxu0 0.0
        %2216 = vmatpush1.msra.mxu0 0.0
        %2217 = vmatprep.subr.mxu0 0.0
        %2218 = vmatpush1.msra.mxu0 0.0
        %2219 = vmatprep.subr.mxu0 0.0
        %2220 = vmatpush1.msra.mxu0 0.0
        %2221 = vmatprep.subr.mxu0 0.0
        %2222 = vmatpush1.msra.mxu0 0.0
        %2223 = vmatprep.subr.mxu0 0.0
        %2224 = vmatpush1.msra.mxu0 0.0
        %2225 = vmatprep.subr.mxu0 0.0
        %2226 = vmatpush1.msra.mxu0 0.0
        %2227 = vmatprep.subr.mxu0 0.0
        %2228 = vmatpush1.msra.mxu0 0.0
        %2229 = vmatprep.subr.mxu0 0.0
        %2230 = vmatpush1.msra.mxu0 0.0
        %2231 = vmatprep.subr.mxu0 0.0
        %2232 = vmatpush1.msra.mxu0 0.0
        %2233 = vmatprep.subr.mxu0 0.0
        %2234 = vmatpush1.msra.mxu0 0.0
        %2235 = vmatprep.subr.mxu0 0.0
        %2236 = vmatpush1.msra.mxu0 0.0
        %2237 = vmatprep.mubr.f32.mxu0 0.0
        %2238 = vmatmul.mubr.f32.gmra.mrb[0].mxu0 %v337
        %v2239 = vpop.f32.mrb[0].mxu0
        %v2240 = vadd.f32 %v329, %v2239
        %v2241 = vpop.f32.mrb[0].mxu0
        %v2242 = vadd.f32 %v329, %v2241
        %2243 = vmatprep.mubr.f32.mxu0 0.0
        %2244 = vmatmul.mubr.f32.gmra.mrb[0].mxu0 %v340
        %v2245 = vpop.f32.mrb[0].mxu0
        %v2246 = vadd.f32 %v333, %v2245
        %v2247 = vpop.f32.mrb[0].mxu0
        %v2248 = vadd.f32 %v333, %v2247
        %2249 = vdwg.mxu0
        %2250 = vmatprep.subr.mxu0 %v2168
        %2251 = vmatpush1.msra.mxu0 %v2167
        %2252 = vmatprep.subr.mxu0 %v2172
        %2253 = vmatpush1.msra.mxu0 %v2171
        %2254 = vmatprep.subr.mxu0 0.0
        %2255 = vmatpush1.msra.mxu0 0.0
        %2256 = vmatprep.subr.mxu0 0.0
        %2257 = vmatpush1.msra.mxu0 0.0
        %2258 = vmatprep.subr.mxu0 0.0
        %2259 = vmatpush1.msra.mxu0 0.0
        %2260 = vmatprep.subr.mxu0 0.0
        %2261 = vmatpush1.msra.mxu0 0.0
        %2262 = vmatprep.subr.mxu0 0.0
        %2263 = vmatpush1.msra.mxu0 0.0
        %2264 = vmatprep.subr.mxu0 0.0
        %2265 = vmatpush1.msra.mxu0 0.0
        %2266 = vmatprep.subr.mxu0 0.0
        %2267 = vmatpush1.msra.mxu0 0.0
        %2268 = vmatprep.subr.mxu0 0.0
        %2269 = vmatpush1.msra.mxu0 0.0
        %2270 = vmatprep.subr.mxu0 0.0
        %2271 = vmatpush1.msra.mxu0 0.0
        %2272 = vmatprep.subr.mxu0 0.0
        %2273 = vmatpush1.msra.mxu0 0.0
        %2274 = vmatprep.subr.mxu0 0.0
        %2275 = vmatpush1.msra.mxu0 0.0
        %2276 = vmatprep.subr.mxu0 0.0
        %2277 = vmatpush1.msra.mxu0 0.0
        %2278 = vmatprep.subr.mxu0 0.0
        %2279 = vmatpush1.msra.mxu0 0.0
        %2280 = vmatprep.subr.mxu0 0.0
        %2281 = vmatpush1.msra.mxu0 0.0
        %2282 = vmatprep.subr.mxu0 0.0
        %2283 = vmatpush1.msra.mxu0 0.0
        %2284 = vmatprep.subr.mxu0 0.0
        %2285 = vmatpush1.msra.mxu0 0.0
        %2286 = vmatprep.subr.mxu0 0.0
        %2287 = vmatpush1.msra.mxu0 0.0
        %2288 = vmatprep.subr.mxu0 0.0
        %2289 = vmatpush1.msra.mxu0 0.0
        %2290 = vmatprep.subr.mxu0 0.0
        %2291 = vmatpush1.msra.mxu0 0.0
        %2292 = vmatprep.subr.mxu0 0.0
        %2293 = vmatpush1.msra.mxu0 0.0
        %2294 = vmatprep.subr.mxu0 0.0
        %2295 = vmatpush1.msra.mxu0 0.0
        %2296 = vmatprep.subr.mxu0 0.0
        %2297 = vmatpush1.msra.mxu0 0.0
        %2298 = vmatprep.subr.mxu0 0.0
        %2299 = vmatpush1.msra.mxu0 0.0
        %2300 = vmatprep.subr.mxu0 0.0
        %2301 = vmatpush1.msra.mxu0 0.0
        %2302 = vmatprep.subr.mxu0 0.0
        %2303 = vmatpush1.msra.mxu0 0.0
        %2304 = vmatprep.subr.mxu0 0.0
        %2305 = vmatpush1.msra.mxu0 0.0
        %2306 = vmatprep.subr.mxu0 0.0
        %2307 = vmatpush1.msra.mxu0 0.0
        %2308 = vmatprep.subr.mxu0 0.0
        %2309 = vmatpush1.msra.mxu0 0.0
        %2310 = vmatprep.subr.mxu0 0.0
        %2311 = vmatpush1.msra.mxu0 0.0
        %2312 = vmatprep.subr.mxu0 0.0
        %2313 = vmatpush1.msra.mxu0 0.0
        %2314 = vmatprep.mubr.f32.mxu0 0.0
        %2315 = vmatmul.mubr.f32.gmra.mrb[0].mxu0 %v337
        %v2316 = vpop.f32.mrb[0].mxu0
        %v2317 = vadd.f32 %v329, %v2316
        %v2318 = vpop.f32.mrb[0].mxu0
        %v2319 = vadd.f32 %v329, %v2318
        %2320 = vmatprep.mubr.f32.mxu0 0.0
        %2321 = vmatmul.mubr.f32.gmra.mrb[0].mxu0 %v340
        %v2322 = vpop.f32.mrb[0].mxu0
        %v2323 = vadd.f32 %v333, %v2322
        %v2324 = vpop.f32.mrb[0].mxu0
        %v2325 = vadd.f32 %v333, %v2324
        %2326 = vdwg.mxu0
        %v2327 = vtanh.pop %v2240
        %v2328 = vtanh.pop %v2242
        %v2329 = vtanh.pop %v2317
        %v2330 = vtanh.pop %v2319
        %v2331 = vtanh.pop %v2246
        %v2332 = vtanh.pop %v2248
        %v2333 = vtanh.pop %v2323
        %v2334 = vtanh.pop %v2325
        %2335 = vmatprep.subr.mxu0 %v2328
        %2336 = vmatpush1.msra.mxu0 %v2327
        %2337 = vmatprep.subr.mxu0 %v2332
        %2338 = vmatpush1.msra.mxu0 %v2331
        %2339 = vmatprep.subr.mxu0 0.0
        %2340 = vmatpush1.msra.mxu0 0.0
        %2341 = vmatprep.subr.mxu0 0.0
        %2342 = vmatpush1.msra.mxu0 0.0
        %2343 = vmatprep.subr.mxu0 0.0
        %2344 = vmatpush1.msra.mxu0 0.0
        %2345 = vmatprep.subr.mxu0 0.0
        %2346 = vmatpush1.msra.mxu0 0.0
        %2347 = vmatprep.subr.mxu0 0.0
        %2348 = vmatpush1.msra.mxu0 0.0
        %2349 = vmatprep.subr.mxu0 0.0
        %2350 = vmatpush1.msra.mxu0 0.0
        %2351 = vmatprep.subr.mxu0 0.0
        %2352 = vmatpush1.msra.mxu0 0.0
        %2353 = vmatprep.subr.mxu0 0.0
        %2354 = vmatpush1.msra.mxu0 0.0
        %2355 = vmatprep.subr.mxu0 0.0
        %2356 = vmatpush1.msra.mxu0 0.0
        %2357 = vmatprep.subr.mxu0 0.0
        %2358 = vmatpush1.msra.mxu0 0.0
        %2359 = vmatprep.subr.mxu0 0.0
        %2360 = vmatpush1.msra.mxu0 0.0
        %2361 = vmatprep.subr.mxu0 0.0
        %2362 = vmatpush1.msra.mxu0 0.0
        %2363 = vmatprep.subr.mxu0 0.0
        %2364 = vmatpush1.msra.mxu0 0.0
        %2365 = vmatprep.subr.mxu0 0.0
        %2366 = vmatpush1.msra.mxu0 0.0
        %2367 = vmatprep.subr.mxu0 0.0
        %2368 = vmatpush1.msra.mxu0 0.0
        %2369 = vmatprep.subr.mxu0 0.0
        %2370 = vmatpush1.msra.mxu0 0.0
        %2371 = vmatprep.subr.mxu0 0.0
        %2372 = vmatpush1.msra.mxu0 0.0
        %2373 = vmatprep.subr.mxu0 0.0
        %2374 = vmatpush1.msra.mxu0 0.0
        %2375 = vmatprep.subr.mxu0 0.0
        %2376 = vmatpush1.msra.mxu0 0.0
        %2377 = vmatprep.subr.mxu0 0.0
        %2378 = vmatpush1.msra.mxu0 0.0
        %2379 = vmatprep.subr.mxu0 0.0
        %2380 = vmatpush1.msra.mxu0 0.0
        %2381 = vmatprep.subr.mxu0 0.0
        %2382 = vmatpush1.msra.mxu0 0.0
        %2383 = vmatprep.subr.mxu0 0.0
        %2384 = vmatpush1.msra.mxu0 0.0
        %2385 = vmatprep.subr.mxu0 0.0
        %2386 = vmatpush1.msra.mxu0 0.0
        %2387 = vmatprep.subr.mxu0 0.0
        %2388 = vmatpush1.msra.mxu0 0.0
        %2389 = vmatprep.subr.mxu0 0.0
        %2390 = vmatpush1.msra.mxu0 0.0
        %2391 = vmatprep.subr.mxu0 0.0
        %2392 = vmatpush1.msra.mxu0 0.0
        %2393 = vmatprep.subr.mxu0 0.0
        %2394 = vmatpush1.msra.mxu0 0.0
        %2395 = vmatprep.subr.mxu0 0.0
        %2396 = vmatpush1.msra.mxu0 0.0
        %2397 = vmatprep.subr.mxu0 0.0
        %2398 = vmatpush1.msra.mxu0 0.0
        %2399 = vmatprep.mubr.f32.mxu0 0.0
        %2400 = vmatmul.mubr.f32.gmra.mrb[0].mxu0 %v513
        %v2401 = vpop.f32.mrb[0].mxu0
        %v2402 = vadd.f32 %v506, %v2401
        %v2403 = vpop.f32.mrb[0].mxu0
        %v2404 = vadd.f32 %v506, %v2403
        %2405 = vmatprep.mubr.f32.mxu0 0.0
        %2406 = vmatmul.mubr.f32.gmra.mrb[0].mxu0 %v516
        %v2407 = vpop.f32.mrb[0].mxu0
        %v2408 = vadd.f32 %v510, %v2407
        %v2409 = vpop.f32.mrb[0].mxu0
        %v2410 = vadd.f32 %v510, %v2409
        %2411 = vdwg.mxu0
        %2412 = vmatprep.subr.mxu0 %v2330
        %2413 = vmatpush1.msra.mxu0 %v2329
        %2414 = vmatprep.subr.mxu0 %v2334
        %2415 = vmatpush1.msra.mxu0 %v2333
        %2416 = vmatprep.subr.mxu0 0.0
        %2417 = vmatpush1.msra.mxu0 0.0
        %2418 = vmatprep.subr.mxu0 0.0
        %2419 = vmatpush1.msra.mxu0 0.0
        %2420 = vmatprep.subr.mxu0 0.0
        %2421 = vmatpush1.msra.mxu0 0.0
        %2422 = vmatprep.subr.mxu0 0.0
        %2423 = vmatpush1.msra.mxu0 0.0
        %2424 = vmatprep.subr.mxu0 0.0
        %2425 = vmatpush1.msra.mxu0 0.0
        %2426 = vmatprep.subr.mxu0 0.0
        %2427 = vmatpush1.msra.mxu0 0.0
        %2428 = vmatprep.subr.mxu0 0.0
        %2429 = vmatpush1.msra.mxu0 0.0
        %2430 = vmatprep.subr.mxu0 0.0
        %2431 = vmatpush1.msra.mxu0 0.0
        %2432 = vmatprep.subr.mxu0 0.0
        %2433 = vmatpush1.msra.mxu0 0.0
        %2434 = vmatprep.subr.mxu0 0.0
        %2435 = vmatpush1.msra.mxu0 0.0
        %2436 = vmatprep.subr.mxu0 0.0
        %2437 = vmatpush1.msra.mxu0 0.0
        %2438 = vmatprep.subr.mxu0 0.0
        %2439 = vmatpush1.msra.mxu0 0.0
        %2440 = vmatprep.subr.mxu0 0.0
        %2441 = vmatpush1.msra.mxu0 0.0
        %2442 = vmatprep.subr.mxu0 0.0
        %2443 = vmatpush1.msra.mxu0 0.0
        %2444 = vmatprep.subr.mxu0 0.0
        %2445 = vmatpush1.msra.mxu0 0.0
        %2446 = vmatprep.subr.mxu0 0.0
        %2447 = vmatpush1.msra.mxu0 0.0
        %2448 = vmatprep.subr.mxu0 0.0
        %2449 = vmatpush1.msra.mxu0 0.0
        %2450 = vmatprep.subr.mxu0 0.0
        %2451 = vmatpush1.msra.mxu0 0.0
        %2452 = vmatprep.subr.mxu0 0.0
        %2453 = vmatpush1.msra.mxu0 0.0
        %2454 = vmatprep.subr.mxu0 0.0
        %2455 = vmatpush1.msra.mxu0 0.0
        %2456 = vmatprep.subr.mxu0 0.0
        %2457 = vmatpush1.msra.mxu0 0.0
        %2458 = vmatprep.subr.mxu0 0.0
        %2459 = vmatpush1.msra.mxu0 0.0
        %2460 = vmatprep.subr.mxu0 0.0
        %2461 = vmatpush1.msra.mxu0 0.0
        %2462 = vmatprep.subr.mxu0 0.0
        %2463 = vmatpush1.msra.mxu0 0.0
        %2464 = vmatprep.subr.mxu0 0.0
        %2465 = vmatpush1.msra.mxu0 0.0
        %2466 = vmatprep.subr.mxu0 0.0
        %2467 = vmatpush1.msra.mxu0 0.0
        %2468 = vmatprep.subr.mxu0 0.0
        %2469 = vmatpush1.msra.mxu0 0.0
        %2470 = vmatprep.subr.mxu0 0.0
        %2471 = vmatpush1.msra.mxu0 0.0
        %2472 = vmatprep.subr.mxu0 0.0
        %2473 = vmatpush1.msra.mxu0 0.0
        %2474 = vmatprep.subr.mxu0 0.0
        %2475 = vmatpush1.msra.mxu0 0.0
        %2476 = vmatprep.mubr.f32.mxu0 0.0
        %2477 = vmatmul.mubr.f32.gmra.mrb[0].mxu0 %v513
        %v2478 = vpop.f32.mrb[0].mxu0
        %v2479 = vadd.f32 %v506, %v2478
        %v2480 = vpop.f32.mrb[0].mxu0
        %v2481 = vadd.f32 %v506, %v2480
        %2482 = vmatprep.mubr.f32.mxu0 0.0
        %2483 = vmatmul.mubr.f32.gmra.mrb[0].mxu0 %v516
        %v2484 = vpop.f32.mrb[0].mxu0
        %v2485 = vadd.f32 %v510, %v2484
        %v2486 = vpop.f32.mrb[0].mxu0
        %v2487 = vadd.f32 %v510, %v2486
        %2488 = vdwg.mxu0
        %v2489 = vtanh.pop %v2402
        %v2490 = vtanh.pop %v2404
        %v2491 = vtanh.pop %v2479
        %v2492 = vtanh.pop %v2481
        %v2493 = vtanh.pop %v2408
        %v2494 = vtanh.pop %v2410
        %v2495 = vtanh.pop %v2485
        %v2496 = vtanh.pop %v2487
        %2497 = vmatprep.subr.mxu0 %v2490
        %2498 = vmatpush1.msra.mxu0 %v2489
        %2499 = vmatprep.subr.mxu0 %v2494
        %2500 = vmatpush1.msra.mxu0 %v2493
        %2501 = vmatprep.subr.mxu0 0.0
        %2502 = vmatpush1.msra.mxu0 0.0
        %2503 = vmatprep.subr.mxu0 0.0
        %2504 = vmatpush1.msra.mxu0 0.0
        %2505 = vmatprep.subr.mxu0 0.0
        %2506 = vmatpush1.msra.mxu0 0.0
        %2507 = vmatprep.subr.mxu0 0.0
        %2508 = vmatpush1.msra.mxu0 0.0
        %2509 = vmatprep.subr.mxu0 0.0
        %2510 = vmatpush1.msra.mxu0 0.0
        %2511 = vmatprep.subr.mxu0 0.0
        %2512 = vmatpush1.msra.mxu0 0.0
        %2513 = vmatprep.subr.mxu0 0.0
        %2514 = vmatpush1.msra.mxu0 0.0
        %2515 = vmatprep.subr.mxu0 0.0
        %2516 = vmatpush1.msra.mxu0 0.0
        %2517 = vmatprep.subr.mxu0 0.0
        %2518 = vmatpush1.msra.mxu0 0.0
        %2519 = vmatprep.subr.mxu0 0.0
        %2520 = vmatpush1.msra.mxu0 0.0
        %2521 = vmatprep.subr.mxu0 0.0
        %2522 = vmatpush1.msra.mxu0 0.0
        %2523 = vmatprep.subr.mxu0 0.0
        %2524 = vmatpush1.msra.mxu0 0.0
        %2525 = vmatprep.subr.mxu0 0.0
        %2526 = vmatpush1.msra.mxu0 0.0
        %2527 = vmatprep.subr.mxu0 0.0
        %2528 = vmatpush1.msra.mxu0 0.0
        %2529 = vmatprep.subr.mxu0 0.0
        %2530 = vmatpush1.msra.mxu0 0.0
        %2531 = vmatprep.subr.mxu0 0.0
        %2532 = vmatpush1.msra.mxu0 0.0
        %2533 = vmatprep.subr.mxu0 0.0
        %2534 = vmatpush1.msra.mxu0 0.0
        %2535 = vmatprep.subr.mxu0 0.0
        %2536 = vmatpush1.msra.mxu0 0.0
        %2537 = vmatprep.subr.mxu0 0.0
        %2538 = vmatpush1.msra.mxu0 0.0
        %2539 = vmatprep.subr.mxu0 0.0
        %2540 = vmatpush1.msra.mxu0 0.0
        %2541 = vmatprep.subr.mxu0 0.0
        %2542 = vmatpush1.msra.mxu0 0.0
        %2543 = vmatprep.subr.mxu0 0.0
        %2544 = vmatpush1.msra.mxu0 0.0
        %2545 = vmatprep.subr.mxu0 0.0
        %2546 = vmatpush1.msra.mxu0 0.0
        %2547 = vmatprep.subr.mxu0 0.0
        %2548 = vmatpush1.msra.mxu0 0.0
        %2549 = vmatprep.subr.mxu0 0.0
        %2550 = vmatpush1.msra.mxu0 0.0
        %2551 = vmatprep.subr.mxu0 0.0
        %2552 = vmatpush1.msra.mxu0 0.0
        %2553 = vmatprep.subr.mxu0 0.0
        %2554 = vmatpush1.msra.mxu0 0.0
        %2555 = vmatprep.subr.mxu0 0.0
        %2556 = vmatpush1.msra.mxu0 0.0
        %2557 = vmatprep.subr.mxu0 0.0
        %2558 = vmatpush1.msra.mxu0 0.0
        %2559 = vmatprep.subr.mxu0 0.0
        %2560 = vmatpush1.msra.mxu0 0.0
        %2561 = vmatprep.mubr.f32.mxu0 0.0
        %2562 = vmatmul.mubr.f32.gmra.mrb[0].mxu0 %v685
        %v2563 = vpop.f32.mrb[0].mxu0
        %v2564 = vadd.f32 %v682, %v2563
        %v2565 = vpop.f32.mrb[0].mxu0
        %v2566 = vadd.f32 %v682, %v2565
        %2567 = vdwg.mxu0
        %2568 = vmatprep.subr.mxu0 %v2492
        %2569 = vmatpush1.msra.mxu0 %v2491
        %2570 = vmatprep.subr.mxu0 %v2496
        %2571 = vmatpush1.msra.mxu0 %v2495
        %2572 = vmatprep.subr.mxu0 0.0
        %2573 = vmatpush1.msra.mxu0 0.0
        %2574 = vmatprep.subr.mxu0 0.0
        %2575 = vmatpush1.msra.mxu0 0.0
        %2576 = vmatprep.subr.mxu0 0.0
        %2577 = vmatpush1.msra.mxu0 0.0
        %2578 = vmatprep.subr.mxu0 0.0
        %2579 = vmatpush1.msra.mxu0 0.0
        %2580 = vmatprep.subr.mxu0 0.0
        %2581 = vmatpush1.msra.mxu0 0.0
        %2582 = vmatprep.subr.mxu0 0.0
        %2583 = vmatpush1.msra.mxu0 0.0
        %2584 = vmatprep.subr.mxu0 0.0
        %2585 = vmatpush1.msra.mxu0 0.0
        %2586 = vmatprep.subr.mxu0 0.0
        %2587 = vmatpush1.msra.mxu0 0.0
        %2588 = vmatprep.subr.mxu0 0.0
        %2589 = vmatpush1.msra.mxu0 0.0
        %2590 = vmatprep.subr.mxu0 0.0
        %2591 = vmatpush1.msra.mxu0 0.0
        %2592 = vmatprep.subr.mxu0 0.0
        %2593 = vmatpush1.msra.mxu0 0.0
        %2594 = vmatprep.subr.mxu0 0.0
        %2595 = vmatpush1.msra.mxu0 0.0
        %2596 = vmatprep.subr.mxu0 0.0
        %2597 = vmatpush1.msra.mxu0 0.0
        %2598 = vmatprep.subr.mxu0 0.0
        %2599 = vmatpush1.msra.mxu0 0.0
        %2600 = vmatprep.subr.mxu0 0.0
        %2601 = vmatpush1.msra.mxu0 0.0
        %2602 = vmatprep.subr.mxu0 0.0
        %2603 = vmatpush1.msra.mxu0 0.0
        %2604 = vmatprep.subr.mxu0 0.0
        %2605 = vmatpush1.msra.mxu0 0.0
        %2606 = vmatprep.subr.mxu0 0.0
        %2607 = vmatpush1.msra.mxu0 0.0
        %2608 = vmatprep.subr.mxu0 0.0
        %2609 = vmatpush1.msra.mxu0 0.0
        %2610 = vmatprep.subr.mxu0 0.0
        %2611 = vmatpush1.msra.mxu0 0.0
        %2612 = vmatprep.subr.mxu0 0.0
        %2613 = vmatpush1.msra.mxu0 0.0
        %2614 = vmatprep.subr.mxu0 0.0
        %2615 = vmatpush1.msra.mxu0 0.0
        %2616 = vmatprep.subr.mxu0 0.0
        %2617 = vmatpush1.msra.mxu0 0.0
        %2618 = vmatprep.subr.mxu0 0.0
        %2619 = vmatpush1.msra.mxu0 0.0
        %2620 = vmatprep.subr.mxu0 0.0
        %2621 = vmatpush1.msra.mxu0 0.0
        %2622 = vmatprep.subr.mxu0 0.0
        %2623 = vmatpush1.msra.mxu0 0.0
        %2624 = vmatprep.subr.mxu0 0.0
        %2625 = vmatpush1.msra.mxu0 0.0
        %2626 = vmatprep.subr.mxu0 0.0
        %2627 = vmatpush1.msra.mxu0 0.0
        %2628 = vmatprep.subr.mxu0 0.0
        %2629 = vmatpush1.msra.mxu0 0.0
        %2630 = vmatprep.subr.mxu0 0.0
        %2631 = vmatpush1.msra.mxu0 0.0
        %2632 = vmatprep.mubr.f32.mxu0 0.0
        %2633 = vmatmul.mubr.f32.gmra.mrb[0].mxu0 %v685
        %v2634 = vpop.f32.mrb[0].mxu0
        %v2635 = vadd.f32 %v682, %v2634
        %v2636 = vpop.f32.mrb[0].mxu0
        %v2637 = vadd.f32 %v682, %v2636
        %2638 = vdwg.mxu0
        %v2639 = vmax.f32 %v2564, 0.0
        %v2640 = vmax.f32 %v2566, 0.0
        %v2641 = vmax.f32 %v2635, 0.0
        %v2642 = vmax.f32 %v2637, 0.0
        %v2643 = vand.u32 2147483647, %v2564
        %v2644 = vand.u32 2147483647, %v2566
        %v2645 = vand.u32 2147483647, %v2635
        %v2646 = vand.u32 2147483647, %v2637
        %v2647 = vsub.f32 0.0, %v2643
        %v2648 = vsub.f32 0.0, %v2644
        %v2649 = vsub.f32 0.0, %v2645
        %v2650 = vsub.f32 0.0, %v2646
        %v2651 = vmul.f32 %v2647, 1.442695
        %v2652 = vpow.pop %v2651
        %v2653 = vmul.f32 %v2648, 1.442695
        %v2654 = vpow.pop %v2653
        %v2655 = vmul.f32 %v2649, 1.442695
        %v2656 = vpow.pop %v2655
        %v2657 = vmul.f32 %v2650, 1.442695
        %v2658 = vpow.pop %v2657
        %v2659 = vadd.f32 %v2652, 1.0
        %v2660 = vlog2.pop %v2659
        %v2661 = vmul.f32 %v2660, 0.6931472
        %v2662 = vmul.f32 -0.5, %v2652
        %v2663 = vadd.f32 %v2662, 1.0
        %v2664 = vmul.f32 %v2663, %v2652
        %v2665 = vand.u32 2147483647, %v2652
        %vm2666 = vcmp.lt.f32.partialorder %v2665, 0.0004427343
        %v2667 = vsel %vm2666, %v2664, %v2661
        %v2668 = vadd.f32 %v2654, 1.0
        %v2669 = vlog2.pop %v2668
        %v2670 = vmul.f32 %v2669, 0.6931472
        %v2671 = vmul.f32 -0.5, %v2654
        %v2672 = vadd.f32 %v2671, 1.0
        %v2673 = vmul.f32 %v2672, %v2654
        %v2674 = vand.u32 2147483647, %v2654
        %vm2675 = vcmp.lt.f32.partialorder %v2674, 0.0004427343
        %v2676 = vsel %vm2675, %v2673, %v2670
        %v2677 = vadd.f32 %v2656, 1.0
        %v2678 = vlog2.pop %v2677
        %v2679 = vmul.f32 %v2678, 0.6931472
        %v2680 = vmul.f32 -0.5, %v2656
        %v2681 = vadd.f32 %v2680, 1.0
        %v2682 = vmul.f32 %v2681, %v2656
        %v2683 = vand.u32 2147483647, %v2656
        %vm2684 = vcmp.lt.f32.partialorder %v2683, 0.0004427343
        %v2685 = vsel %vm2684, %v2682, %v2679
        %v2686 = vadd.f32 %v2658, 1.0
        %v2687 = vlog2.pop %v2686
        %v2688 = vmul.f32 %v2687, 0.6931472
        %v2689 = vmul.f32 -0.5, %v2658
        %v2690 = vadd.f32 %v2689, 1.0
        %v2691 = vmul.f32 %v2690, %v2658
        %v2692 = vand.u32 2147483647, %v2658
        %vm2693 = vcmp.lt.f32.partialorder %v2692, 0.0004427343
        %v2694 = vsel %vm2693, %v2691, %v2688
        %v2695 = vadd.f32 %v2639, %v2667
        %v2696 = vadd.f32 %v2640, %v2676
        %v2697 = vadd.f32 %v2641, %v2685
        %v2698 = vadd.f32 %v2642, %v2694
        %v2703 = vcombine.low %v2695, %v2696
        %v2704 = vcombine.low %v2697, %v2698
        %v2706 = vunpack.c.l.s4 1966171168
        %v2707 = vunpack.c.0.s8 %v2706
        %v2708 = vlaneseq
        %v2709 = vshrl.u32 %v2708, 7
        %v2710 = vsub.s32 %v2707, %v2709
        %v2711 = vrot.slane %v2703, %v2710
        %v2713 = vunpack.c.l.s4 1966171168
        %v2714 = vunpack.c.0.s8 %v2713
        %v2715 = vlaneseq
        %v2716 = vshrl.u32 %v2715, 7
        %v2717 = vsub.s32 %v2714, %v2716
        %v2718 = vrot.slane %v2704, %v2717
        %v2719 = vcombine.low %v2711, %v2718
        %v2721 = vunpack.c.l.s4 1966171168
        %v2722 = vunpack.c.0.s8 %v2721
        %v2723 = vlaneseq
        %v2724 = vshrl.u32 %v2723, 7
        %v2725 = vsub.s32 %v2722, %v2724
        %v2726 = vrot.slane %v2719, %v2725
        %2728 = vst.msk [vmem:[%s245 + $0xc] sm:$0xf] %vm921, %v2726
        %v2729 = vld [vmem:[%s219 + $0x10] sm:$0xf]
        %v2731 = vlaneseq
        %v2732 = vshrl.u32 %v2731, 7
        %v2733 = vsub.s32 0, %v2732
        %v2734 = vrot.slane %v2729, %v2733
        %v2735 = vlaneseq
        %v2736 = vshrl.u32 %v2735, 7
        %v2737 = vsub.s32 1, %v2736
        %v2738 = vrot.slane %v2729, %v2737
        %v2739 = vlaneseq
        %v2740 = vshrl.u32 %v2739, 7
        %v2741 = vsub.s32 2, %v2740
        %v2742 = vrot.slane %v2729, %v2741
        %v2743 = vlaneseq
        %v2744 = vshrl.u32 %v2743, 7
        %v2745 = vsub.s32 3, %v2744
        %v2746 = vrot.slane %v2729, %v2745
        %v2751 = vmul.f32 %v267, %v2734
        %v2752 = vmul.f32 %v267, %v2738
        %v2753 = vmul.f32 %v267, %v2742
        %v2754 = vmul.f32 %v267, %v2746
        %v2755 = vmul.f32 %v272, %v2734
        %v2756 = vmul.f32 %v272, %v2738
        %v2757 = vmul.f32 %v272, %v2742
        %v2758 = vmul.f32 %v272, %v2746
        %v2759 = vadd.f32 %v2751, %v305
        %v2760 = vadd.f32 %v2752, %v305
        %v2761 = vadd.f32 %v2753, %v305
        %v2762 = vadd.f32 %v2754, %v305
        %v2763 = vadd.f32 %v2755, %v309
        %v2764 = vadd.f32 %v2756, %v309
        %v2765 = vadd.f32 %v2757, %v309
        %v2766 = vadd.f32 %v2758, %v309
        %v2767 = vtanh.pop %v2759
        %v2768 = vtanh.pop %v2760
        %v2769 = vtanh.pop %v2761
        %v2770 = vtanh.pop %v2762
        %v2771 = vtanh.pop %v2763
        %v2772 = vtanh.pop %v2764
        %v2773 = vtanh.pop %v2765
        %v2774 = vtanh.pop %v2766
        %2775 = vmatprep.subr.mxu0 %v2768
        %2776 = vmatpush1.msra.mxu0 %v2767
        %2777 = vmatprep.subr.mxu0 %v2772
        %2778 = vmatpush1.msra.mxu0 %v2771
        %2779 = vmatprep.subr.mxu0 0.0
        %2780 = vmatpush1.msra.mxu0 0.0
        %2781 = vmatprep.subr.mxu0 0.0
        %2782 = vmatpush1.msra.mxu0 0.0
        %2783 = vmatprep.subr.mxu0 0.0
        %2784 = vmatpush1.msra.mxu0 0.0
        %2785 = vmatprep.subr.mxu0 0.0
        %2786 = vmatpush1.msra.mxu0 0.0
        %2787 = vmatprep.subr.mxu0 0.0
        %2788 = vmatpush1.msra.mxu0 0.0
        %2789 = vmatprep.subr.mxu0 0.0
        %2790 = vmatpush1.msra.mxu0 0.0
        %2791 = vmatprep.subr.mxu0 0.0
        %2792 = vmatpush1.msra.mxu0 0.0
        %2793 = vmatprep.subr.mxu0 0.0
        %2794 = vmatpush1.msra.mxu0 0.0
        %2795 = vmatprep.subr.mxu0 0.0
        %2796 = vmatpush1.msra.mxu0 0.0
        %2797 = vmatprep.subr.mxu0 0.0
        %2798 = vmatpush1.msra.mxu0 0.0
        %2799 = vmatprep.subr.mxu0 0.0
        %2800 = vmatpush1.msra.mxu0 0.0
        %2801 = vmatprep.subr.mxu0 0.0
        %2802 = vmatpush1.msra.mxu0 0.0
        %2803 = vmatprep.subr.mxu0 0.0
        %2804 = vmatpush1.msra.mxu0 0.0
        %2805 = vmatprep.subr.mxu0 0.0
        %2806 = vmatpush1.msra.mxu0 0.0
        %2807 = vmatprep.subr.mxu0 0.0
        %2808 = vmatpush1.msra.mxu0 0.0
        %2809 = vmatprep.subr.mxu0 0.0
        %2810 = vmatpush1.msra.mxu0 0.0
        %2811 = vmatprep.subr.mxu0 0.0
        %2812 = vmatpush1.msra.mxu0 0.0
        %2813 = vmatprep.subr.mxu0 0.0
        %2814 = vmatpush1.msra.mxu0 0.0
        %2815 = vmatprep.subr.mxu0 0.0
        %2816 = vmatpush1.msra.mxu0 0.0
        %2817 = vmatprep.subr.mxu0 0.0
        %2818 = vmatpush1.msra.mxu0 0.0
        %2819 = vmatprep.subr.mxu0 0.0
        %2820 = vmatpush1.msra.mxu0 0.0
        %2821 = vmatprep.subr.mxu0 0.0
        %2822 = vmatpush1.msra.mxu0 0.0
        %2823 = vmatprep.subr.mxu0 0.0
        %2824 = vmatpush1.msra.mxu0 0.0
        %2825 = vmatprep.subr.mxu0 0.0
        %2826 = vmatpush1.msra.mxu0 0.0
        %2827 = vmatprep.subr.mxu0 0.0
        %2828 = vmatpush1.msra.mxu0 0.0
        %2829 = vmatprep.subr.mxu0 0.0
        %2830 = vmatpush1.msra.mxu0 0.0
        %2831 = vmatprep.subr.mxu0 0.0
        %2832 = vmatpush1.msra.mxu0 0.0
        %2833 = vmatprep.subr.mxu0 0.0
        %2834 = vmatpush1.msra.mxu0 0.0
        %2835 = vmatprep.subr.mxu0 0.0
        %2836 = vmatpush1.msra.mxu0 0.0
        %2837 = vmatprep.subr.mxu0 0.0
        %2838 = vmatpush1.msra.mxu0 0.0
        %2839 = vmatprep.mubr.f32.mxu0 0.0
        %2840 = vmatmul.mubr.f32.gmra.mrb[0].mxu0 %v337
        %v2841 = vpop.f32.mrb[0].mxu0
        %v2842 = vadd.f32 %v329, %v2841
        %v2843 = vpop.f32.mrb[0].mxu0
        %v2844 = vadd.f32 %v329, %v2843
        %2845 = vmatprep.mubr.f32.mxu0 0.0
        %2846 = vmatmul.mubr.f32.gmra.mrb[0].mxu0 %v340
        %v2847 = vpop.f32.mrb[0].mxu0
        %v2848 = vadd.f32 %v333, %v2847
        %v2849 = vpop.f32.mrb[0].mxu0
        %v2850 = vadd.f32 %v333, %v2849
        %2851 = vdwg.mxu0
        %2852 = vmatprep.subr.mxu0 %v2770
        %2853 = vmatpush1.msra.mxu0 %v2769
        %2854 = vmatprep.subr.mxu0 %v2774
        %2855 = vmatpush1.msra.mxu0 %v2773
        %2856 = vmatprep.subr.mxu0 0.0
        %2857 = vmatpush1.msra.mxu0 0.0
        %2858 = vmatprep.subr.mxu0 0.0
        %2859 = vmatpush1.msra.mxu0 0.0
        %2860 = vmatprep.subr.mxu0 0.0
        %2861 = vmatpush1.msra.mxu0 0.0
        %2862 = vmatprep.subr.mxu0 0.0
        %2863 = vmatpush1.msra.mxu0 0.0
        %2864 = vmatprep.subr.mxu0 0.0
        %2865 = vmatpush1.msra.mxu0 0.0
        %2866 = vmatprep.subr.mxu0 0.0
        %2867 = vmatpush1.msra.mxu0 0.0
        %2868 = vmatprep.subr.mxu0 0.0
        %2869 = vmatpush1.msra.mxu0 0.0
        %2870 = vmatprep.subr.mxu0 0.0
        %2871 = vmatpush1.msra.mxu0 0.0
        %2872 = vmatprep.subr.mxu0 0.0
        %2873 = vmatpush1.msra.mxu0 0.0
        %2874 = vmatprep.subr.mxu0 0.0
        %2875 = vmatpush1.msra.mxu0 0.0
        %2876 = vmatprep.subr.mxu0 0.0
        %2877 = vmatpush1.msra.mxu0 0.0
        %2878 = vmatprep.subr.mxu0 0.0
        %2879 = vmatpush1.msra.mxu0 0.0
        %2880 = vmatprep.subr.mxu0 0.0
        %2881 = vmatpush1.msra.mxu0 0.0
        %2882 = vmatprep.subr.mxu0 0.0
        %2883 = vmatpush1.msra.mxu0 0.0
        %2884 = vmatprep.subr.mxu0 0.0
        %2885 = vmatpush1.msra.mxu0 0.0
        %2886 = vmatprep.subr.mxu0 0.0
        %2887 = vmatpush1.msra.mxu0 0.0
        %2888 = vmatprep.subr.mxu0 0.0
        %2889 = vmatpush1.msra.mxu0 0.0
        %2890 = vmatprep.subr.mxu0 0.0
        %2891 = vmatpush1.msra.mxu0 0.0
        %2892 = vmatprep.subr.mxu0 0.0
        %2893 = vmatpush1.msra.mxu0 0.0
        %2894 = vmatprep.subr.mxu0 0.0
        %2895 = vmatpush1.msra.mxu0 0.0
        %2896 = vmatprep.subr.mxu0 0.0
        %2897 = vmatpush1.msra.mxu0 0.0
        %2898 = vmatprep.subr.mxu0 0.0
        %2899 = vmatpush1.msra.mxu0 0.0
        %2900 = vmatprep.subr.mxu0 0.0
        %2901 = vmatpush1.msra.mxu0 0.0
        %2902 = vmatprep.subr.mxu0 0.0
        %2903 = vmatpush1.msra.mxu0 0.0
        %2904 = vmatprep.subr.mxu0 0.0
        %2905 = vmatpush1.msra.mxu0 0.0
        %2906 = vmatprep.subr.mxu0 0.0
        %2907 = vmatpush1.msra.mxu0 0.0
        %2908 = vmatprep.subr.mxu0 0.0
        %2909 = vmatpush1.msra.mxu0 0.0
        %2910 = vmatprep.subr.mxu0 0.0
        %2911 = vmatpush1.msra.mxu0 0.0
        %2912 = vmatprep.subr.mxu0 0.0
        %2913 = vmatpush1.msra.mxu0 0.0
        %2914 = vmatprep.subr.mxu0 0.0
        %2915 = vmatpush1.msra.mxu0 0.0
        %2916 = vmatprep.mubr.f32.mxu0 0.0
        %2917 = vmatmul.mubr.f32.gmra.mrb[0].mxu0 %v337
        %v2918 = vpop.f32.mrb[0].mxu0
        %v2919 = vadd.f32 %v329, %v2918
        %v2920 = vpop.f32.mrb[0].mxu0
        %v2921 = vadd.f32 %v329, %v2920
        %2922 = vmatprep.mubr.f32.mxu0 0.0
        %2923 = vmatmul.mubr.f32.gmra.mrb[0].mxu0 %v340
        %v2924 = vpop.f32.mrb[0].mxu0
        %v2925 = vadd.f32 %v333, %v2924
        %v2926 = vpop.f32.mrb[0].mxu0
        %v2927 = vadd.f32 %v333, %v2926
        %2928 = vdwg.mxu0
        %v2929 = vtanh.pop %v2842
        %v2930 = vtanh.pop %v2844
        %v2931 = vtanh.pop %v2919
        %v2932 = vtanh.pop %v2921
        %v2933 = vtanh.pop %v2848
        %v2934 = vtanh.pop %v2850
        %v2935 = vtanh.pop %v2925
        %v2936 = vtanh.pop %v2927
        %2937 = vmatprep.subr.mxu0 %v2930
        %2938 = vmatpush1.msra.mxu0 %v2929
        %2939 = vmatprep.subr.mxu0 %v2934
        %2940 = vmatpush1.msra.mxu0 %v2933
        %2941 = vmatprep.subr.mxu0 0.0
        %2942 = vmatpush1.msra.mxu0 0.0
        %2943 = vmatprep.subr.mxu0 0.0
        %2944 = vmatpush1.msra.mxu0 0.0
        %2945 = vmatprep.subr.mxu0 0.0
        %2946 = vmatpush1.msra.mxu0 0.0
        %2947 = vmatprep.subr.mxu0 0.0
        %2948 = vmatpush1.msra.mxu0 0.0
        %2949 = vmatprep.subr.mxu0 0.0
        %2950 = vmatpush1.msra.mxu0 0.0
        %2951 = vmatprep.subr.mxu0 0.0
        %2952 = vmatpush1.msra.mxu0 0.0
        %2953 = vmatprep.subr.mxu0 0.0
        %2954 = vmatpush1.msra.mxu0 0.0
        %2955 = vmatprep.subr.mxu0 0.0
        %2956 = vmatpush1.msra.mxu0 0.0
        %2957 = vmatprep.subr.mxu0 0.0
        %2958 = vmatpush1.msra.mxu0 0.0
        %2959 = vmatprep.subr.mxu0 0.0
        %2960 = vmatpush1.msra.mxu0 0.0
        %2961 = vmatprep.subr.mxu0 0.0
        %2962 = vmatpush1.msra.mxu0 0.0
        %2963 = vmatprep.subr.mxu0 0.0
        %2964 = vmatpush1.msra.mxu0 0.0
        %2965 = vmatprep.subr.mxu0 0.0
        %2966 = vmatpush1.msra.mxu0 0.0
        %2967 = vmatprep.subr.mxu0 0.0
        %2968 = vmatpush1.msra.mxu0 0.0
        %2969 = vmatprep.subr.mxu0 0.0
        %2970 = vmatpush1.msra.mxu0 0.0
        %2971 = vmatprep.subr.mxu0 0.0
        %2972 = vmatpush1.msra.mxu0 0.0
        %2973 = vmatprep.subr.mxu0 0.0
        %2974 = vmatpush1.msra.mxu0 0.0
        %2975 = vmatprep.subr.mxu0 0.0
        %2976 = vmatpush1.msra.mxu0 0.0
        %2977 = vmatprep.subr.mxu0 0.0
        %2978 = vmatpush1.msra.mxu0 0.0
        %2979 = vmatprep.subr.mxu0 0.0
        %2980 = vmatpush1.msra.mxu0 0.0
        %2981 = vmatprep.subr.mxu0 0.0
        %2982 = vmatpush1.msra.mxu0 0.0
        %2983 = vmatprep.subr.mxu0 0.0
        %2984 = vmatpush1.msra.mxu0 0.0
        %2985 = vmatprep.subr.mxu0 0.0
        %2986 = vmatpush1.msra.mxu0 0.0
        %2987 = vmatprep.subr.mxu0 0.0
        %2988 = vmatpush1.msra.mxu0 0.0
        %2989 = vmatprep.subr.mxu0 0.0
        %2990 = vmatpush1.msra.mxu0 0.0
        %2991 = vmatprep.subr.mxu0 0.0
        %2992 = vmatpush1.msra.mxu0 0.0
        %2993 = vmatprep.subr.mxu0 0.0
        %2994 = vmatpush1.msra.mxu0 0.0
        %2995 = vmatprep.subr.mxu0 0.0
        %2996 = vmatpush1.msra.mxu0 0.0
        %2997 = vmatprep.subr.mxu0 0.0
        %2998 = vmatpush1.msra.mxu0 0.0
        %2999 = vmatprep.subr.mxu0 0.0
        %3000 = vmatpush1.msra.mxu0 0.0
        %3001 = vmatprep.mubr.f32.mxu0 0.0
        %3002 = vmatmul.mubr.f32.gmra.mrb[0].mxu0 %v513
        %v3003 = vpop.f32.mrb[0].mxu0
        %v3004 = vadd.f32 %v506, %v3003
        %v3005 = vpop.f32.mrb[0].mxu0
        %v3006 = vadd.f32 %v506, %v3005
        %3007 = vmatprep.mubr.f32.mxu0 0.0
        %3008 = vmatmul.mubr.f32.gmra.mrb[0].mxu0 %v516
        %v3009 = vpop.f32.mrb[0].mxu0
        %v3010 = vadd.f32 %v510, %v3009
        %v3011 = vpop.f32.mrb[0].mxu0
        %v3012 = vadd.f32 %v510, %v3011
        %3013 = vdwg.mxu0
        %3014 = vmatprep.subr.mxu0 %v2932
        %3015 = vmatpush1.msra.mxu0 %v2931
        %3016 = vmatprep.subr.mxu0 %v2936
        %3017 = vmatpush1.msra.mxu0 %v2935
        %3018 = vmatprep.subr.mxu0 0.0
        %3019 = vmatpush1.msra.mxu0 0.0
        %3020 = vmatprep.subr.mxu0 0.0
        %3021 = vmatpush1.msra.mxu0 0.0
        %3022 = vmatprep.subr.mxu0 0.0
        %3023 = vmatpush1.msra.mxu0 0.0
        %3024 = vmatprep.subr.mxu0 0.0
        %3025 = vmatpush1.msra.mxu0 0.0
        %3026 = vmatprep.subr.mxu0 0.0
        %3027 = vmatpush1.msra.mxu0 0.0
        %3028 = vmatprep.subr.mxu0 0.0
        %3029 = vmatpush1.msra.mxu0 0.0
        %3030 = vmatprep.subr.mxu0 0.0
        %3031 = vmatpush1.msra.mxu0 0.0
        %3032 = vmatprep.subr.mxu0 0.0
        %3033 = vmatpush1.msra.mxu0 0.0
        %3034 = vmatprep.subr.mxu0 0.0
        %3035 = vmatpush1.msra.mxu0 0.0
        %3036 = vmatprep.subr.mxu0 0.0
        %3037 = vmatpush1.msra.mxu0 0.0
        %3038 = vmatprep.subr.mxu0 0.0
        %3039 = vmatpush1.msra.mxu0 0.0
        %3040 = vmatprep.subr.mxu0 0.0
        %3041 = vmatpush1.msra.mxu0 0.0
        %3042 = vmatprep.subr.mxu0 0.0
        %3043 = vmatpush1.msra.mxu0 0.0
        %3044 = vmatprep.subr.mxu0 0.0
        %3045 = vmatpush1.msra.mxu0 0.0
        %3046 = vmatprep.subr.mxu0 0.0
        %3047 = vmatpush1.msra.mxu0 0.0
        %3048 = vmatprep.subr.mxu0 0.0
        %3049 = vmatpush1.msra.mxu0 0.0
        %3050 = vmatprep.subr.mxu0 0.0
        %3051 = vmatpush1.msra.mxu0 0.0
        %3052 = vmatprep.subr.mxu0 0.0
        %3053 = vmatpush1.msra.mxu0 0.0
        %3054 = vmatprep.subr.mxu0 0.0
        %3055 = vmatpush1.msra.mxu0 0.0
        %3056 = vmatprep.subr.mxu0 0.0
        %3057 = vmatpush1.msra.mxu0 0.0
        %3058 = vmatprep.subr.mxu0 0.0
        %3059 = vmatpush1.msra.mxu0 0.0
        %3060 = vmatprep.subr.mxu0 0.0
        %3061 = vmatpush1.msra.mxu0 0.0
        %3062 = vmatprep.subr.mxu0 0.0
        %3063 = vmatpush1.msra.mxu0 0.0
        %3064 = vmatprep.subr.mxu0 0.0
        %3065 = vmatpush1.msra.mxu0 0.0
        %3066 = vmatprep.subr.mxu0 0.0
        %3067 = vmatpush1.msra.mxu0 0.0
        %3068 = vmatprep.subr.mxu0 0.0
        %3069 = vmatpush1.msra.mxu0 0.0
        %3070 = vmatprep.subr.mxu0 0.0
        %3071 = vmatpush1.msra.mxu0 0.0
        %3072 = vmatprep.subr.mxu0 0.0
        %3073 = vmatpush1.msra.mxu0 0.0
        %3074 = vmatprep.subr.mxu0 0.0
        %3075 = vmatpush1.msra.mxu0 0.0
        %3076 = vmatprep.subr.mxu0 0.0
        %3077 = vmatpush1.msra.mxu0 0.0
        %3078 = vmatprep.mubr.f32.mxu0 0.0
        %3079 = vmatmul.mubr.f32.gmra.mrb[0].mxu0 %v513
        %v3080 = vpop.f32.mrb[0].mxu0
        %v3081 = vadd.f32 %v506, %v3080
        %v3082 = vpop.f32.mrb[0].mxu0
        %v3083 = vadd.f32 %v506, %v3082
        %3084 = vmatprep.mubr.f32.mxu0 0.0
        %3085 = vmatmul.mubr.f32.gmra.mrb[0].mxu0 %v516
        %v3086 = vpop.f32.mrb[0].mxu0
        %v3087 = vadd.f32 %v510, %v3086
        %v3088 = vpop.f32.mrb[0].mxu0
        %v3089 = vadd.f32 %v510, %v3088
        %3090 = vdwg.mxu0
        %v3091 = vtanh.pop %v3004
        %v3092 = vtanh.pop %v3006
        %v3093 = vtanh.pop %v3081
        %v3094 = vtanh.pop %v3083
        %v3095 = vtanh.pop %v3010
        %v3096 = vtanh.pop %v3012
        %v3097 = vtanh.pop %v3087
        %v3098 = vtanh.pop %v3089
        %3099 = vmatprep.subr.mxu0 %v3092
        %3100 = vmatpush1.msra.mxu0 %v3091
        %3101 = vmatprep.subr.mxu0 %v3096
        %3102 = vmatpush1.msra.mxu0 %v3095
        %3103 = vmatprep.subr.mxu0 0.0
        %3104 = vmatpush1.msra.mxu0 0.0
        %3105 = vmatprep.subr.mxu0 0.0
        %3106 = vmatpush1.msra.mxu0 0.0
        %3107 = vmatprep.subr.mxu0 0.0
        %3108 = vmatpush1.msra.mxu0 0.0
        %3109 = vmatprep.subr.mxu0 0.0
        %3110 = vmatpush1.msra.mxu0 0.0
        %3111 = vmatprep.subr.mxu0 0.0
        %3112 = vmatpush1.msra.mxu0 0.0
        %3113 = vmatprep.subr.mxu0 0.0
        %3114 = vmatpush1.msra.mxu0 0.0
        %3115 = vmatprep.subr.mxu0 0.0
        %3116 = vmatpush1.msra.mxu0 0.0
        %3117 = vmatprep.subr.mxu0 0.0
        %3118 = vmatpush1.msra.mxu0 0.0
        %3119 = vmatprep.subr.mxu0 0.0
        %3120 = vmatpush1.msra.mxu0 0.0
        %3121 = vmatprep.subr.mxu0 0.0
        %3122 = vmatpush1.msra.mxu0 0.0
        %3123 = vmatprep.subr.mxu0 0.0
        %3124 = vmatpush1.msra.mxu0 0.0
        %3125 = vmatprep.subr.mxu0 0.0
        %3126 = vmatpush1.msra.mxu0 0.0
        %3127 = vmatprep.subr.mxu0 0.0
        %3128 = vmatpush1.msra.mxu0 0.0
        %3129 = vmatprep.subr.mxu0 0.0
        %3130 = vmatpush1.msra.mxu0 0.0
        %3131 = vmatprep.subr.mxu0 0.0
        %3132 = vmatpush1.msra.mxu0 0.0
        %3133 = vmatprep.subr.mxu0 0.0
        %3134 = vmatpush1.msra.mxu0 0.0
        %3135 = vmatprep.subr.mxu0 0.0
        %3136 = vmatpush1.msra.mxu0 0.0
        %3137 = vmatprep.subr.mxu0 0.0
        %3138 = vmatpush1.msra.mxu0 0.0
        %3139 = vmatprep.subr.mxu0 0.0
        %3140 = vmatpush1.msra.mxu0 0.0
        %3141 = vmatprep.subr.mxu0 0.0
        %3142 = vmatpush1.msra.mxu0 0.0
        %3143 = vmatprep.subr.mxu0 0.0
        %3144 = vmatpush1.msra.mxu0 0.0
        %3145 = vmatprep.subr.mxu0 0.0
        %3146 = vmatpush1.msra.mxu0 0.0
        %3147 = vmatprep.subr.mxu0 0.0
        %3148 = vmatpush1.msra.mxu0 0.0
        %3149 = vmatprep.subr.mxu0 0.0
        %3150 = vmatpush1.msra.mxu0 0.0
        %3151 = vmatprep.subr.mxu0 0.0
        %3152 = vmatpush1.msra.mxu0 0.0
        %3153 = vmatprep.subr.mxu0 0.0
        %3154 = vmatpush1.msra.mxu0 0.0
        %3155 = vmatprep.subr.mxu0 0.0
        %3156 = vmatpush1.msra.mxu0 0.0
        %3157 = vmatprep.subr.mxu0 0.0
        %3158 = vmatpush1.msra.mxu0 0.0
        %3159 = vmatprep.subr.mxu0 0.0
        %3160 = vmatpush1.msra.mxu0 0.0
        %3161 = vmatprep.subr.mxu0 0.0
        %3162 = vmatpush1.msra.mxu0 0.0
        %3163 = vmatprep.mubr.f32.mxu0 0.0
        %3164 = vmatmul.mubr.f32.gmra.mrb[0].mxu0 %v685
        %v3165 = vpop.f32.mrb[0].mxu0
        %v3166 = vadd.f32 %v682, %v3165
        %v3167 = vpop.f32.mrb[0].mxu0
        %v3168 = vadd.f32 %v682, %v3167
        %3169 = vdwg.mxu0
        %3170 = vmatprep.subr.mxu0 %v3094
        %3171 = vmatpush1.msra.mxu0 %v3093
        %3172 = vmatprep.subr.mxu0 %v3098
        %3173 = vmatpush1.msra.mxu0 %v3097
        %3174 = vmatprep.subr.mxu0 0.0
        %3175 = vmatpush1.msra.mxu0 0.0
        %3176 = vmatprep.subr.mxu0 0.0
        %3177 = vmatpush1.msra.mxu0 0.0
        %3178 = vmatprep.subr.mxu0 0.0
        %3179 = vmatpush1.msra.mxu0 0.0
        %3180 = vmatprep.subr.mxu0 0.0
        %3181 = vmatpush1.msra.mxu0 0.0
        %3182 = vmatprep.subr.mxu0 0.0
        %3183 = vmatpush1.msra.mxu0 0.0
        %3184 = vmatprep.subr.mxu0 0.0
        %3185 = vmatpush1.msra.mxu0 0.0
        %3186 = vmatprep.subr.mxu0 0.0
        %3187 = vmatpush1.msra.mxu0 0.0
        %3188 = vmatprep.subr.mxu0 0.0
        %3189 = vmatpush1.msra.mxu0 0.0
        %3190 = vmatprep.subr.mxu0 0.0
        %3191 = vmatpush1.msra.mxu0 0.0
        %3192 = vmatprep.subr.mxu0 0.0
        %3193 = vmatpush1.msra.mxu0 0.0
        %3194 = vmatprep.subr.mxu0 0.0
        %3195 = vmatpush1.msra.mxu0 0.0
        %3196 = vmatprep.subr.mxu0 0.0
        %3197 = vmatpush1.msra.mxu0 0.0
        %3198 = vmatprep.subr.mxu0 0.0
        %3199 = vmatpush1.msra.mxu0 0.0
        %3200 = vmatprep.subr.mxu0 0.0
        %3201 = vmatpush1.msra.mxu0 0.0
        %3202 = vmatprep.subr.mxu0 0.0
        %3203 = vmatpush1.msra.mxu0 0.0
        %3204 = vmatprep.subr.mxu0 0.0
        %3205 = vmatpush1.msra.mxu0 0.0
        %3206 = vmatprep.subr.mxu0 0.0
        %3207 = vmatpush1.msra.mxu0 0.0
        %3208 = vmatprep.subr.mxu0 0.0
        %3209 = vmatpush1.msra.mxu0 0.0
        %3210 = vmatprep.subr.mxu0 0.0
        %3211 = vmatpush1.msra.mxu0 0.0
        %3212 = vmatprep.subr.mxu0 0.0
        %3213 = vmatpush1.msra.mxu0 0.0
        %3214 = vmatprep.subr.mxu0 0.0
        %3215 = vmatpush1.msra.mxu0 0.0
        %3216 = vmatprep.subr.mxu0 0.0
        %3217 = vmatpush1.msra.mxu0 0.0
        %3218 = vmatprep.subr.mxu0 0.0
        %3219 = vmatpush1.msra.mxu0 0.0
        %3220 = vmatprep.subr.mxu0 0.0
        %3221 = vmatpush1.msra.mxu0 0.0
        %3222 = vmatprep.subr.mxu0 0.0
        %3223 = vmatpush1.msra.mxu0 0.0
        %3224 = vmatprep.subr.mxu0 0.0
        %3225 = vmatpush1.msra.mxu0 0.0
        %3226 = vmatprep.subr.mxu0 0.0
        %3227 = vmatpush1.msra.mxu0 0.0
        %3228 = vmatprep.subr.mxu0 0.0
        %3229 = vmatpush1.msra.mxu0 0.0
        %3230 = vmatprep.subr.mxu0 0.0
        %3231 = vmatpush1.msra.mxu0 0.0
        %3232 = vmatprep.subr.mxu0 0.0
        %3233 = vmatpush1.msra.mxu0 0.0
        %3234 = vmatprep.mubr.f32.mxu0 0.0
        %3235 = vmatmul.mubr.f32.gmra.mrb[0].mxu0 %v685
        %v3236 = vpop.f32.mrb[0].mxu0
        %v3237 = vadd.f32 %v682, %v3236
        %v3238 = vpop.f32.mrb[0].mxu0
        %v3239 = vadd.f32 %v682, %v3238
        %3240 = vdwg.mxu0
        %v3241 = vmax.f32 %v3166, 0.0
        %v3242 = vmax.f32 %v3168, 0.0
        %v3243 = vmax.f32 %v3237, 0.0
        %v3244 = vmax.f32 %v3239, 0.0
        %v3245 = vand.u32 2147483647, %v3166
        %v3246 = vand.u32 2147483647, %v3168
        %v3247 = vand.u32 2147483647, %v3237
        %v3248 = vand.u32 2147483647, %v3239
        %v3249 = vsub.f32 0.0, %v3245
        %v3250 = vsub.f32 0.0, %v3246
        %v3251 = vsub.f32 0.0, %v3247
        %v3252 = vsub.f32 0.0, %v3248
        %v3253 = vmul.f32 %v3249, 1.442695
        %v3254 = vpow.pop %v3253
        %v3255 = vmul.f32 %v3250, 1.442695
        %v3256 = vpow.pop %v3255
        %v3257 = vmul.f32 %v3251, 1.442695
        %v3258 = vpow.pop %v3257
        %v3259 = vmul.f32 %v3252, 1.442695
        %v3260 = vpow.pop %v3259
        %v3261 = vadd.f32 %v3254, 1.0
        %v3262 = vlog2.pop %v3261
        %v3263 = vmul.f32 %v3262, 0.6931472
        %v3264 = vmul.f32 -0.5, %v3254
        %v3265 = vadd.f32 %v3264, 1.0
        %v3266 = vmul.f32 %v3265, %v3254
        %v3267 = vand.u32 2147483647, %v3254
        %vm3268 = vcmp.lt.f32.partialorder %v3267, 0.0004427343
        %v3269 = vsel %vm3268, %v3266, %v3263
        %v3270 = vadd.f32 %v3256, 1.0
        %v3271 = vlog2.pop %v3270
        %v3272 = vmul.f32 %v3271, 0.6931472
        %v3273 = vmul.f32 -0.5, %v3256
        %v3274 = vadd.f32 %v3273, 1.0
        %v3275 = vmul.f32 %v3274, %v3256
        %v3276 = vand.u32 2147483647, %v3256
        %vm3277 = vcmp.lt.f32.partialorder %v3276, 0.0004427343
        %v3278 = vsel %vm3277, %v3275, %v3272
        %v3279 = vadd.f32 %v3258, 1.0
        %v3280 = vlog2.pop %v3279
        %v3281 = vmul.f32 %v3280, 0.6931472
        %v3282 = vmul.f32 -0.5, %v3258
        %v3283 = vadd.f32 %v3282, 1.0
        %v3284 = vmul.f32 %v3283, %v3258
        %v3285 = vand.u32 2147483647, %v3258
        %vm3286 = vcmp.lt.f32.partialorder %v3285, 0.0004427343
        %v3287 = vsel %vm3286, %v3284, %v3281
        %v3288 = vadd.f32 %v3260, 1.0
        %v3289 = vlog2.pop %v3288
        %v3290 = vmul.f32 %v3289, 0.6931472
        %v3291 = vmul.f32 -0.5, %v3260
        %v3292 = vadd.f32 %v3291, 1.0
        %v3293 = vmul.f32 %v3292, %v3260
        %v3294 = vand.u32 2147483647, %v3260
        %vm3295 = vcmp.lt.f32.partialorder %v3294, 0.0004427343
        %v3296 = vsel %vm3295, %v3293, %v3290
        %v3297 = vadd.f32 %v3241, %v3269
        %v3298 = vadd.f32 %v3242, %v3278
        %v3299 = vadd.f32 %v3243, %v3287
        %v3300 = vadd.f32 %v3244, %v3296
        %v3305 = vcombine.low %v3297, %v3298
        %v3306 = vcombine.low %v3299, %v3300
        %v3308 = vunpack.c.l.s4 1966171168
        %v3309 = vunpack.c.0.s8 %v3308
        %v3310 = vlaneseq
        %v3311 = vshrl.u32 %v3310, 7
        %v3312 = vsub.s32 %v3309, %v3311
        %v3313 = vrot.slane %v3305, %v3312
        %v3315 = vunpack.c.l.s4 1966171168
        %v3316 = vunpack.c.0.s8 %v3315
        %v3317 = vlaneseq
        %v3318 = vshrl.u32 %v3317, 7
        %v3319 = vsub.s32 %v3316, %v3318
        %v3320 = vrot.slane %v3306, %v3319
        %v3321 = vcombine.low %v3313, %v3320
        %v3323 = vunpack.c.l.s4 1966171168
        %v3324 = vunpack.c.0.s8 %v3323
        %v3325 = vlaneseq
        %v3326 = vshrl.u32 %v3325, 7
        %v3327 = vsub.s32 %v3324, %v3326
        %v3328 = vrot.slane %v3321, %v3327
        %3330 = vst.msk [vmem:[%s245 + $0x10] sm:$0xf] %vm921, %v3328
        %v3331 = vld [vmem:[%s219 + $0x14] sm:$0xf]
        %v3333 = vlaneseq
        %v3334 = vshrl.u32 %v3333, 7
        %v3335 = vsub.s32 0, %v3334
        %v3336 = vrot.slane %v3331, %v3335
        %v3337 = vlaneseq
        %v3338 = vshrl.u32 %v3337, 7
        %v3339 = vsub.s32 1, %v3338
        %v3340 = vrot.slane %v3331, %v3339
        %v3341 = vlaneseq
        %v3342 = vshrl.u32 %v3341, 7
        %v3343 = vsub.s32 2, %v3342
        %v3344 = vrot.slane %v3331, %v3343
        %v3345 = vlaneseq
        %v3346 = vshrl.u32 %v3345, 7
        %v3347 = vsub.s32 3, %v3346
        %v3348 = vrot.slane %v3331, %v3347
        %v3353 = vmul.f32 %v267, %v3336
        %v3354 = vmul.f32 %v267, %v3340
        %v3355 = vmul.f32 %v267, %v3344
        %v3356 = vmul.f32 %v267, %v3348
        %v3357 = vmul.f32 %v272, %v3336
        %v3358 = vmul.f32 %v272, %v3340
        %v3359 = vmul.f32 %v272, %v3344
        %v3360 = vmul.f32 %v272, %v3348
        %v3361 = vadd.f32 %v3353, %v305
        %v3362 = vadd.f32 %v3354, %v305
        %v3363 = vadd.f32 %v3355, %v305
        %v3364 = vadd.f32 %v3356, %v305
        %v3365 = vadd.f32 %v3357, %v309
        %v3366 = vadd.f32 %v3358, %v309
        %v3367 = vadd.f32 %v3359, %v309
        %v3368 = vadd.f32 %v3360, %v309
        %v3369 = vtanh.pop %v3361
        %v3370 = vtanh.pop %v3362
        %v3371 = vtanh.pop %v3363
        %v3372 = vtanh.pop %v3364
        %v3373 = vtanh.pop %v3365
        %v3374 = vtanh.pop %v3366
        %v3375 = vtanh.pop %v3367
        %v3376 = vtanh.pop %v3368
        %3377 = vmatprep.subr.mxu0 %v3370
        %3378 = vmatpush1.msra.mxu0 %v3369
        %3379 = vmatprep.subr.mxu0 %v3374
        %3380 = vmatpush1.msra.mxu0 %v3373
        %3381 = vmatprep.subr.mxu0 0.0
        %3382 = vmatpush1.msra.mxu0 0.0
        %3383 = vmatprep.subr.mxu0 0.0
        %3384 = vmatpush1.msra.mxu0 0.0
        %3385 = vmatprep.subr.mxu0 0.0
        %3386 = vmatpush1.msra.mxu0 0.0
        %3387 = vmatprep.subr.mxu0 0.0
        %3388 = vmatpush1.msra.mxu0 0.0
        %3389 = vmatprep.subr.mxu0 0.0
        %3390 = vmatpush1.msra.mxu0 0.0
        %3391 = vmatprep.subr.mxu0 0.0
        %3392 = vmatpush1.msra.mxu0 0.0
        %3393 = vmatprep.subr.mxu0 0.0
        %3394 = vmatpush1.msra.mxu0 0.0
        %3395 = vmatprep.subr.mxu0 0.0
        %3396 = vmatpush1.msra.mxu0 0.0
        %3397 = vmatprep.subr.mxu0 0.0
        %3398 = vmatpush1.msra.mxu0 0.0
        %3399 = vmatprep.subr.mxu0 0.0
        %3400 = vmatpush1.msra.mxu0 0.0
        %3401 = vmatprep.subr.mxu0 0.0
        %3402 = vmatpush1.msra.mxu0 0.0
        %3403 = vmatprep.subr.mxu0 0.0
        %3404 = vmatpush1.msra.mxu0 0.0
        %3405 = vmatprep.subr.mxu0 0.0
        %3406 = vmatpush1.msra.mxu0 0.0
        %3407 = vmatprep.subr.mxu0 0.0
        %3408 = vmatpush1.msra.mxu0 0.0
        %3409 = vmatprep.subr.mxu0 0.0
        %3410 = vmatpush1.msra.mxu0 0.0
        %3411 = vmatprep.subr.mxu0 0.0
        %3412 = vmatpush1.msra.mxu0 0.0
        %3413 = vmatprep.subr.mxu0 0.0
        %3414 = vmatpush1.msra.mxu0 0.0
        %3415 = vmatprep.subr.mxu0 0.0
        %3416 = vmatpush1.msra.mxu0 0.0
        %3417 = vmatprep.subr.mxu0 0.0
        %3418 = vmatpush1.msra.mxu0 0.0
        %3419 = vmatprep.subr.mxu0 0.0
        %3420 = vmatpush1.msra.mxu0 0.0
        %3421 = vmatprep.subr.mxu0 0.0
        %3422 = vmatpush1.msra.mxu0 0.0
        %3423 = vmatprep.subr.mxu0 0.0
        %3424 = vmatpush1.msra.mxu0 0.0
        %3425 = vmatprep.subr.mxu0 0.0
        %3426 = vmatpush1.msra.mxu0 0.0
        %3427 = vmatprep.subr.mxu0 0.0
        %3428 = vmatpush1.msra.mxu0 0.0
        %3429 = vmatprep.subr.mxu0 0.0
        %3430 = vmatpush1.msra.mxu0 0.0
        %3431 = vmatprep.subr.mxu0 0.0
        %3432 = vmatpush1.msra.mxu0 0.0
        %3433 = vmatprep.subr.mxu0 0.0
        %3434 = vmatpush1.msra.mxu0 0.0
        %3435 = vmatprep.subr.mxu0 0.0
        %3436 = vmatpush1.msra.mxu0 0.0
        %3437 = vmatprep.subr.mxu0 0.0
        %3438 = vmatpush1.msra.mxu0 0.0
        %3439 = vmatprep.subr.mxu0 0.0
        %3440 = vmatpush1.msra.mxu0 0.0
        %3441 = vmatprep.mubr.f32.mxu0 0.0
        %3442 = vmatmul.mubr.f32.gmra.mrb[0].mxu0 %v337
        %v3443 = vpop.f32.mrb[0].mxu0
        %v3444 = vadd.f32 %v329, %v3443
        %v3445 = vpop.f32.mrb[0].mxu0
        %v3446 = vadd.f32 %v329, %v3445
        %3447 = vmatprep.mubr.f32.mxu0 0.0
        %3448 = vmatmul.mubr.f32.gmra.mrb[0].mxu0 %v340
        %v3449 = vpop.f32.mrb[0].mxu0
        %v3450 = vadd.f32 %v333, %v3449
        %v3451 = vpop.f32.mrb[0].mxu0
        %v3452 = vadd.f32 %v333, %v3451
        %3453 = vdwg.mxu0
        %3454 = vmatprep.subr.mxu0 %v3372
        %3455 = vmatpush1.msra.mxu0 %v3371
        %3456 = vmatprep.subr.mxu0 %v3376
        %3457 = vmatpush1.msra.mxu0 %v3375
        %3458 = vmatprep.subr.mxu0 0.0
        %3459 = vmatpush1.msra.mxu0 0.0
        %3460 = vmatprep.subr.mxu0 0.0
        %3461 = vmatpush1.msra.mxu0 0.0
        %3462 = vmatprep.subr.mxu0 0.0
        %3463 = vmatpush1.msra.mxu0 0.0
        %3464 = vmatprep.subr.mxu0 0.0
        %3465 = vmatpush1.msra.mxu0 0.0
        %3466 = vmatprep.subr.mxu0 0.0
        %3467 = vmatpush1.msra.mxu0 0.0
        %3468 = vmatprep.subr.mxu0 0.0
        %3469 = vmatpush1.msra.mxu0 0.0
        %3470 = vmatprep.subr.mxu0 0.0
        %3471 = vmatpush1.msra.mxu0 0.0
        %3472 = vmatprep.subr.mxu0 0.0
        %3473 = vmatpush1.msra.mxu0 0.0
        %3474 = vmatprep.subr.mxu0 0.0
        %3475 = vmatpush1.msra.mxu0 0.0
        %3476 = vmatprep.subr.mxu0 0.0
        %3477 = vmatpush1.msra.mxu0 0.0
        %3478 = vmatprep.subr.mxu0 0.0
        %3479 = vmatpush1.msra.mxu0 0.0
        %3480 = vmatprep.subr.mxu0 0.0
        %3481 = vmatpush1.msra.mxu0 0.0
        %3482 = vmatprep.subr.mxu0 0.0
        %3483 = vmatpush1.msra.mxu0 0.0
        %3484 = vmatprep.subr.mxu0 0.0
        %3485 = vmatpush1.msra.mxu0 0.0
        %3486 = vmatprep.subr.mxu0 0.0
        %3487 = vmatpush1.msra.mxu0 0.0
        %3488 = vmatprep.subr.mxu0 0.0
        %3489 = vmatpush1.msra.mxu0 0.0
        %3490 = vmatprep.subr.mxu0 0.0
        %3491 = vmatpush1.msra.mxu0 0.0
        %3492 = vmatprep.subr.mxu0 0.0
        %3493 = vmatpush1.msra.mxu0 0.0
        %3494 = vmatprep.subr.mxu0 0.0
        %3495 = vmatpush1.msra.mxu0 0.0
        %3496 = vmatprep.subr.mxu0 0.0
        %3497 = vmatpush1.msra.mxu0 0.0
        %3498 = vmatprep.subr.mxu0 0.0
        %3499 = vmatpush1.msra.mxu0 0.0
        %3500 = vmatprep.subr.mxu0 0.0
        %3501 = vmatpush1.msra.mxu0 0.0
        %3502 = vmatprep.subr.mxu0 0.0
        %3503 = vmatpush1.msra.mxu0 0.0
        %3504 = vmatprep.subr.mxu0 0.0
        %3505 = vmatpush1.msra.mxu0 0.0
        %3506 = vmatprep.subr.mxu0 0.0
        %3507 = vmatpush1.msra.mxu0 0.0
        %3508 = vmatprep.subr.mxu0 0.0
        %3509 = vmatpush1.msra.mxu0 0.0
        %3510 = vmatprep.subr.mxu0 0.0
        %3511 = vmatpush1.msra.mxu0 0.0
        %3512 = vmatprep.subr.mxu0 0.0
        %3513 = vmatpush1.msra.mxu0 0.0
        %3514 = vmatprep.subr.mxu0 0.0
        %3515 = vmatpush1.msra.mxu0 0.0
        %3516 = vmatprep.subr.mxu0 0.0
        %3517 = vmatpush1.msra.mxu0 0.0
        %3518 = vmatprep.mubr.f32.mxu0 0.0
        %3519 = vmatmul.mubr.f32.gmra.mrb[0].mxu0 %v337
        %v3520 = vpop.f32.mrb[0].mxu0
        %v3521 = vadd.f32 %v329, %v3520
        %v3522 = vpop.f32.mrb[0].mxu0
        %v3523 = vadd.f32 %v329, %v3522
        %3524 = vmatprep.mubr.f32.mxu0 0.0
        %3525 = vmatmul.mubr.f32.gmra.mrb[0].mxu0 %v340
        %v3526 = vpop.f32.mrb[0].mxu0
        %v3527 = vadd.f32 %v333, %v3526
        %v3528 = vpop.f32.mrb[0].mxu0
        %v3529 = vadd.f32 %v333, %v3528
        %3530 = vdwg.mxu0
        %v3531 = vtanh.pop %v3444
        %v3532 = vtanh.pop %v3446
        %v3533 = vtanh.pop %v3521
        %v3534 = vtanh.pop %v3523
        %v3535 = vtanh.pop %v3450
        %v3536 = vtanh.pop %v3452
        %v3537 = vtanh.pop %v3527
        %v3538 = vtanh.pop %v3529
        %3539 = vmatprep.subr.mxu0 %v3532
        %3540 = vmatpush1.msra.mxu0 %v3531
        %3541 = vmatprep.subr.mxu0 %v3536
        %3542 = vmatpush1.msra.mxu0 %v3535
        %3543 = vmatprep.subr.mxu0 0.0
        %3544 = vmatpush1.msra.mxu0 0.0
        %3545 = vmatprep.subr.mxu0 0.0
        %3546 = vmatpush1.msra.mxu0 0.0
        %3547 = vmatprep.subr.mxu0 0.0
        %3548 = vmatpush1.msra.mxu0 0.0
        %3549 = vmatprep.subr.mxu0 0.0
        %3550 = vmatpush1.msra.mxu0 0.0
        %3551 = vmatprep.subr.mxu0 0.0
        %3552 = vmatpush1.msra.mxu0 0.0
        %3553 = vmatprep.subr.mxu0 0.0
        %3554 = vmatpush1.msra.mxu0 0.0
        %3555 = vmatprep.subr.mxu0 0.0
        %3556 = vmatpush1.msra.mxu0 0.0
        %3557 = vmatprep.subr.mxu0 0.0
        %3558 = vmatpush1.msra.mxu0 0.0
        %3559 = vmatprep.subr.mxu0 0.0
        %3560 = vmatpush1.msra.mxu0 0.0
        %3561 = vmatprep.subr.mxu0 0.0
        %3562 = vmatpush1.msra.mxu0 0.0
        %3563 = vmatprep.subr.mxu0 0.0
        %3564 = vmatpush1.msra.mxu0 0.0
        %3565 = vmatprep.subr.mxu0 0.0
        %3566 = vmatpush1.msra.mxu0 0.0
        %3567 = vmatprep.subr.mxu0 0.0
        %3568 = vmatpush1.msra.mxu0 0.0
        %3569 = vmatprep.subr.mxu0 0.0
        %3570 = vmatpush1.msra.mxu0 0.0
        %3571 = vmatprep.subr.mxu0 0.0
        %3572 = vmatpush1.msra.mxu0 0.0
        %3573 = vmatprep.subr.mxu0 0.0
        %3574 = vmatpush1.msra.mxu0 0.0
        %3575 = vmatprep.subr.mxu0 0.0
        %3576 = vmatpush1.msra.mxu0 0.0
        %3577 = vmatprep.subr.mxu0 0.0
        %3578 = vmatpush1.msra.mxu0 0.0
        %3579 = vmatprep.subr.mxu0 0.0
        %3580 = vmatpush1.msra.mxu0 0.0
        %3581 = vmatprep.subr.mxu0 0.0
        %3582 = vmatpush1.msra.mxu0 0.0
        %3583 = vmatprep.subr.mxu0 0.0
        %3584 = vmatpush1.msra.mxu0 0.0
        %3585 = vmatprep.subr.mxu0 0.0
        %3586 = vmatpush1.msra.mxu0 0.0
        %3587 = vmatprep.subr.mxu0 0.0
        %3588 = vmatpush1.msra.mxu0 0.0
        %3589 = vmatprep.subr.mxu0 0.0
        %3590 = vmatpush1.msra.mxu0 0.0
        %3591 = vmatprep.subr.mxu0 0.0
        %3592 = vmatpush1.msra.mxu0 0.0
        %3593 = vmatprep.subr.mxu0 0.0
        %3594 = vmatpush1.msra.mxu0 0.0
        %3595 = vmatprep.subr.mxu0 0.0
        %3596 = vmatpush1.msra.mxu0 0.0
        %3597 = vmatprep.subr.mxu0 0.0
        %3598 = vmatpush1.msra.mxu0 0.0
        %3599 = vmatprep.subr.mxu0 0.0
        %3600 = vmatpush1.msra.mxu0 0.0
        %3601 = vmatprep.subr.mxu0 0.0
        %3602 = vmatpush1.msra.mxu0 0.0
        %3603 = vmatprep.mubr.f32.mxu0 0.0
        %3604 = vmatmul.mubr.f32.gmra.mrb[0].mxu0 %v513
        %v3605 = vpop.f32.mrb[0].mxu0
        %v3606 = vadd.f32 %v506, %v3605
        %v3607 = vpop.f32.mrb[0].mxu0
        %v3608 = vadd.f32 %v506, %v3607
        %3609 = vmatprep.mubr.f32.mxu0 0.0
        %3610 = vmatmul.mubr.f32.gmra.mrb[0].mxu0 %v516
        %v3611 = vpop.f32.mrb[0].mxu0
        %v3612 = vadd.f32 %v510, %v3611
        %v3613 = vpop.f32.mrb[0].mxu0
        %v3614 = vadd.f32 %v510, %v3613
        %3615 = vdwg.mxu0
        %3616 = vmatprep.subr.mxu0 %v3534
        %3617 = vmatpush1.msra.mxu0 %v3533
        %3618 = vmatprep.subr.mxu0 %v3538
        %3619 = vmatpush1.msra.mxu0 %v3537
        %3620 = vmatprep.subr.mxu0 0.0
        %3621 = vmatpush1.msra.mxu0 0.0
        %3622 = vmatprep.subr.mxu0 0.0
        %3623 = vmatpush1.msra.mxu0 0.0
        %3624 = vmatprep.subr.mxu0 0.0
        %3625 = vmatpush1.msra.mxu0 0.0
        %3626 = vmatprep.subr.mxu0 0.0
        %3627 = vmatpush1.msra.mxu0 0.0
        %3628 = vmatprep.subr.mxu0 0.0
        %3629 = vmatpush1.msra.mxu0 0.0
        %3630 = vmatprep.subr.mxu0 0.0
        %3631 = vmatpush1.msra.mxu0 0.0
        %3632 = vmatprep.subr.mxu0 0.0
        %3633 = vmatpush1.msra.mxu0 0.0
        %3634 = vmatprep.subr.mxu0 0.0
        %3635 = vmatpush1.msra.mxu0 0.0
        %3636 = vmatprep.subr.mxu0 0.0
        %3637 = vmatpush1.msra.mxu0 0.0
        %3638 = vmatprep.subr.mxu0 0.0
        %3639 = vmatpush1.msra.mxu0 0.0
        %3640 = vmatprep.subr.mxu0 0.0
        %3641 = vmatpush1.msra.mxu0 0.0
        %3642 = vmatprep.subr.mxu0 0.0
        %3643 = vmatpush1.msra.mxu0 0.0
        %3644 = vmatprep.subr.mxu0 0.0
        %3645 = vmatpush1.msra.mxu0 0.0
        %3646 = vmatprep.subr.mxu0 0.0
        %3647 = vmatpush1.msra.mxu0 0.0
        %3648 = vmatprep.subr.mxu0 0.0
        %3649 = vmatpush1.msra.mxu0 0.0
        %3650 = vmatprep.subr.mxu0 0.0
        %3651 = vmatpush1.msra.mxu0 0.0
        %3652 = vmatprep.subr.mxu0 0.0
        %3653 = vmatpush1.msra.mxu0 0.0
        %3654 = vmatprep.subr.mxu0 0.0
        %3655 = vmatpush1.msra.mxu0 0.0
        %3656 = vmatprep.subr.mxu0 0.0
        %3657 = vmatpush1.msra.mxu0 0.0
        %3658 = vmatprep.subr.mxu0 0.0
        %3659 = vmatpush1.msra.mxu0 0.0
        %3660 = vmatprep.subr.mxu0 0.0
        %3661 = vmatpush1.msra.mxu0 0.0
        %3662 = vmatprep.subr.mxu0 0.0
        %3663 = vmatpush1.msra.mxu0 0.0
        %3664 = vmatprep.subr.mxu0 0.0
        %3665 = vmatpush1.msra.mxu0 0.0
        %3666 = vmatprep.subr.mxu0 0.0
        %3667 = vmatpush1.msra.mxu0 0.0
        %3668 = vmatprep.subr.mxu0 0.0
        %3669 = vmatpush1.msra.mxu0 0.0
        %3670 = vmatprep.subr.mxu0 0.0
        %3671 = vmatpush1.msra.mxu0 0.0
        %3672 = vmatprep.subr.mxu0 0.0
        %3673 = vmatpush1.msra.mxu0 0.0
        %3674 = vmatprep.subr.mxu0 0.0
        %3675 = vmatpush1.msra.mxu0 0.0
        %3676 = vmatprep.subr.mxu0 0.0
        %3677 = vmatpush1.msra.mxu0 0.0
        %3678 = vmatprep.subr.mxu0 0.0
        %3679 = vmatpush1.msra.mxu0 0.0
        %3680 = vmatprep.mubr.f32.mxu0 0.0
        %3681 = vmatmul.mubr.f32.gmra.mrb[0].mxu0 %v513
        %v3682 = vpop.f32.mrb[0].mxu0
        %v3683 = vadd.f32 %v506, %v3682
        %v3684 = vpop.f32.mrb[0].mxu0
        %v3685 = vadd.f32 %v506, %v3684
        %3686 = vmatprep.mubr.f32.mxu0 0.0
        %3687 = vmatmul.mubr.f32.gmra.mrb[0].mxu0 %v516
        %v3688 = vpop.f32.mrb[0].mxu0
        %v3689 = vadd.f32 %v510, %v3688
        %v3690 = vpop.f32.mrb[0].mxu0
        %v3691 = vadd.f32 %v510, %v3690
        %3692 = vdwg.mxu0
        %v3693 = vtanh.pop %v3606
        %v3694 = vtanh.pop %v3608
        %v3695 = vtanh.pop %v3683
        %v3696 = vtanh.pop %v3685
        %v3697 = vtanh.pop %v3612
        %v3698 = vtanh.pop %v3614
        %v3699 = vtanh.pop %v3689
        %v3700 = vtanh.pop %v3691
        %3701 = vmatprep.subr.mxu0 %v3694
        %3702 = vmatpush1.msra.mxu0 %v3693
        %3703 = vmatprep.subr.mxu0 %v3698
        %3704 = vmatpush1.msra.mxu0 %v3697
        %3705 = vmatprep.subr.mxu0 0.0
        %3706 = vmatpush1.msra.mxu0 0.0
        %3707 = vmatprep.subr.mxu0 0.0
        %3708 = vmatpush1.msra.mxu0 0.0
        %3709 = vmatprep.subr.mxu0 0.0
        %3710 = vmatpush1.msra.mxu0 0.0
        %3711 = vmatprep.subr.mxu0 0.0
        %3712 = vmatpush1.msra.mxu0 0.0
        %3713 = vmatprep.subr.mxu0 0.0
        %3714 = vmatpush1.msra.mxu0 0.0
        %3715 = vmatprep.subr.mxu0 0.0
        %3716 = vmatpush1.msra.mxu0 0.0
        %3717 = vmatprep.subr.mxu0 0.0
        %3718 = vmatpush1.msra.mxu0 0.0
        %3719 = vmatprep.subr.mxu0 0.0
        %3720 = vmatpush1.msra.mxu0 0.0
        %3721 = vmatprep.subr.mxu0 0.0
        %3722 = vmatpush1.msra.mxu0 0.0
        %3723 = vmatprep.subr.mxu0 0.0
        %3724 = vmatpush1.msra.mxu0 0.0
        %3725 = vmatprep.subr.mxu0 0.0
        %3726 = vmatpush1.msra.mxu0 0.0
        %3727 = vmatprep.subr.mxu0 0.0
        %3728 = vmatpush1.msra.mxu0 0.0
        %3729 = vmatprep.subr.mxu0 0.0
        %3730 = vmatpush1.msra.mxu0 0.0
        %3731 = vmatprep.subr.mxu0 0.0
        %3732 = vmatpush1.msra.mxu0 0.0
        %3733 = vmatprep.subr.mxu0 0.0
        %3734 = vmatpush1.msra.mxu0 0.0
        %3735 = vmatprep.subr.mxu0 0.0
        %3736 = vmatpush1.msra.mxu0 0.0
        %3737 = vmatprep.subr.mxu0 0.0
        %3738 = vmatpush1.msra.mxu0 0.0
        %3739 = vmatprep.subr.mxu0 0.0
        %3740 = vmatpush1.msra.mxu0 0.0
        %3741 = vmatprep.subr.mxu0 0.0
        %3742 = vmatpush1.msra.mxu0 0.0
        %3743 = vmatprep.subr.mxu0 0.0
        %3744 = vmatpush1.msra.mxu0 0.0
        %3745 = vmatprep.subr.mxu0 0.0
        %3746 = vmatpush1.msra.mxu0 0.0
        %3747 = vmatprep.subr.mxu0 0.0
        %3748 = vmatpush1.msra.mxu0 0.0
        %3749 = vmatprep.subr.mxu0 0.0
        %3750 = vmatpush1.msra.mxu0 0.0
        %3751 = vmatprep.subr.mxu0 0.0
        %3752 = vmatpush1.msra.mxu0 0.0
        %3753 = vmatprep.subr.mxu0 0.0
        %3754 = vmatpush1.msra.mxu0 0.0
        %3755 = vmatprep.subr.mxu0 0.0
        %3756 = vmatpush1.msra.mxu0 0.0
        %3757 = vmatprep.subr.mxu0 0.0
        %3758 = vmatpush1.msra.mxu0 0.0
        %3759 = vmatprep.subr.mxu0 0.0
        %3760 = vmatpush1.msra.mxu0 0.0
        %3761 = vmatprep.subr.mxu0 0.0
        %3762 = vmatpush1.msra.mxu0 0.0
        %3763 = vmatprep.subr.mxu0 0.0
        %3764 = vmatpush1.msra.mxu0 0.0
        %3765 = vmatprep.mubr.f32.mxu0 0.0
        %3766 = vmatmul.mubr.f32.gmra.mrb[0].mxu0 %v685
        %v3767 = vpop.f32.mrb[0].mxu0
        %v3768 = vadd.f32 %v682, %v3767
        %v3769 = vpop.f32.mrb[0].mxu0
        %v3770 = vadd.f32 %v682, %v3769
        %3771 = vdwg.mxu0
        %3772 = vmatprep.subr.mxu0 %v3696
        %3773 = vmatpush1.msra.mxu0 %v3695
        %3774 = vmatprep.subr.mxu0 %v3700
        %3775 = vmatpush1.msra.mxu0 %v3699
        %3776 = vmatprep.subr.mxu0 0.0
        %3777 = vmatpush1.msra.mxu0 0.0
        %3778 = vmatprep.subr.mxu0 0.0
        %3779 = vmatpush1.msra.mxu0 0.0
        %3780 = vmatprep.subr.mxu0 0.0
        %3781 = vmatpush1.msra.mxu0 0.0
        %3782 = vmatprep.subr.mxu0 0.0
        %3783 = vmatpush1.msra.mxu0 0.0
        %3784 = vmatprep.subr.mxu0 0.0
        %3785 = vmatpush1.msra.mxu0 0.0
        %3786 = vmatprep.subr.mxu0 0.0
        %3787 = vmatpush1.msra.mxu0 0.0
        %3788 = vmatprep.subr.mxu0 0.0
        %3789 = vmatpush1.msra.mxu0 0.0
        %3790 = vmatprep.subr.mxu0 0.0
        %3791 = vmatpush1.msra.mxu0 0.0
        %3792 = vmatprep.subr.mxu0 0.0
        %3793 = vmatpush1.msra.mxu0 0.0
        %3794 = vmatprep.subr.mxu0 0.0
        %3795 = vmatpush1.msra.mxu0 0.0
        %3796 = vmatprep.subr.mxu0 0.0
        %3797 = vmatpush1.msra.mxu0 0.0
        %3798 = vmatprep.subr.mxu0 0.0
        %3799 = vmatpush1.msra.mxu0 0.0
        %3800 = vmatprep.subr.mxu0 0.0
        %3801 = vmatpush1.msra.mxu0 0.0
        %3802 = vmatprep.subr.mxu0 0.0
        %3803 = vmatpush1.msra.mxu0 0.0
        %3804 = vmatprep.subr.mxu0 0.0
        %3805 = vmatpush1.msra.mxu0 0.0
        %3806 = vmatprep.subr.mxu0 0.0
        %3807 = vmatpush1.msra.mxu0 0.0
        %3808 = vmatprep.subr.mxu0 0.0
        %3809 = vmatpush1.msra.mxu0 0.0
        %3810 = vmatprep.subr.mxu0 0.0
        %3811 = vmatpush1.msra.mxu0 0.0
        %3812 = vmatprep.subr.mxu0 0.0
        %3813 = vmatpush1.msra.mxu0 0.0
        %3814 = vmatprep.subr.mxu0 0.0
        %3815 = vmatpush1.msra.mxu0 0.0
        %3816 = vmatprep.subr.mxu0 0.0
        %3817 = vmatpush1.msra.mxu0 0.0
        %3818 = vmatprep.subr.mxu0 0.0
        %3819 = vmatpush1.msra.mxu0 0.0
        %3820 = vmatprep.subr.mxu0 0.0
        %3821 = vmatpush1.msra.mxu0 0.0
        %3822 = vmatprep.subr.mxu0 0.0
        %3823 = vmatpush1.msra.mxu0 0.0
        %3824 = vmatprep.subr.mxu0 0.0
        %3825 = vmatpush1.msra.mxu0 0.0
        %3826 = vmatprep.subr.mxu0 0.0
        %3827 = vmatpush1.msra.mxu0 0.0
        %3828 = vmatprep.subr.mxu0 0.0
        %3829 = vmatpush1.msra.mxu0 0.0
        %3830 = vmatprep.subr.mxu0 0.0
        %3831 = vmatpush1.msra.mxu0 0.0
        %3832 = vmatprep.subr.mxu0 0.0
        %3833 = vmatpush1.msra.mxu0 0.0
        %3834 = vmatprep.subr.mxu0 0.0
        %3835 = vmatpush1.msra.mxu0 0.0
        %3836 = vmatprep.mubr.f32.mxu0 0.0
        %3837 = vmatmul.mubr.f32.gmra.mrb[0].mxu0 %v685
        %v3838 = vpop.f32.mrb[0].mxu0
        %v3839 = vadd.f32 %v682, %v3838
        %v3840 = vpop.f32.mrb[0].mxu0
        %v3841 = vadd.f32 %v682, %v3840
        %3842 = vdwg.mxu0
        %v3843 = vmax.f32 %v3768, 0.0
        %v3844 = vmax.f32 %v3770, 0.0
        %v3845 = vmax.f32 %v3839, 0.0
        %v3846 = vmax.f32 %v3841, 0.0
        %v3847 = vand.u32 2147483647, %v3768
        %v3848 = vand.u32 2147483647, %v3770
        %v3849 = vand.u32 2147483647, %v3839
        %v3850 = vand.u32 2147483647, %v3841
        %v3851 = vsub.f32 0.0, %v3847
        %v3852 = vsub.f32 0.0, %v3848
        %v3853 = vsub.f32 0.0, %v3849
        %v3854 = vsub.f32 0.0, %v3850
        %v3855 = vmul.f32 %v3851, 1.442695
        %v3856 = vpow.pop %v3855
        %v3857 = vmul.f32 %v3852, 1.442695
        %v3858 = vpow.pop %v3857
        %v3859 = vmul.f32 %v3853, 1.442695
        %v3860 = vpow.pop %v3859
        %v3861 = vmul.f32 %v3854, 1.442695
        %v3862 = vpow.pop %v3861
        %v3863 = vadd.f32 %v3856, 1.0
        %v3864 = vlog2.pop %v3863
        %v3865 = vmul.f32 %v3864, 0.6931472
        %v3866 = vmul.f32 -0.5, %v3856
        %v3867 = vadd.f32 %v3866, 1.0
        %v3868 = vmul.f32 %v3867, %v3856
        %v3869 = vand.u32 2147483647, %v3856
        %vm3870 = vcmp.lt.f32.partialorder %v3869, 0.0004427343
        %v3871 = vsel %vm3870, %v3868, %v3865
        %v3872 = vadd.f32 %v3858, 1.0
        %v3873 = vlog2.pop %v3872
        %v3874 = vmul.f32 %v3873, 0.6931472
        %v3875 = vmul.f32 -0.5, %v3858
        %v3876 = vadd.f32 %v3875, 1.0
        %v3877 = vmul.f32 %v3876, %v3858
        %v3878 = vand.u32 2147483647, %v3858
        %vm3879 = vcmp.lt.f32.partialorder %v3878, 0.0004427343
        %v3880 = vsel %vm3879, %v3877, %v3874
        %v3881 = vadd.f32 %v3860, 1.0
        %v3882 = vlog2.pop %v3881
        %v3883 = vmul.f32 %v3882, 0.6931472
        %v3884 = vmul.f32 -0.5, %v3860
        %v3885 = vadd.f32 %v3884, 1.0
        %v3886 = vmul.f32 %v3885, %v3860
        %v3887 = vand.u32 2147483647, %v3860
        %vm3888 = vcmp.lt.f32.partialorder %v3887, 0.0004427343
        %v3889 = vsel %vm3888, %v3886, %v3883
        %v3890 = vadd.f32 %v3862, 1.0
        %v3891 = vlog2.pop %v3890
        %v3892 = vmul.f32 %v3891, 0.6931472
        %v3893 = vmul.f32 -0.5, %v3862
        %v3894 = vadd.f32 %v3893, 1.0
        %v3895 = vmul.f32 %v3894, %v3862
        %v3896 = vand.u32 2147483647, %v3862
        %vm3897 = vcmp.lt.f32.partialorder %v3896, 0.0004427343
        %v3898 = vsel %vm3897, %v3895, %v3892
        %v3899 = vadd.f32 %v3843, %v3871
        %v3900 = vadd.f32 %v3844, %v3880
        %v3901 = vadd.f32 %v3845, %v3889
        %v3902 = vadd.f32 %v3846, %v3898
        %v3907 = vcombine.low %v3899, %v3900
        %v3908 = vcombine.low %v3901, %v3902
        %v3910 = vunpack.c.l.s4 1966171168
        %v3911 = vunpack.c.0.s8 %v3910
        %v3912 = vlaneseq
        %v3913 = vshrl.u32 %v3912, 7
        %v3914 = vsub.s32 %v3911, %v3913
        %v3915 = vrot.slane %v3907, %v3914
        %v3917 = vunpack.c.l.s4 1966171168
        %v3918 = vunpack.c.0.s8 %v3917
        %v3919 = vlaneseq
        %v3920 = vshrl.u32 %v3919, 7
        %v3921 = vsub.s32 %v3918, %v3920
        %v3922 = vrot.slane %v3908, %v3921
        %v3923 = vcombine.low %v3915, %v3922
        %v3925 = vunpack.c.l.s4 1966171168
        %v3926 = vunpack.c.0.s8 %v3925
        %v3927 = vlaneseq
        %v3928 = vshrl.u32 %v3927, 7
        %v3929 = vsub.s32 %v3926, %v3928
        %v3930 = vrot.slane %v3923, %v3929
        %3932 = vst.msk [vmem:[%s245 + $0x14] sm:$0xf] %vm921, %v3930
        %v3933 = vld [vmem:[%s219 + $0x18] sm:$0xf]
        %v3935 = vlaneseq
        %v3936 = vshrl.u32 %v3935, 7
        %v3937 = vsub.s32 0, %v3936
        %v3938 = vrot.slane %v3933, %v3937
        %v3939 = vlaneseq
        %v3940 = vshrl.u32 %v3939, 7
        %v3941 = vsub.s32 1, %v3940
        %v3942 = vrot.slane %v3933, %v3941
        %v3943 = vlaneseq
        %v3944 = vshrl.u32 %v3943, 7
        %v3945 = vsub.s32 2, %v3944
        %v3946 = vrot.slane %v3933, %v3945
        %v3947 = vlaneseq
        %v3948 = vshrl.u32 %v3947, 7
        %v3949 = vsub.s32 3, %v3948
        %v3950 = vrot.slane %v3933, %v3949
        %v3955 = vmul.f32 %v267, %v3938
        %v3956 = vmul.f32 %v267, %v3942
        %v3957 = vmul.f32 %v267, %v3946
        %v3958 = vmul.f32 %v267, %v3950
        %v3959 = vmul.f32 %v272, %v3938
        %v3960 = vmul.f32 %v272, %v3942
        %v3961 = vmul.f32 %v272, %v3946
        %v3962 = vmul.f32 %v272, %v3950
        %v3963 = vadd.f32 %v3955, %v305
        %v3964 = vadd.f32 %v3956, %v305
        %v3965 = vadd.f32 %v3957, %v305
        %v3966 = vadd.f32 %v3958, %v305
        %v3967 = vadd.f32 %v3959, %v309
        %v3968 = vadd.f32 %v3960, %v309
        %v3969 = vadd.f32 %v3961, %v309
        %v3970 = vadd.f32 %v3962, %v309
        %v3971 = vtanh.pop %v3963
        %v3972 = vtanh.pop %v3964
        %v3973 = vtanh.pop %v3965
        %v3974 = vtanh.pop %v3966
        %v3975 = vtanh.pop %v3967
        %v3976 = vtanh.pop %v3968
        %v3977 = vtanh.pop %v3969
        %v3978 = vtanh.pop %v3970
        %3979 = vmatprep.subr.mxu0 %v3972
        %3980 = vmatpush1.msra.mxu0 %v3971
        %3981 = vmatprep.subr.mxu0 %v3976
        %3982 = vmatpush1.msra.mxu0 %v3975
        %3983 = vmatprep.subr.mxu0 0.0
        %3984 = vmatpush1.msra.mxu0 0.0
        %3985 = vmatprep.subr.mxu0 0.0
        %3986 = vmatpush1.msra.mxu0 0.0
        %3987 = vmatprep.subr.mxu0 0.0
        %3988 = vmatpush1.msra.mxu0 0.0
        %3989 = vmatprep.subr.mxu0 0.0
        %3990 = vmatpush1.msra.mxu0 0.0
        %3991 = vmatprep.subr.mxu0 0.0
        %3992 = vmatpush1.msra.mxu0 0.0
        %3993 = vmatprep.subr.mxu0 0.0
        %3994 = vmatpush1.msra.mxu0 0.0
        %3995 = vmatprep.subr.mxu0 0.0
        %3996 = vmatpush1.msra.mxu0 0.0
        %3997 = vmatprep.subr.mxu0 0.0
        %3998 = vmatpush1.msra.mxu0 0.0
        %3999 = vmatprep.subr.mxu0 0.0
        %4000 = vmatpush1.msra.mxu0 0.0
        %4001 = vmatprep.subr.mxu0 0.0
        %4002 = vmatpush1.msra.mxu0 0.0
        %4003 = vmatprep.subr.mxu0 0.0
        %4004 = vmatpush1.msra.mxu0 0.0
        %4005 = vmatprep.subr.mxu0 0.0
        %4006 = vmatpush1.msra.mxu0 0.0
        %4007 = vmatprep.subr.mxu0 0.0
        %4008 = vmatpush1.msra.mxu0 0.0
        %4009 = vmatprep.subr.mxu0 0.0
        %4010 = vmatpush1.msra.mxu0 0.0
        %4011 = vmatprep.subr.mxu0 0.0
        %4012 = vmatpush1.msra.mxu0 0.0
        %4013 = vmatprep.subr.mxu0 0.0
        %4014 = vmatpush1.msra.mxu0 0.0
        %4015 = vmatprep.subr.mxu0 0.0
        %4016 = vmatpush1.msra.mxu0 0.0
        %4017 = vmatprep.subr.mxu0 0.0
        %4018 = vmatpush1.msra.mxu0 0.0
        %4019 = vmatprep.subr.mxu0 0.0
        %4020 = vmatpush1.msra.mxu0 0.0
        %4021 = vmatprep.subr.mxu0 0.0
        %4022 = vmatpush1.msra.mxu0 0.0
        %4023 = vmatprep.subr.mxu0 0.0
        %4024 = vmatpush1.msra.mxu0 0.0
        %4025 = vmatprep.subr.mxu0 0.0
        %4026 = vmatpush1.msra.mxu0 0.0
        %4027 = vmatprep.subr.mxu0 0.0
        %4028 = vmatpush1.msra.mxu0 0.0
        %4029 = vmatprep.subr.mxu0 0.0
        %4030 = vmatpush1.msra.mxu0 0.0
        %4031 = vmatprep.subr.mxu0 0.0
        %4032 = vmatpush1.msra.mxu0 0.0
        %4033 = vmatprep.subr.mxu0 0.0
        %4034 = vmatpush1.msra.mxu0 0.0
        %4035 = vmatprep.subr.mxu0 0.0
        %4036 = vmatpush1.msra.mxu0 0.0
        %4037 = vmatprep.subr.mxu0 0.0
        %4038 = vmatpush1.msra.mxu0 0.0
        %4039 = vmatprep.subr.mxu0 0.0
        %4040 = vmatpush1.msra.mxu0 0.0
        %4041 = vmatprep.subr.mxu0 0.0
        %4042 = vmatpush1.msra.mxu0 0.0
        %4043 = vmatprep.mubr.f32.mxu0 0.0
        %4044 = vmatmul.mubr.f32.gmra.mrb[0].mxu0 %v337
        %v4045 = vpop.f32.mrb[0].mxu0
        %v4046 = vadd.f32 %v329, %v4045
        %v4047 = vpop.f32.mrb[0].mxu0
        %v4048 = vadd.f32 %v329, %v4047
        %4049 = vmatprep.mubr.f32.mxu0 0.0
        %4050 = vmatmul.mubr.f32.gmra.mrb[0].mxu0 %v340
        %v4051 = vpop.f32.mrb[0].mxu0
        %v4052 = vadd.f32 %v333, %v4051
        %v4053 = vpop.f32.mrb[0].mxu0
        %v4054 = vadd.f32 %v333, %v4053
        %4055 = vdwg.mxu0
        %4056 = vmatprep.subr.mxu0 %v3974
        %4057 = vmatpush1.msra.mxu0 %v3973
        %4058 = vmatprep.subr.mxu0 %v3978
        %4059 = vmatpush1.msra.mxu0 %v3977
        %4060 = vmatprep.subr.mxu0 0.0
        %4061 = vmatpush1.msra.mxu0 0.0
        %4062 = vmatprep.subr.mxu0 0.0
        %4063 = vmatpush1.msra.mxu0 0.0
        %4064 = vmatprep.subr.mxu0 0.0
        %4065 = vmatpush1.msra.mxu0 0.0
        %4066 = vmatprep.subr.mxu0 0.0
        %4067 = vmatpush1.msra.mxu0 0.0
        %4068 = vmatprep.subr.mxu0 0.0
        %4069 = vmatpush1.msra.mxu0 0.0
        %4070 = vmatprep.subr.mxu0 0.0
        %4071 = vmatpush1.msra.mxu0 0.0
        %4072 = vmatprep.subr.mxu0 0.0
        %4073 = vmatpush1.msra.mxu0 0.0
        %4074 = vmatprep.subr.mxu0 0.0
        %4075 = vmatpush1.msra.mxu0 0.0
        %4076 = vmatprep.subr.mxu0 0.0
        %4077 = vmatpush1.msra.mxu0 0.0
        %4078 = vmatprep.subr.mxu0 0.0
        %4079 = vmatpush1.msra.mxu0 0.0
        %4080 = vmatprep.subr.mxu0 0.0
        %4081 = vmatpush1.msra.mxu0 0.0
        %4082 = vmatprep.subr.mxu0 0.0
        %4083 = vmatpush1.msra.mxu0 0.0
        %4084 = vmatprep.subr.mxu0 0.0
        %4085 = vmatpush1.msra.mxu0 0.0
        %4086 = vmatprep.subr.mxu0 0.0
        %4087 = vmatpush1.msra.mxu0 0.0
        %4088 = vmatprep.subr.mxu0 0.0
        %4089 = vmatpush1.msra.mxu0 0.0
        %4090 = vmatprep.subr.mxu0 0.0
        %4091 = vmatpush1.msra.mxu0 0.0
        %4092 = vmatprep.subr.mxu0 0.0
        %4093 = vmatpush1.msra.mxu0 0.0
        %4094 = vmatprep.subr.mxu0 0.0
        %4095 = vmatpush1.msra.mxu0 0.0
        %4096 = vmatprep.subr.mxu0 0.0
        %4097 = vmatpush1.msra.mxu0 0.0
        %4098 = vmatprep.subr.mxu0 0.0
        %4099 = vmatpush1.msra.mxu0 0.0
        %4100 = vmatprep.subr.mxu0 0.0
        %4101 = vmatpush1.msra.mxu0 0.0
        %4102 = vmatprep.subr.mxu0 0.0
        %4103 = vmatpush1.msra.mxu0 0.0
        %4104 = vmatprep.subr.mxu0 0.0
        %4105 = vmatpush1.msra.mxu0 0.0
        %4106 = vmatprep.subr.mxu0 0.0
        %4107 = vmatpush1.msra.mxu0 0.0
        %4108 = vmatprep.subr.mxu0 0.0
        %4109 = vmatpush1.msra.mxu0 0.0
        %4110 = vmatprep.subr.mxu0 0.0
        %4111 = vmatpush1.msra.mxu0 0.0
        %4112 = vmatprep.subr.mxu0 0.0
        %4113 = vmatpush1.msra.mxu0 0.0
        %4114 = vmatprep.subr.mxu0 0.0
        %4115 = vmatpush1.msra.mxu0 0.0
        %4116 = vmatprep.subr.mxu0 0.0
        %4117 = vmatpush1.msra.mxu0 0.0
        %4118 = vmatprep.subr.mxu0 0.0
        %4119 = vmatpush1.msra.mxu0 0.0
        %4120 = vmatprep.mubr.f32.mxu0 0.0
        %4121 = vmatmul.mubr.f32.gmra.mrb[0].mxu0 %v337
        %v4122 = vpop.f32.mrb[0].mxu0
        %v4123 = vadd.f32 %v329, %v4122
        %v4124 = vpop.f32.mrb[0].mxu0
        %v4125 = vadd.f32 %v329, %v4124
        %4126 = vmatprep.mubr.f32.mxu0 0.0
        %4127 = vmatmul.mubr.f32.gmra.mrb[0].mxu0 %v340
        %v4128 = vpop.f32.mrb[0].mxu0
        %v4129 = vadd.f32 %v333, %v4128
        %v4130 = vpop.f32.mrb[0].mxu0
        %v4131 = vadd.f32 %v333, %v4130
        %4132 = vdwg.mxu0
        %v4133 = vtanh.pop %v4046
        %v4134 = vtanh.pop %v4048
        %v4135 = vtanh.pop %v4123
        %v4136 = vtanh.pop %v4125
        %v4137 = vtanh.pop %v4052
        %v4138 = vtanh.pop %v4054
        %v4139 = vtanh.pop %v4129
        %v4140 = vtanh.pop %v4131
        %4141 = vmatprep.subr.mxu0 %v4134
        %4142 = vmatpush1.msra.mxu0 %v4133
        %4143 = vmatprep.subr.mxu0 %v4138
        %4144 = vmatpush1.msra.mxu0 %v4137
        %4145 = vmatprep.subr.mxu0 0.0
        %4146 = vmatpush1.msra.mxu0 0.0
        %4147 = vmatprep.subr.mxu0 0.0
        %4148 = vmatpush1.msra.mxu0 0.0
        %4149 = vmatprep.subr.mxu0 0.0
        %4150 = vmatpush1.msra.mxu0 0.0
        %4151 = vmatprep.subr.mxu0 0.0
        %4152 = vmatpush1.msra.mxu0 0.0
        %4153 = vmatprep.subr.mxu0 0.0
        %4154 = vmatpush1.msra.mxu0 0.0
        %4155 = vmatprep.subr.mxu0 0.0
        %4156 = vmatpush1.msra.mxu0 0.0
        %4157 = vmatprep.subr.mxu0 0.0
        %4158 = vmatpush1.msra.mxu0 0.0
        %4159 = vmatprep.subr.mxu0 0.0
        %4160 = vmatpush1.msra.mxu0 0.0
        %4161 = vmatprep.subr.mxu0 0.0
        %4162 = vmatpush1.msra.mxu0 0.0
        %4163 = vmatprep.subr.mxu0 0.0
        %4164 = vmatpush1.msra.mxu0 0.0
        %4165 = vmatprep.subr.mxu0 0.0
        %4166 = vmatpush1.msra.mxu0 0.0
        %4167 = vmatprep.subr.mxu0 0.0
        %4168 = vmatpush1.msra.mxu0 0.0
        %4169 = vmatprep.subr.mxu0 0.0
        %4170 = vmatpush1.msra.mxu0 0.0
        %4171 = vmatprep.subr.mxu0 0.0
        %4172 = vmatpush1.msra.mxu0 0.0
        %4173 = vmatprep.subr.mxu0 0.0
        %4174 = vmatpush1.msra.mxu0 0.0
        %4175 = vmatprep.subr.mxu0 0.0
        %4176 = vmatpush1.msra.mxu0 0.0
        %4177 = vmatprep.subr.mxu0 0.0
        %4178 = vmatpush1.msra.mxu0 0.0
        %4179 = vmatprep.subr.mxu0 0.0
        %4180 = vmatpush1.msra.mxu0 0.0
        %4181 = vmatprep.subr.mxu0 0.0
        %4182 = vmatpush1.msra.mxu0 0.0
        %4183 = vmatprep.subr.mxu0 0.0
        %4184 = vmatpush1.msra.mxu0 0.0
        %4185 = vmatprep.subr.mxu0 0.0
        %4186 = vmatpush1.msra.mxu0 0.0
        %4187 = vmatprep.subr.mxu0 0.0
        %4188 = vmatpush1.msra.mxu0 0.0
        %4189 = vmatprep.subr.mxu0 0.0
        %4190 = vmatpush1.msra.mxu0 0.0
        %4191 = vmatprep.subr.mxu0 0.0
        %4192 = vmatpush1.msra.mxu0 0.0
        %4193 = vmatprep.subr.mxu0 0.0
        %4194 = vmatpush1.msra.mxu0 0.0
        %4195 = vmatprep.subr.mxu0 0.0
        %4196 = vmatpush1.msra.mxu0 0.0
        %4197 = vmatprep.subr.mxu0 0.0
        %4198 = vmatpush1.msra.mxu0 0.0
        %4199 = vmatprep.subr.mxu0 0.0
        %4200 = vmatpush1.msra.mxu0 0.0
        %4201 = vmatprep.subr.mxu0 0.0
        %4202 = vmatpush1.msra.mxu0 0.0
        %4203 = vmatprep.subr.mxu0 0.0
        %4204 = vmatpush1.msra.mxu0 0.0
        %4205 = vmatprep.mubr.f32.mxu0 0.0
        %4206 = vmatmul.mubr.f32.gmra.mrb[0].mxu0 %v513
        %v4207 = vpop.f32.mrb[0].mxu0
        %v4208 = vadd.f32 %v506, %v4207
        %v4209 = vpop.f32.mrb[0].mxu0
        %v4210 = vadd.f32 %v506, %v4209
        %4211 = vmatprep.mubr.f32.mxu0 0.0
        %4212 = vmatmul.mubr.f32.gmra.mrb[0].mxu0 %v516
        %v4213 = vpop.f32.mrb[0].mxu0
        %v4214 = vadd.f32 %v510, %v4213
        %v4215 = vpop.f32.mrb[0].mxu0
        %v4216 = vadd.f32 %v510, %v4215
        %4217 = vdwg.mxu0
        %4218 = vmatprep.subr.mxu0 %v4136
        %4219 = vmatpush1.msra.mxu0 %v4135
        %4220 = vmatprep.subr.mxu0 %v4140
        %4221 = vmatpush1.msra.mxu0 %v4139
        %4222 = vmatprep.subr.mxu0 0.0
        %4223 = vmatpush1.msra.mxu0 0.0
        %4224 = vmatprep.subr.mxu0 0.0
        %4225 = vmatpush1.msra.mxu0 0.0
        %4226 = vmatprep.subr.mxu0 0.0
        %4227 = vmatpush1.msra.mxu0 0.0
        %4228 = vmatprep.subr.mxu0 0.0
        %4229 = vmatpush1.msra.mxu0 0.0
        %4230 = vmatprep.subr.mxu0 0.0
        %4231 = vmatpush1.msra.mxu0 0.0
        %4232 = vmatprep.subr.mxu0 0.0
        %4233 = vmatpush1.msra.mxu0 0.0
        %4234 = vmatprep.subr.mxu0 0.0
        %4235 = vmatpush1.msra.mxu0 0.0
        %4236 = vmatprep.subr.mxu0 0.0
        %4237 = vmatpush1.msra.mxu0 0.0
        %4238 = vmatprep.subr.mxu0 0.0
        %4239 = vmatpush1.msra.mxu0 0.0
        %4240 = vmatprep.subr.mxu0 0.0
        %4241 = vmatpush1.msra.mxu0 0.0
        %4242 = vmatprep.subr.mxu0 0.0
        %4243 = vmatpush1.msra.mxu0 0.0
        %4244 = vmatprep.subr.mxu0 0.0
        %4245 = vmatpush1.msra.mxu0 0.0
        %4246 = vmatprep.subr.mxu0 0.0
        %4247 = vmatpush1.msra.mxu0 0.0
        %4248 = vmatprep.subr.mxu0 0.0
        %4249 = vmatpush1.msra.mxu0 0.0
        %4250 = vmatprep.subr.mxu0 0.0
        %4251 = vmatpush1.msra.mxu0 0.0
        %4252 = vmatprep.subr.mxu0 0.0
        %4253 = vmatpush1.msra.mxu0 0.0
        %4254 = vmatprep.subr.mxu0 0.0
        %4255 = vmatpush1.msra.mxu0 0.0
        %4256 = vmatprep.subr.mxu0 0.0
        %4257 = vmatpush1.msra.mxu0 0.0
        %4258 = vmatprep.subr.mxu0 0.0
        %4259 = vmatpush1.msra.mxu0 0.0
        %4260 = vmatprep.subr.mxu0 0.0
        %4261 = vmatpush1.msra.mxu0 0.0
        %4262 = vmatprep.subr.mxu0 0.0
        %4263 = vmatpush1.msra.mxu0 0.0
        %4264 = vmatprep.subr.mxu0 0.0
        %4265 = vmatpush1.msra.mxu0 0.0
        %4266 = vmatprep.subr.mxu0 0.0
        %4267 = vmatpush1.msra.mxu0 0.0
        %4268 = vmatprep.subr.mxu0 0.0
        %4269 = vmatpush1.msra.mxu0 0.0
        %4270 = vmatprep.subr.mxu0 0.0
        %4271 = vmatpush1.msra.mxu0 0.0
        %4272 = vmatprep.subr.mxu0 0.0
        %4273 = vmatpush1.msra.mxu0 0.0
        %4274 = vmatprep.subr.mxu0 0.0
        %4275 = vmatpush1.msra.mxu0 0.0
        %4276 = vmatprep.subr.mxu0 0.0
        %4277 = vmatpush1.msra.mxu0 0.0
        %4278 = vmatprep.subr.mxu0 0.0
        %4279 = vmatpush1.msra.mxu0 0.0
        %4280 = vmatprep.subr.mxu0 0.0
        %4281 = vmatpush1.msra.mxu0 0.0
        %4282 = vmatprep.mubr.f32.mxu0 0.0
        %4283 = vmatmul.mubr.f32.gmra.mrb[0].mxu0 %v513
        %v4284 = vpop.f32.mrb[0].mxu0
        %v4285 = vadd.f32 %v506, %v4284
        %v4286 = vpop.f32.mrb[0].mxu0
        %v4287 = vadd.f32 %v506, %v4286
        %4288 = vmatprep.mubr.f32.mxu0 0.0
        %4289 = vmatmul.mubr.f32.gmra.mrb[0].mxu0 %v516
        %v4290 = vpop.f32.mrb[0].mxu0
        %v4291 = vadd.f32 %v510, %v4290
        %v4292 = vpop.f32.mrb[0].mxu0
        %v4293 = vadd.f32 %v510, %v4292
        %4294 = vdwg.mxu0
        %v4295 = vtanh.pop %v4208
        %v4296 = vtanh.pop %v4210
        %v4297 = vtanh.pop %v4285
        %v4298 = vtanh.pop %v4287
        %v4299 = vtanh.pop %v4214
        %v4300 = vtanh.pop %v4216
        %v4301 = vtanh.pop %v4291
        %v4302 = vtanh.pop %v4293
        %4303 = vmatprep.subr.mxu0 %v4296
        %4304 = vmatpush1.msra.mxu0 %v4295
        %4305 = vmatprep.subr.mxu0 %v4300
        %4306 = vmatpush1.msra.mxu0 %v4299
        %4307 = vmatprep.subr.mxu0 0.0
        %4308 = vmatpush1.msra.mxu0 0.0
        %4309 = vmatprep.subr.mxu0 0.0
        %4310 = vmatpush1.msra.mxu0 0.0
        %4311 = vmatprep.subr.mxu0 0.0
        %4312 = vmatpush1.msra.mxu0 0.0
        %4313 = vmatprep.subr.mxu0 0.0
        %4314 = vmatpush1.msra.mxu0 0.0
        %4315 = vmatprep.subr.mxu0 0.0
        %4316 = vmatpush1.msra.mxu0 0.0
        %4317 = vmatprep.subr.mxu0 0.0
        %4318 = vmatpush1.msra.mxu0 0.0
        %4319 = vmatprep.subr.mxu0 0.0
        %4320 = vmatpush1.msra.mxu0 0.0
        %4321 = vmatprep.subr.mxu0 0.0
        %4322 = vmatpush1.msra.mxu0 0.0
        %4323 = vmatprep.subr.mxu0 0.0
        %4324 = vmatpush1.msra.mxu0 0.0
        %4325 = vmatprep.subr.mxu0 0.0
        %4326 = vmatpush1.msra.mxu0 0.0
        %4327 = vmatprep.subr.mxu0 0.0
        %4328 = vmatpush1.msra.mxu0 0.0
        %4329 = vmatprep.subr.mxu0 0.0
        %4330 = vmatpush1.msra.mxu0 0.0
        %4331 = vmatprep.subr.mxu0 0.0
        %4332 = vmatpush1.msra.mxu0 0.0
        %4333 = vmatprep.subr.mxu0 0.0
        %4334 = vmatpush1.msra.mxu0 0.0
        %4335 = vmatprep.subr.mxu0 0.0
        %4336 = vmatpush1.msra.mxu0 0.0
        %4337 = vmatprep.subr.mxu0 0.0
        %4338 = vmatpush1.msra.mxu0 0.0
        %4339 = vmatprep.subr.mxu0 0.0
        %4340 = vmatpush1.msra.mxu0 0.0
        %4341 = vmatprep.subr.mxu0 0.0
        %4342 = vmatpush1.msra.mxu0 0.0
        %4343 = vmatprep.subr.mxu0 0.0
        %4344 = vmatpush1.msra.mxu0 0.0
        %4345 = vmatprep.subr.mxu0 0.0
        %4346 = vmatpush1.msra.mxu0 0.0
        %4347 = vmatprep.subr.mxu0 0.0
        %4348 = vmatpush1.msra.mxu0 0.0
        %4349 = vmatprep.subr.mxu0 0.0
        %4350 = vmatpush1.msra.mxu0 0.0
        %4351 = vmatprep.subr.mxu0 0.0
        %4352 = vmatpush1.msra.mxu0 0.0
        %4353 = vmatprep.subr.mxu0 0.0
        %4354 = vmatpush1.msra.mxu0 0.0
        %4355 = vmatprep.subr.mxu0 0.0
        %4356 = vmatpush1.msra.mxu0 0.0
        %4357 = vmatprep.subr.mxu0 0.0
        %4358 = vmatpush1.msra.mxu0 0.0
        %4359 = vmatprep.subr.mxu0 0.0
        %4360 = vmatpush1.msra.mxu0 0.0
        %4361 = vmatprep.subr.mxu0 0.0
        %4362 = vmatpush1.msra.mxu0 0.0
        %4363 = vmatprep.subr.mxu0 0.0
        %4364 = vmatpush1.msra.mxu0 0.0
        %4365 = vmatprep.subr.mxu0 0.0
        %4366 = vmatpush1.msra.mxu0 0.0
        %4367 = vmatprep.mubr.f32.mxu0 0.0
        %4368 = vmatmul.mubr.f32.gmra.mrb[0].mxu0 %v685
        %v4369 = vpop.f32.mrb[0].mxu0
        %v4370 = vadd.f32 %v682, %v4369
        %v4371 = vpop.f32.mrb[0].mxu0
        %v4372 = vadd.f32 %v682, %v4371
        %4373 = vdwg.mxu0
        %4374 = vmatprep.subr.mxu0 %v4298
        %4375 = vmatpush1.msra.mxu0 %v4297
        %4376 = vmatprep.subr.mxu0 %v4302
        %4377 = vmatpush1.msra.mxu0 %v4301
        %4378 = vmatprep.subr.mxu0 0.0
        %4379 = vmatpush1.msra.mxu0 0.0
        %4380 = vmatprep.subr.mxu0 0.0
        %4381 = vmatpush1.msra.mxu0 0.0
        %4382 = vmatprep.subr.mxu0 0.0
        %4383 = vmatpush1.msra.mxu0 0.0
        %4384 = vmatprep.subr.mxu0 0.0
        %4385 = vmatpush1.msra.mxu0 0.0
        %4386 = vmatprep.subr.mxu0 0.0
        %4387 = vmatpush1.msra.mxu0 0.0
        %4388 = vmatprep.subr.mxu0 0.0
        %4389 = vmatpush1.msra.mxu0 0.0
        %4390 = vmatprep.subr.mxu0 0.0
        %4391 = vmatpush1.msra.mxu0 0.0
        %4392 = vmatprep.subr.mxu0 0.0
        %4393 = vmatpush1.msra.mxu0 0.0
        %4394 = vmatprep.subr.mxu0 0.0
        %4395 = vmatpush1.msra.mxu0 0.0
        %4396 = vmatprep.subr.mxu0 0.0
        %4397 = vmatpush1.msra.mxu0 0.0
        %4398 = vmatprep.subr.mxu0 0.0
        %4399 = vmatpush1.msra.mxu0 0.0
        %4400 = vmatprep.subr.mxu0 0.0
        %4401 = vmatpush1.msra.mxu0 0.0
        %4402 = vmatprep.subr.mxu0 0.0
        %4403 = vmatpush1.msra.mxu0 0.0
        %4404 = vmatprep.subr.mxu0 0.0
        %4405 = vmatpush1.msra.mxu0 0.0
        %4406 = vmatprep.subr.mxu0 0.0
        %4407 = vmatpush1.msra.mxu0 0.0
        %4408 = vmatprep.subr.mxu0 0.0
        %4409 = vmatpush1.msra.mxu0 0.0
        %4410 = vmatprep.subr.mxu0 0.0
        %4411 = vmatpush1.msra.mxu0 0.0
        %4412 = vmatprep.subr.mxu0 0.0
        %4413 = vmatpush1.msra.mxu0 0.0
        %4414 = vmatprep.subr.mxu0 0.0
        %4415 = vmatpush1.msra.mxu0 0.0
        %4416 = vmatprep.subr.mxu0 0.0
        %4417 = vmatpush1.msra.mxu0 0.0
        %4418 = vmatprep.subr.mxu0 0.0
        %4419 = vmatpush1.msra.mxu0 0.0
        %4420 = vmatprep.subr.mxu0 0.0
        %4421 = vmatpush1.msra.mxu0 0.0
        %4422 = vmatprep.subr.mxu0 0.0
        %4423 = vmatpush1.msra.mxu0 0.0
        %4424 = vmatprep.subr.mxu0 0.0
        %4425 = vmatpush1.msra.mxu0 0.0
        %4426 = vmatprep.subr.mxu0 0.0
        %4427 = vmatpush1.msra.mxu0 0.0
        %4428 = vmatprep.subr.mxu0 0.0
        %4429 = vmatpush1.msra.mxu0 0.0
        %4430 = vmatprep.subr.mxu0 0.0
        %4431 = vmatpush1.msra.mxu0 0.0
        %4432 = vmatprep.subr.mxu0 0.0
        %4433 = vmatpush1.msra.mxu0 0.0
        %4434 = vmatprep.subr.mxu0 0.0
        %4435 = vmatpush1.msra.mxu0 0.0
        %4436 = vmatprep.subr.mxu0 0.0
        %4437 = vmatpush1.msra.mxu0 0.0
        %4438 = vmatprep.mubr.f32.mxu0 0.0
        %4439 = vmatmul.mubr.f32.gmra.mrb[0].mxu0 %v685
        %v4440 = vpop.f32.mrb[0].mxu0
        %v4441 = vadd.f32 %v682, %v4440
        %v4442 = vpop.f32.mrb[0].mxu0
        %v4443 = vadd.f32 %v682, %v4442
        %4444 = vdwg.mxu0
        %v4445 = vmax.f32 %v4370, 0.0
        %v4446 = vmax.f32 %v4372, 0.0
        %v4447 = vmax.f32 %v4441, 0.0
        %v4448 = vmax.f32 %v4443, 0.0
        %v4449 = vand.u32 2147483647, %v4370
        %v4450 = vand.u32 2147483647, %v4372
        %v4451 = vand.u32 2147483647, %v4441
        %v4452 = vand.u32 2147483647, %v4443
        %v4453 = vsub.f32 0.0, %v4449
        %v4454 = vsub.f32 0.0, %v4450
        %v4455 = vsub.f32 0.0, %v4451
        %v4456 = vsub.f32 0.0, %v4452
        %v4457 = vmul.f32 %v4453, 1.442695
        %v4458 = vpow.pop %v4457
        %v4459 = vmul.f32 %v4454, 1.442695
        %v4460 = vpow.pop %v4459
        %v4461 = vmul.f32 %v4455, 1.442695
        %v4462 = vpow.pop %v4461
        %v4463 = vmul.f32 %v4456, 1.442695
        %v4464 = vpow.pop %v4463
        %v4465 = vadd.f32 %v4458, 1.0
        %v4466 = vlog2.pop %v4465
        %v4467 = vmul.f32 %v4466, 0.6931472
        %v4468 = vmul.f32 -0.5, %v4458
        %v4469 = vadd.f32 %v4468, 1.0
        %v4470 = vmul.f32 %v4469, %v4458
        %v4471 = vand.u32 2147483647, %v4458
        %vm4472 = vcmp.lt.f32.partialorder %v4471, 0.0004427343
        %v4473 = vsel %vm4472, %v4470, %v4467
        %v4474 = vadd.f32 %v4460, 1.0
        %v4475 = vlog2.pop %v4474
        %v4476 = vmul.f32 %v4475, 0.6931472
        %v4477 = vmul.f32 -0.5, %v4460
        %v4478 = vadd.f32 %v4477, 1.0
        %v4479 = vmul.f32 %v4478, %v4460
        %v4480 = vand.u32 2147483647, %v4460
        %vm4481 = vcmp.lt.f32.partialorder %v4480, 0.0004427343
        %v4482 = vsel %vm4481, %v4479, %v4476
        %v4483 = vadd.f32 %v4462, 1.0
        %v4484 = vlog2.pop %v4483
        %v4485 = vmul.f32 %v4484, 0.6931472
        %v4486 = vmul.f32 -0.5, %v4462
        %v4487 = vadd.f32 %v4486, 1.0
        %v4488 = vmul.f32 %v4487, %v4462
        %v4489 = vand.u32 2147483647, %v4462
        %vm4490 = vcmp.lt.f32.partialorder %v4489, 0.0004427343
        %v4491 = vsel %vm4490, %v4488, %v4485
        %v4492 = vadd.f32 %v4464, 1.0
        %v4493 = vlog2.pop %v4492
        %v4494 = vmul.f32 %v4493, 0.6931472
        %v4495 = vmul.f32 -0.5, %v4464
        %v4496 = vadd.f32 %v4495, 1.0
        %v4497 = vmul.f32 %v4496, %v4464
        %v4498 = vand.u32 2147483647, %v4464
        %vm4499 = vcmp.lt.f32.partialorder %v4498, 0.0004427343
        %v4500 = vsel %vm4499, %v4497, %v4494
        %v4501 = vadd.f32 %v4445, %v4473
        %v4502 = vadd.f32 %v4446, %v4482
        %v4503 = vadd.f32 %v4447, %v4491
        %v4504 = vadd.f32 %v4448, %v4500
        %v4509 = vcombine.low %v4501, %v4502
        %v4510 = vcombine.low %v4503, %v4504
        %v4512 = vunpack.c.l.s4 1966171168
        %v4513 = vunpack.c.0.s8 %v4512
        %v4514 = vlaneseq
        %v4515 = vshrl.u32 %v4514, 7
        %v4516 = vsub.s32 %v4513, %v4515
        %v4517 = vrot.slane %v4509, %v4516
        %v4519 = vunpack.c.l.s4 1966171168
        %v4520 = vunpack.c.0.s8 %v4519
        %v4521 = vlaneseq
        %v4522 = vshrl.u32 %v4521, 7
        %v4523 = vsub.s32 %v4520, %v4522
        %v4524 = vrot.slane %v4510, %v4523
        %v4525 = vcombine.low %v4517, %v4524
        %v4527 = vunpack.c.l.s4 1966171168
        %v4528 = vunpack.c.0.s8 %v4527
        %v4529 = vlaneseq
        %v4530 = vshrl.u32 %v4529, 7
        %v4531 = vsub.s32 %v4528, %v4530
        %v4532 = vrot.slane %v4525, %v4531
        %4534 = vst.msk [vmem:[%s245 + $0x18] sm:$0xf] %vm921, %v4532
        %v4535 = vld [vmem:[%s219 + $0x1c] sm:$0xf]
        %v4537 = vlaneseq
        %v4538 = vshrl.u32 %v4537, 7
        %v4539 = vsub.s32 0, %v4538
        %v4540 = vrot.slane %v4535, %v4539
        %v4541 = vlaneseq
        %v4542 = vshrl.u32 %v4541, 7
        %v4543 = vsub.s32 1, %v4542
        %v4544 = vrot.slane %v4535, %v4543
        %v4545 = vlaneseq
        %v4546 = vshrl.u32 %v4545, 7
        %v4547 = vsub.s32 2, %v4546
        %v4548 = vrot.slane %v4535, %v4547
        %v4549 = vlaneseq
        %v4550 = vshrl.u32 %v4549, 7
        %v4551 = vsub.s32 3, %v4550
        %v4552 = vrot.slane %v4535, %v4551
        %v4557 = vmul.f32 %v267, %v4540
        %v4558 = vmul.f32 %v267, %v4544
        %v4559 = vmul.f32 %v267, %v4548
        %v4560 = vmul.f32 %v267, %v4552
        %v4561 = vmul.f32 %v272, %v4540
        %v4562 = vmul.f32 %v272, %v4544
        %v4563 = vmul.f32 %v272, %v4548
        %v4564 = vmul.f32 %v272, %v4552
        %v4565 = vadd.f32 %v4557, %v305
        %v4566 = vadd.f32 %v4558, %v305
        %v4567 = vadd.f32 %v4559, %v305
        %v4568 = vadd.f32 %v4560, %v305
        %v4569 = vadd.f32 %v4561, %v309
        %v4570 = vadd.f32 %v4562, %v309
        %v4571 = vadd.f32 %v4563, %v309
        %v4572 = vadd.f32 %v4564, %v309
        %v4573 = vtanh.pop %v4565
        %v4574 = vtanh.pop %v4566
        %v4575 = vtanh.pop %v4567
        %v4576 = vtanh.pop %v4568
        %v4577 = vtanh.pop %v4569
        %v4578 = vtanh.pop %v4570
        %v4579 = vtanh.pop %v4571
        %v4580 = vtanh.pop %v4572
        %4581 = vmatprep.subr.mxu0 %v4574
        %4582 = vmatpush1.msra.mxu0 %v4573
        %4583 = vmatprep.subr.mxu0 %v4578
        %4584 = vmatpush1.msra.mxu0 %v4577
        %4585 = vmatprep.subr.mxu0 0.0
        %4586 = vmatpush1.msra.mxu0 0.0
        %4587 = vmatprep.subr.mxu0 0.0
        %4588 = vmatpush1.msra.mxu0 0.0
        %4589 = vmatprep.subr.mxu0 0.0
        %4590 = vmatpush1.msra.mxu0 0.0
        %4591 = vmatprep.subr.mxu0 0.0
        %4592 = vmatpush1.msra.mxu0 0.0
        %4593 = vmatprep.subr.mxu0 0.0
        %4594 = vmatpush1.msra.mxu0 0.0
        %4595 = vmatprep.subr.mxu0 0.0
        %4596 = vmatpush1.msra.mxu0 0.0
        %4597 = vmatprep.subr.mxu0 0.0
        %4598 = vmatpush1.msra.mxu0 0.0
        %4599 = vmatprep.subr.mxu0 0.0
        %4600 = vmatpush1.msra.mxu0 0.0
        %4601 = vmatprep.subr.mxu0 0.0
        %4602 = vmatpush1.msra.mxu0 0.0
        %4603 = vmatprep.subr.mxu0 0.0
        %4604 = vmatpush1.msra.mxu0 0.0
        %4605 = vmatprep.subr.mxu0 0.0
        %4606 = vmatpush1.msra.mxu0 0.0
        %4607 = vmatprep.subr.mxu0 0.0
        %4608 = vmatpush1.msra.mxu0 0.0
        %4609 = vmatprep.subr.mxu0 0.0
        %4610 = vmatpush1.msra.mxu0 0.0
        %4611 = vmatprep.subr.mxu0 0.0
        %4612 = vmatpush1.msra.mxu0 0.0
        %4613 = vmatprep.subr.mxu0 0.0
        %4614 = vmatpush1.msra.mxu0 0.0
        %4615 = vmatprep.subr.mxu0 0.0
        %4616 = vmatpush1.msra.mxu0 0.0
        %4617 = vmatprep.subr.mxu0 0.0
        %4618 = vmatpush1.msra.mxu0 0.0
        %4619 = vmatprep.subr.mxu0 0.0
        %4620 = vmatpush1.msra.mxu0 0.0
        %4621 = vmatprep.subr.mxu0 0.0
        %4622 = vmatpush1.msra.mxu0 0.0
        %4623 = vmatprep.subr.mxu0 0.0
        %4624 = vmatpush1.msra.mxu0 0.0
        %4625 = vmatprep.subr.mxu0 0.0
        %4626 = vmatpush1.msra.mxu0 0.0
        %4627 = vmatprep.subr.mxu0 0.0
        %4628 = vmatpush1.msra.mxu0 0.0
        %4629 = vmatprep.subr.mxu0 0.0
        %4630 = vmatpush1.msra.mxu0 0.0
        %4631 = vmatprep.subr.mxu0 0.0
        %4632 = vmatpush1.msra.mxu0 0.0
        %4633 = vmatprep.subr.mxu0 0.0
        %4634 = vmatpush1.msra.mxu0 0.0
        %4635 = vmatprep.subr.mxu0 0.0
        %4636 = vmatpush1.msra.mxu0 0.0
        %4637 = vmatprep.subr.mxu0 0.0
        %4638 = vmatpush1.msra.mxu0 0.0
        %4639 = vmatprep.subr.mxu0 0.0
        %4640 = vmatpush1.msra.mxu0 0.0
        %4641 = vmatprep.subr.mxu0 0.0
        %4642 = vmatpush1.msra.mxu0 0.0
        %4643 = vmatprep.subr.mxu0 0.0
        %4644 = vmatpush1.msra.mxu0 0.0
        %4645 = vmatprep.mubr.f32.mxu0 0.0
        %4646 = vmatmul.mubr.f32.gmra.mrb[0].mxu0 %v337
        %v4647 = vpop.f32.mrb[0].mxu0
        %v4648 = vadd.f32 %v329, %v4647
        %v4649 = vpop.f32.mrb[0].mxu0
        %v4650 = vadd.f32 %v329, %v4649
        %4651 = vmatprep.mubr.f32.mxu0 0.0
        %4652 = vmatmul.mubr.f32.gmra.mrb[0].mxu0 %v340
        %v4653 = vpop.f32.mrb[0].mxu0
        %v4654 = vadd.f32 %v333, %v4653
        %v4655 = vpop.f32.mrb[0].mxu0
        %v4656 = vadd.f32 %v333, %v4655
        %4657 = vdwg.mxu0
        %4658 = vmatprep.subr.mxu0 %v4576
        %4659 = vmatpush1.msra.mxu0 %v4575
        %4660 = vmatprep.subr.mxu0 %v4580
        %4661 = vmatpush1.msra.mxu0 %v4579
        %4662 = vmatprep.subr.mxu0 0.0
        %4663 = vmatpush1.msra.mxu0 0.0
        %4664 = vmatprep.subr.mxu0 0.0
        %4665 = vmatpush1.msra.mxu0 0.0
        %4666 = vmatprep.subr.mxu0 0.0
        %4667 = vmatpush1.msra.mxu0 0.0
        %4668 = vmatprep.subr.mxu0 0.0
        %4669 = vmatpush1.msra.mxu0 0.0
        %4670 = vmatprep.subr.mxu0 0.0
        %4671 = vmatpush1.msra.mxu0 0.0
        %4672 = vmatprep.subr.mxu0 0.0
        %4673 = vmatpush1.msra.mxu0 0.0
        %4674 = vmatprep.subr.mxu0 0.0
        %4675 = vmatpush1.msra.mxu0 0.0
        %4676 = vmatprep.subr.mxu0 0.0
        %4677 = vmatpush1.msra.mxu0 0.0
        %4678 = vmatprep.subr.mxu0 0.0
        %4679 = vmatpush1.msra.mxu0 0.0
        %4680 = vmatprep.subr.mxu0 0.0
        %4681 = vmatpush1.msra.mxu0 0.0
        %4682 = vmatprep.subr.mxu0 0.0
        %4683 = vmatpush1.msra.mxu0 0.0
        %4684 = vmatprep.subr.mxu0 0.0
        %4685 = vmatpush1.msra.mxu0 0.0
        %4686 = vmatprep.subr.mxu0 0.0
        %4687 = vmatpush1.msra.mxu0 0.0
        %4688 = vmatprep.subr.mxu0 0.0
        %4689 = vmatpush1.msra.mxu0 0.0
        %4690 = vmatprep.subr.mxu0 0.0
        %4691 = vmatpush1.msra.mxu0 0.0
        %4692 = vmatprep.subr.mxu0 0.0
        %4693 = vmatpush1.msra.mxu0 0.0
        %4694 = vmatprep.subr.mxu0 0.0
        %4695 = vmatpush1.msra.mxu0 0.0
        %4696 = vmatprep.subr.mxu0 0.0
        %4697 = vmatpush1.msra.mxu0 0.0
        %4698 = vmatprep.subr.mxu0 0.0
        %4699 = vmatpush1.msra.mxu0 0.0
        %4700 = vmatprep.subr.mxu0 0.0
        %4701 = vmatpush1.msra.mxu0 0.0
        %4702 = vmatprep.subr.mxu0 0.0
        %4703 = vmatpush1.msra.mxu0 0.0
        %4704 = vmatprep.subr.mxu0 0.0
        %4705 = vmatpush1.msra.mxu0 0.0
        %4706 = vmatprep.subr.mxu0 0.0
        %4707 = vmatpush1.msra.mxu0 0.0
        %4708 = vmatprep.subr.mxu0 0.0
        %4709 = vmatpush1.msra.mxu0 0.0
        %4710 = vmatprep.subr.mxu0 0.0
        %4711 = vmatpush1.msra.mxu0 0.0
        %4712 = vmatprep.subr.mxu0 0.0
        %4713 = vmatpush1.msra.mxu0 0.0
        %4714 = vmatprep.subr.mxu0 0.0
        %4715 = vmatpush1.msra.mxu0 0.0
        %4716 = vmatprep.subr.mxu0 0.0
        %4717 = vmatpush1.msra.mxu0 0.0
        %4718 = vmatprep.subr.mxu0 0.0
        %4719 = vmatpush1.msra.mxu0 0.0
        %4720 = vmatprep.subr.mxu0 0.0
        %4721 = vmatpush1.msra.mxu0 0.0
        %4722 = vmatprep.mubr.f32.mxu0 0.0
        %4723 = vmatmul.mubr.f32.gmra.mrb[0].mxu0 %v337
        %v4724 = vpop.f32.mrb[0].mxu0
        %v4725 = vadd.f32 %v329, %v4724
        %v4726 = vpop.f32.mrb[0].mxu0
        %v4727 = vadd.f32 %v329, %v4726
        %4728 = vmatprep.mubr.f32.mxu0 0.0
        %4729 = vmatmul.mubr.f32.gmra.mrb[0].mxu0 %v340
        %v4730 = vpop.f32.mrb[0].mxu0
        %v4731 = vadd.f32 %v333, %v4730
        %v4732 = vpop.f32.mrb[0].mxu0
        %v4733 = vadd.f32 %v333, %v4732
        %4734 = vdwg.mxu0
        %v4735 = vtanh.pop %v4648
        %v4736 = vtanh.pop %v4650
        %v4737 = vtanh.pop %v4725
        %v4738 = vtanh.pop %v4727
        %v4739 = vtanh.pop %v4654
        %v4740 = vtanh.pop %v4656
        %v4741 = vtanh.pop %v4731
        %v4742 = vtanh.pop %v4733
        %4743 = vmatprep.subr.mxu0 %v4736
        %4744 = vmatpush1.msra.mxu0 %v4735
        %4745 = vmatprep.subr.mxu0 %v4740
        %4746 = vmatpush1.msra.mxu0 %v4739
        %4747 = vmatprep.subr.mxu0 0.0
        %4748 = vmatpush1.msra.mxu0 0.0
        %4749 = vmatprep.subr.mxu0 0.0
        %4750 = vmatpush1.msra.mxu0 0.0
        %4751 = vmatprep.subr.mxu0 0.0
        %4752 = vmatpush1.msra.mxu0 0.0
        %4753 = vmatprep.subr.mxu0 0.0
        %4754 = vmatpush1.msra.mxu0 0.0
        %4755 = vmatprep.subr.mxu0 0.0
        %4756 = vmatpush1.msra.mxu0 0.0
        %4757 = vmatprep.subr.mxu0 0.0
        %4758 = vmatpush1.msra.mxu0 0.0
        %4759 = vmatprep.subr.mxu0 0.0
        %4760 = vmatpush1.msra.mxu0 0.0
        %4761 = vmatprep.subr.mxu0 0.0
        %4762 = vmatpush1.msra.mxu0 0.0
        %4763 = vmatprep.subr.mxu0 0.0
        %4764 = vmatpush1.msra.mxu0 0.0
        %4765 = vmatprep.subr.mxu0 0.0
        %4766 = vmatpush1.msra.mxu0 0.0
        %4767 = vmatprep.subr.mxu0 0.0
        %4768 = vmatpush1.msra.mxu0 0.0
        %4769 = vmatprep.subr.mxu0 0.0
        %4770 = vmatpush1.msra.mxu0 0.0
        %4771 = vmatprep.subr.mxu0 0.0
        %4772 = vmatpush1.msra.mxu0 0.0
        %4773 = vmatprep.subr.mxu0 0.0
        %4774 = vmatpush1.msra.mxu0 0.0
        %4775 = vmatprep.subr.mxu0 0.0
        %4776 = vmatpush1.msra.mxu0 0.0
        %4777 = vmatprep.subr.mxu0 0.0
        %4778 = vmatpush1.msra.mxu0 0.0
        %4779 = vmatprep.subr.mxu0 0.0
        %4780 = vmatpush1.msra.mxu0 0.0
        %4781 = vmatprep.subr.mxu0 0.0
        %4782 = vmatpush1.msra.mxu0 0.0
        %4783 = vmatprep.subr.mxu0 0.0
        %4784 = vmatpush1.msra.mxu0 0.0
        %4785 = vmatprep.subr.mxu0 0.0
        %4786 = vmatpush1.msra.mxu0 0.0
        %4787 = vmatprep.subr.mxu0 0.0
        %4788 = vmatpush1.msra.mxu0 0.0
        %4789 = vmatprep.subr.mxu0 0.0
        %4790 = vmatpush1.msra.mxu0 0.0
        %4791 = vmatprep.subr.mxu0 0.0
        %4792 = vmatpush1.msra.mxu0 0.0
        %4793 = vmatprep.subr.mxu0 0.0
        %4794 = vmatpush1.msra.mxu0 0.0
        %4795 = vmatprep.subr.mxu0 0.0
        %4796 = vmatpush1.msra.mxu0 0.0
        %4797 = vmatprep.subr.mxu0 0.0
        %4798 = vmatpush1.msra.mxu0 0.0
        %4799 = vmatprep.subr.mxu0 0.0
        %4800 = vmatpush1.msra.mxu0 0.0
        %4801 = vmatprep.subr.mxu0 0.0
        %4802 = vmatpush1.msra.mxu0 0.0
        %4803 = vmatprep.subr.mxu0 0.0
        %4804 = vmatpush1.msra.mxu0 0.0
        %4805 = vmatprep.subr.mxu0 0.0
        %4806 = vmatpush1.msra.mxu0 0.0
        %4807 = vmatprep.mubr.f32.mxu0 0.0
        %4808 = vmatmul.mubr.f32.gmra.mrb[0].mxu0 %v513
        %v4809 = vpop.f32.mrb[0].mxu0
        %v4810 = vadd.f32 %v506, %v4809
        %v4811 = vpop.f32.mrb[0].mxu0
        %v4812 = vadd.f32 %v506, %v4811
        %4813 = vmatprep.mubr.f32.mxu0 0.0
        %4814 = vmatmul.mubr.f32.gmra.mrb[0].mxu0 %v516
        %v4815 = vpop.f32.mrb[0].mxu0
        %v4816 = vadd.f32 %v510, %v4815
        %v4817 = vpop.f32.mrb[0].mxu0
        %v4818 = vadd.f32 %v510, %v4817
        %4819 = vdwg.mxu0
        %4820 = vmatprep.subr.mxu0 %v4738
        %4821 = vmatpush1.msra.mxu0 %v4737
        %4822 = vmatprep.subr.mxu0 %v4742
        %4823 = vmatpush1.msra.mxu0 %v4741
        %4824 = vmatprep.subr.mxu0 0.0
        %4825 = vmatpush1.msra.mxu0 0.0
        %4826 = vmatprep.subr.mxu0 0.0
        %4827 = vmatpush1.msra.mxu0 0.0
        %4828 = vmatprep.subr.mxu0 0.0
        %4829 = vmatpush1.msra.mxu0 0.0
        %4830 = vmatprep.subr.mxu0 0.0
        %4831 = vmatpush1.msra.mxu0 0.0
        %4832 = vmatprep.subr.mxu0 0.0
        %4833 = vmatpush1.msra.mxu0 0.0
        %4834 = vmatprep.subr.mxu0 0.0
        %4835 = vmatpush1.msra.mxu0 0.0
        %4836 = vmatprep.subr.mxu0 0.0
        %4837 = vmatpush1.msra.mxu0 0.0
        %4838 = vmatprep.subr.mxu0 0.0
        %4839 = vmatpush1.msra.mxu0 0.0
        %4840 = vmatprep.subr.mxu0 0.0
        %4841 = vmatpush1.msra.mxu0 0.0
        %4842 = vmatprep.subr.mxu0 0.0
        %4843 = vmatpush1.msra.mxu0 0.0
        %4844 = vmatprep.subr.mxu0 0.0
        %4845 = vmatpush1.msra.mxu0 0.0
        %4846 = vmatprep.subr.mxu0 0.0
        %4847 = vmatpush1.msra.mxu0 0.0
        %4848 = vmatprep.subr.mxu0 0.0
        %4849 = vmatpush1.msra.mxu0 0.0
        %4850 = vmatprep.subr.mxu0 0.0
        %4851 = vmatpush1.msra.mxu0 0.0
        %4852 = vmatprep.subr.mxu0 0.0
        %4853 = vmatpush1.msra.mxu0 0.0
        %4854 = vmatprep.subr.mxu0 0.0
        %4855 = vmatpush1.msra.mxu0 0.0
        %4856 = vmatprep.subr.mxu0 0.0
        %4857 = vmatpush1.msra.mxu0 0.0
        %4858 = vmatprep.subr.mxu0 0.0
        %4859 = vmatpush1.msra.mxu0 0.0
        %4860 = vmatprep.subr.mxu0 0.0
        %4861 = vmatpush1.msra.mxu0 0.0
        %4862 = vmatprep.subr.mxu0 0.0
        %4863 = vmatpush1.msra.mxu0 0.0
        %4864 = vmatprep.subr.mxu0 0.0
        %4865 = vmatpush1.msra.mxu0 0.0
        %4866 = vmatprep.subr.mxu0 0.0
        %4867 = vmatpush1.msra.mxu0 0.0
        %4868 = vmatprep.subr.mxu0 0.0
        %4869 = vmatpush1.msra.mxu0 0.0
        %4870 = vmatprep.subr.mxu0 0.0
        %4871 = vmatpush1.msra.mxu0 0.0
        %4872 = vmatprep.subr.mxu0 0.0
        %4873 = vmatpush1.msra.mxu0 0.0
        %4874 = vmatprep.subr.mxu0 0.0
        %4875 = vmatpush1.msra.mxu0 0.0
        %4876 = vmatprep.subr.mxu0 0.0
        %4877 = vmatpush1.msra.mxu0 0.0
        %4878 = vmatprep.subr.mxu0 0.0
        %4879 = vmatpush1.msra.mxu0 0.0
        %4880 = vmatprep.subr.mxu0 0.0
        %4881 = vmatpush1.msra.mxu0 0.0
        %4882 = vmatprep.subr.mxu0 0.0
        %4883 = vmatpush1.msra.mxu0 0.0
        %4884 = vmatprep.mubr.f32.mxu0 0.0
        %4885 = vmatmul.mubr.f32.gmra.mrb[0].mxu0 %v513
        %v4886 = vpop.f32.mrb[0].mxu0
        %v4887 = vadd.f32 %v506, %v4886
        %v4888 = vpop.f32.mrb[0].mxu0
        %v4889 = vadd.f32 %v506, %v4888
        %4890 = vmatprep.mubr.f32.mxu0 0.0
        %4891 = vmatmul.mubr.f32.gmra.mrb[0].mxu0 %v516
        %v4892 = vpop.f32.mrb[0].mxu0
        %v4893 = vadd.f32 %v510, %v4892
        %v4894 = vpop.f32.mrb[0].mxu0
        %v4895 = vadd.f32 %v510, %v4894
        %4896 = vdwg.mxu0
        %v4897 = vtanh.pop %v4810
        %v4898 = vtanh.pop %v4812
        %v4899 = vtanh.pop %v4887
        %v4900 = vtanh.pop %v4889
        %v4901 = vtanh.pop %v4816
        %v4902 = vtanh.pop %v4818
        %v4903 = vtanh.pop %v4893
        %v4904 = vtanh.pop %v4895
        %4905 = vmatprep.subr.mxu0 %v4898
        %4906 = vmatpush1.msra.mxu0 %v4897
        %4907 = vmatprep.subr.mxu0 %v4902
        %4908 = vmatpush1.msra.mxu0 %v4901
        %4909 = vmatprep.subr.mxu0 0.0
        %4910 = vmatpush1.msra.mxu0 0.0
        %4911 = vmatprep.subr.mxu0 0.0
        %4912 = vmatpush1.msra.mxu0 0.0
        %4913 = vmatprep.subr.mxu0 0.0
        %4914 = vmatpush1.msra.mxu0 0.0
        %4915 = vmatprep.subr.mxu0 0.0
        %4916 = vmatpush1.msra.mxu0 0.0
        %4917 = vmatprep.subr.mxu0 0.0
        %4918 = vmatpush1.msra.mxu0 0.0
        %4919 = vmatprep.subr.mxu0 0.0
        %4920 = vmatpush1.msra.mxu0 0.0
        %4921 = vmatprep.subr.mxu0 0.0
        %4922 = vmatpush1.msra.mxu0 0.0
        %4923 = vmatprep.subr.mxu0 0.0
        %4924 = vmatpush1.msra.mxu0 0.0
        %4925 = vmatprep.subr.mxu0 0.0
        %4926 = vmatpush1.msra.mxu0 0.0
        %4927 = vmatprep.subr.mxu0 0.0
        %4928 = vmatpush1.msra.mxu0 0.0
        %4929 = vmatprep.subr.mxu0 0.0
        %4930 = vmatpush1.msra.mxu0 0.0
        %4931 = vmatprep.subr.mxu0 0.0
        %4932 = vmatpush1.msra.mxu0 0.0
        %4933 = vmatprep.subr.mxu0 0.0
        %4934 = vmatpush1.msra.mxu0 0.0
        %4935 = vmatprep.subr.mxu0 0.0
        %4936 = vmatpush1.msra.mxu0 0.0
        %4937 = vmatprep.subr.mxu0 0.0
        %4938 = vmatpush1.msra.mxu0 0.0
        %4939 = vmatprep.subr.mxu0 0.0
        %4940 = vmatpush1.msra.mxu0 0.0
        %4941 = vmatprep.subr.mxu0 0.0
        %4942 = vmatpush1.msra.mxu0 0.0
        %4943 = vmatprep.subr.mxu0 0.0
        %4944 = vmatpush1.msra.mxu0 0.0
        %4945 = vmatprep.subr.mxu0 0.0
        %4946 = vmatpush1.msra.mxu0 0.0
        %4947 = vmatprep.subr.mxu0 0.0
        %4948 = vmatpush1.msra.mxu0 0.0
        %4949 = vmatprep.subr.mxu0 0.0
        %4950 = vmatpush1.msra.mxu0 0.0
        %4951 = vmatprep.subr.mxu0 0.0
        %4952 = vmatpush1.msra.mxu0 0.0
        %4953 = vmatprep.subr.mxu0 0.0
        %4954 = vmatpush1.msra.mxu0 0.0
        %4955 = vmatprep.subr.mxu0 0.0
        %4956 = vmatpush1.msra.mxu0 0.0
        %4957 = vmatprep.subr.mxu0 0.0
        %4958 = vmatpush1.msra.mxu0 0.0
        %4959 = vmatprep.subr.mxu0 0.0
        %4960 = vmatpush1.msra.mxu0 0.0
        %4961 = vmatprep.subr.mxu0 0.0
        %4962 = vmatpush1.msra.mxu0 0.0
        %4963 = vmatprep.subr.mxu0 0.0
        %4964 = vmatpush1.msra.mxu0 0.0
        %4965 = vmatprep.subr.mxu0 0.0
        %4966 = vmatpush1.msra.mxu0 0.0
        %4967 = vmatprep.subr.mxu0 0.0
        %4968 = vmatpush1.msra.mxu0 0.0
        %4969 = vmatprep.mubr.f32.mxu0 0.0
        %4970 = vmatmul.mubr.f32.gmra.mrb[0].mxu0 %v685
        %v4971 = vpop.f32.mrb[0].mxu0
        %v4972 = vadd.f32 %v682, %v4971
        %v4973 = vpop.f32.mrb[0].mxu0
        %v4974 = vadd.f32 %v682, %v4973
        %4975 = vdwg.mxu0
        %4976 = vmatprep.subr.mxu0 %v4900
        %4977 = vmatpush1.msra.mxu0 %v4899
        %4978 = vmatprep.subr.mxu0 %v4904
        %4979 = vmatpush1.msra.mxu0 %v4903
        %4980 = vmatprep.subr.mxu0 0.0
        %4981 = vmatpush1.msra.mxu0 0.0
        %4982 = vmatprep.subr.mxu0 0.0
        %4983 = vmatpush1.msra.mxu0 0.0
        %4984 = vmatprep.subr.mxu0 0.0
        %4985 = vmatpush1.msra.mxu0 0.0
        %4986 = vmatprep.subr.mxu0 0.0
        %4987 = vmatpush1.msra.mxu0 0.0
        %4988 = vmatprep.subr.mxu0 0.0
        %4989 = vmatpush1.msra.mxu0 0.0
        %4990 = vmatprep.subr.mxu0 0.0
        %4991 = vmatpush1.msra.mxu0 0.0
        %4992 = vmatprep.subr.mxu0 0.0
        %4993 = vmatpush1.msra.mxu0 0.0
        %4994 = vmatprep.subr.mxu0 0.0
        %4995 = vmatpush1.msra.mxu0 0.0
        %4996 = vmatprep.subr.mxu0 0.0
        %4997 = vmatpush1.msra.mxu0 0.0
        %4998 = vmatprep.subr.mxu0 0.0
        %4999 = vmatpush1.msra.mxu0 0.0
        %5000 = vmatprep.subr.mxu0 0.0
        %5001 = vmatpush1.msra.mxu0 0.0
        %5002 = vmatprep.subr.mxu0 0.0
        %5003 = vmatpush1.msra.mxu0 0.0
        %5004 = vmatprep.subr.mxu0 0.0
        %5005 = vmatpush1.msra.mxu0 0.0
        %5006 = vmatprep.subr.mxu0 0.0
        %5007 = vmatpush1.msra.mxu0 0.0
        %5008 = vmatprep.subr.mxu0 0.0
        %5009 = vmatpush1.msra.mxu0 0.0
        %5010 = vmatprep.subr.mxu0 0.0
        %5011 = vmatpush1.msra.mxu0 0.0
        %5012 = vmatprep.subr.mxu0 0.0
        %5013 = vmatpush1.msra.mxu0 0.0
        %5014 = vmatprep.subr.mxu0 0.0
        %5015 = vmatpush1.msra.mxu0 0.0
        %5016 = vmatprep.subr.mxu0 0.0
        %5017 = vmatpush1.msra.mxu0 0.0
        %5018 = vmatprep.subr.mxu0 0.0
        %5019 = vmatpush1.msra.mxu0 0.0
        %5020 = vmatprep.subr.mxu0 0.0
        %5021 = vmatpush1.msra.mxu0 0.0
        %5022 = vmatprep.subr.mxu0 0.0
        %5023 = vmatpush1.msra.mxu0 0.0
        %5024 = vmatprep.subr.mxu0 0.0
        %5025 = vmatpush1.msra.mxu0 0.0
        %5026 = vmatprep.subr.mxu0 0.0
        %5027 = vmatpush1.msra.mxu0 0.0
        %5028 = vmatprep.subr.mxu0 0.0
        %5029 = vmatpush1.msra.mxu0 0.0
        %5030 = vmatprep.subr.mxu0 0.0
        %5031 = vmatpush1.msra.mxu0 0.0
        %5032 = vmatprep.subr.mxu0 0.0
        %5033 = vmatpush1.msra.mxu0 0.0
        %5034 = vmatprep.subr.mxu0 0.0
        %5035 = vmatpush1.msra.mxu0 0.0
        %5036 = vmatprep.subr.mxu0 0.0
        %5037 = vmatpush1.msra.mxu0 0.0
        %5038 = vmatprep.subr.mxu0 0.0
        %5039 = vmatpush1.msra.mxu0 0.0
        %5040 = vmatprep.mubr.f32.mxu0 0.0
        %5041 = vmatmul.mubr.f32.gmra.mrb[0].mxu0 %v685
        %v5042 = vpop.f32.mrb[0].mxu0
        %v5043 = vadd.f32 %v682, %v5042
        %v5044 = vpop.f32.mrb[0].mxu0
        %v5045 = vadd.f32 %v682, %v5044
        %5046 = vdwg.mxu0
        %v5047 = vmax.f32 %v4972, 0.0
        %v5048 = vmax.f32 %v4974, 0.0
        %v5049 = vmax.f32 %v5043, 0.0
        %v5050 = vmax.f32 %v5045, 0.0
        %v5051 = vand.u32 2147483647, %v4972
        %v5052 = vand.u32 2147483647, %v4974
        %v5053 = vand.u32 2147483647, %v5043
        %v5054 = vand.u32 2147483647, %v5045
        %v5055 = vsub.f32 0.0, %v5051
        %v5056 = vsub.f32 0.0, %v5052
        %v5057 = vsub.f32 0.0, %v5053
        %v5058 = vsub.f32 0.0, %v5054
        %v5059 = vmul.f32 %v5055, 1.442695
        %v5060 = vpow.pop %v5059
        %v5061 = vmul.f32 %v5056, 1.442695
        %v5062 = vpow.pop %v5061
        %v5063 = vmul.f32 %v5057, 1.442695
        %v5064 = vpow.pop %v5063
        %v5065 = vmul.f32 %v5058, 1.442695
        %v5066 = vpow.pop %v5065
        %v5067 = vadd.f32 %v5060, 1.0
        %v5068 = vlog2.pop %v5067
        %v5069 = vmul.f32 %v5068, 0.6931472
        %v5070 = vmul.f32 -0.5, %v5060
        %v5071 = vadd.f32 %v5070, 1.0
        %v5072 = vmul.f32 %v5071, %v5060
        %v5073 = vand.u32 2147483647, %v5060
        %vm5074 = vcmp.lt.f32.partialorder %v5073, 0.0004427343
        %v5075 = vsel %vm5074, %v5072, %v5069
        %v5076 = vadd.f32 %v5062, 1.0
        %v5077 = vlog2.pop %v5076
        %v5078 = vmul.f32 %v5077, 0.6931472
        %v5079 = vmul.f32 -0.5, %v5062
        %v5080 = vadd.f32 %v5079, 1.0
        %v5081 = vmul.f32 %v5080, %v5062
        %v5082 = vand.u32 2147483647, %v5062
        %vm5083 = vcmp.lt.f32.partialorder %v5082, 0.0004427343
        %v5084 = vsel %vm5083, %v5081, %v5078
        %v5085 = vadd.f32 %v5064, 1.0
        %v5086 = vlog2.pop %v5085
        %v5087 = vmul.f32 %v5086, 0.6931472
        %v5088 = vmul.f32 -0.5, %v5064
        %v5089 = vadd.f32 %v5088, 1.0
        %v5090 = vmul.f32 %v5089, %v5064
        %v5091 = vand.u32 2147483647, %v5064
        %vm5092 = vcmp.lt.f32.partialorder %v5091, 0.0004427343
        %v5093 = vsel %vm5092, %v5090, %v5087
        %v5094 = vadd.f32 %v5066, 1.0
        %v5095 = vlog2.pop %v5094
        %v5096 = vmul.f32 %v5095, 0.6931472
        %v5097 = vmul.f32 -0.5, %v5066
        %v5098 = vadd.f32 %v5097, 1.0
        %v5099 = vmul.f32 %v5098, %v5066
        %v5100 = vand.u32 2147483647, %v5066
        %vm5101 = vcmp.lt.f32.partialorder %v5100, 0.0004427343
        %v5102 = vsel %vm5101, %v5099, %v5096
        %v5103 = vadd.f32 %v5047, %v5075
        %v5104 = vadd.f32 %v5048, %v5084
        %v5105 = vadd.f32 %v5049, %v5093
        %v5106 = vadd.f32 %v5050, %v5102
        %v5111 = vcombine.low %v5103, %v5104
        %v5112 = vcombine.low %v5105, %v5106
        %v5114 = vunpack.c.l.s4 1966171168
        %v5115 = vunpack.c.0.s8 %v5114
        %v5116 = vlaneseq
        %v5117 = vshrl.u32 %v5116, 7
        %v5118 = vsub.s32 %v5115, %v5117
        %v5119 = vrot.slane %v5111, %v5118
        %v5121 = vunpack.c.l.s4 1966171168
        %v5122 = vunpack.c.0.s8 %v5121
        %v5123 = vlaneseq
        %v5124 = vshrl.u32 %v5123, 7
        %v5125 = vsub.s32 %v5122, %v5124
        %v5126 = vrot.slane %v5112, %v5125
        %v5127 = vcombine.low %v5119, %v5126
        %v5129 = vunpack.c.l.s4 1966171168
        %v5130 = vunpack.c.0.s8 %v5129
        %v5131 = vlaneseq
        %v5132 = vshrl.u32 %v5131, 7
        %v5133 = vsub.s32 %v5130, %v5132
        %v5134 = vrot.slane %v5127, %v5133
        %5136 = vst.msk [vmem:[%s245 + $0x1c] sm:$0xf] %vm921, %v5134
        %v5137 = vld [vmem:[%s219 + $0x20] sm:$0xf]
        %v5139 = vlaneseq
        %v5140 = vshrl.u32 %v5139, 7
        %v5141 = vsub.s32 0, %v5140
        %v5142 = vrot.slane %v5137, %v5141
        %v5143 = vlaneseq
        %v5144 = vshrl.u32 %v5143, 7
        %v5145 = vsub.s32 1, %v5144
        %v5146 = vrot.slane %v5137, %v5145
        %v5147 = vlaneseq
        %v5148 = vshrl.u32 %v5147, 7
        %v5149 = vsub.s32 2, %v5148
        %v5150 = vrot.slane %v5137, %v5149
        %v5151 = vlaneseq
        %v5152 = vshrl.u32 %v5151, 7
        %v5153 = vsub.s32 3, %v5152
        %v5154 = vrot.slane %v5137, %v5153
        %v5159 = vmul.f32 %v267, %v5142
        %v5160 = vmul.f32 %v267, %v5146
        %v5161 = vmul.f32 %v267, %v5150
        %v5162 = vmul.f32 %v267, %v5154
        %v5163 = vmul.f32 %v272, %v5142
        %v5164 = vmul.f32 %v272, %v5146
        %v5165 = vmul.f32 %v272, %v5150
        %v5166 = vmul.f32 %v272, %v5154
        %v5167 = vadd.f32 %v5159, %v305
        %v5168 = vadd.f32 %v5160, %v305
        %v5169 = vadd.f32 %v5161, %v305
        %v5170 = vadd.f32 %v5162, %v305
        %v5171 = vadd.f32 %v5163, %v309
        %v5172 = vadd.f32 %v5164, %v309
        %v5173 = vadd.f32 %v5165, %v309
        %v5174 = vadd.f32 %v5166, %v309
        %v5175 = vtanh.pop %v5167
        %v5176 = vtanh.pop %v5168
        %v5177 = vtanh.pop %v5169
        %v5178 = vtanh.pop %v5170
        %v5179 = vtanh.pop %v5171
        %v5180 = vtanh.pop %v5172
        %v5181 = vtanh.pop %v5173
        %v5182 = vtanh.pop %v5174
        %5183 = vmatprep.subr.mxu0 %v5176
        %5184 = vmatpush1.msra.mxu0 %v5175
        %5185 = vmatprep.subr.mxu0 %v5180
        %5186 = vmatpush1.msra.mxu0 %v5179
        %5187 = vmatprep.subr.mxu0 0.0
        %5188 = vmatpush1.msra.mxu0 0.0
        %5189 = vmatprep.subr.mxu0 0.0
        %5190 = vmatpush1.msra.mxu0 0.0
        %5191 = vmatprep.subr.mxu0 0.0
        %5192 = vmatpush1.msra.mxu0 0.0
        %5193 = vmatprep.subr.mxu0 0.0
        %5194 = vmatpush1.msra.mxu0 0.0
        %5195 = vmatprep.subr.mxu0 0.0
        %5196 = vmatpush1.msra.mxu0 0.0
        %5197 = vmatprep.subr.mxu0 0.0
        %5198 = vmatpush1.msra.mxu0 0.0
        %5199 = vmatprep.subr.mxu0 0.0
        %5200 = vmatpush1.msra.mxu0 0.0
        %5201 = vmatprep.subr.mxu0 0.0
        %5202 = vmatpush1.msra.mxu0 0.0
        %5203 = vmatprep.subr.mxu0 0.0
        %5204 = vmatpush1.msra.mxu0 0.0
        %5205 = vmatprep.subr.mxu0 0.0
        %5206 = vmatpush1.msra.mxu0 0.0
        %5207 = vmatprep.subr.mxu0 0.0
        %5208 = vmatpush1.msra.mxu0 0.0
        %5209 = vmatprep.subr.mxu0 0.0
        %5210 = vmatpush1.msra.mxu0 0.0
        %5211 = vmatprep.subr.mxu0 0.0
        %5212 = vmatpush1.msra.mxu0 0.0
        %5213 = vmatprep.subr.mxu0 0.0
        %5214 = vmatpush1.msra.mxu0 0.0
        %5215 = vmatprep.subr.mxu0 0.0
        %5216 = vmatpush1.msra.mxu0 0.0
        %5217 = vmatprep.subr.mxu0 0.0
        %5218 = vmatpush1.msra.mxu0 0.0
        %5219 = vmatprep.subr.mxu0 0.0
        %5220 = vmatpush1.msra.mxu0 0.0
        %5221 = vmatprep.subr.mxu0 0.0
        %5222 = vmatpush1.msra.mxu0 0.0
        %5223 = vmatprep.subr.mxu0 0.0
        %5224 = vmatpush1.msra.mxu0 0.0
        %5225 = vmatprep.subr.mxu0 0.0
        %5226 = vmatpush1.msra.mxu0 0.0
        %5227 = vmatprep.subr.mxu0 0.0
        %5228 = vmatpush1.msra.mxu0 0.0
        %5229 = vmatprep.subr.mxu0 0.0
        %5230 = vmatpush1.msra.mxu0 0.0
        %5231 = vmatprep.subr.mxu0 0.0
        %5232 = vmatpush1.msra.mxu0 0.0
        %5233 = vmatprep.subr.mxu0 0.0
        %5234 = vmatpush1.msra.mxu0 0.0
        %5235 = vmatprep.subr.mxu0 0.0
        %5236 = vmatpush1.msra.mxu0 0.0
        %5237 = vmatprep.subr.mxu0 0.0
        %5238 = vmatpush1.msra.mxu0 0.0
        %5239 = vmatprep.subr.mxu0 0.0
        %5240 = vmatpush1.msra.mxu0 0.0
        %5241 = vmatprep.subr.mxu0 0.0
        %5242 = vmatpush1.msra.mxu0 0.0
        %5243 = vmatprep.subr.mxu0 0.0
        %5244 = vmatpush1.msra.mxu0 0.0
        %5245 = vmatprep.subr.mxu0 0.0
        %5246 = vmatpush1.msra.mxu0 0.0
        %5247 = vmatprep.mubr.f32.mxu0 0.0
        %5248 = vmatmul.mubr.f32.gmra.mrb[0].mxu0 %v337
        %v5249 = vpop.f32.mrb[0].mxu0
        %v5250 = vadd.f32 %v329, %v5249
        %v5251 = vpop.f32.mrb[0].mxu0
        %v5252 = vadd.f32 %v329, %v5251
        %5253 = vmatprep.mubr.f32.mxu0 0.0
        %5254 = vmatmul.mubr.f32.gmra.mrb[0].mxu0 %v340
        %v5255 = vpop.f32.mrb[0].mxu0
        %v5256 = vadd.f32 %v333, %v5255
        %v5257 = vpop.f32.mrb[0].mxu0
        %v5258 = vadd.f32 %v333, %v5257
        %5259 = vdwg.mxu0
        %5260 = vmatprep.subr.mxu0 %v5178
        %5261 = vmatpush1.msra.mxu0 %v5177
        %5262 = vmatprep.subr.mxu0 %v5182
        %5263 = vmatpush1.msra.mxu0 %v5181
        %5264 = vmatprep.subr.mxu0 0.0
        %5265 = vmatpush1.msra.mxu0 0.0
        %5266 = vmatprep.subr.mxu0 0.0
        %5267 = vmatpush1.msra.mxu0 0.0
        %5268 = vmatprep.subr.mxu0 0.0
        %5269 = vmatpush1.msra.mxu0 0.0
        %5270 = vmatprep.subr.mxu0 0.0
        %5271 = vmatpush1.msra.mxu0 0.0
        %5272 = vmatprep.subr.mxu0 0.0
        %5273 = vmatpush1.msra.mxu0 0.0
        %5274 = vmatprep.subr.mxu0 0.0
        %5275 = vmatpush1.msra.mxu0 0.0
        %5276 = vmatprep.subr.mxu0 0.0
        %5277 = vmatpush1.msra.mxu0 0.0
        %5278 = vmatprep.subr.mxu0 0.0
        %5279 = vmatpush1.msra.mxu0 0.0
        %5280 = vmatprep.subr.mxu0 0.0
        %5281 = vmatpush1.msra.mxu0 0.0
        %5282 = vmatprep.subr.mxu0 0.0
        %5283 = vmatpush1.msra.mxu0 0.0
        %5284 = vmatprep.subr.mxu0 0.0
        %5285 = vmatpush1.msra.mxu0 0.0
        %5286 = vmatprep.subr.mxu0 0.0
        %5287 = vmatpush1.msra.mxu0 0.0
        %5288 = vmatprep.subr.mxu0 0.0
        %5289 = vmatpush1.msra.mxu0 0.0
        %5290 = vmatprep.subr.mxu0 0.0
        %5291 = vmatpush1.msra.mxu0 0.0
        %5292 = vmatprep.subr.mxu0 0.0
        %5293 = vmatpush1.msra.mxu0 0.0
        %5294 = vmatprep.subr.mxu0 0.0
        %5295 = vmatpush1.msra.mxu0 0.0
        %5296 = vmatprep.subr.mxu0 0.0
        %5297 = vmatpush1.msra.mxu0 0.0
        %5298 = vmatprep.subr.mxu0 0.0
        %5299 = vmatpush1.msra.mxu0 0.0
        %5300 = vmatprep.subr.mxu0 0.0
        %5301 = vmatpush1.msra.mxu0 0.0
        %5302 = vmatprep.subr.mxu0 0.0
        %5303 = vmatpush1.msra.mxu0 0.0
        %5304 = vmatprep.subr.mxu0 0.0
        %5305 = vmatpush1.msra.mxu0 0.0
        %5306 = vmatprep.subr.mxu0 0.0
        %5307 = vmatpush1.msra.mxu0 0.0
        %5308 = vmatprep.subr.mxu0 0.0
        %5309 = vmatpush1.msra.mxu0 0.0
        %5310 = vmatprep.subr.mxu0 0.0
        %5311 = vmatpush1.msra.mxu0 0.0
        %5312 = vmatprep.subr.mxu0 0.0
        %5313 = vmatpush1.msra.mxu0 0.0
        %5314 = vmatprep.subr.mxu0 0.0
        %5315 = vmatpush1.msra.mxu0 0.0
        %5316 = vmatprep.subr.mxu0 0.0
        %5317 = vmatpush1.msra.mxu0 0.0
        %5318 = vmatprep.subr.mxu0 0.0
        %5319 = vmatpush1.msra.mxu0 0.0
        %5320 = vmatprep.subr.mxu0 0.0
        %5321 = vmatpush1.msra.mxu0 0.0
        %5322 = vmatprep.subr.mxu0 0.0
        %5323 = vmatpush1.msra.mxu0 0.0
        %5324 = vmatprep.mubr.f32.mxu0 0.0
        %5325 = vmatmul.mubr.f32.gmra.mrb[0].mxu0 %v337
        %v5326 = vpop.f32.mrb[0].mxu0
        %v5327 = vadd.f32 %v329, %v5326
        %v5328 = vpop.f32.mrb[0].mxu0
        %v5329 = vadd.f32 %v329, %v5328
        %5330 = vmatprep.mubr.f32.mxu0 0.0
        %5331 = vmatmul.mubr.f32.gmra.mrb[0].mxu0 %v340
        %v5332 = vpop.f32.mrb[0].mxu0
        %v5333 = vadd.f32 %v333, %v5332
        %v5334 = vpop.f32.mrb[0].mxu0
        %v5335 = vadd.f32 %v333, %v5334
        %5336 = vdwg.mxu0
        %v5337 = vtanh.pop %v5250
        %v5338 = vtanh.pop %v5252
        %v5339 = vtanh.pop %v5327
        %v5340 = vtanh.pop %v5329
        %v5341 = vtanh.pop %v5256
        %v5342 = vtanh.pop %v5258
        %v5343 = vtanh.pop %v5333
        %v5344 = vtanh.pop %v5335
        %5345 = vmatprep.subr.mxu0 %v5338
        %5346 = vmatpush1.msra.mxu0 %v5337
        %5347 = vmatprep.subr.mxu0 %v5342
        %5348 = vmatpush1.msra.mxu0 %v5341
        %5349 = vmatprep.subr.mxu0 0.0
        %5350 = vmatpush1.msra.mxu0 0.0
        %5351 = vmatprep.subr.mxu0 0.0
        %5352 = vmatpush1.msra.mxu0 0.0
        %5353 = vmatprep.subr.mxu0 0.0
        %5354 = vmatpush1.msra.mxu0 0.0
        %5355 = vmatprep.subr.mxu0 0.0
        %5356 = vmatpush1.msra.mxu0 0.0
        %5357 = vmatprep.subr.mxu0 0.0
        %5358 = vmatpush1.msra.mxu0 0.0
        %5359 = vmatprep.subr.mxu0 0.0
        %5360 = vmatpush1.msra.mxu0 0.0
        %5361 = vmatprep.subr.mxu0 0.0
        %5362 = vmatpush1.msra.mxu0 0.0
        %5363 = vmatprep.subr.mxu0 0.0
        %5364 = vmatpush1.msra.mxu0 0.0
        %5365 = vmatprep.subr.mxu0 0.0
        %5366 = vmatpush1.msra.mxu0 0.0
        %5367 = vmatprep.subr.mxu0 0.0
        %5368 = vmatpush1.msra.mxu0 0.0
        %5369 = vmatprep.subr.mxu0 0.0
        %5370 = vmatpush1.msra.mxu0 0.0
        %5371 = vmatprep.subr.mxu0 0.0
        %5372 = vmatpush1.msra.mxu0 0.0
        %5373 = vmatprep.subr.mxu0 0.0
        %5374 = vmatpush1.msra.mxu0 0.0
        %5375 = vmatprep.subr.mxu0 0.0
        %5376 = vmatpush1.msra.mxu0 0.0
        %5377 = vmatprep.subr.mxu0 0.0
        %5378 = vmatpush1.msra.mxu0 0.0
        %5379 = vmatprep.subr.mxu0 0.0
        %5380 = vmatpush1.msra.mxu0 0.0
        %5381 = vmatprep.subr.mxu0 0.0
        %5382 = vmatpush1.msra.mxu0 0.0
        %5383 = vmatprep.subr.mxu0 0.0
        %5384 = vmatpush1.msra.mxu0 0.0
        %5385 = vmatprep.subr.mxu0 0.0
        %5386 = vmatpush1.msra.mxu0 0.0
        %5387 = vmatprep.subr.mxu0 0.0
        %5388 = vmatpush1.msra.mxu0 0.0
        %5389 = vmatprep.subr.mxu0 0.0
        %5390 = vmatpush1.msra.mxu0 0.0
        %5391 = vmatprep.subr.mxu0 0.0
        %5392 = vmatpush1.msra.mxu0 0.0
        %5393 = vmatprep.subr.mxu0 0.0
        %5394 = vmatpush1.msra.mxu0 0.0
        %5395 = vmatprep.subr.mxu0 0.0
        %5396 = vmatpush1.msra.mxu0 0.0
        %5397 = vmatprep.subr.mxu0 0.0
        %5398 = vmatpush1.msra.mxu0 0.0
        %5399 = vmatprep.subr.mxu0 0.0
        %5400 = vmatpush1.msra.mxu0 0.0
        %5401 = vmatprep.subr.mxu0 0.0
        %5402 = vmatpush1.msra.mxu0 0.0
        %5403 = vmatprep.subr.mxu0 0.0
        %5404 = vmatpush1.msra.mxu0 0.0
        %5405 = vmatprep.subr.mxu0 0.0
        %5406 = vmatpush1.msra.mxu0 0.0
        %5407 = vmatprep.subr.mxu0 0.0
        %5408 = vmatpush1.msra.mxu0 0.0
        %5409 = vmatprep.mubr.f32.mxu0 0.0
        %5410 = vmatmul.mubr.f32.gmra.mrb[0].mxu0 %v513
        %v5411 = vpop.f32.mrb[0].mxu0
        %v5412 = vadd.f32 %v506, %v5411
        %v5413 = vpop.f32.mrb[0].mxu0
        %v5414 = vadd.f32 %v506, %v5413
        %5415 = vmatprep.mubr.f32.mxu0 0.0
        %5416 = vmatmul.mubr.f32.gmra.mrb[0].mxu0 %v516
        %v5417 = vpop.f32.mrb[0].mxu0
        %v5418 = vadd.f32 %v510, %v5417
        %v5419 = vpop.f32.mrb[0].mxu0
        %v5420 = vadd.f32 %v510, %v5419
        %5421 = vdwg.mxu0
        %5422 = vmatprep.subr.mxu0 %v5340
        %5423 = vmatpush1.msra.mxu0 %v5339
        %5424 = vmatprep.subr.mxu0 %v5344
        %5425 = vmatpush1.msra.mxu0 %v5343
        %5426 = vmatprep.subr.mxu0 0.0
        %5427 = vmatpush1.msra.mxu0 0.0
        %5428 = vmatprep.subr.mxu0 0.0
        %5429 = vmatpush1.msra.mxu0 0.0
        %5430 = vmatprep.subr.mxu0 0.0
        %5431 = vmatpush1.msra.mxu0 0.0
        %5432 = vmatprep.subr.mxu0 0.0
        %5433 = vmatpush1.msra.mxu0 0.0
        %5434 = vmatprep.subr.mxu0 0.0
        %5435 = vmatpush1.msra.mxu0 0.0
        %5436 = vmatprep.subr.mxu0 0.0
        %5437 = vmatpush1.msra.mxu0 0.0
        %5438 = vmatprep.subr.mxu0 0.0
        %5439 = vmatpush1.msra.mxu0 0.0
        %5440 = vmatprep.subr.mxu0 0.0
        %5441 = vmatpush1.msra.mxu0 0.0
        %5442 = vmatprep.subr.mxu0 0.0
        %5443 = vmatpush1.msra.mxu0 0.0
        %5444 = vmatprep.subr.mxu0 0.0
        %5445 = vmatpush1.msra.mxu0 0.0
        %5446 = vmatprep.subr.mxu0 0.0
        %5447 = vmatpush1.msra.mxu0 0.0
        %5448 = vmatprep.subr.mxu0 0.0
        %5449 = vmatpush1.msra.mxu0 0.0
        %5450 = vmatprep.subr.mxu0 0.0
        %5451 = vmatpush1.msra.mxu0 0.0
        %5452 = vmatprep.subr.mxu0 0.0
        %5453 = vmatpush1.msra.mxu0 0.0
        %5454 = vmatprep.subr.mxu0 0.0
        %5455 = vmatpush1.msra.mxu0 0.0
        %5456 = vmatprep.subr.mxu0 0.0
        %5457 = vmatpush1.msra.mxu0 0.0
        %5458 = vmatprep.subr.mxu0 0.0
        %5459 = vmatpush1.msra.mxu0 0.0
        %5460 = vmatprep.subr.mxu0 0.0
        %5461 = vmatpush1.msra.mxu0 0.0
        %5462 = vmatprep.subr.mxu0 0.0
        %5463 = vmatpush1.msra.mxu0 0.0
        %5464 = vmatprep.subr.mxu0 0.0
        %5465 = vmatpush1.msra.mxu0 0.0
        %5466 = vmatprep.subr.mxu0 0.0
        %5467 = vmatpush1.msra.mxu0 0.0
        %5468 = vmatprep.subr.mxu0 0.0
        %5469 = vmatpush1.msra.mxu0 0.0
        %5470 = vmatprep.subr.mxu0 0.0
        %5471 = vmatpush1.msra.mxu0 0.0
        %5472 = vmatprep.subr.mxu0 0.0
        %5473 = vmatpush1.msra.mxu0 0.0
        %5474 = vmatprep.subr.mxu0 0.0
        %5475 = vmatpush1.msra.mxu0 0.0
        %5476 = vmatprep.subr.mxu0 0.0
        %5477 = vmatpush1.msra.mxu0 0.0
        %5478 = vmatprep.subr.mxu0 0.0
        %5479 = vmatpush1.msra.mxu0 0.0
        %5480 = vmatprep.subr.mxu0 0.0
        %5481 = vmatpush1.msra.mxu0 0.0
        %5482 = vmatprep.subr.mxu0 0.0
        %5483 = vmatpush1.msra.mxu0 0.0
        %5484 = vmatprep.subr.mxu0 0.0
        %5485 = vmatpush1.msra.mxu0 0.0
        %5486 = vmatprep.mubr.f32.mxu0 0.0
        %5487 = vmatmul.mubr.f32.gmra.mrb[0].mxu0 %v513
        %v5488 = vpop.f32.mrb[0].mxu0
        %v5489 = vadd.f32 %v506, %v5488
        %v5490 = vpop.f32.mrb[0].mxu0
        %v5491 = vadd.f32 %v506, %v5490
        %5492 = vmatprep.mubr.f32.mxu0 0.0
        %5493 = vmatmul.mubr.f32.gmra.mrb[0].mxu0 %v516
        %v5494 = vpop.f32.mrb[0].mxu0
        %v5495 = vadd.f32 %v510, %v5494
        %v5496 = vpop.f32.mrb[0].mxu0
        %v5497 = vadd.f32 %v510, %v5496
        %5498 = vdwg.mxu0
        %v5499 = vtanh.pop %v5412
        %v5500 = vtanh.pop %v5414
        %v5501 = vtanh.pop %v5489
        %v5502 = vtanh.pop %v5491
        %v5503 = vtanh.pop %v5418
        %v5504 = vtanh.pop %v5420
        %v5505 = vtanh.pop %v5495
        %v5506 = vtanh.pop %v5497
        %5507 = vmatprep.subr.mxu0 %v5500
        %5508 = vmatpush1.msra.mxu0 %v5499
        %5509 = vmatprep.subr.mxu0 %v5504
        %5510 = vmatpush1.msra.mxu0 %v5503
        %5511 = vmatprep.subr.mxu0 0.0
        %5512 = vmatpush1.msra.mxu0 0.0
        %5513 = vmatprep.subr.mxu0 0.0
        %5514 = vmatpush1.msra.mxu0 0.0
        %5515 = vmatprep.subr.mxu0 0.0
        %5516 = vmatpush1.msra.mxu0 0.0
        %5517 = vmatprep.subr.mxu0 0.0
        %5518 = vmatpush1.msra.mxu0 0.0
        %5519 = vmatprep.subr.mxu0 0.0
        %5520 = vmatpush1.msra.mxu0 0.0
        %5521 = vmatprep.subr.mxu0 0.0
        %5522 = vmatpush1.msra.mxu0 0.0
        %5523 = vmatprep.subr.mxu0 0.0
        %5524 = vmatpush1.msra.mxu0 0.0
        %5525 = vmatprep.subr.mxu0 0.0
        %5526 = vmatpush1.msra.mxu0 0.0
        %5527 = vmatprep.subr.mxu0 0.0
        %5528 = vmatpush1.msra.mxu0 0.0
        %5529 = vmatprep.subr.mxu0 0.0
        %5530 = vmatpush1.msra.mxu0 0.0
        %5531 = vmatprep.subr.mxu0 0.0
        %5532 = vmatpush1.msra.mxu0 0.0
        %5533 = vmatprep.subr.mxu0 0.0
        %5534 = vmatpush1.msra.mxu0 0.0
        %5535 = vmatprep.subr.mxu0 0.0
        %5536 = vmatpush1.msra.mxu0 0.0
        %5537 = vmatprep.subr.mxu0 0.0
        %5538 = vmatpush1.msra.mxu0 0.0
        %5539 = vmatprep.subr.mxu0 0.0
        %5540 = vmatpush1.msra.mxu0 0.0
        %5541 = vmatprep.subr.mxu0 0.0
        %5542 = vmatpush1.msra.mxu0 0.0
        %5543 = vmatprep.subr.mxu0 0.0
        %5544 = vmatpush1.msra.mxu0 0.0
        %5545 = vmatprep.subr.mxu0 0.0
        %5546 = vmatpush1.msra.mxu0 0.0
        %5547 = vmatprep.subr.mxu0 0.0
        %5548 = vmatpush1.msra.mxu0 0.0
        %5549 = vmatprep.subr.mxu0 0.0
        %5550 = vmatpush1.msra.mxu0 0.0
        %5551 = vmatprep.subr.mxu0 0.0
        %5552 = vmatpush1.msra.mxu0 0.0
        %5553 = vmatprep.subr.mxu0 0.0
        %5554 = vmatpush1.msra.mxu0 0.0
        %5555 = vmatprep.subr.mxu0 0.0
        %5556 = vmatpush1.msra.mxu0 0.0
        %5557 = vmatprep.subr.mxu0 0.0
        %5558 = vmatpush1.msra.mxu0 0.0
        %5559 = vmatprep.subr.mxu0 0.0
        %5560 = vmatpush1.msra.mxu0 0.0
        %5561 = vmatprep.subr.mxu0 0.0
        %5562 = vmatpush1.msra.mxu0 0.0
        %5563 = vmatprep.subr.mxu0 0.0
        %5564 = vmatpush1.msra.mxu0 0.0
        %5565 = vmatprep.subr.mxu0 0.0
        %5566 = vmatpush1.msra.mxu0 0.0
        %5567 = vmatprep.subr.mxu0 0.0
        %5568 = vmatpush1.msra.mxu0 0.0
        %5569 = vmatprep.subr.mxu0 0.0
        %5570 = vmatpush1.msra.mxu0 0.0
        %5571 = vmatprep.mubr.f32.mxu0 0.0
        %5572 = vmatmul.mubr.f32.gmra.mrb[0].mxu0 %v685
        %v5573 = vpop.f32.mrb[0].mxu0
        %v5574 = vadd.f32 %v682, %v5573
        %v5575 = vpop.f32.mrb[0].mxu0
        %v5576 = vadd.f32 %v682, %v5575
        %5577 = vdwg.mxu0
        %5578 = vmatprep.subr.mxu0 %v5502
        %5579 = vmatpush1.msra.mxu0 %v5501
        %5580 = vmatprep.subr.mxu0 %v5506
        %5581 = vmatpush1.msra.mxu0 %v5505
        %5582 = vmatprep.subr.mxu0 0.0
        %5583 = vmatpush1.msra.mxu0 0.0
        %5584 = vmatprep.subr.mxu0 0.0
        %5585 = vmatpush1.msra.mxu0 0.0
        %5586 = vmatprep.subr.mxu0 0.0
        %5587 = vmatpush1.msra.mxu0 0.0
        %5588 = vmatprep.subr.mxu0 0.0
        %5589 = vmatpush1.msra.mxu0 0.0
        %5590 = vmatprep.subr.mxu0 0.0
        %5591 = vmatpush1.msra.mxu0 0.0
        %5592 = vmatprep.subr.mxu0 0.0
        %5593 = vmatpush1.msra.mxu0 0.0
        %5594 = vmatprep.subr.mxu0 0.0
        %5595 = vmatpush1.msra.mxu0 0.0
        %5596 = vmatprep.subr.mxu0 0.0
        %5597 = vmatpush1.msra.mxu0 0.0
        %5598 = vmatprep.subr.mxu0 0.0
        %5599 = vmatpush1.msra.mxu0 0.0
        %5600 = vmatprep.subr.mxu0 0.0
        %5601 = vmatpush1.msra.mxu0 0.0
        %5602 = vmatprep.subr.mxu0 0.0
        %5603 = vmatpush1.msra.mxu0 0.0
        %5604 = vmatprep.subr.mxu0 0.0
        %5605 = vmatpush1.msra.mxu0 0.0
        %5606 = vmatprep.subr.mxu0 0.0
        %5607 = vmatpush1.msra.mxu0 0.0
        %5608 = vmatprep.subr.mxu0 0.0
        %5609 = vmatpush1.msra.mxu0 0.0
        %5610 = vmatprep.subr.mxu0 0.0
        %5611 = vmatpush1.msra.mxu0 0.0
        %5612 = vmatprep.subr.mxu0 0.0
        %5613 = vmatpush1.msra.mxu0 0.0
        %5614 = vmatprep.subr.mxu0 0.0
        %5615 = vmatpush1.msra.mxu0 0.0
        %5616 = vmatprep.subr.mxu0 0.0
        %5617 = vmatpush1.msra.mxu0 0.0
        %5618 = vmatprep.subr.mxu0 0.0
        %5619 = vmatpush1.msra.mxu0 0.0
        %5620 = vmatprep.subr.mxu0 0.0
        %5621 = vmatpush1.msra.mxu0 0.0
        %5622 = vmatprep.subr.mxu0 0.0
        %5623 = vmatpush1.msra.mxu0 0.0
        %5624 = vmatprep.subr.mxu0 0.0
        %5625 = vmatpush1.msra.mxu0 0.0
        %5626 = vmatprep.subr.mxu0 0.0
        %5627 = vmatpush1.msra.mxu0 0.0
        %5628 = vmatprep.subr.mxu0 0.0
        %5629 = vmatpush1.msra.mxu0 0.0
        %5630 = vmatprep.subr.mxu0 0.0
        %5631 = vmatpush1.msra.mxu0 0.0
        %5632 = vmatprep.subr.mxu0 0.0
        %5633 = vmatpush1.msra.mxu0 0.0
        %5634 = vmatprep.subr.mxu0 0.0
        %5635 = vmatpush1.msra.mxu0 0.0
        %5636 = vmatprep.subr.mxu0 0.0
        %5637 = vmatpush1.msra.mxu0 0.0
        %5638 = vmatprep.subr.mxu0 0.0
        %5639 = vmatpush1.msra.mxu0 0.0
        %5640 = vmatprep.subr.mxu0 0.0
        %5641 = vmatpush1.msra.mxu0 0.0
        %5642 = vmatprep.mubr.f32.mxu0 0.0
        %5643 = vmatmul.mubr.f32.gmra.mrb[0].mxu0 %v685
        %v5644 = vpop.f32.mrb[0].mxu0
        %v5645 = vadd.f32 %v682, %v5644
        %v5646 = vpop.f32.mrb[0].mxu0
        %v5647 = vadd.f32 %v682, %v5646
        %5648 = vdwg.mxu0
        %v5649 = vmax.f32 %v5574, 0.0
        %v5650 = vmax.f32 %v5576, 0.0
        %v5651 = vmax.f32 %v5645, 0.0
        %v5652 = vmax.f32 %v5647, 0.0
        %v5653 = vand.u32 2147483647, %v5574
        %v5654 = vand.u32 2147483647, %v5576
        %v5655 = vand.u32 2147483647, %v5645
        %v5656 = vand.u32 2147483647, %v5647
        %v5657 = vsub.f32 0.0, %v5653
        %v5658 = vsub.f32 0.0, %v5654
        %v5659 = vsub.f32 0.0, %v5655
        %v5660 = vsub.f32 0.0, %v5656
        %v5661 = vmul.f32 %v5657, 1.442695
        %v5662 = vpow.pop %v5661
        %v5663 = vmul.f32 %v5658, 1.442695
        %v5664 = vpow.pop %v5663
        %v5665 = vmul.f32 %v5659, 1.442695
        %v5666 = vpow.pop %v5665
        %v5667 = vmul.f32 %v5660, 1.442695
        %v5668 = vpow.pop %v5667
        %v5669 = vadd.f32 %v5662, 1.0
        %v5670 = vlog2.pop %v5669
        %v5671 = vmul.f32 %v5670, 0.6931472
        %v5672 = vmul.f32 -0.5, %v5662
        %v5673 = vadd.f32 %v5672, 1.0
        %v5674 = vmul.f32 %v5673, %v5662
        %v5675 = vand.u32 2147483647, %v5662
        %vm5676 = vcmp.lt.f32.partialorder %v5675, 0.0004427343
        %v5677 = vsel %vm5676, %v5674, %v5671
        %v5678 = vadd.f32 %v5664, 1.0
        %v5679 = vlog2.pop %v5678
        %v5680 = vmul.f32 %v5679, 0.6931472
        %v5681 = vmul.f32 -0.5, %v5664
        %v5682 = vadd.f32 %v5681, 1.0
        %v5683 = vmul.f32 %v5682, %v5664
        %v5684 = vand.u32 2147483647, %v5664
        %vm5685 = vcmp.lt.f32.partialorder %v5684, 0.0004427343
        %v5686 = vsel %vm5685, %v5683, %v5680
        %v5687 = vadd.f32 %v5666, 1.0
        %v5688 = vlog2.pop %v5687
        %v5689 = vmul.f32 %v5688, 0.6931472
        %v5690 = vmul.f32 -0.5, %v5666
        %v5691 = vadd.f32 %v5690, 1.0
        %v5692 = vmul.f32 %v5691, %v5666
        %v5693 = vand.u32 2147483647, %v5666
        %vm5694 = vcmp.lt.f32.partialorder %v5693, 0.0004427343
        %v5695 = vsel %vm5694, %v5692, %v5689
        %v5696 = vadd.f32 %v5668, 1.0
        %v5697 = vlog2.pop %v5696
        %v5698 = vmul.f32 %v5697, 0.6931472
        %v5699 = vmul.f32 -0.5, %v5668
        %v5700 = vadd.f32 %v5699, 1.0
        %v5701 = vmul.f32 %v5700, %v5668
        %v5702 = vand.u32 2147483647, %v5668
        %vm5703 = vcmp.lt.f32.partialorder %v5702, 0.0004427343
        %v5704 = vsel %vm5703, %v5701, %v5698
        %v5705 = vadd.f32 %v5649, %v5677
        %v5706 = vadd.f32 %v5650, %v5686
        %v5707 = vadd.f32 %v5651, %v5695
        %v5708 = vadd.f32 %v5652, %v5704
        %v5713 = vcombine.low %v5705, %v5706
        %v5714 = vcombine.low %v5707, %v5708
        %v5716 = vunpack.c.l.s4 1966171168
        %v5717 = vunpack.c.0.s8 %v5716
        %v5718 = vlaneseq
        %v5719 = vshrl.u32 %v5718, 7
        %v5720 = vsub.s32 %v5717, %v5719
        %v5721 = vrot.slane %v5713, %v5720
        %v5723 = vunpack.c.l.s4 1966171168
        %v5724 = vunpack.c.0.s8 %v5723
        %v5725 = vlaneseq
        %v5726 = vshrl.u32 %v5725, 7
        %v5727 = vsub.s32 %v5724, %v5726
        %v5728 = vrot.slane %v5714, %v5727
        %v5729 = vcombine.low %v5721, %v5728
        %v5731 = vunpack.c.l.s4 1966171168
        %v5732 = vunpack.c.0.s8 %v5731
        %v5733 = vlaneseq
        %v5734 = vshrl.u32 %v5733, 7
        %v5735 = vsub.s32 %v5732, %v5734
        %v5736 = vrot.slane %v5729, %v5735
        %5738 = vst.msk [vmem:[%s245 + $0x20] sm:$0xf] %vm921, %v5736
        %v5739 = vld [vmem:[%s219 + $0x24] sm:$0xf]
        %v5741 = vlaneseq
        %v5742 = vshrl.u32 %v5741, 7
        %v5743 = vsub.s32 0, %v5742
        %v5744 = vrot.slane %v5739, %v5743
        %v5745 = vlaneseq
        %v5746 = vshrl.u32 %v5745, 7
        %v5747 = vsub.s32 1, %v5746
        %v5748 = vrot.slane %v5739, %v5747
        %v5749 = vlaneseq
        %v5750 = vshrl.u32 %v5749, 7
        %v5751 = vsub.s32 2, %v5750
        %v5752 = vrot.slane %v5739, %v5751
        %v5753 = vlaneseq
        %v5754 = vshrl.u32 %v5753, 7
        %v5755 = vsub.s32 3, %v5754
        %v5756 = vrot.slane %v5739, %v5755
        %v5761 = vmul.f32 %v267, %v5744
        %v5762 = vmul.f32 %v267, %v5748
        %v5763 = vmul.f32 %v267, %v5752
        %v5764 = vmul.f32 %v267, %v5756
        %v5765 = vmul.f32 %v272, %v5744
        %v5766 = vmul.f32 %v272, %v5748
        %v5767 = vmul.f32 %v272, %v5752
        %v5768 = vmul.f32 %v272, %v5756
        %v5769 = vadd.f32 %v5761, %v305
        %v5770 = vadd.f32 %v5762, %v305
        %v5771 = vadd.f32 %v5763, %v305
        %v5772 = vadd.f32 %v5764, %v305
        %v5773 = vadd.f32 %v5765, %v309
        %v5774 = vadd.f32 %v5766, %v309
        %v5775 = vadd.f32 %v5767, %v309
        %v5776 = vadd.f32 %v5768, %v309
        %v5777 = vtanh.pop %v5769
        %v5778 = vtanh.pop %v5770
        %v5779 = vtanh.pop %v5771
        %v5780 = vtanh.pop %v5772
        %v5781 = vtanh.pop %v5773
        %v5782 = vtanh.pop %v5774
        %v5783 = vtanh.pop %v5775
        %v5784 = vtanh.pop %v5776
        %5785 = vmatprep.subr.mxu0 %v5778
        %5786 = vmatpush1.msra.mxu0 %v5777
        %5787 = vmatprep.subr.mxu0 %v5782
        %5788 = vmatpush1.msra.mxu0 %v5781
        %5789 = vmatprep.subr.mxu0 0.0
        %5790 = vmatpush1.msra.mxu0 0.0
        %5791 = vmatprep.subr.mxu0 0.0
        %5792 = vmatpush1.msra.mxu0 0.0
        %5793 = vmatprep.subr.mxu0 0.0
        %5794 = vmatpush1.msra.mxu0 0.0
        %5795 = vmatprep.subr.mxu0 0.0
        %5796 = vmatpush1.msra.mxu0 0.0
        %5797 = vmatprep.subr.mxu0 0.0
        %5798 = vmatpush1.msra.mxu0 0.0
        %5799 = vmatprep.subr.mxu0 0.0
        %5800 = vmatpush1.msra.mxu0 0.0
        %5801 = vmatprep.subr.mxu0 0.0
        %5802 = vmatpush1.msra.mxu0 0.0
        %5803 = vmatprep.subr.mxu0 0.0
        %5804 = vmatpush1.msra.mxu0 0.0
        %5805 = vmatprep.subr.mxu0 0.0
        %5806 = vmatpush1.msra.mxu0 0.0
        %5807 = vmatprep.subr.mxu0 0.0
        %5808 = vmatpush1.msra.mxu0 0.0
        %5809 = vmatprep.subr.mxu0 0.0
        %5810 = vmatpush1.msra.mxu0 0.0
        %5811 = vmatprep.subr.mxu0 0.0
        %5812 = vmatpush1.msra.mxu0 0.0
        %5813 = vmatprep.subr.mxu0 0.0
        %5814 = vmatpush1.msra.mxu0 0.0
        %5815 = vmatprep.subr.mxu0 0.0
        %5816 = vmatpush1.msra.mxu0 0.0
        %5817 = vmatprep.subr.mxu0 0.0
        %5818 = vmatpush1.msra.mxu0 0.0
        %5819 = vmatprep.subr.mxu0 0.0
        %5820 = vmatpush1.msra.mxu0 0.0
        %5821 = vmatprep.subr.mxu0 0.0
        %5822 = vmatpush1.msra.mxu0 0.0
        %5823 = vmatprep.subr.mxu0 0.0
        %5824 = vmatpush1.msra.mxu0 0.0
        %5825 = vmatprep.subr.mxu0 0.0
        %5826 = vmatpush1.msra.mxu0 0.0
        %5827 = vmatprep.subr.mxu0 0.0
        %5828 = vmatpush1.msra.mxu0 0.0
        %5829 = vmatprep.subr.mxu0 0.0
        %5830 = vmatpush1.msra.mxu0 0.0
        %5831 = vmatprep.subr.mxu0 0.0
        %5832 = vmatpush1.msra.mxu0 0.0
        %5833 = vmatprep.subr.mxu0 0.0
        %5834 = vmatpush1.msra.mxu0 0.0
        %5835 = vmatprep.subr.mxu0 0.0
        %5836 = vmatpush1.msra.mxu0 0.0
        %5837 = vmatprep.subr.mxu0 0.0
        %5838 = vmatpush1.msra.mxu0 0.0
        %5839 = vmatprep.subr.mxu0 0.0
        %5840 = vmatpush1.msra.mxu0 0.0
        %5841 = vmatprep.subr.mxu0 0.0
        %5842 = vmatpush1.msra.mxu0 0.0
        %5843 = vmatprep.subr.mxu0 0.0
        %5844 = vmatpush1.msra.mxu0 0.0
        %5845 = vmatprep.subr.mxu0 0.0
        %5846 = vmatpush1.msra.mxu0 0.0
        %5847 = vmatprep.subr.mxu0 0.0
        %5848 = vmatpush1.msra.mxu0 0.0
        %5849 = vmatprep.mubr.f32.mxu0 0.0
        %5850 = vmatmul.mubr.f32.gmra.mrb[0].mxu0 %v337
        %v5851 = vpop.f32.mrb[0].mxu0
        %v5852 = vadd.f32 %v329, %v5851
        %v5853 = vpop.f32.mrb[0].mxu0
        %v5854 = vadd.f32 %v329, %v5853
        %5855 = vmatprep.mubr.f32.mxu0 0.0
        %5856 = vmatmul.mubr.f32.gmra.mrb[0].mxu0 %v340
        %v5857 = vpop.f32.mrb[0].mxu0
        %v5858 = vadd.f32 %v333, %v5857
        %v5859 = vpop.f32.mrb[0].mxu0
        %v5860 = vadd.f32 %v333, %v5859
        %5861 = vdwg.mxu0
        %5862 = vmatprep.subr.mxu0 %v5780
        %5863 = vmatpush1.msra.mxu0 %v5779
        %5864 = vmatprep.subr.mxu0 %v5784
        %5865 = vmatpush1.msra.mxu0 %v5783
        %5866 = vmatprep.subr.mxu0 0.0
        %5867 = vmatpush1.msra.mxu0 0.0
        %5868 = vmatprep.subr.mxu0 0.0
        %5869 = vmatpush1.msra.mxu0 0.0
        %5870 = vmatprep.subr.mxu0 0.0
        %5871 = vmatpush1.msra.mxu0 0.0
        %5872 = vmatprep.subr.mxu0 0.0
        %5873 = vmatpush1.msra.mxu0 0.0
        %5874 = vmatprep.subr.mxu0 0.0
        %5875 = vmatpush1.msra.mxu0 0.0
        %5876 = vmatprep.subr.mxu0 0.0
        %5877 = vmatpush1.msra.mxu0 0.0
        %5878 = vmatprep.subr.mxu0 0.0
        %5879 = vmatpush1.msra.mxu0 0.0
        %5880 = vmatprep.subr.mxu0 0.0
        %5881 = vmatpush1.msra.mxu0 0.0
        %5882 = vmatprep.subr.mxu0 0.0
        %5883 = vmatpush1.msra.mxu0 0.0
        %5884 = vmatprep.subr.mxu0 0.0
        %5885 = vmatpush1.msra.mxu0 0.0
        %5886 = vmatprep.subr.mxu0 0.0
        %5887 = vmatpush1.msra.mxu0 0.0
        %5888 = vmatprep.subr.mxu0 0.0
        %5889 = vmatpush1.msra.mxu0 0.0
        %5890 = vmatprep.subr.mxu0 0.0
        %5891 = vmatpush1.msra.mxu0 0.0
        %5892 = vmatprep.subr.mxu0 0.0
        %5893 = vmatpush1.msra.mxu0 0.0
        %5894 = vmatprep.subr.mxu0 0.0
        %5895 = vmatpush1.msra.mxu0 0.0
        %5896 = vmatprep.subr.mxu0 0.0
        %5897 = vmatpush1.msra.mxu0 0.0
        %5898 = vmatprep.subr.mxu0 0.0
        %5899 = vmatpush1.msra.mxu0 0.0
        %5900 = vmatprep.subr.mxu0 0.0
        %5901 = vmatpush1.msra.mxu0 0.0
        %5902 = vmatprep.subr.mxu0 0.0
        %5903 = vmatpush1.msra.mxu0 0.0
        %5904 = vmatprep.subr.mxu0 0.0
        %5905 = vmatpush1.msra.mxu0 0.0
        %5906 = vmatprep.subr.mxu0 0.0
        %5907 = vmatpush1.msra.mxu0 0.0
        %5908 = vmatprep.subr.mxu0 0.0
        %5909 = vmatpush1.msra.mxu0 0.0
        %5910 = vmatprep.subr.mxu0 0.0
        %5911 = vmatpush1.msra.mxu0 0.0
        %5912 = vmatprep.subr.mxu0 0.0
        %5913 = vmatpush1.msra.mxu0 0.0
        %5914 = vmatprep.subr.mxu0 0.0
        %5915 = vmatpush1.msra.mxu0 0.0
        %5916 = vmatprep.subr.mxu0 0.0
        %5917 = vmatpush1.msra.mxu0 0.0
        %5918 = vmatprep.subr.mxu0 0.0
        %5919 = vmatpush1.msra.mxu0 0.0
        %5920 = vmatprep.subr.mxu0 0.0
        %5921 = vmatpush1.msra.mxu0 0.0
        %5922 = vmatprep.subr.mxu0 0.0
        %5923 = vmatpush1.msra.mxu0 0.0
        %5924 = vmatprep.subr.mxu0 0.0
        %5925 = vmatpush1.msra.mxu0 0.0
        %5926 = vmatprep.mubr.f32.mxu0 0.0
        %5927 = vmatmul.mubr.f32.gmra.mrb[0].mxu0 %v337
        %v5928 = vpop.f32.mrb[0].mxu0
        %v5929 = vadd.f32 %v329, %v5928
        %v5930 = vpop.f32.mrb[0].mxu0
        %v5931 = vadd.f32 %v329, %v5930
        %5932 = vmatprep.mubr.f32.mxu0 0.0
        %5933 = vmatmul.mubr.f32.gmra.mrb[0].mxu0 %v340
        %v5934 = vpop.f32.mrb[0].mxu0
        %v5935 = vadd.f32 %v333, %v5934
        %v5936 = vpop.f32.mrb[0].mxu0
        %v5937 = vadd.f32 %v333, %v5936
        %5938 = vdwg.mxu0
        %v5939 = vtanh.pop %v5852
        %v5940 = vtanh.pop %v5854
        %v5941 = vtanh.pop %v5929
        %v5942 = vtanh.pop %v5931
        %v5943 = vtanh.pop %v5858
        %v5944 = vtanh.pop %v5860
        %v5945 = vtanh.pop %v5935
        %v5946 = vtanh.pop %v5937
        %5947 = vmatprep.subr.mxu0 %v5940
        %5948 = vmatpush1.msra.mxu0 %v5939
        %5949 = vmatprep.subr.mxu0 %v5944
        %5950 = vmatpush1.msra.mxu0 %v5943
        %5951 = vmatprep.subr.mxu0 0.0
        %5952 = vmatpush1.msra.mxu0 0.0
        %5953 = vmatprep.subr.mxu0 0.0
        %5954 = vmatpush1.msra.mxu0 0.0
        %5955 = vmatprep.subr.mxu0 0.0
        %5956 = vmatpush1.msra.mxu0 0.0
        %5957 = vmatprep.subr.mxu0 0.0
        %5958 = vmatpush1.msra.mxu0 0.0
        %5959 = vmatprep.subr.mxu0 0.0
        %5960 = vmatpush1.msra.mxu0 0.0
        %5961 = vmatprep.subr.mxu0 0.0
        %5962 = vmatpush1.msra.mxu0 0.0
        %5963 = vmatprep.subr.mxu0 0.0
        %5964 = vmatpush1.msra.mxu0 0.0
        %5965 = vmatprep.subr.mxu0 0.0
        %5966 = vmatpush1.msra.mxu0 0.0
        %5967 = vmatprep.subr.mxu0 0.0
        %5968 = vmatpush1.msra.mxu0 0.0
        %5969 = vmatprep.subr.mxu0 0.0
        %5970 = vmatpush1.msra.mxu0 0.0
        %5971 = vmatprep.subr.mxu0 0.0
        %5972 = vmatpush1.msra.mxu0 0.0
        %5973 = vmatprep.subr.mxu0 0.0
        %5974 = vmatpush1.msra.mxu0 0.0
        %5975 = vmatprep.subr.mxu0 0.0
        %5976 = vmatpush1.msra.mxu0 0.0
        %5977 = vmatprep.subr.mxu0 0.0
        %5978 = vmatpush1.msra.mxu0 0.0
        %5979 = vmatprep.subr.mxu0 0.0
        %5980 = vmatpush1.msra.mxu0 0.0
        %5981 = vmatprep.subr.mxu0 0.0
        %5982 = vmatpush1.msra.mxu0 0.0
        %5983 = vmatprep.subr.mxu0 0.0
        %5984 = vmatpush1.msra.mxu0 0.0
        %5985 = vmatprep.subr.mxu0 0.0
        %5986 = vmatpush1.msra.mxu0 0.0
        %5987 = vmatprep.subr.mxu0 0.0
        %5988 = vmatpush1.msra.mxu0 0.0
        %5989 = vmatprep.subr.mxu0 0.0
        %5990 = vmatpush1.msra.mxu0 0.0
        %5991 = vmatprep.subr.mxu0 0.0
        %5992 = vmatpush1.msra.mxu0 0.0
        %5993 = vmatprep.subr.mxu0 0.0
        %5994 = vmatpush1.msra.mxu0 0.0
        %5995 = vmatprep.subr.mxu0 0.0
        %5996 = vmatpush1.msra.mxu0 0.0
        %5997 = vmatprep.subr.mxu0 0.0
        %5998 = vmatpush1.msra.mxu0 0.0
        %5999 = vmatprep.subr.mxu0 0.0
        %6000 = vmatpush1.msra.mxu0 0.0
        %6001 = vmatprep.subr.mxu0 0.0
        %6002 = vmatpush1.msra.mxu0 0.0
        %6003 = vmatprep.subr.mxu0 0.0
        %6004 = vmatpush1.msra.mxu0 0.0
        %6005 = vmatprep.subr.mxu0 0.0
        %6006 = vmatpush1.msra.mxu0 0.0
        %6007 = vmatprep.subr.mxu0 0.0
        %6008 = vmatpush1.msra.mxu0 0.0
        %6009 = vmatprep.subr.mxu0 0.0
        %6010 = vmatpush1.msra.mxu0 0.0
        %6011 = vmatprep.mubr.f32.mxu0 0.0
        %6012 = vmatmul.mubr.f32.gmra.mrb[0].mxu0 %v513
        %v6013 = vpop.f32.mrb[0].mxu0
        %v6014 = vadd.f32 %v506, %v6013
        %v6015 = vpop.f32.mrb[0].mxu0
        %v6016 = vadd.f32 %v506, %v6015
        %6017 = vmatprep.mubr.f32.mxu0 0.0
        %6018 = vmatmul.mubr.f32.gmra.mrb[0].mxu0 %v516
        %v6019 = vpop.f32.mrb[0].mxu0
        %v6020 = vadd.f32 %v510, %v6019
        %v6021 = vpop.f32.mrb[0].mxu0
        %v6022 = vadd.f32 %v510, %v6021
        %6023 = vdwg.mxu0
        %6024 = vmatprep.subr.mxu0 %v5942
        %6025 = vmatpush1.msra.mxu0 %v5941
        %6026 = vmatprep.subr.mxu0 %v5946
        %6027 = vmatpush1.msra.mxu0 %v5945
        %6028 = vmatprep.subr.mxu0 0.0
        %6029 = vmatpush1.msra.mxu0 0.0
        %6030 = vmatprep.subr.mxu0 0.0
        %6031 = vmatpush1.msra.mxu0 0.0
        %6032 = vmatprep.subr.mxu0 0.0
        %6033 = vmatpush1.msra.mxu0 0.0
        %6034 = vmatprep.subr.mxu0 0.0
        %6035 = vmatpush1.msra.mxu0 0.0
        %6036 = vmatprep.subr.mxu0 0.0
        %6037 = vmatpush1.msra.mxu0 0.0
        %6038 = vmatprep.subr.mxu0 0.0
        %6039 = vmatpush1.msra.mxu0 0.0
        %6040 = vmatprep.subr.mxu0 0.0
        %6041 = vmatpush1.msra.mxu0 0.0
        %6042 = vmatprep.subr.mxu0 0.0
        %6043 = vmatpush1.msra.mxu0 0.0
        %6044 = vmatprep.subr.mxu0 0.0
        %6045 = vmatpush1.msra.mxu0 0.0
        %6046 = vmatprep.subr.mxu0 0.0
        %6047 = vmatpush1.msra.mxu0 0.0
        %6048 = vmatprep.subr.mxu0 0.0
        %6049 = vmatpush1.msra.mxu0 0.0
        %6050 = vmatprep.subr.mxu0 0.0
        %6051 = vmatpush1.msra.mxu0 0.0
        %6052 = vmatprep.subr.mxu0 0.0
        %6053 = vmatpush1.msra.mxu0 0.0
        %6054 = vmatprep.subr.mxu0 0.0
        %6055 = vmatpush1.msra.mxu0 0.0
        %6056 = vmatprep.subr.mxu0 0.0
        %6057 = vmatpush1.msra.mxu0 0.0
        %6058 = vmatprep.subr.mxu0 0.0
        %6059 = vmatpush1.msra.mxu0 0.0
        %6060 = vmatprep.subr.mxu0 0.0
        %6061 = vmatpush1.msra.mxu0 0.0
        %6062 = vmatprep.subr.mxu0 0.0
        %6063 = vmatpush1.msra.mxu0 0.0
        %6064 = vmatprep.subr.mxu0 0.0
        %6065 = vmatpush1.msra.mxu0 0.0
        %6066 = vmatprep.subr.mxu0 0.0
        %6067 = vmatpush1.msra.mxu0 0.0
        %6068 = vmatprep.subr.mxu0 0.0
        %6069 = vmatpush1.msra.mxu0 0.0
        %6070 = vmatprep.subr.mxu0 0.0
        %6071 = vmatpush1.msra.mxu0 0.0
        %6072 = vmatprep.subr.mxu0 0.0
        %6073 = vmatpush1.msra.mxu0 0.0
        %6074 = vmatprep.subr.mxu0 0.0
        %6075 = vmatpush1.msra.mxu0 0.0
        %6076 = vmatprep.subr.mxu0 0.0
        %6077 = vmatpush1.msra.mxu0 0.0
        %6078 = vmatprep.subr.mxu0 0.0
        %6079 = vmatpush1.msra.mxu0 0.0
        %6080 = vmatprep.subr.mxu0 0.0
        %6081 = vmatpush1.msra.mxu0 0.0
        %6082 = vmatprep.subr.mxu0 0.0
        %6083 = vmatpush1.msra.mxu0 0.0
        %6084 = vmatprep.subr.mxu0 0.0
        %6085 = vmatpush1.msra.mxu0 0.0
        %6086 = vmatprep.subr.mxu0 0.0
        %6087 = vmatpush1.msra.mxu0 0.0
        %6088 = vmatprep.mubr.f32.mxu0 0.0
        %6089 = vmatmul.mubr.f32.gmra.mrb[0].mxu0 %v513
        %v6090 = vpop.f32.mrb[0].mxu0
        %v6091 = vadd.f32 %v506, %v6090
        %v6092 = vpop.f32.mrb[0].mxu0
        %v6093 = vadd.f32 %v506, %v6092
        %6094 = vmatprep.mubr.f32.mxu0 0.0
        %6095 = vmatmul.mubr.f32.gmra.mrb[0].mxu0 %v516
        %v6096 = vpop.f32.mrb[0].mxu0
        %v6097 = vadd.f32 %v510, %v6096
        %v6098 = vpop.f32.mrb[0].mxu0
        %v6099 = vadd.f32 %v510, %v6098
        %6100 = vdwg.mxu0
        %v6101 = vtanh.pop %v6014
        %v6102 = vtanh.pop %v6016
        %v6103 = vtanh.pop %v6091
        %v6104 = vtanh.pop %v6093
        %v6105 = vtanh.pop %v6020
        %v6106 = vtanh.pop %v6022
        %v6107 = vtanh.pop %v6097
        %v6108 = vtanh.pop %v6099
        %6109 = vmatprep.subr.mxu0 %v6102
        %6110 = vmatpush1.msra.mxu0 %v6101
        %6111 = vmatprep.subr.mxu0 %v6106
        %6112 = vmatpush1.msra.mxu0 %v6105
        %6113 = vmatprep.subr.mxu0 0.0
        %6114 = vmatpush1.msra.mxu0 0.0
        %6115 = vmatprep.subr.mxu0 0.0
        %6116 = vmatpush1.msra.mxu0 0.0
        %6117 = vmatprep.subr.mxu0 0.0
        %6118 = vmatpush1.msra.mxu0 0.0
        %6119 = vmatprep.subr.mxu0 0.0
        %6120 = vmatpush1.msra.mxu0 0.0
        %6121 = vmatprep.subr.mxu0 0.0
        %6122 = vmatpush1.msra.mxu0 0.0
        %6123 = vmatprep.subr.mxu0 0.0
        %6124 = vmatpush1.msra.mxu0 0.0
        %6125 = vmatprep.subr.mxu0 0.0
        %6126 = vmatpush1.msra.mxu0 0.0
        %6127 = vmatprep.subr.mxu0 0.0
        %6128 = vmatpush1.msra.mxu0 0.0
        %6129 = vmatprep.subr.mxu0 0.0
        %6130 = vmatpush1.msra.mxu0 0.0
        %6131 = vmatprep.subr.mxu0 0.0
        %6132 = vmatpush1.msra.mxu0 0.0
        %6133 = vmatprep.subr.mxu0 0.0
        %6134 = vmatpush1.msra.mxu0 0.0
        %6135 = vmatprep.subr.mxu0 0.0
        %6136 = vmatpush1.msra.mxu0 0.0
        %6137 = vmatprep.subr.mxu0 0.0
        %6138 = vmatpush1.msra.mxu0 0.0
        %6139 = vmatprep.subr.mxu0 0.0
        %6140 = vmatpush1.msra.mxu0 0.0
        %6141 = vmatprep.subr.mxu0 0.0
        %6142 = vmatpush1.msra.mxu0 0.0
        %6143 = vmatprep.subr.mxu0 0.0
        %6144 = vmatpush1.msra.mxu0 0.0
        %6145 = vmatprep.subr.mxu0 0.0
        %6146 = vmatpush1.msra.mxu0 0.0
        %6147 = vmatprep.subr.mxu0 0.0
        %6148 = vmatpush1.msra.mxu0 0.0
        %6149 = vmatprep.subr.mxu0 0.0
        %6150 = vmatpush1.msra.mxu0 0.0
        %6151 = vmatprep.subr.mxu0 0.0
        %6152 = vmatpush1.msra.mxu0 0.0
        %6153 = vmatprep.subr.mxu0 0.0
        %6154 = vmatpush1.msra.mxu0 0.0
        %6155 = vmatprep.subr.mxu0 0.0
        %6156 = vmatpush1.msra.mxu0 0.0
        %6157 = vmatprep.subr.mxu0 0.0
        %6158 = vmatpush1.msra.mxu0 0.0
        %6159 = vmatprep.subr.mxu0 0.0
        %6160 = vmatpush1.msra.mxu0 0.0
        %6161 = vmatprep.subr.mxu0 0.0
        %6162 = vmatpush1.msra.mxu0 0.0
        %6163 = vmatprep.subr.mxu0 0.0
        %6164 = vmatpush1.msra.mxu0 0.0
        %6165 = vmatprep.subr.mxu0 0.0
        %6166 = vmatpush1.msra.mxu0 0.0
        %6167 = vmatprep.subr.mxu0 0.0
        %6168 = vmatpush1.msra.mxu0 0.0
        %6169 = vmatprep.subr.mxu0 0.0
        %6170 = vmatpush1.msra.mxu0 0.0
        %6171 = vmatprep.subr.mxu0 0.0
        %6172 = vmatpush1.msra.mxu0 0.0
        %6173 = vmatprep.mubr.f32.mxu0 0.0
        %6174 = vmatmul.mubr.f32.gmra.mrb[0].mxu0 %v685
        %v6175 = vpop.f32.mrb[0].mxu0
        %v6176 = vadd.f32 %v682, %v6175
        %v6177 = vpop.f32.mrb[0].mxu0
        %v6178 = vadd.f32 %v682, %v6177
        %6179 = vdwg.mxu0
        %6180 = vmatprep.subr.mxu0 %v6104
        %6181 = vmatpush1.msra.mxu0 %v6103
        %6182 = vmatprep.subr.mxu0 %v6108
        %6183 = vmatpush1.msra.mxu0 %v6107
        %6184 = vmatprep.subr.mxu0 0.0
        %6185 = vmatpush1.msra.mxu0 0.0
        %6186 = vmatprep.subr.mxu0 0.0
        %6187 = vmatpush1.msra.mxu0 0.0
        %6188 = vmatprep.subr.mxu0 0.0
        %6189 = vmatpush1.msra.mxu0 0.0
        %6190 = vmatprep.subr.mxu0 0.0
        %6191 = vmatpush1.msra.mxu0 0.0
        %6192 = vmatprep.subr.mxu0 0.0
        %6193 = vmatpush1.msra.mxu0 0.0
        %6194 = vmatprep.subr.mxu0 0.0
        %6195 = vmatpush1.msra.mxu0 0.0
        %6196 = vmatprep.subr.mxu0 0.0
        %6197 = vmatpush1.msra.mxu0 0.0
        %6198 = vmatprep.subr.mxu0 0.0
        %6199 = vmatpush1.msra.mxu0 0.0
        %6200 = vmatprep.subr.mxu0 0.0
        %6201 = vmatpush1.msra.mxu0 0.0
        %6202 = vmatprep.subr.mxu0 0.0
        %6203 = vmatpush1.msra.mxu0 0.0
        %6204 = vmatprep.subr.mxu0 0.0
        %6205 = vmatpush1.msra.mxu0 0.0
        %6206 = vmatprep.subr.mxu0 0.0
        %6207 = vmatpush1.msra.mxu0 0.0
        %6208 = vmatprep.subr.mxu0 0.0
        %6209 = vmatpush1.msra.mxu0 0.0
        %6210 = vmatprep.subr.mxu0 0.0
        %6211 = vmatpush1.msra.mxu0 0.0
        %6212 = vmatprep.subr.mxu0 0.0
        %6213 = vmatpush1.msra.mxu0 0.0
        %6214 = vmatprep.subr.mxu0 0.0
        %6215 = vmatpush1.msra.mxu0 0.0
        %6216 = vmatprep.subr.mxu0 0.0
        %6217 = vmatpush1.msra.mxu0 0.0
        %6218 = vmatprep.subr.mxu0 0.0
        %6219 = vmatpush1.msra.mxu0 0.0
        %6220 = vmatprep.subr.mxu0 0.0
        %6221 = vmatpush1.msra.mxu0 0.0
        %6222 = vmatprep.subr.mxu0 0.0
        %6223 = vmatpush1.msra.mxu0 0.0
        %6224 = vmatprep.subr.mxu0 0.0
        %6225 = vmatpush1.msra.mxu0 0.0
        %6226 = vmatprep.subr.mxu0 0.0
        %6227 = vmatpush1.msra.mxu0 0.0
        %6228 = vmatprep.subr.mxu0 0.0
        %6229 = vmatpush1.msra.mxu0 0.0
        %6230 = vmatprep.subr.mxu0 0.0
        %6231 = vmatpush1.msra.mxu0 0.0
        %6232 = vmatprep.subr.mxu0 0.0
        %6233 = vmatpush1.msra.mxu0 0.0
        %6234 = vmatprep.subr.mxu0 0.0
        %6235 = vmatpush1.msra.mxu0 0.0
        %6236 = vmatprep.subr.mxu0 0.0
        %6237 = vmatpush1.msra.mxu0 0.0
        %6238 = vmatprep.subr.mxu0 0.0
        %6239 = vmatpush1.msra.mxu0 0.0
        %6240 = vmatprep.subr.mxu0 0.0
        %6241 = vmatpush1.msra.mxu0 0.0
        %6242 = vmatprep.subr.mxu0 0.0
        %6243 = vmatpush1.msra.mxu0 0.0
        %6244 = vmatprep.mubr.f32.mxu0 0.0
        %6245 = vmatmul.mubr.f32.gmra.mrb[0].mxu0 %v685
        %v6246 = vpop.f32.mrb[0].mxu0
        %v6247 = vadd.f32 %v682, %v6246
        %v6248 = vpop.f32.mrb[0].mxu0
        %v6249 = vadd.f32 %v682, %v6248
        %6250 = vdwg.mxu0
        %v6251 = vmax.f32 %v6176, 0.0
        %v6252 = vmax.f32 %v6178, 0.0
        %v6253 = vmax.f32 %v6247, 0.0
        %v6254 = vmax.f32 %v6249, 0.0
        %v6255 = vand.u32 2147483647, %v6176
        %v6256 = vand.u32 2147483647, %v6178
        %v6257 = vand.u32 2147483647, %v6247
        %v6258 = vand.u32 2147483647, %v6249
        %v6259 = vsub.f32 0.0, %v6255
        %v6260 = vsub.f32 0.0, %v6256
        %v6261 = vsub.f32 0.0, %v6257
        %v6262 = vsub.f32 0.0, %v6258
        %v6263 = vmul.f32 %v6259, 1.442695
        %v6264 = vpow.pop %v6263
        %v6265 = vmul.f32 %v6260, 1.442695
        %v6266 = vpow.pop %v6265
        %v6267 = vmul.f32 %v6261, 1.442695
        %v6268 = vpow.pop %v6267
        %v6269 = vmul.f32 %v6262, 1.442695
        %v6270 = vpow.pop %v6269
        %v6271 = vadd.f32 %v6264, 1.0
        %v6272 = vlog2.pop %v6271
        %v6273 = vmul.f32 %v6272, 0.6931472
        %v6274 = vmul.f32 -0.5, %v6264
        %v6275 = vadd.f32 %v6274, 1.0
        %v6276 = vmul.f32 %v6275, %v6264
        %v6277 = vand.u32 2147483647, %v6264
        %vm6278 = vcmp.lt.f32.partialorder %v6277, 0.0004427343
        %v6279 = vsel %vm6278, %v6276, %v6273
        %v6280 = vadd.f32 %v6266, 1.0
        %v6281 = vlog2.pop %v6280
        %v6282 = vmul.f32 %v6281, 0.6931472
        %v6283 = vmul.f32 -0.5, %v6266
        %v6284 = vadd.f32 %v6283, 1.0
        %v6285 = vmul.f32 %v6284, %v6266
        %v6286 = vand.u32 2147483647, %v6266
        %vm6287 = vcmp.lt.f32.partialorder %v6286, 0.0004427343
        %v6288 = vsel %vm6287, %v6285, %v6282
        %v6289 = vadd.f32 %v6268, 1.0
        %v6290 = vlog2.pop %v6289
        %v6291 = vmul.f32 %v6290, 0.6931472
        %v6292 = vmul.f32 -0.5, %v6268
        %v6293 = vadd.f32 %v6292, 1.0
        %v6294 = vmul.f32 %v6293, %v6268
        %v6295 = vand.u32 2147483647, %v6268
        %vm6296 = vcmp.lt.f32.partialorder %v6295, 0.0004427343
        %v6297 = vsel %vm6296, %v6294, %v6291
        %v6298 = vadd.f32 %v6270, 1.0
        %v6299 = vlog2.pop %v6298
        %v6300 = vmul.f32 %v6299, 0.6931472
        %v6301 = vmul.f32 -0.5, %v6270
        %v6302 = vadd.f32 %v6301, 1.0
        %v6303 = vmul.f32 %v6302, %v6270
        %v6304 = vand.u32 2147483647, %v6270
        %vm6305 = vcmp.lt.f32.partialorder %v6304, 0.0004427343
        %v6306 = vsel %vm6305, %v6303, %v6300
        %v6307 = vadd.f32 %v6251, %v6279
        %v6308 = vadd.f32 %v6252, %v6288
        %v6309 = vadd.f32 %v6253, %v6297
        %v6310 = vadd.f32 %v6254, %v6306
        %v6315 = vcombine.low %v6307, %v6308
        %v6316 = vcombine.low %v6309, %v6310
        %v6318 = vunpack.c.l.s4 1966171168
        %v6319 = vunpack.c.0.s8 %v6318
        %v6320 = vlaneseq
        %v6321 = vshrl.u32 %v6320, 7
        %v6322 = vsub.s32 %v6319, %v6321
        %v6323 = vrot.slane %v6315, %v6322
        %v6325 = vunpack.c.l.s4 1966171168
        %v6326 = vunpack.c.0.s8 %v6325
        %v6327 = vlaneseq
        %v6328 = vshrl.u32 %v6327, 7
        %v6329 = vsub.s32 %v6326, %v6328
        %v6330 = vrot.slane %v6316, %v6329
        %v6331 = vcombine.low %v6323, %v6330
        %v6333 = vunpack.c.l.s4 1966171168
        %v6334 = vunpack.c.0.s8 %v6333
        %v6335 = vlaneseq
        %v6336 = vshrl.u32 %v6335, 7
        %v6337 = vsub.s32 %v6334, %v6336
        %v6338 = vrot.slane %v6331, %v6337
        %6340 = vst.msk [vmem:[%s245 + $0x24] sm:$0xf] %vm921, %v6338
        %s6341 = sand.u32 %s140, 1
        %s6342 = scalar_lea.sflag [#allocation4], %s6341
        %s6343 = sand.u32 %s140, 1
        %s6344 = smul.addr %s6343, 40
        %s6345 = scalar_lea.vmem [#allocation5], %s6344
        // Predicated region
        $region45: #{param_function_forward.1} parent=39 // pred_check
          %p6346 = pneg %p150
        $region46: #{param_function_forward.1} parent=39 // pred_check_branch
          %6348 = sbr.rel (%p6346) target = $region48
        $region47: #{param_function_forward.1} parent=39 // pred_region
          %s6349 = smul.u32 40, %s22
          %s6350 = ssub.s32 79, %s6349
          %p6351 = scmp.lt.s32.totalorder %s6350, 40
          %s6352 = scalar_select %p6351, %s6350, 40
          %s6353 = smul.u32 16, %s6352
          %s6355 = ssub.s32 640, %s6353
          %6356 = vsyncadd %s6342, %s6355
          %p6357 = scmp.ne.s32.totalorder 0, %s6353
          %s6358 = smul.addr %s6349, 16
          %s6359 = scalar_lea.hbm %s5, %s6358
          %s6360 = sshll.u32 %s6352, 4
          %s6361 = sshll.u32 %s6345, 4
          %s6362 = int_to_ptr.vmem [resolvable:$true] %s6361
          %6364 = dma.vmem_to_hbm [thread:$0]  (%p6357), %s6362, %s6360, %s6359, %s6342
        $region48: #{param_function_forward.1} parent=39 // pred_fallthru
          _
      $region40: #{param_function_forward.1} parent=5 // pred_fallthru
        _
      %p6365 = scmp.le.s32.totalorder 2, %s17
      // Predicated region
      $region49: #{param_function_forward.1} parent=5 // pred_check
        %p6366 = pneg %p6365
      $region50: #{param_function_forward.1} parent=5 // pred_check_branch
        %6368 = sbr.rel (%p6366) target = $region52
      $region51: #{param_function_forward.1} parent=5 // pred_region
        %s6369 = ssub.s32 %s17, 2
        // Predicated region
        $region53: #{param_function_forward.1} parent=51 // pred_check
          %p6370 = pneg %p156
        $region54: #{param_function_forward.1} parent=51 // pred_check_branch
          %6372 = sbr.rel (%p6370) target = $region56
        $region55: #{param_function_forward.1} parent=51 // pred_region
          %s6373 = sand.u32 %s141, 1
          %s6374 = scalar_lea.sflag [#allocation4], %s6373
          %s6375 = sand.u32 %s141, 1
          %s6376 = smul.addr %s6375, 40
          %s6377 = scalar_lea.vmem [#allocation5], %s6376
          %6378 = dma.done %s6374, 640
        $region56: #{param_function_forward.1} parent=51 // pred_fallthru
          _
      $region52: #{param_function_forward.1} parent=5 // pred_fallthru
        _
    $region6: #{param_function_forward.1} parent=1 // loop_footer
      %s21 = sadd.s32 1, %s17
    $region7: #{param_function_forward.1} parent=1 // loop_footer_branch
      %16 = sbr.rel target = $region3
    $region8: #{param_function_forward.1} parent=1 // loop_exit
      _
    %6379 = vsyncpa [#allocation3], 1
    %s6380 = scalar_lea.sflag [#allocation3], 1
    %6381 = vsyncpa %s6380, 1
    %6382 = vsyncpa [#allocation4], 1
    %s6383 = scalar_lea.sflag [#allocation4], 1
    %6384 = vsyncpa %s6383, 1

</llo_original>
